<compile_context>
chip_gen: v6e
topology: v6e:2x2x1
jax: 0.10.0
libtpu: 0.0.40
codegen_flags: <defaults>
</compile_context>

<pallas_src>
import functools

import jax
import jax.numpy as jnp
from jax.experimental import pallas as pl
from jax.experimental.pallas import tpu as pltpu


# ---------------------------------------------------------------------------
# Single fused Pallas kernel: the entire decoder stack + output projection.
# One grid step == one batch element ("parallel" -> both v7x TensorCores work).
# ---------------------------------------------------------------------------
def _decoder_stack_kernel(x_ref, enc_ref, tbias_ref, sbias_ref,
                          sa_wq_ref, sa_wkv_ref, sa_wo_ref, sa_bo_ref,
                          n0_g_ref, n0_b_ref,
                          ca_wq_ref, ca_wkv_ref, ca_wo_ref, ca_bo_ref,
                          n1_g_ref, n1_b_ref,
                          ff_w1_ref, ff_b1_ref, ff_w2_ref, ff_b2_ref,
                          n2_g_ref, n2_b_ref,
                          ow_ref, ob_ref, o_ref, *, heads, num_layers, inv_scale):
    E = x_ref.shape[-1]
    d = E // heads

    x = x_ref[0]                        # (S, E)   decoder activations
    enc = enc_ref[0]                    # (Sk, E)  encoder output
    tbias = tbias_ref[0]                # (S, S)   additive target-mask bias
    sbias = sbias_ref[0]                # (1, Sk)  additive source-mask bias

    def layer_norm(y, g, b):
        mu = jnp.mean(y, axis=-1, keepdims=True)
        var = jnp.mean(jnp.square(y - mu), axis=-1, keepdims=True)
        return (y - mu) * jax.lax.rsqrt(var + 1e-5) * g + b   # PyTorch LN eps

    def mha(xq, xkv, bias, wq, wkv, wo, bo):
        """Fused QKV proj -> all heads' attention -> Wo (+bias).  Everything
        stays in vregs/VMEM; per-head ctx folds straight into the Wo matmul."""
        q = jnp.dot(xq, wq, preferred_element_type=jnp.float32) * inv_scale
        kv = jnp.dot(xkv, wkv, preferred_element_type=jnp.float32)     # (Sk, 2E)
        k = kv[:, :E]
        v = kv[:, E:]
        out = None
        for h in range(heads):          # static unroll (heads is a Python int)
            lo = h * d
            qh = q[:, lo:lo + d]        # (S, d)
            kh = k[:, lo:lo + d]        # (Sk, d)
            vh = v[:, lo:lo + d]        # (Sk, d)
            # contract last axes of both operands -> no materialized k.T
            s = jax.lax.dot_general(qh, kh, (((1,), (1,)), ((), ())),
                                    preferred_element_type=jnp.float32)
            s = s + bias                # broadcasts over query rows when mq == 1
            m = jnp.max(s, axis=-1, keepdims=True)
            p = jnp.exp(s - m)
            denom = jnp.sum(p, axis=-1, keepdims=True)
            p = p * pl.reciprocal(denom, approx=True)      # EUP slot, VALU-free
            ctx = jnp.dot(p, vh, preferred_element_type=jnp.float32)   # (S, d)
            part = jnp.dot(ctx, wo[lo:lo + d, :],
                           preferred_element_type=jnp.float32)
            out = part if out is None else out + part
        return out + bo

    for l in range(num_layers):         # static unroll over layers
        # masked self-attention -> add & LN
        a = mha(x, x, tbias, sa_wq_ref[l], sa_wkv_ref[l], sa_wo_ref[l], sa_bo_ref[l])
        query = layer_norm(a + x, n0_g_ref[l], n0_b_ref[l])
        # cross-attention (key = value = encoder_out) -> add & LN
        c = mha(query, enc, sbias, ca_wq_ref[l], ca_wkv_ref[l], ca_wo_ref[l],
                ca_bo_ref[l])
        xq = layer_norm(c + query, n1_g_ref[l], n1_b_ref[l])
        # feed-forward (ReLU) -> add & LN
        h = jnp.dot(xq, ff_w1_ref[l], preferred_element_type=jnp.float32) + ff_b1_ref[l]
        h = jnp.maximum(h, 0.0)
        f = jnp.dot(h, ff_w2_ref[l], preferred_element_type=jnp.float32) + ff_b2_ref[l]
        x = layer_norm(f + xq, n2_g_ref[l], n2_b_ref[l])

    # final vocab projection (vocab padded to lane-dense multiple of 128)
    o_ref[0] = (jnp.dot(x, ow_ref[...], preferred_element_type=jnp.float32)
                + ob_ref[...])


# ---------------------------------------------------------------------------
# Parameter preparation (done once; hoists all weight fusion out of the fwd path)
# ---------------------------------------------------------------------------
def prepare_params(params, heads):
    """Pre-fuse per-head weights into block-diagonal slabs, stack per-layer
    params along a leading L axis, pad vocab to 128, and reshape biases /
    LN params to (1, E) so no per-call reshapes remain."""
    E = params["word_emb"].shape[1]
    vocab = params["out_w"].shape[1]
    vpad = ((vocab + 127) // 128) * 128

    def bd(w):  # (d,d) per-head weight -> block-diagonal (E,E)
        return jnp.kron(jnp.eye(heads, dtype=w.dtype), w)

    def stack(fn):
        return jnp.stack([fn(lp) for lp in params["layers"]], axis=0)

    return dict(
        word_emb=params["word_emb"],
        pos_emb=params["pos_emb"],
        out_w_pad=jnp.pad(params["out_w"], ((0, 0), (0, vpad - vocab))),
        out_b_pad=jnp.pad(params["out_b"], (0, vpad - vocab)).reshape(1, vpad),
        sa_wq=stack(lambda lp: bd(lp["sa"]["wq"])),
        sa_wkv=stack(lambda lp: jnp.concatenate(
            [bd(lp["sa"]["wk"]), bd(lp["sa"]["wv"])], axis=1)),
        sa_wo=stack(lambda lp: lp["sa"]["wo"]),
        sa_bo=stack(lambda lp: lp["sa"]["bo"].reshape(1, E)),
        n0_g=stack(lambda lp: lp["n0_g"].reshape(1, E)),
        n0_b=stack(lambda lp: lp["n0_b"].reshape(1, E)),
        ca_wq=stack(lambda lp: bd(lp["ca"]["wq"])),
        ca_wkv=stack(lambda lp: jnp.concatenate(
            [bd(lp["ca"]["wk"]), bd(lp["ca"]["wv"])], axis=1)),
        ca_wo=stack(lambda lp: lp["ca"]["wo"]),
        ca_bo=stack(lambda lp: lp["ca"]["bo"].reshape(1, E)),
        n1_g=stack(lambda lp: lp["n1_g"].reshape(1, E)),
        n1_b=stack(lambda lp: lp["n1_b"].reshape(1, E)),
        ff_w1=stack(lambda lp: lp["ff_w1"]),
        ff_b1=stack(lambda lp: lp["ff_b1"].reshape(1, -1)),
        ff_w2=stack(lambda lp: lp["ff_w2"]),
        ff_b2=stack(lambda lp: lp["ff_b2"].reshape(1, E)),
        n2_g=stack(lambda lp: lp["n2_g"].reshape(1, E)),
        n2_b=stack(lambda lp: lp["n2_b"].reshape(1, E)),
    )


# ---------------------------------------------------------------------------
# Forward pass (glue: embedding gather + mask->bias; all compute in one kernel)
# ---------------------------------------------------------------------------
def decoder_forward(prepared, tokens, encoder_out, src_mask, trg_mask, *,
                    heads, num_layers, vocab):
    N, S = tokens.shape
    E = prepared["word_emb"].shape[1]
    Sk = encoder_out.shape[1]
    vpad = prepared["out_w_pad"].shape[1]
    hid = prepared["ff_w1"].shape[2]
    L = num_layers

    # TODO(synk): embedding gather (token-id lookup) stays in JAX glue; a
    # BlockSpec cannot express a data-dependent vocab-row gather cleanly.
    x = prepared["word_emb"][tokens] + prepared["pos_emb"][:S][None, :, :]

    # masks -> additive 0 / -1e20 bias, computed once per call (batch-dependent
    # in general, so kept at shape (N, mq, Sk); rows broadcast in-kernel).
    trg_bias = jnp.where(trg_mask[:, 0] == 0.0, -1e20, 0.0).astype(jnp.float32)  # (N,S,S)
    src_bias = jnp.where(src_mask[:, 0] == 0.0, -1e20, 0.0).astype(jnp.float32)  # (N,1,Sk)

    kernel = functools.partial(_decoder_stack_kernel, heads=heads,
                               num_layers=num_layers,
                               inv_scale=1.0 / (float(E) ** 0.5))

    def full(shape):  # grid-invariant weight slab (fetched once, stays in VMEM)
        nd = len(shape)
        return pl.BlockSpec(shape, lambda n, _nd=nd: (0,) * _nd)

    in_specs = [
        pl.BlockSpec((1, S, E), lambda n: (n, 0, 0)),     # x
        pl.BlockSpec((1, Sk, E), lambda n: (n, 0, 0)),    # encoder_out
        pl.BlockSpec((1, S, S), lambda n: (n, 0, 0)),     # target-mask bias
        pl.BlockSpec((1, 1, Sk), lambda n: (n, 0, 0)),    # source-mask bias
        full((L, E, E)), full((L, E, 2 * E)), full((L, E, E)), full((L, 1, E)),
        full((L, 1, E)), full((L, 1, E)),
        full((L, E, E)), full((L, E, 2 * E)), full((L, E, E)), full((L, 1, E)),
        full((L, 1, E)), full((L, 1, E)),
        full((L, E, hid)), full((L, 1, hid)), full((L, hid, E)), full((L, 1, E)),
        full((L, 1, E)), full((L, 1, E)),
        full((E, vpad)), full((1, vpad)),
    ]

    logits_pad = pl.pallas_call(
        kernel,
        out_shape=jax.ShapeDtypeStruct((N, S, vpad), jnp.float32),
        grid=(N,),
        in_specs=in_specs,
        out_specs=pl.BlockSpec((1, S, vpad), lambda n: (n, 0, 0)),
        compiler_params=pltpu.CompilerParams(dimension_semantics=("parallel",)),
    )(x, encoder_out, trg_bias, src_bias,
      prepared["sa_wq"], prepared["sa_wkv"], prepared["sa_wo"], prepared["sa_bo"],
      prepared["n0_g"], prepared["n0_b"],
      prepared["ca_wq"], prepared["ca_wkv"], prepared["ca_wo"], prepared["ca_bo"],
      prepared["n1_g"], prepared["n1_b"],
      prepared["ff_w1"], prepared["ff_b1"], prepared["ff_w2"], prepared["ff_b2"],
      prepared["n2_g"], prepared["n2_b"],
      prepared["out_w_pad"], prepared["out_b_pad"])

    return logits_pad[:, :, :vocab]


# ---------------------------------------------------------------------------
# Deterministic parameter init (weights stored as (in, out) == W.T of nn.Linear)
# ---------------------------------------------------------------------------
def init_params(key, vocab, E, num_layers, heads, fe, max_len):
    d = E // heads
    keys = jax.random.split(key, 3 + num_layers)

    def w(k, shape, scale=0.02):
        return (scale * jax.random.normal(k, shape)).astype(jnp.float32)

    params = dict(
        word_emb=w(keys[0], (vocab, E), 1.0),
        pos_emb=w(keys[1], (max_len, E), 1.0),
        out_w=w(keys[2], (E, vocab)),
        out_b=jnp.zeros((vocab,), jnp.float32),
        layers=[],
    )
    for i in range(num_layers):
        lk = jax.random.split(keys[3 + i], 10)
        ones = jnp.ones((E,), jnp.float32)
        zeros = jnp.zeros((E,), jnp.float32)
        layer = dict(
            sa=dict(wv=w(lk[0], (d, d)), wk=w(lk[1], (d, d)), wq=w(lk[2], (d, d)),
                    wo=w(lk[3], (E, E)), bo=zeros),
            n0_g=ones, n0_b=zeros,
            ca=dict(wv=w(lk[4], (d, d)), wk=w(lk[5], (d, d)), wq=w(lk[6], (d, d)),
                    wo=w(lk[7], (E, E)), bo=zeros),
            n1_g=ones, n1_b=zeros,
            ff_w1=w(lk[8], (E, fe * E)), ff_b1=jnp.zeros((fe * E,), jnp.float32),
            ff_w2=w(lk[9], (fe * E, E)), ff_b2=zeros,
            n2_g=ones, n2_b=zeros,
        )
        params["layers"].append(layer)
    return params


# ---------------------------------------------------------------------------
if __name__ == "__main__":
    # config: target_vocab=100, embed=32, layers=2, heads=4, expansion=4,
    #         dropout=0.0, max_length=16
    VOCAB, E, LAYERS, HEADS, FE, MAXLEN = 100, 32, 2, 4, 4, 16
    N, S, S_SRC = 2, 8, 8

    key = jax.random.PRNGKey(0)
    kp, kx, ke = jax.random.split(key, 3)

    params = init_params(kp, VOCAB, E, LAYERS, HEADS, FE, MAXLEN)
    prepared = prepare_params(params, HEADS)                 # one-time weight fusion

    tokens = jax.random.randint(kx, (N, S), 0, VOCAB)
    encoder_out = jax.random.normal(ke, (N, S_SRC, E), jnp.float32)
    # causal target mask (N,1,S,S), all-ones source mask (N,1,1,S_src)
    trg_mask = jnp.broadcast_to(jnp.tril(jnp.ones((S, S), jnp.float32)), (N, 1, S, S))
    src_mask = jnp.ones((N, 1, 1, S_SRC), jnp.float32)

    fwd = jax.jit(functools.partial(decoder_forward, heads=HEADS,
                                    num_layers=LAYERS, vocab=VOCAB))
    out = fwd(prepared, tokens, encoder_out, src_mask, trg_mask)
    out = jax.block_until_ready(out)

    assert out.shape == (N, S, VOCAB) and out.dtype == jnp.float32
    assert bool(jnp.all(jnp.isfinite(out)))
    print("KERNEL_OK")
</pallas_src>

<mosaic_0001>
module attributes {stable_mosaic.version = 11 : i64} {
  func.func @_decoder_stack_kernel(%arg0: i32, %arg1: memref<1x8x32xf32, #tpu.memory_space<vmem>>, %arg2: memref<1x8x32xf32, #tpu.memory_space<vmem>>, %arg3: memref<1x8x8xf32, #tpu.memory_space<vmem>>, %arg4: memref<1x1x8xf32, #tpu.memory_space<vmem>>, %arg5: memref<2x32x32xf32, #tpu.memory_space<vmem>>, %arg6: memref<2x32x64xf32, #tpu.memory_space<vmem>>, %arg7: memref<2x32x32xf32, #tpu.memory_space<vmem>>, %arg8: memref<2x1x32xf32, #tpu.memory_space<vmem>>, %arg9: memref<2x1x32xf32, #tpu.memory_space<vmem>>, %arg10: memref<2x1x32xf32, #tpu.memory_space<vmem>>, %arg11: memref<2x32x32xf32, #tpu.memory_space<vmem>>, %arg12: memref<2x32x64xf32, #tpu.memory_space<vmem>>, %arg13: memref<2x32x32xf32, #tpu.memory_space<vmem>>, %arg14: memref<2x1x32xf32, #tpu.memory_space<vmem>>, %arg15: memref<2x1x32xf32, #tpu.memory_space<vmem>>, %arg16: memref<2x1x32xf32, #tpu.memory_space<vmem>>, %arg17: memref<2x32x128xf32, #tpu.memory_space<vmem>>, %arg18: memref<2x1x128xf32, #tpu.memory_space<vmem>>, %arg19: memref<2x128x32xf32, #tpu.memory_space<vmem>>, %arg20: memref<2x1x32xf32, #tpu.memory_space<vmem>>, %arg21: memref<2x1x32xf32, #tpu.memory_space<vmem>>, %arg22: memref<2x1x32xf32, #tpu.memory_space<vmem>>, %arg23: memref<32x128xf32, #tpu.memory_space<vmem>>, %arg24: memref<1x128xf32, #tpu.memory_space<vmem>>, %arg25: memref<1x8x128xf32, #tpu.memory_space<vmem>>) attributes {dimension_semantics = [#tpu.dimension_semantics<parallel>], iteration_bounds = array<i64: 2>, scalar_prefetch = 0 : i64, scratch_operands = 0 : i64, tpu.core_type = #tpu.core_type<tc>, window_params = [{transform_indices = @transform_0, window_bounds = array<i64: 1, 8, 32>}, {transform_indices = @transform_1, window_bounds = array<i64: 1, 8, 32>}, {transform_indices = @transform_2, window_bounds = array<i64: 1, 8, 8>}, {transform_indices = @transform_3, window_bounds = array<i64: 1, 1, 8>}, {pipeline_mode = #tpu.pipeline_mode<synchronous>, transform_indices = @transform_4, window_bounds = array<i64: 2, 32, 32>}, {pipeline_mode = #tpu.pipeline_mode<synchronous>, transform_indices = @transform_5, window_bounds = array<i64: 2, 32, 64>}, {pipeline_mode = #tpu.pipeline_mode<synchronous>, transform_indices = @transform_6, window_bounds = array<i64: 2, 32, 32>}, {pipeline_mode = #tpu.pipeline_mode<synchronous>, transform_indices = @transform_7, window_bounds = array<i64: 2, 1, 32>}, {pipeline_mode = #tpu.pipeline_mode<synchronous>, transform_indices = @transform_8, window_bounds = array<i64: 2, 1, 32>}, {pipeline_mode = #tpu.pipeline_mode<synchronous>, transform_indices = @transform_9, window_bounds = array<i64: 2, 1, 32>}, {pipeline_mode = #tpu.pipeline_mode<synchronous>, transform_indices = @transform_10, window_bounds = array<i64: 2, 32, 32>}, {pipeline_mode = #tpu.pipeline_mode<synchronous>, transform_indices = @transform_11, window_bounds = array<i64: 2, 32, 64>}, {pipeline_mode = #tpu.pipeline_mode<synchronous>, transform_indices = @transform_12, window_bounds = array<i64: 2, 32, 32>}, {pipeline_mode = #tpu.pipeline_mode<synchronous>, transform_indices = @transform_13, window_bounds = array<i64: 2, 1, 32>}, {pipeline_mode = #tpu.pipeline_mode<synchronous>, transform_indices = @transform_14, window_bounds = array<i64: 2, 1, 32>}, {pipeline_mode = #tpu.pipeline_mode<synchronous>, transform_indices = @transform_15, window_bounds = array<i64: 2, 1, 32>}, {pipeline_mode = #tpu.pipeline_mode<synchronous>, transform_indices = @transform_16, window_bounds = array<i64: 2, 32, 128>}, {pipeline_mode = #tpu.pipeline_mode<synchronous>, transform_indices = @transform_17, window_bounds = array<i64: 2, 1, 128>}, {pipeline_mode = #tpu.pipeline_mode<synchronous>, transform_indices = @transform_18, window_bounds = array<i64: 2, 128, 32>}, {pipeline_mode = #tpu.pipeline_mode<synchronous>, transform_indices = @transform_19, window_bounds = array<i64: 2, 1, 32>}, {pipeline_mode = #tpu.pipeline_mode<synchronous>, transform_indices = @transform_20, window_bounds = array<i64: 2, 1, 32>}, {pipeline_mode = #tpu.pipeline_mode<synchronous>, transform_indices = @transform_21, window_bounds = array<i64: 2, 1, 32>}, {pipeline_mode = #tpu.pipeline_mode<synchronous>, transform_indices = @transform_22, window_bounds = array<i64: 32, 128>}, {pipeline_mode = #tpu.pipeline_mode<synchronous>, transform_indices = @transform_23, window_bounds = array<i64: 1, 128>}, {transform_indices = @transform_24, window_bounds = array<i64: 1, 8, 128>}]} {
    %c0 = arith.constant 0 : index
    %c0_0 = arith.constant 0 : index
    %c0_1 = arith.constant 0 : index
    %0 = vector.load %arg1[%c0, %c0_0, %c0_1] : memref<1x8x32xf32, #tpu.memory_space<vmem>>, vector<1x8x32xf32>
    %1 = vector.shape_cast %0 : vector<1x8x32xf32> to vector<8x32xf32>
    %c0_2 = arith.constant 0 : index
    %c0_3 = arith.constant 0 : index
    %c0_4 = arith.constant 0 : index
    %2 = vector.load %arg2[%c0_2, %c0_3, %c0_4] : memref<1x8x32xf32, #tpu.memory_space<vmem>>, vector<1x8x32xf32>
    %3 = vector.shape_cast %2 : vector<1x8x32xf32> to vector<8x32xf32>
    %c0_5 = arith.constant 0 : index
    %c0_6 = arith.constant 0 : index
    %c0_7 = arith.constant 0 : index
    %4 = vector.load %arg3[%c0_5, %c0_6, %c0_7] : memref<1x8x8xf32, #tpu.memory_space<vmem>>, vector<1x8x8xf32>
    %5 = vector.shape_cast %4 : vector<1x8x8xf32> to vector<8x8xf32>
    %c0_8 = arith.constant 0 : index
    %c0_9 = arith.constant 0 : index
    %c0_10 = arith.constant 0 : index
    %6 = vector.load %arg4[%c0_8, %c0_9, %c0_10] : memref<1x1x8xf32, #tpu.memory_space<vmem>>, vector<1x1x8xf32>
    %7 = vector.shape_cast %6 : vector<1x1x8xf32> to vector<1x8xf32>
    %c0_11 = arith.constant 0 : index
    %c0_12 = arith.constant 0 : index
    %c0_13 = arith.constant 0 : index
    %8 = vector.load %arg5[%c0_11, %c0_12, %c0_13] : memref<2x32x32xf32, #tpu.memory_space<vmem>>, vector<1x32x32xf32>
    %9 = vector.shape_cast %8 : vector<1x32x32xf32> to vector<32x32xf32>
    %c0_14 = arith.constant 0 : index
    %c0_15 = arith.constant 0 : index
    %c0_16 = arith.constant 0 : index
    %10 = vector.load %arg6[%c0_14, %c0_15, %c0_16] : memref<2x32x64xf32, #tpu.memory_space<vmem>>, vector<1x32x64xf32>
    %11 = vector.shape_cast %10 : vector<1x32x64xf32> to vector<32x64xf32>
    %c0_17 = arith.constant 0 : index
    %c0_18 = arith.constant 0 : index
    %c0_19 = arith.constant 0 : index
    %12 = vector.load %arg7[%c0_17, %c0_18, %c0_19] : memref<2x32x32xf32, #tpu.memory_space<vmem>>, vector<1x32x32xf32>
    %13 = vector.shape_cast %12 : vector<1x32x32xf32> to vector<32x32xf32>
    %c0_20 = arith.constant 0 : index
    %c0_21 = arith.constant 0 : index
    %c0_22 = arith.constant 0 : index
    %14 = vector.load %arg8[%c0_20, %c0_21, %c0_22] : memref<2x1x32xf32, #tpu.memory_space<vmem>>, vector<1x1x32xf32>
    %15 = vector.shape_cast %14 : vector<1x1x32xf32> to vector<1x32xf32>
    %cst = arith.constant dense<0.000000e+00> : vector<8x32xf32>
    %16 = tpu.matmul %1, %9, %cst {dimension_numbers = #tpu.dot_dimension_numbers<[1], [0], [0], [1], [0, 0, 1, 1], [], []>} : vector<8x32xf32>, vector<32x32xf32>, vector<8x32xf32> -> vector<8x32xf32>
    %cst_23 = arith.constant 0.176776692 : f32
    %17 = vector.broadcast %cst_23 : f32 to vector<8x32xf32>
    %18 = arith.mulf %16, %17 : vector<8x32xf32>
    %cst_24 = arith.constant dense<0.000000e+00> : vector<8x64xf32>
    %19 = tpu.matmul %1, %11, %cst_24 {dimension_numbers = #tpu.dot_dimension_numbers<[1], [0], [0], [1], [0, 0, 1, 1], [], []>} : vector<8x32xf32>, vector<32x64xf32>, vector<8x64xf32> -> vector<8x64xf32>
    %20 = vector.extract_strided_slice %19 {offsets = [0, 0], sizes = [8, 32], strides = [1, 1]} : vector<8x64xf32> to vector<8x32xf32>
    %21 = vector.extract_strided_slice %19 {offsets = [0, 32], sizes = [8, 32], strides = [1, 1]} : vector<8x64xf32> to vector<8x32xf32>
    %22 = vector.extract_strided_slice %18 {offsets = [0, 0], sizes = [8, 8], strides = [1, 1]} : vector<8x32xf32> to vector<8x8xf32>
    %23 = vector.extract_strided_slice %20 {offsets = [0, 0], sizes = [8, 8], strides = [1, 1]} : vector<8x32xf32> to vector<8x8xf32>
    %24 = vector.extract_strided_slice %21 {offsets = [0, 0], sizes = [8, 8], strides = [1, 1]} : vector<8x32xf32> to vector<8x8xf32>
    %cst_25 = arith.constant dense<0.000000e+00> : vector<8x8xf32>
    %25 = tpu.matmul %22, %23, %cst_25 {dimension_numbers = #tpu.dot_dimension_numbers<[1], [1], [0], [0], [0, 0, 1, 0], [], []>} : vector<8x8xf32>, vector<8x8xf32>, vector<8x8xf32> -> vector<8x8xf32>
    %26 = arith.addf %25, %5 : vector<8x8xf32>
    %cst_26 = arith.constant dense<0xFF800000> : vector<8xf32>
    %27 = vector.multi_reduction <maximumf>, %26, %cst_26 [1] : vector<8x8xf32> to vector<8xf32>
    %28 = vector.shape_cast %27 : vector<8xf32> to vector<8x1xf32>
    %29 = vector.broadcast %28 : vector<8x1xf32> to vector<8x8xf32>
    %30 = arith.subf %26, %29 : vector<8x8xf32>
    %31 = math.exp %30 : vector<8x8xf32>
    %cst_27 = arith.constant dense<0.000000e+00> : vector<8xf32>
    %32 = vector.multi_reduction <add>, %31, %cst_27 [1] : vector<8x8xf32> to vector<8xf32>
    %33 = vector.shape_cast %32 : vector<8xf32> to vector<8x1xf32>
    %34 = tpu.reciprocal %33 {approx = true} : vector<8x1xf32> -> vector<8x1xf32>
    %35 = vector.broadcast %34 : vector<8x1xf32> to vector<8x8xf32>
    %36 = arith.mulf %31, %35 : vector<8x8xf32>
    %cst_28 = arith.constant dense<0.000000e+00> : vector<8x8xf32>
    %37 = tpu.matmul %36, %24, %cst_28 {dimension_numbers = #tpu.dot_dimension_numbers<[1], [0], [0], [1], [0, 0, 1, 1], [], []>} : vector<8x8xf32>, vector<8x8xf32>, vector<8x8xf32> -> vector<8x8xf32>
    %38 = vector.extract_strided_slice %13 {offsets = [0, 0], sizes = [8, 32], strides = [1, 1]} : vector<32x32xf32> to vector<8x32xf32>
    %cst_29 = arith.constant dense<0.000000e+00> : vector<8x32xf32>
    %39 = tpu.matmul %37, %38, %cst_29 {dimension_numbers = #tpu.dot_dimension_numbers<[1], [0], [0], [1], [0, 0, 1, 1], [], []>} : vector<8x8xf32>, vector<8x32xf32>, vector<8x32xf32> -> vector<8x32xf32>
    %40 = vector.extract_strided_slice %18 {offsets = [0, 8], sizes = [8, 8], strides = [1, 1]} : vector<8x32xf32> to vector<8x8xf32>
    %41 = vector.extract_strided_slice %20 {offsets = [0, 8], sizes = [8, 8], strides = [1, 1]} : vector<8x32xf32> to vector<8x8xf32>
    %42 = vector.extract_strided_slice %21 {offsets = [0, 8], sizes = [8, 8], strides = [1, 1]} : vector<8x32xf32> to vector<8x8xf32>
    %cst_30 = arith.constant dense<0.000000e+00> : vector<8x8xf32>
    %43 = tpu.matmul %40, %41, %cst_30 {dimension_numbers = #tpu.dot_dimension_numbers<[1], [1], [0], [0], [0, 0, 1, 0], [], []>} : vector<8x8xf32>, vector<8x8xf32>, vector<8x8xf32> -> vector<8x8xf32>
    %44 = arith.addf %43, %5 : vector<8x8xf32>
    %cst_31 = arith.constant dense<0xFF800000> : vector<8xf32>
    %45 = vector.multi_reduction <maximumf>, %44, %cst_31 [1] : vector<8x8xf32> to vector<8xf32>
    %46 = vector.shape_cast %45 : vector<8xf32> to vector<8x1xf32>
    %47 = vector.broadcast %46 : vector<8x1xf32> to vector<8x8xf32>
    %48 = arith.subf %44, %47 : vector<8x8xf32>
    %49 = math.exp %48 : vector<8x8xf32>
    %cst_32 = arith.constant dense<0.000000e+00> : vector<8xf32>
    %50 = vector.multi_reduction <add>, %49, %cst_32 [1] : vector<8x8xf32> to vector<8xf32>
    %51 = vector.shape_cast %50 : vector<8xf32> to vector<8x1xf32>
    %52 = tpu.reciprocal %51 {approx = true} : vector<8x1xf32> -> vector<8x1xf32>
    %53 = vector.broadcast %52 : vector<8x1xf32> to vector<8x8xf32>
    %54 = arith.mulf %49, %53 : vector<8x8xf32>
    %cst_33 = arith.constant dense<0.000000e+00> : vector<8x8xf32>
    %55 = tpu.matmul %54, %42, %cst_33 {dimension_numbers = #tpu.dot_dimension_numbers<[1], [0], [0], [1], [0, 0, 1, 1], [], []>} : vector<8x8xf32>, vector<8x8xf32>, vector<8x8xf32> -> vector<8x8xf32>
    %56 = vector.extract_strided_slice %13 {offsets = [8, 0], sizes = [8, 32], strides = [1, 1]} : vector<32x32xf32> to vector<8x32xf32>
    %cst_34 = arith.constant dense<0.000000e+00> : vector<8x32xf32>
    %57 = tpu.matmul %55, %56, %cst_34 {dimension_numbers = #tpu.dot_dimension_numbers<[1], [0], [0], [1], [0, 0, 1, 1], [], []>} : vector<8x8xf32>, vector<8x32xf32>, vector<8x32xf32> -> vector<8x32xf32>
    %58 = arith.addf %39, %57 : vector<8x32xf32>
    %59 = vector.extract_strided_slice %18 {offsets = [0, 16], sizes = [8, 8], strides = [1, 1]} : vector<8x32xf32> to vector<8x8xf32>
    %60 = vector.extract_strided_slice %20 {offsets = [0, 16], sizes = [8, 8], strides = [1, 1]} : vector<8x32xf32> to vector<8x8xf32>
    %61 = vector.extract_strided_slice %21 {offsets = [0, 16], sizes = [8, 8], strides = [1, 1]} : vector<8x32xf32> to vector<8x8xf32>
    %cst_35 = arith.constant dense<0.000000e+00> : vector<8x8xf32>
    %62 = tpu.matmul %59, %60, %cst_35 {dimension_numbers = #tpu.dot_dimension_numbers<[1], [1], [0], [0], [0, 0, 1, 0], [], []>} : vector<8x8xf32>, vector<8x8xf32>, vector<8x8xf32> -> vector<8x8xf32>
    %63 = arith.addf %62, %5 : vector<8x8xf32>
    %cst_36 = arith.constant dense<0xFF800000> : vector<8xf32>
    %64 = vector.multi_reduction <maximumf>, %63, %cst_36 [1] : vector<8x8xf32> to vector<8xf32>
    %65 = vector.shape_cast %64 : vector<8xf32> to vector<8x1xf32>
    %66 = vector.broadcast %65 : vector<8x1xf32> to vector<8x8xf32>
    %67 = arith.subf %63, %66 : vector<8x8xf32>
    %68 = math.exp %67 : vector<8x8xf32>
    %cst_37 = arith.constant dense<0.000000e+00> : vector<8xf32>
    %69 = vector.multi_reduction <add>, %68, %cst_37 [1] : vector<8x8xf32> to vector<8xf32>
    %70 = vector.shape_cast %69 : vector<8xf32> to vector<8x1xf32>
    %71 = tpu.reciprocal %70 {approx = true} : vector<8x1xf32> -> vector<8x1xf32>
    %72 = vector.broadcast %71 : vector<8x1xf32> to vector<8x8xf32>
    %73 = arith.mulf %68, %72 : vector<8x8xf32>
    %cst_38 = arith.constant dense<0.000000e+00> : vector<8x8xf32>
    %74 = tpu.matmul %73, %61, %cst_38 {dimension_numbers = #tpu.dot_dimension_numbers<[1], [0], [0], [1], [0, 0, 1, 1], [], []>} : vector<8x8xf32>, vector<8x8xf32>, vector<8x8xf32> -> vector<8x8xf32>
    %75 = vector.extract_strided_slice %13 {offsets = [16, 0], sizes = [8, 32], strides = [1, 1]} : vector<32x32xf32> to vector<8x32xf32>
    %cst_39 = arith.constant dense<0.000000e+00> : vector<8x32xf32>
    %76 = tpu.matmul %74, %75, %cst_39 {dimension_numbers = #tpu.dot_dimension_numbers<[1], [0], [0], [1], [0, 0, 1, 1], [], []>} : vector<8x8xf32>, vector<8x32xf32>, vector<8x32xf32> -> vector<8x32xf32>
    %77 = arith.addf %58, %76 : vector<8x32xf32>
    %78 = vector.extract_strided_slice %18 {offsets = [0, 24], sizes = [8, 8], strides = [1, 1]} : vector<8x32xf32> to vector<8x8xf32>
    %79 = vector.extract_strided_slice %20 {offsets = [0, 24], sizes = [8, 8], strides = [1, 1]} : vector<8x32xf32> to vector<8x8xf32>
    %80 = vector.extract_strided_slice %21 {offsets = [0, 24], sizes = [8, 8], strides = [1, 1]} : vector<8x32xf32> to vector<8x8xf32>
    %cst_40 = arith.constant dense<0.000000e+00> : vector<8x8xf32>
    %81 = tpu.matmul %78, %79, %cst_40 {dimension_numbers = #tpu.dot_dimension_numbers<[1], [1], [0], [0], [0, 0, 1, 0], [], []>} : vector<8x8xf32>, vector<8x8xf32>, vector<8x8xf32> -> vector<8x8xf32>
    %82 = arith.addf %81, %5 : vector<8x8xf32>
    %cst_41 = arith.constant dense<0xFF800000> : vector<8xf32>
    %83 = vector.multi_reduction <maximumf>, %82, %cst_41 [1] : vector<8x8xf32> to vector<8xf32>
    %84 = vector.shape_cast %83 : vector<8xf32> to vector<8x1xf32>
    %85 = vector.broadcast %84 : vector<8x1xf32> to vector<8x8xf32>
    %86 = arith.subf %82, %85 : vector<8x8xf32>
    %87 = math.exp %86 : vector<8x8xf32>
    %cst_42 = arith.constant dense<0.000000e+00> : vector<8xf32>
    %88 = vector.multi_reduction <add>, %87, %cst_42 [1] : vector<8x8xf32> to vector<8xf32>
    %89 = vector.shape_cast %88 : vector<8xf32> to vector<8x1xf32>
    %90 = tpu.reciprocal %89 {approx = true} : vector<8x1xf32> -> vector<8x1xf32>
    %91 = vector.broadcast %90 : vector<8x1xf32> to vector<8x8xf32>
    %92 = arith.mulf %87, %91 : vector<8x8xf32>
    %cst_43 = arith.constant dense<0.000000e+00> : vector<8x8xf32>
    %93 = tpu.matmul %92, %80, %cst_43 {dimension_numbers = #tpu.dot_dimension_numbers<[1], [0], [0], [1], [0, 0, 1, 1], [], []>} : vector<8x8xf32>, vector<8x8xf32>, vector<8x8xf32> -> vector<8x8xf32>
    %94 = vector.extract_strided_slice %13 {offsets = [24, 0], sizes = [8, 32], strides = [1, 1]} : vector<32x32xf32> to vector<8x32xf32>
    %cst_44 = arith.constant dense<0.000000e+00> : vector<8x32xf32>
    %95 = tpu.matmul %93, %94, %cst_44 {dimension_numbers = #tpu.dot_dimension_numbers<[1], [0], [0], [1], [0, 0, 1, 1], [], []>} : vector<8x8xf32>, vector<8x32xf32>, vector<8x32xf32> -> vector<8x32xf32>
    %96 = arith.addf %77, %95 : vector<8x32xf32>
    %97 = vector.broadcast %15 : vector<1x32xf32> to vector<8x32xf32>
    %98 = arith.addf %96, %97 : vector<8x32xf32>
    %99 = arith.addf %98, %1 : vector<8x32xf32>
    %c0_45 = arith.constant 0 : index
    %c0_46 = arith.constant 0 : index
    %c0_47 = arith.constant 0 : index
    %100 = vector.load %arg9[%c0_45, %c0_46, %c0_47] : memref<2x1x32xf32, #tpu.memory_space<vmem>>, vector<1x1x32xf32>
    %101 = vector.shape_cast %100 : vector<1x1x32xf32> to vector<1x32xf32>
    %c0_48 = arith.constant 0 : index
    %c0_49 = arith.constant 0 : index
    %c0_50 = arith.constant 0 : index
    %102 = vector.load %arg10[%c0_48, %c0_49, %c0_50] : memref<2x1x32xf32, #tpu.memory_space<vmem>>, vector<1x1x32xf32>
    %103 = vector.shape_cast %102 : vector<1x1x32xf32> to vector<1x32xf32>
    %cst_51 = arith.constant dense<0.000000e+00> : vector<8xf32>
    %104 = vector.multi_reduction <add>, %99, %cst_51 [1] : vector<8x32xf32> to vector<8xf32>
    %105 = vector.shape_cast %104 : vector<8xf32> to vector<8x1xf32>
    %cst_52 = arith.constant 3.200000e+01 : f32
    %106 = vector.broadcast %cst_52 : f32 to vector<8x1xf32>
    %107 = arith.divf %105, %106 : vector<8x1xf32>
    %108 = vector.broadcast %107 : vector<8x1xf32> to vector<8x32xf32>
    %109 = arith.subf %99, %108 : vector<8x32xf32>
    %110 = arith.mulf %109, %109 : vector<8x32xf32>
    %cst_53 = arith.constant dense<0.000000e+00> : vector<8xf32>
    %111 = vector.multi_reduction <add>, %110, %cst_53 [1] : vector<8x32xf32> to vector<8xf32>
    %112 = vector.shape_cast %111 : vector<8xf32> to vector<8x1xf32>
    %cst_54 = arith.constant 3.200000e+01 : f32
    %113 = vector.broadcast %cst_54 : f32 to vector<8x1xf32>
    %114 = arith.divf %112, %113 : vector<8x1xf32>
    %115 = vector.broadcast %107 : vector<8x1xf32> to vector<8x32xf32>
    %116 = arith.subf %99, %115 : vector<8x32xf32>
    %cst_55 = arith.constant 9.99999974E-6 : f32
    %117 = vector.broadcast %cst_55 : f32 to vector<8x1xf32>
    %118 = arith.addf %114, %117 : vector<8x1xf32>
    %119 = math.rsqrt %118 : vector<8x1xf32>
    %120 = vector.broadcast %119 : vector<8x1xf32> to vector<8x32xf32>
    %121 = arith.mulf %116, %120 : vector<8x32xf32>
    %122 = vector.broadcast %101 : vector<1x32xf32> to vector<8x32xf32>
    %123 = arith.mulf %121, %122 : vector<8x32xf32>
    %124 = vector.broadcast %103 : vector<1x32xf32> to vector<8x32xf32>
    %125 = arith.addf %123, %124 : vector<8x32xf32>
    %c0_56 = arith.constant 0 : index
    %c0_57 = arith.constant 0 : index
    %c0_58 = arith.constant 0 : index
    %126 = vector.load %arg11[%c0_56, %c0_57, %c0_58] : memref<2x32x32xf32, #tpu.memory_space<vmem>>, vector<1x32x32xf32>
    %127 = vector.shape_cast %126 : vector<1x32x32xf32> to vector<32x32xf32>
    %c0_59 = arith.constant 0 : index
    %c0_60 = arith.constant 0 : index
    %c0_61 = arith.constant 0 : index
    %128 = vector.load %arg12[%c0_59, %c0_60, %c0_61] : memref<2x32x64xf32, #tpu.memory_space<vmem>>, vector<1x32x64xf32>
    %129 = vector.shape_cast %128 : vector<1x32x64xf32> to vector<32x64xf32>
    %c0_62 = arith.constant 0 : index
    %c0_63 = arith.constant 0 : index
    %c0_64 = arith.constant 0 : index
    %130 = vector.load %arg13[%c0_62, %c0_63, %c0_64] : memref<2x32x32xf32, #tpu.memory_space<vmem>>, vector<1x32x32xf32>
    %131 = vector.shape_cast %130 : vector<1x32x32xf32> to vector<32x32xf32>
    %c0_65 = arith.constant 0 : index
    %c0_66 = arith.constant 0 : index
    %c0_67 = arith.constant 0 : index
    %132 = vector.load %arg14[%c0_65, %c0_66, %c0_67] : memref<2x1x32xf32, #tpu.memory_space<vmem>>, vector<1x1x32xf32>
    %133 = vector.shape_cast %132 : vector<1x1x32xf32> to vector<1x32xf32>
    %cst_68 = arith.constant dense<0.000000e+00> : vector<8x32xf32>
    %134 = tpu.matmul %125, %127, %cst_68 {dimension_numbers = #tpu.dot_dimension_numbers<[1], [0], [0], [1], [0, 0, 1, 1], [], []>} : vector<8x32xf32>, vector<32x32xf32>, vector<8x32xf32> -> vector<8x32xf32>
    %cst_69 = arith.constant 0.176776692 : f32
    %135 = vector.broadcast %cst_69 : f32 to vector<8x32xf32>
    %136 = arith.mulf %134, %135 : vector<8x32xf32>
    %cst_70 = arith.constant dense<0.000000e+00> : vector<8x64xf32>
    %137 = tpu.matmul %3, %129, %cst_70 {dimension_numbers = #tpu.dot_dimension_numbers<[1], [0], [0], [1], [0, 0, 1, 1], [], []>} : vector<8x32xf32>, vector<32x64xf32>, vector<8x64xf32> -> vector<8x64xf32>
    %138 = vector.extract_strided_slice %137 {offsets = [0, 0], sizes = [8, 32], strides = [1, 1]} : vector<8x64xf32> to vector<8x32xf32>
    %139 = vector.extract_strided_slice %137 {offsets = [0, 32], sizes = [8, 32], strides = [1, 1]} : vector<8x64xf32> to vector<8x32xf32>
    %140 = vector.extract_strided_slice %136 {offsets = [0, 0], sizes = [8, 8], strides = [1, 1]} : vector<8x32xf32> to vector<8x8xf32>
    %141 = vector.extract_strided_slice %138 {offsets = [0, 0], sizes = [8, 8], strides = [1, 1]} : vector<8x32xf32> to vector<8x8xf32>
    %142 = vector.extract_strided_slice %139 {offsets = [0, 0], sizes = [8, 8], strides = [1, 1]} : vector<8x32xf32> to vector<8x8xf32>
    %cst_71 = arith.constant dense<0.000000e+00> : vector<8x8xf32>
    %143 = tpu.matmul %140, %141, %cst_71 {dimension_numbers = #tpu.dot_dimension_numbers<[1], [1], [0], [0], [0, 0, 1, 0], [], []>} : vector<8x8xf32>, vector<8x8xf32>, vector<8x8xf32> -> vector<8x8xf32>
    %144 = vector.broadcast %7 : vector<1x8xf32> to vector<8x8xf32>
    %145 = arith.addf %143, %144 : vector<8x8xf32>
    %cst_72 = arith.constant dense<0xFF800000> : vector<8xf32>
    %146 = vector.multi_reduction <maximumf>, %145, %cst_72 [1] : vector<8x8xf32> to vector<8xf32>
    %147 = vector.shape_cast %146 : vector<8xf32> to vector<8x1xf32>
    %148 = vector.broadcast %147 : vector<8x1xf32> to vector<8x8xf32>
    %149 = arith.subf %145, %148 : vector<8x8xf32>
    %150 = math.exp %149 : vector<8x8xf32>
    %cst_73 = arith.constant dense<0.000000e+00> : vector<8xf32>
    %151 = vector.multi_reduction <add>, %150, %cst_73 [1] : vector<8x8xf32> to vector<8xf32>
    %152 = vector.shape_cast %151 : vector<8xf32> to vector<8x1xf32>
    %153 = tpu.reciprocal %152 {approx = true} : vector<8x1xf32> -> vector<8x1xf32>
    %154 = vector.broadcast %153 : vector<8x1xf32> to vector<8x8xf32>
    %155 = arith.mulf %150, %154 : vector<8x8xf32>
    %cst_74 = arith.constant dense<0.000000e+00> : vector<8x8xf32>
    %156 = tpu.matmul %155, %142, %cst_74 {dimension_numbers = #tpu.dot_dimension_numbers<[1], [0], [0], [1], [0, 0, 1, 1], [], []>} : vector<8x8xf32>, vector<8x8xf32>, vector<8x8xf32> -> vector<8x8xf32>
    %157 = vector.extract_strided_slice %131 {offsets = [0, 0], sizes = [8, 32], strides = [1, 1]} : vector<32x32xf32> to vector<8x32xf32>
    %cst_75 = arith.constant dense<0.000000e+00> : vector<8x32xf32>
    %158 = tpu.matmul %156, %157, %cst_75 {dimension_numbers = #tpu.dot_dimension_numbers<[1], [0], [0], [1], [0, 0, 1, 1], [], []>} : vector<8x8xf32>, vector<8x32xf32>, vector<8x32xf32> -> vector<8x32xf32>
    %159 = vector.extract_strided_slice %136 {offsets = [0, 8], sizes = [8, 8], strides = [1, 1]} : vector<8x32xf32> to vector<8x8xf32>
    %160 = vector.extract_strided_slice %138 {offsets = [0, 8], sizes = [8, 8], strides = [1, 1]} : vector<8x32xf32> to vector<8x8xf32>
    %161 = vector.extract_strided_slice %139 {offsets = [0, 8], sizes = [8, 8], strides = [1, 1]} : vector<8x32xf32> to vector<8x8xf32>
    %cst_76 = arith.constant dense<0.000000e+00> : vector<8x8xf32>
    %162 = tpu.matmul %159, %160, %cst_76 {dimension_numbers = #tpu.dot_dimension_numbers<[1], [1], [0], [0], [0, 0, 1, 0], [], []>} : vector<8x8xf32>, vector<8x8xf32>, vector<8x8xf32> -> vector<8x8xf32>
    %163 = vector.broadcast %7 : vector<1x8xf32> to vector<8x8xf32>
    %164 = arith.addf %162, %163 : vector<8x8xf32>
    %cst_77 = arith.constant dense<0xFF800000> : vector<8xf32>
    %165 = vector.multi_reduction <maximumf>, %164, %cst_77 [1] : vector<8x8xf32> to vector<8xf32>
    %166 = vector.shape_cast %165 : vector<8xf32> to vector<8x1xf32>
    %167 = vector.broadcast %166 : vector<8x1xf32> to vector<8x8xf32>
    %168 = arith.subf %164, %167 : vector<8x8xf32>
    %169 = math.exp %168 : vector<8x8xf32>
    %cst_78 = arith.constant dense<0.000000e+00> : vector<8xf32>
    %170 = vector.multi_reduction <add>, %169, %cst_78 [1] : vector<8x8xf32> to vector<8xf32>
    %171 = vector.shape_cast %170 : vector<8xf32> to vector<8x1xf32>
    %172 = tpu.reciprocal %171 {approx = true} : vector<8x1xf32> -> vector<8x1xf32>
    %173 = vector.broadcast %172 : vector<8x1xf32> to vector<8x8xf32>
    %174 = arith.mulf %169, %173 : vector<8x8xf32>
    %cst_79 = arith.constant dense<0.000000e+00> : vector<8x8xf32>
    %175 = tpu.matmul %174, %161, %cst_79 {dimension_numbers = #tpu.dot_dimension_numbers<[1], [0], [0], [1], [0, 0, 1, 1], [], []>} : vector<8x8xf32>, vector<8x8xf32>, vector<8x8xf32> -> vector<8x8xf32>
    %176 = vector.extract_strided_slice %131 {offsets = [8, 0], sizes = [8, 32], strides = [1, 1]} : vector<32x32xf32> to vector<8x32xf32>
    %cst_80 = arith.constant dense<0.000000e+00> : vector<8x32xf32>
    %177 = tpu.matmul %175, %176, %cst_80 {dimension_numbers = #tpu.dot_dimension_numbers<[1], [0], [0], [1], [0, 0, 1, 1], [], []>} : vector<8x8xf32>, vector<8x32xf32>, vector<8x32xf32> -> vector<8x32xf32>
    %178 = arith.addf %158, %177 : vector<8x32xf32>
    %179 = vector.extract_strided_slice %136 {offsets = [0, 16], sizes = [8, 8], strides = [1, 1]} : vector<8x32xf32> to vector<8x8xf32>
    %180 = vector.extract_strided_slice %138 {offsets = [0, 16], sizes = [8, 8], strides = [1, 1]} : vector<8x32xf32> to vector<8x8xf32>
    %181 = vector.extract_strided_slice %139 {offsets = [0, 16], sizes = [8, 8], strides = [1, 1]} : vector<8x32xf32> to vector<8x8xf32>
    %cst_81 = arith.constant dense<0.000000e+00> : vector<8x8xf32>
    %182 = tpu.matmul %179, %180, %cst_81 {dimension_numbers = #tpu.dot_dimension_numbers<[1], [1], [0], [0], [0, 0, 1, 0], [], []>} : vector<8x8xf32>, vector<8x8xf32>, vector<8x8xf32> -> vector<8x8xf32>
    %183 = vector.broadcast %7 : vector<1x8xf32> to vector<8x8xf32>
    %184 = arith.addf %182, %183 : vector<8x8xf32>
    %cst_82 = arith.constant dense<0xFF800000> : vector<8xf32>
    %185 = vector.multi_reduction <maximumf>, %184, %cst_82 [1] : vector<8x8xf32> to vector<8xf32>
    %186 = vector.shape_cast %185 : vector<8xf32> to vector<8x1xf32>
    %187 = vector.broadcast %186 : vector<8x1xf32> to vector<8x8xf32>
    %188 = arith.subf %184, %187 : vector<8x8xf32>
    %189 = math.exp %188 : vector<8x8xf32>
    %cst_83 = arith.constant dense<0.000000e+00> : vector<8xf32>
    %190 = vector.multi_reduction <add>, %189, %cst_83 [1] : vector<8x8xf32> to vector<8xf32>
    %191 = vector.shape_cast %190 : vector<8xf32> to vector<8x1xf32>
    %192 = tpu.reciprocal %191 {approx = true} : vector<8x1xf32> -> vector<8x1xf32>
    %193 = vector.broadcast %192 : vector<8x1xf32> to vector<8x8xf32>
    %194 = arith.mulf %189, %193 : vector<8x8xf32>
    %cst_84 = arith.constant dense<0.000000e+00> : vector<8x8xf32>
    %195 = tpu.matmul %194, %181, %cst_84 {dimension_numbers = #tpu.dot_dimension_numbers<[1], [0], [0], [1], [0, 0, 1, 1], [], []>} : vector<8x8xf32>, vector<8x8xf32>, vector<8x8xf32> -> vector<8x8xf32>
    %196 = vector.extract_strided_slice %131 {offsets = [16, 0], sizes = [8, 32], strides = [1, 1]} : vector<32x32xf32> to vector<8x32xf32>
    %cst_85 = arith.constant dense<0.000000e+00> : vector<8x32xf32>
    %197 = tpu.matmul %195, %196, %cst_85 {dimension_numbers = #tpu.dot_dimension_numbers<[1], [0], [0], [1], [0, 0, 1, 1], [], []>} : vector<8x8xf32>, vector<8x32xf32>, vector<8x32xf32> -> vector<8x32xf32>
    %198 = arith.addf %178, %197 : vector<8x32xf32>
    %199 = vector.extract_strided_slice %136 {offsets = [0, 24], sizes = [8, 8], strides = [1, 1]} : vector<8x32xf32> to vector<8x8xf32>
    %200 = vector.extract_strided_slice %138 {offsets = [0, 24], sizes = [8, 8], strides = [1, 1]} : vector<8x32xf32> to vector<8x8xf32>
    %201 = vector.extract_strided_slice %139 {offsets = [0, 24], sizes = [8, 8], strides = [1, 1]} : vector<8x32xf32> to vector<8x8xf32>
    %cst_86 = arith.constant dense<0.000000e+00> : vector<8x8xf32>
    %202 = tpu.matmul %199, %200, %cst_86 {dimension_numbers = #tpu.dot_dimension_numbers<[1], [1], [0], [0], [0, 0, 1, 0], [], []>} : vector<8x8xf32>, vector<8x8xf32>, vector<8x8xf32> -> vector<8x8xf32>
    %203 = vector.broadcast %7 : vector<1x8xf32> to vector<8x8xf32>
    %204 = arith.addf %202, %203 : vector<8x8xf32>
    %cst_87 = arith.constant dense<0xFF800000> : vector<8xf32>
    %205 = vector.multi_reduction <maximumf>, %204, %cst_87 [1] : vector<8x8xf32> to vector<8xf32>
    %206 = vector.shape_cast %205 : vector<8xf32> to vector<8x1xf32>
    %207 = vector.broadcast %206 : vector<8x1xf32> to vector<8x8xf32>
    %208 = arith.subf %204, %207 : vector<8x8xf32>
    %209 = math.exp %208 : vector<8x8xf32>
    %cst_88 = arith.constant dense<0.000000e+00> : vector<8xf32>
    %210 = vector.multi_reduction <add>, %209, %cst_88 [1] : vector<8x8xf32> to vector<8xf32>
    %211 = vector.shape_cast %210 : vector<8xf32> to vector<8x1xf32>
    %212 = tpu.reciprocal %211 {approx = true} : vector<8x1xf32> -> vector<8x1xf32>
    %213 = vector.broadcast %212 : vector<8x1xf32> to vector<8x8xf32>
    %214 = arith.mulf %209, %213 : vector<8x8xf32>
    %cst_89 = arith.constant dense<0.000000e+00> : vector<8x8xf32>
    %215 = tpu.matmul %214, %201, %cst_89 {dimension_numbers = #tpu.dot_dimension_numbers<[1], [0], [0], [1], [0, 0, 1, 1], [], []>} : vector<8x8xf32>, vector<8x8xf32>, vector<8x8xf32> -> vector<8x8xf32>
    %216 = vector.extract_strided_slice %131 {offsets = [24, 0], sizes = [8, 32], strides = [1, 1]} : vector<32x32xf32> to vector<8x32xf32>
    %cst_90 = arith.constant dense<0.000000e+00> : vector<8x32xf32>
    %217 = tpu.matmul %215, %216, %cst_90 {dimension_numbers = #tpu.dot_dimension_numbers<[1], [0], [0], [1], [0, 0, 1, 1], [], []>} : vector<8x8xf32>, vector<8x32xf32>, vector<8x32xf32> -> vector<8x32xf32>
    %218 = arith.addf %198, %217 : vector<8x32xf32>
    %219 = vector.broadcast %133 : vector<1x32xf32> to vector<8x32xf32>
    %220 = arith.addf %218, %219 : vector<8x32xf32>
    %221 = arith.addf %220, %125 : vector<8x32xf32>
    %c0_91 = arith.constant 0 : index
    %c0_92 = arith.constant 0 : index
    %c0_93 = arith.constant 0 : index
    %222 = vector.load %arg15[%c0_91, %c0_92, %c0_93] : memref<2x1x32xf32, #tpu.memory_space<vmem>>, vector<1x1x32xf32>
    %223 = vector.shape_cast %222 : vector<1x1x32xf32> to vector<1x32xf32>
    %c0_94 = arith.constant 0 : index
    %c0_95 = arith.constant 0 : index
    %c0_96 = arith.constant 0 : index
    %224 = vector.load %arg16[%c0_94, %c0_95, %c0_96] : memref<2x1x32xf32, #tpu.memory_space<vmem>>, vector<1x1x32xf32>
    %225 = vector.shape_cast %224 : vector<1x1x32xf32> to vector<1x32xf32>
    %cst_97 = arith.constant dense<0.000000e+00> : vector<8xf32>
    %226 = vector.multi_reduction <add>, %221, %cst_97 [1] : vector<8x32xf32> to vector<8xf32>
    %227 = vector.shape_cast %226 : vector<8xf32> to vector<8x1xf32>
    %cst_98 = arith.constant 3.200000e+01 : f32
    %228 = vector.broadcast %cst_98 : f32 to vector<8x1xf32>
    %229 = arith.divf %227, %228 : vector<8x1xf32>
    %230 = vector.broadcast %229 : vector<8x1xf32> to vector<8x32xf32>
    %231 = arith.subf %221, %230 : vector<8x32xf32>
    %232 = arith.mulf %231, %231 : vector<8x32xf32>
    %cst_99 = arith.constant dense<0.000000e+00> : vector<8xf32>
    %233 = vector.multi_reduction <add>, %232, %cst_99 [1] : vector<8x32xf32> to vector<8xf32>
    %234 = vector.shape_cast %233 : vector<8xf32> to vector<8x1xf32>
    %cst_100 = arith.constant 3.200000e+01 : f32
    %235 = vector.broadcast %cst_100 : f32 to vector<8x1xf32>
    %236 = arith.divf %234, %235 : vector<8x1xf32>
    %237 = vector.broadcast %229 : vector<8x1xf32> to vector<8x32xf32>
    %238 = arith.subf %221, %237 : vector<8x32xf32>
    %cst_101 = arith.constant 9.99999974E-6 : f32
    %239 = vector.broadcast %cst_101 : f32 to vector<8x1xf32>
    %240 = arith.addf %236, %239 : vector<8x1xf32>
    %241 = math.rsqrt %240 : vector<8x1xf32>
    %242 = vector.broadcast %241 : vector<8x1xf32> to vector<8x32xf32>
    %243 = arith.mulf %238, %242 : vector<8x32xf32>
    %244 = vector.broadcast %223 : vector<1x32xf32> to vector<8x32xf32>
    %245 = arith.mulf %243, %244 : vector<8x32xf32>
    %246 = vector.broadcast %225 : vector<1x32xf32> to vector<8x32xf32>
    %247 = arith.addf %245, %246 : vector<8x32xf32>
    %c0_102 = arith.constant 0 : index
    %c0_103 = arith.constant 0 : index
    %c0_104 = arith.constant 0 : index
    %248 = vector.load %arg17[%c0_102, %c0_103, %c0_104] : memref<2x32x128xf32, #tpu.memory_space<vmem>>, vector<1x32x128xf32>
    %249 = vector.shape_cast %248 : vector<1x32x128xf32> to vector<32x128xf32>
    %cst_105 = arith.constant dense<0.000000e+00> : vector<8x128xf32>
    %250 = tpu.matmul %247, %249, %cst_105 {dimension_numbers = #tpu.dot_dimension_numbers<[1], [0], [0], [1], [0, 0, 1, 1], [], []>} : vector<8x32xf32>, vector<32x128xf32>, vector<8x128xf32> -> vector<8x128xf32>
    %c0_106 = arith.constant 0 : index
    %c0_107 = arith.constant 0 : index
    %c0_108 = arith.constant 0 : index
    %251 = vector.load %arg18[%c0_106, %c0_107, %c0_108] : memref<2x1x128xf32, #tpu.memory_space<vmem>>, vector<1x1x128xf32>
    %252 = vector.shape_cast %251 : vector<1x1x128xf32> to vector<1x128xf32>
    %253 = vector.broadcast %252 : vector<1x128xf32> to vector<8x128xf32>
    %254 = arith.addf %250, %253 : vector<8x128xf32>
    %cst_109 = arith.constant 0.000000e+00 : f32
    %255 = vector.broadcast %cst_109 : f32 to vector<8x128xf32>
    %256 = arith.maximumf %254, %255 : vector<8x128xf32>
    %c0_110 = arith.constant 0 : index
    %c0_111 = arith.constant 0 : index
    %c0_112 = arith.constant 0 : index
    %257 = vector.load %arg19[%c0_110, %c0_111, %c0_112] : memref<2x128x32xf32, #tpu.memory_space<vmem>>, vector<1x128x32xf32>
    %258 = vector.shape_cast %257 : vector<1x128x32xf32> to vector<128x32xf32>
    %cst_113 = arith.constant dense<0.000000e+00> : vector<8x32xf32>
    %259 = tpu.matmul %256, %258, %cst_113 {dimension_numbers = #tpu.dot_dimension_numbers<[1], [0], [0], [1], [0, 0, 1, 1], [], []>} : vector<8x128xf32>, vector<128x32xf32>, vector<8x32xf32> -> vector<8x32xf32>
    %c0_114 = arith.constant 0 : index
    %c0_115 = arith.constant 0 : index
    %c0_116 = arith.constant 0 : index
    %260 = vector.load %arg20[%c0_114, %c0_115, %c0_116] : memref<2x1x32xf32, #tpu.memory_space<vmem>>, vector<1x1x32xf32>
    %261 = vector.shape_cast %260 : vector<1x1x32xf32> to vector<1x32xf32>
    %262 = vector.broadcast %261 : vector<1x32xf32> to vector<8x32xf32>
    %263 = arith.addf %259, %262 : vector<8x32xf32>
    %264 = arith.addf %263, %247 : vector<8x32xf32>
    %c0_117 = arith.constant 0 : index
    %c0_118 = arith.constant 0 : index
    %c0_119 = arith.constant 0 : index
    %265 = vector.load %arg21[%c0_117, %c0_118, %c0_119] : memref<2x1x32xf32, #tpu.memory_space<vmem>>, vector<1x1x32xf32>
    %266 = vector.shape_cast %265 : vector<1x1x32xf32> to vector<1x32xf32>
    %c0_120 = arith.constant 0 : index
    %c0_121 = arith.constant 0 : index
    %c0_122 = arith.constant 0 : index
    %267 = vector.load %arg22[%c0_120, %c0_121, %c0_122] : memref<2x1x32xf32, #tpu.memory_space<vmem>>, vector<1x1x32xf32>
    %268 = vector.shape_cast %267 : vector<1x1x32xf32> to vector<1x32xf32>
    %cst_123 = arith.constant dense<0.000000e+00> : vector<8xf32>
    %269 = vector.multi_reduction <add>, %264, %cst_123 [1] : vector<8x32xf32> to vector<8xf32>
    %270 = vector.shape_cast %269 : vector<8xf32> to vector<8x1xf32>
    %cst_124 = arith.constant 3.200000e+01 : f32
    %271 = vector.broadcast %cst_124 : f32 to vector<8x1xf32>
    %272 = arith.divf %270, %271 : vector<8x1xf32>
    %273 = vector.broadcast %272 : vector<8x1xf32> to vector<8x32xf32>
    %274 = arith.subf %264, %273 : vector<8x32xf32>
    %275 = arith.mulf %274, %274 : vector<8x32xf32>
    %cst_125 = arith.constant dense<0.000000e+00> : vector<8xf32>
    %276 = vector.multi_reduction <add>, %275, %cst_125 [1] : vector<8x32xf32> to vector<8xf32>
    %277 = vector.shape_cast %276 : vector<8xf32> to vector<8x1xf32>
    %cst_126 = arith.constant 3.200000e+01 : f32
    %278 = vector.broadcast %cst_126 : f32 to vector<8x1xf32>
    %279 = arith.divf %277, %278 : vector<8x1xf32>
    %280 = vector.broadcast %272 : vector<8x1xf32> to vector<8x32xf32>
    %281 = arith.subf %264, %280 : vector<8x32xf32>
    %cst_127 = arith.constant 9.99999974E-6 : f32
    %282 = vector.broadcast %cst_127 : f32 to vector<8x1xf32>
    %283 = arith.addf %279, %282 : vector<8x1xf32>
    %284 = math.rsqrt %283 : vector<8x1xf32>
    %285 = vector.broadcast %284 : vector<8x1xf32> to vector<8x32xf32>
    %286 = arith.mulf %281, %285 : vector<8x32xf32>
    %287 = vector.broadcast %266 : vector<1x32xf32> to vector<8x32xf32>
    %288 = arith.mulf %286, %287 : vector<8x32xf32>
    %289 = vector.broadcast %268 : vector<1x32xf32> to vector<8x32xf32>
    %290 = arith.addf %288, %289 : vector<8x32xf32>
    %c1 = arith.constant 1 : index
    %c0_128 = arith.constant 0 : index
    %c0_129 = arith.constant 0 : index
    %291 = vector.load %arg5[%c1, %c0_128, %c0_129] : memref<2x32x32xf32, #tpu.memory_space<vmem>>, vector<1x32x32xf32>
    %292 = vector.shape_cast %291 : vector<1x32x32xf32> to vector<32x32xf32>
    %c1_130 = arith.constant 1 : index
    %c0_131 = arith.constant 0 : index
    %c0_132 = arith.constant 0 : index
    %293 = vector.load %arg6[%c1_130, %c0_131, %c0_132] : memref<2x32x64xf32, #tpu.memory_space<vmem>>, vector<1x32x64xf32>
    %294 = vector.shape_cast %293 : vector<1x32x64xf32> to vector<32x64xf32>
    %c1_133 = arith.constant 1 : index
    %c0_134 = arith.constant 0 : index
    %c0_135 = arith.constant 0 : index
    %295 = vector.load %arg7[%c1_133, %c0_134, %c0_135] : memref<2x32x32xf32, #tpu.memory_space<vmem>>, vector<1x32x32xf32>
    %296 = vector.shape_cast %295 : vector<1x32x32xf32> to vector<32x32xf32>
    %c1_136 = arith.constant 1 : index
    %c0_137 = arith.constant 0 : index
    %c0_138 = arith.constant 0 : index
    %297 = vector.load %arg8[%c1_136, %c0_137, %c0_138] : memref<2x1x32xf32, #tpu.memory_space<vmem>>, vector<1x1x32xf32>
    %298 = vector.shape_cast %297 : vector<1x1x32xf32> to vector<1x32xf32>
    %cst_139 = arith.constant dense<0.000000e+00> : vector<8x32xf32>
    %299 = tpu.matmul %290, %292, %cst_139 {dimension_numbers = #tpu.dot_dimension_numbers<[1], [0], [0], [1], [0, 0, 1, 1], [], []>} : vector<8x32xf32>, vector<32x32xf32>, vector<8x32xf32> -> vector<8x32xf32>
    %cst_140 = arith.constant 0.176776692 : f32
    %300 = vector.broadcast %cst_140 : f32 to vector<8x32xf32>
    %301 = arith.mulf %299, %300 : vector<8x32xf32>
    %cst_141 = arith.constant dense<0.000000e+00> : vector<8x64xf32>
    %302 = tpu.matmul %290, %294, %cst_141 {dimension_numbers = #tpu.dot_dimension_numbers<[1], [0], [0], [1], [0, 0, 1, 1], [], []>} : vector<8x32xf32>, vector<32x64xf32>, vector<8x64xf32> -> vector<8x64xf32>
    %303 = vector.extract_strided_slice %302 {offsets = [0, 0], sizes = [8, 32], strides = [1, 1]} : vector<8x64xf32> to vector<8x32xf32>
    %304 = vector.extract_strided_slice %302 {offsets = [0, 32], sizes = [8, 32], strides = [1, 1]} : vector<8x64xf32> to vector<8x32xf32>
    %305 = vector.extract_strided_slice %301 {offsets = [0, 0], sizes = [8, 8], strides = [1, 1]} : vector<8x32xf32> to vector<8x8xf32>
    %306 = vector.extract_strided_slice %303 {offsets = [0, 0], sizes = [8, 8], strides = [1, 1]} : vector<8x32xf32> to vector<8x8xf32>
    %307 = vector.extract_strided_slice %304 {offsets = [0, 0], sizes = [8, 8], strides = [1, 1]} : vector<8x32xf32> to vector<8x8xf32>
    %cst_142 = arith.constant dense<0.000000e+00> : vector<8x8xf32>
    %308 = tpu.matmul %305, %306, %cst_142 {dimension_numbers = #tpu.dot_dimension_numbers<[1], [1], [0], [0], [0, 0, 1, 0], [], []>} : vector<8x8xf32>, vector<8x8xf32>, vector<8x8xf32> -> vector<8x8xf32>
    %309 = arith.addf %308, %5 : vector<8x8xf32>
    %cst_143 = arith.constant dense<0xFF800000> : vector<8xf32>
    %310 = vector.multi_reduction <maximumf>, %309, %cst_143 [1] : vector<8x8xf32> to vector<8xf32>
    %311 = vector.shape_cast %310 : vector<8xf32> to vector<8x1xf32>
    %312 = vector.broadcast %311 : vector<8x1xf32> to vector<8x8xf32>
    %313 = arith.subf %309, %312 : vector<8x8xf32>
    %314 = math.exp %313 : vector<8x8xf32>
    %cst_144 = arith.constant dense<0.000000e+00> : vector<8xf32>
    %315 = vector.multi_reduction <add>, %314, %cst_144 [1] : vector<8x8xf32> to vector<8xf32>
    %316 = vector.shape_cast %315 : vector<8xf32> to vector<8x1xf32>
    %317 = tpu.reciprocal %316 {approx = true} : vector<8x1xf32> -> vector<8x1xf32>
    %318 = vector.broadcast %317 : vector<8x1xf32> to vector<8x8xf32>
    %319 = arith.mulf %314, %318 : vector<8x8xf32>
    %cst_145 = arith.constant dense<0.000000e+00> : vector<8x8xf32>
    %320 = tpu.matmul %319, %307, %cst_145 {dimension_numbers = #tpu.dot_dimension_numbers<[1], [0], [0], [1], [0, 0, 1, 1], [], []>} : vector<8x8xf32>, vector<8x8xf32>, vector<8x8xf32> -> vector<8x8xf32>
    %321 = vector.extract_strided_slice %296 {offsets = [0, 0], sizes = [8, 32], strides = [1, 1]} : vector<32x32xf32> to vector<8x32xf32>
    %cst_146 = arith.constant dense<0.000000e+00> : vector<8x32xf32>
    %322 = tpu.matmul %320, %321, %cst_146 {dimension_numbers = #tpu.dot_dimension_numbers<[1], [0], [0], [1], [0, 0, 1, 1], [], []>} : vector<8x8xf32>, vector<8x32xf32>, vector<8x32xf32> -> vector<8x32xf32>
    %323 = vector.extract_strided_slice %301 {offsets = [0, 8], sizes = [8, 8], strides = [1, 1]} : vector<8x32xf32> to vector<8x8xf32>
    %324 = vector.extract_strided_slice %303 {offsets = [0, 8], sizes = [8, 8], strides = [1, 1]} : vector<8x32xf32> to vector<8x8xf32>
    %325 = vector.extract_strided_slice %304 {offsets = [0, 8], sizes = [8, 8], strides = [1, 1]} : vector<8x32xf32> to vector<8x8xf32>
    %cst_147 = arith.constant dense<0.000000e+00> : vector<8x8xf32>
    %326 = tpu.matmul %323, %324, %cst_147 {dimension_numbers = #tpu.dot_dimension_numbers<[1], [1], [0], [0], [0, 0, 1, 0], [], []>} : vector<8x8xf32>, vector<8x8xf32>, vector<8x8xf32> -> vector<8x8xf32>
    %327 = arith.addf %326, %5 : vector<8x8xf32>
    %cst_148 = arith.constant dense<0xFF800000> : vector<8xf32>
    %328 = vector.multi_reduction <maximumf>, %327, %cst_148 [1] : vector<8x8xf32> to vector<8xf32>
    %329 = vector.shape_cast %328 : vector<8xf32> to vector<8x1xf32>
    %330 = vector.broadcast %329 : vector<8x1xf32> to vector<8x8xf32>
    %331 = arith.subf %327, %330 : vector<8x8xf32>
    %332 = math.exp %331 : vector<8x8xf32>
    %cst_149 = arith.constant dense<0.000000e+00> : vector<8xf32>
    %333 = vector.multi_reduction <add>, %332, %cst_149 [1] : vector<8x8xf32> to vector<8xf32>
    %334 = vector.shape_cast %333 : vector<8xf32> to vector<8x1xf32>
    %335 = tpu.reciprocal %334 {approx = true} : vector<8x1xf32> -> vector<8x1xf32>
    %336 = vector.broadcast %335 : vector<8x1xf32> to vector<8x8xf32>
    %337 = arith.mulf %332, %336 : vector<8x8xf32>
    %cst_150 = arith.constant dense<0.000000e+00> : vector<8x8xf32>
    %338 = tpu.matmul %337, %325, %cst_150 {dimension_numbers = #tpu.dot_dimension_numbers<[1], [0], [0], [1], [0, 0, 1, 1], [], []>} : vector<8x8xf32>, vector<8x8xf32>, vector<8x8xf32> -> vector<8x8xf32>
    %339 = vector.extract_strided_slice %296 {offsets = [8, 0], sizes = [8, 32], strides = [1, 1]} : vector<32x32xf32> to vector<8x32xf32>
    %cst_151 = arith.constant dense<0.000000e+00> : vector<8x32xf32>
    %340 = tpu.matmul %338, %339, %cst_151 {dimension_numbers = #tpu.dot_dimension_numbers<[1], [0], [0], [1], [0, 0, 1, 1], [], []>} : vector<8x8xf32>, vector<8x32xf32>, vector<8x32xf32> -> vector<8x32xf32>
    %341 = arith.addf %322, %340 : vector<8x32xf32>
    %342 = vector.extract_strided_slice %301 {offsets = [0, 16], sizes = [8, 8], strides = [1, 1]} : vector<8x32xf32> to vector<8x8xf32>
    %343 = vector.extract_strided_slice %303 {offsets = [0, 16], sizes = [8, 8], strides = [1, 1]} : vector<8x32xf32> to vector<8x8xf32>
    %344 = vector.extract_strided_slice %304 {offsets = [0, 16], sizes = [8, 8], strides = [1, 1]} : vector<8x32xf32> to vector<8x8xf32>
    %cst_152 = arith.constant dense<0.000000e+00> : vector<8x8xf32>
    %345 = tpu.matmul %342, %343, %cst_152 {dimension_numbers = #tpu.dot_dimension_numbers<[1], [1], [0], [0], [0, 0, 1, 0], [], []>} : vector<8x8xf32>, vector<8x8xf32>, vector<8x8xf32> -> vector<8x8xf32>
    %346 = arith.addf %345, %5 : vector<8x8xf32>
    %cst_153 = arith.constant dense<0xFF800000> : vector<8xf32>
    %347 = vector.multi_reduction <maximumf>, %346, %cst_153 [1] : vector<8x8xf32> to vector<8xf32>
    %348 = vector.shape_cast %347 : vector<8xf32> to vector<8x1xf32>
    %349 = vector.broadcast %348 : vector<8x1xf32> to vector<8x8xf32>
    %350 = arith.subf %346, %349 : vector<8x8xf32>
    %351 = math.exp %350 : vector<8x8xf32>
    %cst_154 = arith.constant dense<0.000000e+00> : vector<8xf32>
    %352 = vector.multi_reduction <add>, %351, %cst_154 [1] : vector<8x8xf32> to vector<8xf32>
    %353 = vector.shape_cast %352 : vector<8xf32> to vector<8x1xf32>
    %354 = tpu.reciprocal %353 {approx = true} : vector<8x1xf32> -> vector<8x1xf32>
    %355 = vector.broadcast %354 : vector<8x1xf32> to vector<8x8xf32>
    %356 = arith.mulf %351, %355 : vector<8x8xf32>
    %cst_155 = arith.constant dense<0.000000e+00> : vector<8x8xf32>
    %357 = tpu.matmul %356, %344, %cst_155 {dimension_numbers = #tpu.dot_dimension_numbers<[1], [0], [0], [1], [0, 0, 1, 1], [], []>} : vector<8x8xf32>, vector<8x8xf32>, vector<8x8xf32> -> vector<8x8xf32>
    %358 = vector.extract_strided_slice %296 {offsets = [16, 0], sizes = [8, 32], strides = [1, 1]} : vector<32x32xf32> to vector<8x32xf32>
    %cst_156 = arith.constant dense<0.000000e+00> : vector<8x32xf32>
    %359 = tpu.matmul %357, %358, %cst_156 {dimension_numbers = #tpu.dot_dimension_numbers<[1], [0], [0], [1], [0, 0, 1, 1], [], []>} : vector<8x8xf32>, vector<8x32xf32>, vector<8x32xf32> -> vector<8x32xf32>
    %360 = arith.addf %341, %359 : vector<8x32xf32>
    %361 = vector.extract_strided_slice %301 {offsets = [0, 24], sizes = [8, 8], strides = [1, 1]} : vector<8x32xf32> to vector<8x8xf32>
    %362 = vector.extract_strided_slice %303 {offsets = [0, 24], sizes = [8, 8], strides = [1, 1]} : vector<8x32xf32> to vector<8x8xf32>
    %363 = vector.extract_strided_slice %304 {offsets = [0, 24], sizes = [8, 8], strides = [1, 1]} : vector<8x32xf32> to vector<8x8xf32>
    %cst_157 = arith.constant dense<0.000000e+00> : vector<8x8xf32>
    %364 = tpu.matmul %361, %362, %cst_157 {dimension_numbers = #tpu.dot_dimension_numbers<[1], [1], [0], [0], [0, 0, 1, 0], [], []>} : vector<8x8xf32>, vector<8x8xf32>, vector<8x8xf32> -> vector<8x8xf32>
    %365 = arith.addf %364, %5 : vector<8x8xf32>
    %cst_158 = arith.constant dense<0xFF800000> : vector<8xf32>
    %366 = vector.multi_reduction <maximumf>, %365, %cst_158 [1] : vector<8x8xf32> to vector<8xf32>
    %367 = vector.shape_cast %366 : vector<8xf32> to vector<8x1xf32>
    %368 = vector.broadcast %367 : vector<8x1xf32> to vector<8x8xf32>
    %369 = arith.subf %365, %368 : vector<8x8xf32>
    %370 = math.exp %369 : vector<8x8xf32>
    %cst_159 = arith.constant dense<0.000000e+00> : vector<8xf32>
    %371 = vector.multi_reduction <add>, %370, %cst_159 [1] : vector<8x8xf32> to vector<8xf32>
    %372 = vector.shape_cast %371 : vector<8xf32> to vector<8x1xf32>
    %373 = tpu.reciprocal %372 {approx = true} : vector<8x1xf32> -> vector<8x1xf32>
    %374 = vector.broadcast %373 : vector<8x1xf32> to vector<8x8xf32>
    %375 = arith.mulf %370, %374 : vector<8x8xf32>
    %cst_160 = arith.constant dense<0.000000e+00> : vector<8x8xf32>
    %376 = tpu.matmul %375, %363, %cst_160 {dimension_numbers = #tpu.dot_dimension_numbers<[1], [0], [0], [1], [0, 0, 1, 1], [], []>} : vector<8x8xf32>, vector<8x8xf32>, vector<8x8xf32> -> vector<8x8xf32>
    %377 = vector.extract_strided_slice %296 {offsets = [24, 0], sizes = [8, 32], strides = [1, 1]} : vector<32x32xf32> to vector<8x32xf32>
    %cst_161 = arith.constant dense<0.000000e+00> : vector<8x32xf32>
    %378 = tpu.matmul %376, %377, %cst_161 {dimension_numbers = #tpu.dot_dimension_numbers<[1], [0], [0], [1], [0, 0, 1, 1], [], []>} : vector<8x8xf32>, vector<8x32xf32>, vector<8x32xf32> -> vector<8x32xf32>
    %379 = arith.addf %360, %378 : vector<8x32xf32>
    %380 = vector.broadcast %298 : vector<1x32xf32> to vector<8x32xf32>
    %381 = arith.addf %379, %380 : vector<8x32xf32>
    %382 = arith.addf %381, %290 : vector<8x32xf32>
    %c1_162 = arith.constant 1 : index
    %c0_163 = arith.constant 0 : index
    %c0_164 = arith.constant 0 : index
    %383 = vector.load %arg9[%c1_162, %c0_163, %c0_164] : memref<2x1x32xf32, #tpu.memory_space<vmem>>, vector<1x1x32xf32>
    %384 = vector.shape_cast %383 : vector<1x1x32xf32> to vector<1x32xf32>
    %c1_165 = arith.constant 1 : index
    %c0_166 = arith.constant 0 : index
    %c0_167 = arith.constant 0 : index
    %385 = vector.load %arg10[%c1_165, %c0_166, %c0_167] : memref<2x1x32xf32, #tpu.memory_space<vmem>>, vector<1x1x32xf32>
    %386 = vector.shape_cast %385 : vector<1x1x32xf32> to vector<1x32xf32>
    %cst_168 = arith.constant dense<0.000000e+00> : vector<8xf32>
    %387 = vector.multi_reduction <add>, %382, %cst_168 [1] : vector<8x32xf32> to vector<8xf32>
    %388 = vector.shape_cast %387 : vector<8xf32> to vector<8x1xf32>
    %cst_169 = arith.constant 3.200000e+01 : f32
    %389 = vector.broadcast %cst_169 : f32 to vector<8x1xf32>
    %390 = arith.divf %388, %389 : vector<8x1xf32>
    %391 = vector.broadcast %390 : vector<8x1xf32> to vector<8x32xf32>
    %392 = arith.subf %382, %391 : vector<8x32xf32>
    %393 = arith.mulf %392, %392 : vector<8x32xf32>
    %cst_170 = arith.constant dense<0.000000e+00> : vector<8xf32>
    %394 = vector.multi_reduction <add>, %393, %cst_170 [1] : vector<8x32xf32> to vector<8xf32>
    %395 = vector.shape_cast %394 : vector<8xf32> to vector<8x1xf32>
    %cst_171 = arith.constant 3.200000e+01 : f32
    %396 = vector.broadcast %cst_171 : f32 to vector<8x1xf32>
    %397 = arith.divf %395, %396 : vector<8x1xf32>
    %398 = vector.broadcast %390 : vector<8x1xf32> to vector<8x32xf32>
    %399 = arith.subf %382, %398 : vector<8x32xf32>
    %cst_172 = arith.constant 9.99999974E-6 : f32
    %400 = vector.broadcast %cst_172 : f32 to vector<8x1xf32>
    %401 = arith.addf %397, %400 : vector<8x1xf32>
    %402 = math.rsqrt %401 : vector<8x1xf32>
    %403 = vector.broadcast %402 : vector<8x1xf32> to vector<8x32xf32>
    %404 = arith.mulf %399, %403 : vector<8x32xf32>
    %405 = vector.broadcast %384 : vector<1x32xf32> to vector<8x32xf32>
    %406 = arith.mulf %404, %405 : vector<8x32xf32>
    %407 = vector.broadcast %386 : vector<1x32xf32> to vector<8x32xf32>
    %408 = arith.addf %406, %407 : vector<8x32xf32>
    %c1_173 = arith.constant 1 : index
    %c0_174 = arith.constant 0 : index
    %c0_175 = arith.constant 0 : index
    %409 = vector.load %arg11[%c1_173, %c0_174, %c0_175] : memref<2x32x32xf32, #tpu.memory_space<vmem>>, vector<1x32x32xf32>
    %410 = vector.shape_cast %409 : vector<1x32x32xf32> to vector<32x32xf32>
    %c1_176 = arith.constant 1 : index
    %c0_177 = arith.constant 0 : index
    %c0_178 = arith.constant 0 : index
    %411 = vector.load %arg12[%c1_176, %c0_177, %c0_178] : memref<2x32x64xf32, #tpu.memory_space<vmem>>, vector<1x32x64xf32>
    %412 = vector.shape_cast %411 : vector<1x32x64xf32> to vector<32x64xf32>
    %c1_179 = arith.constant 1 : index
    %c0_180 = arith.constant 0 : index
    %c0_181 = arith.constant 0 : index
    %413 = vector.load %arg13[%c1_179, %c0_180, %c0_181] : memref<2x32x32xf32, #tpu.memory_space<vmem>>, vector<1x32x32xf32>
    %414 = vector.shape_cast %413 : vector<1x32x32xf32> to vector<32x32xf32>
    %c1_182 = arith.constant 1 : index
    %c0_183 = arith.constant 0 : index
    %c0_184 = arith.constant 0 : index
    %415 = vector.load %arg14[%c1_182, %c0_183, %c0_184] : memref<2x1x32xf32, #tpu.memory_space<vmem>>, vector<1x1x32xf32>
    %416 = vector.shape_cast %415 : vector<1x1x32xf32> to vector<1x32xf32>
    %cst_185 = arith.constant dense<0.000000e+00> : vector<8x32xf32>
    %417 = tpu.matmul %408, %410, %cst_185 {dimension_numbers = #tpu.dot_dimension_numbers<[1], [0], [0], [1], [0, 0, 1, 1], [], []>} : vector<8x32xf32>, vector<32x32xf32>, vector<8x32xf32> -> vector<8x32xf32>
    %cst_186 = arith.constant 0.176776692 : f32
    %418 = vector.broadcast %cst_186 : f32 to vector<8x32xf32>
    %419 = arith.mulf %417, %418 : vector<8x32xf32>
    %cst_187 = arith.constant dense<0.000000e+00> : vector<8x64xf32>
    %420 = tpu.matmul %3, %412, %cst_187 {dimension_numbers = #tpu.dot_dimension_numbers<[1], [0], [0], [1], [0, 0, 1, 1], [], []>} : vector<8x32xf32>, vector<32x64xf32>, vector<8x64xf32> -> vector<8x64xf32>
    %421 = vector.extract_strided_slice %420 {offsets = [0, 0], sizes = [8, 32], strides = [1, 1]} : vector<8x64xf32> to vector<8x32xf32>
    %422 = vector.extract_strided_slice %420 {offsets = [0, 32], sizes = [8, 32], strides = [1, 1]} : vector<8x64xf32> to vector<8x32xf32>
    %423 = vector.extract_strided_slice %419 {offsets = [0, 0], sizes = [8, 8], strides = [1, 1]} : vector<8x32xf32> to vector<8x8xf32>
    %424 = vector.extract_strided_slice %421 {offsets = [0, 0], sizes = [8, 8], strides = [1, 1]} : vector<8x32xf32> to vector<8x8xf32>
    %425 = vector.extract_strided_slice %422 {offsets = [0, 0], sizes = [8, 8], strides = [1, 1]} : vector<8x32xf32> to vector<8x8xf32>
    %cst_188 = arith.constant dense<0.000000e+00> : vector<8x8xf32>
    %426 = tpu.matmul %423, %424, %cst_188 {dimension_numbers = #tpu.dot_dimension_numbers<[1], [1], [0], [0], [0, 0, 1, 0], [], []>} : vector<8x8xf32>, vector<8x8xf32>, vector<8x8xf32> -> vector<8x8xf32>
    %427 = vector.broadcast %7 : vector<1x8xf32> to vector<8x8xf32>
    %428 = arith.addf %426, %427 : vector<8x8xf32>
    %cst_189 = arith.constant dense<0xFF800000> : vector<8xf32>
    %429 = vector.multi_reduction <maximumf>, %428, %cst_189 [1] : vector<8x8xf32> to vector<8xf32>
    %430 = vector.shape_cast %429 : vector<8xf32> to vector<8x1xf32>
    %431 = vector.broadcast %430 : vector<8x1xf32> to vector<8x8xf32>
    %432 = arith.subf %428, %431 : vector<8x8xf32>
    %433 = math.exp %432 : vector<8x8xf32>
    %cst_190 = arith.constant dense<0.000000e+00> : vector<8xf32>
    %434 = vector.multi_reduction <add>, %433, %cst_190 [1] : vector<8x8xf32> to vector<8xf32>
    %435 = vector.shape_cast %434 : vector<8xf32> to vector<8x1xf32>
    %436 = tpu.reciprocal %435 {approx = true} : vector<8x1xf32> -> vector<8x1xf32>
    %437 = vector.broadcast %436 : vector<8x1xf32> to vector<8x8xf32>
    %438 = arith.mulf %433, %437 : vector<8x8xf32>
    %cst_191 = arith.constant dense<0.000000e+00> : vector<8x8xf32>
    %439 = tpu.matmul %438, %425, %cst_191 {dimension_numbers = #tpu.dot_dimension_numbers<[1], [0], [0], [1], [0, 0, 1, 1], [], []>} : vector<8x8xf32>, vector<8x8xf32>, vector<8x8xf32> -> vector<8x8xf32>
    %440 = vector.extract_strided_slice %414 {offsets = [0, 0], sizes = [8, 32], strides = [1, 1]} : vector<32x32xf32> to vector<8x32xf32>
    %cst_192 = arith.constant dense<0.000000e+00> : vector<8x32xf32>
    %441 = tpu.matmul %439, %440, %cst_192 {dimension_numbers = #tpu.dot_dimension_numbers<[1], [0], [0], [1], [0, 0, 1, 1], [], []>} : vector<8x8xf32>, vector<8x32xf32>, vector<8x32xf32> -> vector<8x32xf32>
    %442 = vector.extract_strided_slice %419 {offsets = [0, 8], sizes = [8, 8], strides = [1, 1]} : vector<8x32xf32> to vector<8x8xf32>
    %443 = vector.extract_strided_slice %421 {offsets = [0, 8], sizes = [8, 8], strides = [1, 1]} : vector<8x32xf32> to vector<8x8xf32>
    %444 = vector.extract_strided_slice %422 {offsets = [0, 8], sizes = [8, 8], strides = [1, 1]} : vector<8x32xf32> to vector<8x8xf32>
    %cst_193 = arith.constant dense<0.000000e+00> : vector<8x8xf32>
    %445 = tpu.matmul %442, %443, %cst_193 {dimension_numbers = #tpu.dot_dimension_numbers<[1], [1], [0], [0], [0, 0, 1, 0], [], []>} : vector<8x8xf32>, vector<8x8xf32>, vector<8x8xf32> -> vector<8x8xf32>
    %446 = vector.broadcast %7 : vector<1x8xf32> to vector<8x8xf32>
    %447 = arith.addf %445, %446 : vector<8x8xf32>
    %cst_194 = arith.constant dense<0xFF800000> : vector<8xf32>
    %448 = vector.multi_reduction <maximumf>, %447, %cst_194 [1] : vector<8x8xf32> to vector<8xf32>
    %449 = vector.shape_cast %448 : vector<8xf32> to vector<8x1xf32>
    %450 = vector.broadcast %449 : vector<8x1xf32> to vector<8x8xf32>
    %451 = arith.subf %447, %450 : vector<8x8xf32>
    %452 = math.exp %451 : vector<8x8xf32>
    %cst_195 = arith.constant dense<0.000000e+00> : vector<8xf32>
    %453 = vector.multi_reduction <add>, %452, %cst_195 [1] : vector<8x8xf32> to vector<8xf32>
    %454 = vector.shape_cast %453 : vector<8xf32> to vector<8x1xf32>
    %455 = tpu.reciprocal %454 {approx = true} : vector<8x1xf32> -> vector<8x1xf32>
    %456 = vector.broadcast %455 : vector<8x1xf32> to vector<8x8xf32>
    %457 = arith.mulf %452, %456 : vector<8x8xf32>
    %cst_196 = arith.constant dense<0.000000e+00> : vector<8x8xf32>
    %458 = tpu.matmul %457, %444, %cst_196 {dimension_numbers = #tpu.dot_dimension_numbers<[1], [0], [0], [1], [0, 0, 1, 1], [], []>} : vector<8x8xf32>, vector<8x8xf32>, vector<8x8xf32> -> vector<8x8xf32>
    %459 = vector.extract_strided_slice %414 {offsets = [8, 0], sizes = [8, 32], strides = [1, 1]} : vector<32x32xf32> to vector<8x32xf32>
    %cst_197 = arith.constant dense<0.000000e+00> : vector<8x32xf32>
    %460 = tpu.matmul %458, %459, %cst_197 {dimension_numbers = #tpu.dot_dimension_numbers<[1], [0], [0], [1], [0, 0, 1, 1], [], []>} : vector<8x8xf32>, vector<8x32xf32>, vector<8x32xf32> -> vector<8x32xf32>
    %461 = arith.addf %441, %460 : vector<8x32xf32>
    %462 = vector.extract_strided_slice %419 {offsets = [0, 16], sizes = [8, 8], strides = [1, 1]} : vector<8x32xf32> to vector<8x8xf32>
    %463 = vector.extract_strided_slice %421 {offsets = [0, 16], sizes = [8, 8], strides = [1, 1]} : vector<8x32xf32> to vector<8x8xf32>
    %464 = vector.extract_strided_slice %422 {offsets = [0, 16], sizes = [8, 8], strides = [1, 1]} : vector<8x32xf32> to vector<8x8xf32>
    %cst_198 = arith.constant dense<0.000000e+00> : vector<8x8xf32>
    %465 = tpu.matmul %462, %463, %cst_198 {dimension_numbers = #tpu.dot_dimension_numbers<[1], [1], [0], [0], [0, 0, 1, 0], [], []>} : vector<8x8xf32>, vector<8x8xf32>, vector<8x8xf32> -> vector<8x8xf32>
    %466 = vector.broadcast %7 : vector<1x8xf32> to vector<8x8xf32>
    %467 = arith.addf %465, %466 : vector<8x8xf32>
    %cst_199 = arith.constant dense<0xFF800000> : vector<8xf32>
    %468 = vector.multi_reduction <maximumf>, %467, %cst_199 [1] : vector<8x8xf32> to vector<8xf32>
    %469 = vector.shape_cast %468 : vector<8xf32> to vector<8x1xf32>
    %470 = vector.broadcast %469 : vector<8x1xf32> to vector<8x8xf32>
    %471 = arith.subf %467, %470 : vector<8x8xf32>
    %472 = math.exp %471 : vector<8x8xf32>
    %cst_200 = arith.constant dense<0.000000e+00> : vector<8xf32>
    %473 = vector.multi_reduction <add>, %472, %cst_200 [1] : vector<8x8xf32> to vector<8xf32>
    %474 = vector.shape_cast %473 : vector<8xf32> to vector<8x1xf32>
    %475 = tpu.reciprocal %474 {approx = true} : vector<8x1xf32> -> vector<8x1xf32>
    %476 = vector.broadcast %475 : vector<8x1xf32> to vector<8x8xf32>
    %477 = arith.mulf %472, %476 : vector<8x8xf32>
    %cst_201 = arith.constant dense<0.000000e+00> : vector<8x8xf32>
    %478 = tpu.matmul %477, %464, %cst_201 {dimension_numbers = #tpu.dot_dimension_numbers<[1], [0], [0], [1], [0, 0, 1, 1], [], []>} : vector<8x8xf32>, vector<8x8xf32>, vector<8x8xf32> -> vector<8x8xf32>
    %479 = vector.extract_strided_slice %414 {offsets = [16, 0], sizes = [8, 32], strides = [1, 1]} : vector<32x32xf32> to vector<8x32xf32>
    %cst_202 = arith.constant dense<0.000000e+00> : vector<8x32xf32>
    %480 = tpu.matmul %478, %479, %cst_202 {dimension_numbers = #tpu.dot_dimension_numbers<[1], [0], [0], [1], [0, 0, 1, 1], [], []>} : vector<8x8xf32>, vector<8x32xf32>, vector<8x32xf32> -> vector<8x32xf32>
    %481 = arith.addf %461, %480 : vector<8x32xf32>
    %482 = vector.extract_strided_slice %419 {offsets = [0, 24], sizes = [8, 8], strides = [1, 1]} : vector<8x32xf32> to vector<8x8xf32>
    %483 = vector.extract_strided_slice %421 {offsets = [0, 24], sizes = [8, 8], strides = [1, 1]} : vector<8x32xf32> to vector<8x8xf32>
    %484 = vector.extract_strided_slice %422 {offsets = [0, 24], sizes = [8, 8], strides = [1, 1]} : vector<8x32xf32> to vector<8x8xf32>
    %cst_203 = arith.constant dense<0.000000e+00> : vector<8x8xf32>
    %485 = tpu.matmul %482, %483, %cst_203 {dimension_numbers = #tpu.dot_dimension_numbers<[1], [1], [0], [0], [0, 0, 1, 0], [], []>} : vector<8x8xf32>, vector<8x8xf32>, vector<8x8xf32> -> vector<8x8xf32>
    %486 = vector.broadcast %7 : vector<1x8xf32> to vector<8x8xf32>
    %487 = arith.addf %485, %486 : vector<8x8xf32>
    %cst_204 = arith.constant dense<0xFF800000> : vector<8xf32>
    %488 = vector.multi_reduction <maximumf>, %487, %cst_204 [1] : vector<8x8xf32> to vector<8xf32>
    %489 = vector.shape_cast %488 : vector<8xf32> to vector<8x1xf32>
    %490 = vector.broadcast %489 : vector<8x1xf32> to vector<8x8xf32>
    %491 = arith.subf %487, %490 : vector<8x8xf32>
    %492 = math.exp %491 : vector<8x8xf32>
    %cst_205 = arith.constant dense<0.000000e+00> : vector<8xf32>
    %493 = vector.multi_reduction <add>, %492, %cst_205 [1] : vector<8x8xf32> to vector<8xf32>
    %494 = vector.shape_cast %493 : vector<8xf32> to vector<8x1xf32>
    %495 = tpu.reciprocal %494 {approx = true} : vector<8x1xf32> -> vector<8x1xf32>
    %496 = vector.broadcast %495 : vector<8x1xf32> to vector<8x8xf32>
    %497 = arith.mulf %492, %496 : vector<8x8xf32>
    %cst_206 = arith.constant dense<0.000000e+00> : vector<8x8xf32>
    %498 = tpu.matmul %497, %484, %cst_206 {dimension_numbers = #tpu.dot_dimension_numbers<[1], [0], [0], [1], [0, 0, 1, 1], [], []>} : vector<8x8xf32>, vector<8x8xf32>, vector<8x8xf32> -> vector<8x8xf32>
    %499 = vector.extract_strided_slice %414 {offsets = [24, 0], sizes = [8, 32], strides = [1, 1]} : vector<32x32xf32> to vector<8x32xf32>
    %cst_207 = arith.constant dense<0.000000e+00> : vector<8x32xf32>
    %500 = tpu.matmul %498, %499, %cst_207 {dimension_numbers = #tpu.dot_dimension_numbers<[1], [0], [0], [1], [0, 0, 1, 1], [], []>} : vector<8x8xf32>, vector<8x32xf32>, vector<8x32xf32> -> vector<8x32xf32>
    %501 = arith.addf %481, %500 : vector<8x32xf32>
    %502 = vector.broadcast %416 : vector<1x32xf32> to vector<8x32xf32>
    %503 = arith.addf %501, %502 : vector<8x32xf32>
    %504 = arith.addf %503, %408 : vector<8x32xf32>
    %c1_208 = arith.constant 1 : index
    %c0_209 = arith.constant 0 : index
    %c0_210 = arith.constant 0 : index
    %505 = vector.load %arg15[%c1_208, %c0_209, %c0_210] : memref<2x1x32xf32, #tpu.memory_space<vmem>>, vector<1x1x32xf32>
    %506 = vector.shape_cast %505 : vector<1x1x32xf32> to vector<1x32xf32>
    %c1_211 = arith.constant 1 : index
    %c0_212 = arith.constant 0 : index
    %c0_213 = arith.constant 0 : index
    %507 = vector.load %arg16[%c1_211, %c0_212, %c0_213] : memref<2x1x32xf32, #tpu.memory_space<vmem>>, vector<1x1x32xf32>
    %508 = vector.shape_cast %507 : vector<1x1x32xf32> to vector<1x32xf32>
    %cst_214 = arith.constant dense<0.000000e+00> : vector<8xf32>
    %509 = vector.multi_reduction <add>, %504, %cst_214 [1] : vector<8x32xf32> to vector<8xf32>
    %510 = vector.shape_cast %509 : vector<8xf32> to vector<8x1xf32>
    %cst_215 = arith.constant 3.200000e+01 : f32
    %511 = vector.broadcast %cst_215 : f32 to vector<8x1xf32>
    %512 = arith.divf %510, %511 : vector<8x1xf32>
    %513 = vector.broadcast %512 : vector<8x1xf32> to vector<8x32xf32>
    %514 = arith.subf %504, %513 : vector<8x32xf32>
    %515 = arith.mulf %514, %514 : vector<8x32xf32>
    %cst_216 = arith.constant dense<0.000000e+00> : vector<8xf32>
    %516 = vector.multi_reduction <add>, %515, %cst_216 [1] : vector<8x32xf32> to vector<8xf32>
    %517 = vector.shape_cast %516 : vector<8xf32> to vector<8x1xf32>
    %cst_217 = arith.constant 3.200000e+01 : f32
    %518 = vector.broadcast %cst_217 : f32 to vector<8x1xf32>
    %519 = arith.divf %517, %518 : vector<8x1xf32>
    %520 = vector.broadcast %512 : vector<8x1xf32> to vector<8x32xf32>
    %521 = arith.subf %504, %520 : vector<8x32xf32>
    %cst_218 = arith.constant 9.99999974E-6 : f32
    %522 = vector.broadcast %cst_218 : f32 to vector<8x1xf32>
    %523 = arith.addf %519, %522 : vector<8x1xf32>
    %524 = math.rsqrt %523 : vector<8x1xf32>
    %525 = vector.broadcast %524 : vector<8x1xf32> to vector<8x32xf32>
    %526 = arith.mulf %521, %525 : vector<8x32xf32>
    %527 = vector.broadcast %506 : vector<1x32xf32> to vector<8x32xf32>
    %528 = arith.mulf %526, %527 : vector<8x32xf32>
    %529 = vector.broadcast %508 : vector<1x32xf32> to vector<8x32xf32>
    %530 = arith.addf %528, %529 : vector<8x32xf32>
    %c1_219 = arith.constant 1 : index
    %c0_220 = arith.constant 0 : index
    %c0_221 = arith.constant 0 : index
    %531 = vector.load %arg17[%c1_219, %c0_220, %c0_221] : memref<2x32x128xf32, #tpu.memory_space<vmem>>, vector<1x32x128xf32>
    %532 = vector.shape_cast %531 : vector<1x32x128xf32> to vector<32x128xf32>
    %cst_222 = arith.constant dense<0.000000e+00> : vector<8x128xf32>
    %533 = tpu.matmul %530, %532, %cst_222 {dimension_numbers = #tpu.dot_dimension_numbers<[1], [0], [0], [1], [0, 0, 1, 1], [], []>} : vector<8x32xf32>, vector<32x128xf32>, vector<8x128xf32> -> vector<8x128xf32>
    %c1_223 = arith.constant 1 : index
    %c0_224 = arith.constant 0 : index
    %c0_225 = arith.constant 0 : index
    %534 = vector.load %arg18[%c1_223, %c0_224, %c0_225] : memref<2x1x128xf32, #tpu.memory_space<vmem>>, vector<1x1x128xf32>
    %535 = vector.shape_cast %534 : vector<1x1x128xf32> to vector<1x128xf32>
    %536 = vector.broadcast %535 : vector<1x128xf32> to vector<8x128xf32>
    %537 = arith.addf %533, %536 : vector<8x128xf32>
    %cst_226 = arith.constant 0.000000e+00 : f32
    %538 = vector.broadcast %cst_226 : f32 to vector<8x128xf32>
    %539 = arith.maximumf %537, %538 : vector<8x128xf32>
    %c1_227 = arith.constant 1 : index
    %c0_228 = arith.constant 0 : index
    %c0_229 = arith.constant 0 : index
    %540 = vector.load %arg19[%c1_227, %c0_228, %c0_229] : memref<2x128x32xf32, #tpu.memory_space<vmem>>, vector<1x128x32xf32>
    %541 = vector.shape_cast %540 : vector<1x128x32xf32> to vector<128x32xf32>
    %cst_230 = arith.constant dense<0.000000e+00> : vector<8x32xf32>
    %542 = tpu.matmul %539, %541, %cst_230 {dimension_numbers = #tpu.dot_dimension_numbers<[1], [0], [0], [1], [0, 0, 1, 1], [], []>} : vector<8x128xf32>, vector<128x32xf32>, vector<8x32xf32> -> vector<8x32xf32>
    %c1_231 = arith.constant 1 : index
    %c0_232 = arith.constant 0 : index
    %c0_233 = arith.constant 0 : index
    %543 = vector.load %arg20[%c1_231, %c0_232, %c0_233] : memref<2x1x32xf32, #tpu.memory_space<vmem>>, vector<1x1x32xf32>
    %544 = vector.shape_cast %543 : vector<1x1x32xf32> to vector<1x32xf32>
    %545 = vector.broadcast %544 : vector<1x32xf32> to vector<8x32xf32>
    %546 = arith.addf %542, %545 : vector<8x32xf32>
    %547 = arith.addf %546, %530 : vector<8x32xf32>
    %c1_234 = arith.constant 1 : index
    %c0_235 = arith.constant 0 : index
    %c0_236 = arith.constant 0 : index
    %548 = vector.load %arg21[%c1_234, %c0_235, %c0_236] : memref<2x1x32xf32, #tpu.memory_space<vmem>>, vector<1x1x32xf32>
    %549 = vector.shape_cast %548 : vector<1x1x32xf32> to vector<1x32xf32>
    %c1_237 = arith.constant 1 : index
    %c0_238 = arith.constant 0 : index
    %c0_239 = arith.constant 0 : index
    %550 = vector.load %arg22[%c1_237, %c0_238, %c0_239] : memref<2x1x32xf32, #tpu.memory_space<vmem>>, vector<1x1x32xf32>
    %551 = vector.shape_cast %550 : vector<1x1x32xf32> to vector<1x32xf32>
    %cst_240 = arith.constant dense<0.000000e+00> : vector<8xf32>
    %552 = vector.multi_reduction <add>, %547, %cst_240 [1] : vector<8x32xf32> to vector<8xf32>
    %553 = vector.shape_cast %552 : vector<8xf32> to vector<8x1xf32>
    %cst_241 = arith.constant 3.200000e+01 : f32
    %554 = vector.broadcast %cst_241 : f32 to vector<8x1xf32>
    %555 = arith.divf %553, %554 : vector<8x1xf32>
    %556 = vector.broadcast %555 : vector<8x1xf32> to vector<8x32xf32>
    %557 = arith.subf %547, %556 : vector<8x32xf32>
    %558 = arith.mulf %557, %557 : vector<8x32xf32>
    %cst_242 = arith.constant dense<0.000000e+00> : vector<8xf32>
    %559 = vector.multi_reduction <add>, %558, %cst_242 [1] : vector<8x32xf32> to vector<8xf32>
    %560 = vector.shape_cast %559 : vector<8xf32> to vector<8x1xf32>
    %cst_243 = arith.constant 3.200000e+01 : f32
    %561 = vector.broadcast %cst_243 : f32 to vector<8x1xf32>
    %562 = arith.divf %560, %561 : vector<8x1xf32>
    %563 = vector.broadcast %555 : vector<8x1xf32> to vector<8x32xf32>
    %564 = arith.subf %547, %563 : vector<8x32xf32>
    %cst_244 = arith.constant 9.99999974E-6 : f32
    %565 = vector.broadcast %cst_244 : f32 to vector<8x1xf32>
    %566 = arith.addf %562, %565 : vector<8x1xf32>
    %567 = math.rsqrt %566 : vector<8x1xf32>
    %568 = vector.broadcast %567 : vector<8x1xf32> to vector<8x32xf32>
    %569 = arith.mulf %564, %568 : vector<8x32xf32>
    %570 = vector.broadcast %549 : vector<1x32xf32> to vector<8x32xf32>
    %571 = arith.mulf %569, %570 : vector<8x32xf32>
    %572 = vector.broadcast %551 : vector<1x32xf32> to vector<8x32xf32>
    %573 = arith.addf %571, %572 : vector<8x32xf32>
    %c0_245 = arith.constant 0 : index
    %c0_246 = arith.constant 0 : index
    %574 = vector.load %arg23[%c0_245, %c0_246] : memref<32x128xf32, #tpu.memory_space<vmem>>, vector<32x128xf32>
    %cst_247 = arith.constant dense<0.000000e+00> : vector<8x128xf32>
    %575 = tpu.matmul %573, %574, %cst_247 {dimension_numbers = #tpu.dot_dimension_numbers<[1], [0], [0], [1], [0, 0, 1, 1], [], []>} : vector<8x32xf32>, vector<32x128xf32>, vector<8x128xf32> -> vector<8x128xf32>
    %c0_248 = arith.constant 0 : index
    %c0_249 = arith.constant 0 : index
    %576 = vector.load %arg24[%c0_248, %c0_249] : memref<1x128xf32, #tpu.memory_space<vmem>>, vector<1x128xf32>
    %577 = vector.broadcast %576 : vector<1x128xf32> to vector<8x128xf32>
    %578 = arith.addf %575, %577 : vector<8x128xf32>
    %c0_250 = arith.constant 0 : index
    %c0_251 = arith.constant 0 : index
    %c0_252 = arith.constant 0 : index
    %579 = vector.load %arg25[%c0_250, %c0_251, %c0_252] : memref<1x8x128xf32, #tpu.memory_space<vmem>>, vector<1x8x128xf32>
    %580 = vector.shape_cast %579 : vector<1x8x128xf32> to vector<8x128xf32>
    %581 = vector.shape_cast %578 : vector<8x128xf32> to vector<1x8x128xf32>
    tpu.vector_store %arg25[%c0_250, %c0_251, %c0_252], %581 {strides = array<i32>} : memref<1x8x128xf32, #tpu.memory_space<vmem>>, vector<1x8x128xf32>,
    return
  }
  func.func @transform_0(%arg0: i32) -> (i32, i32, i32) {
    %c0_i32 = arith.constant 0 : i32
    %c0_i32_0 = arith.constant 0 : i32
    %c0_i32_1 = arith.constant 0 : i32
    return %arg0, %c0_i32, %c0_i32_0 : i32, i32, i32
  }
  func.func @transform_1(%arg0: i32) -> (i32, i32, i32) {
    %c0_i32 = arith.constant 0 : i32
    %c0_i32_0 = arith.constant 0 : i32
    %c0_i32_1 = arith.constant 0 : i32
    return %arg0, %c0_i32, %c0_i32_0 : i32, i32, i32
  }
  func.func @transform_2(%arg0: i32) -> (i32, i32, i32) {
    %c0_i32 = arith.constant 0 : i32
    %c0_i32_0 = arith.constant 0 : i32
    %c0_i32_1 = arith.constant 0 : i32
    return %arg0, %c0_i32, %c0_i32_0 : i32, i32, i32
  }
  func.func @transform_3(%arg0: i32) -> (i32, i32, i32) {
    %c0_i32 = arith.constant 0 : i32
    %c0_i32_0 = arith.constant 0 : i32
    %c0_i32_1 = arith.constant 0 : i32
    return %arg0, %c0_i32, %c0_i32_0 : i32, i32, i32
  }
  func.func @transform_4(%arg0: i32) -> (i32, i32, i32) {
    %c0_i32 = arith.constant 0 : i32
    %c0_i32_0 = arith.constant 0 : i32
    %c0_i32_1 = arith.constant 0 : i32
    %c0_i32_2 = arith.constant 0 : i32
    return %c0_i32, %c0_i32_0, %c0_i32_1 : i32, i32, i32
  }
  func.func @transform_5(%arg0: i32) -> (i32, i32, i32) {
    %c0_i32 = arith.constant 0 : i32
    %c0_i32_0 = arith.constant 0 : i32
    %c0_i32_1 = arith.constant 0 : i32
    %c0_i32_2 = arith.constant 0 : i32
    return %c0_i32, %c0_i32_0, %c0_i32_1 : i32, i32, i32
  }
  func.func @transform_6(%arg0: i32) -> (i32, i32, i32) {
    %c0_i32 = arith.constant 0 : i32
    %c0_i32_0 = arith.constant 0 : i32
    %c0_i32_1 = arith.constant 0 : i32
    %c0_i32_2 = arith.constant 0 : i32
    return %c0_i32, %c0_i32_0, %c0_i32_1 : i32, i32, i32
  }
  func.func @transform_7(%arg0: i32) -> (i32, i32, i32) {
    %c0_i32 = arith.constant 0 : i32
    %c0_i32_0 = arith.constant 0 : i32
    %c0_i32_1 = arith.constant 0 : i32
    %c0_i32_2 = arith.constant 0 : i32
    return %c0_i32, %c0_i32_0, %c0_i32_1 : i32, i32, i32
  }
  func.func @transform_8(%arg0: i32) -> (i32, i32, i32) {
    %c0_i32 = arith.constant 0 : i32
    %c0_i32_0 = arith.constant 0 : i32
    %c0_i32_1 = arith.constant 0 : i32
    %c0_i32_2 = arith.constant 0 : i32
    return %c0_i32, %c0_i32_0, %c0_i32_1 : i32, i32, i32
  }
  func.func @transform_9(%arg0: i32) -> (i32, i32, i32) {
    %c0_i32 = arith.constant 0 : i32
    %c0_i32_0 = arith.constant 0 : i32
    %c0_i32_1 = arith.constant 0 : i32
    %c0_i32_2 = arith.constant 0 : i32
    return %c0_i32, %c0_i32_0, %c0_i32_1 : i32, i32, i32
  }
  func.func @transform_10(%arg0: i32) -> (i32, i32, i32) {
    %c0_i32 = arith.constant 0 : i32
    %c0_i32_0 = arith.constant 0 : i32
    %c0_i32_1 = arith.constant 0 : i32
    %c0_i32_2 = arith.constant 0 : i32
    return %c0_i32, %c0_i32_0, %c0_i32_1 : i32, i32, i32
  }
  func.func @transform_11(%arg0: i32) -> (i32, i32, i32) {
    %c0_i32 = arith.constant 0 : i32
    %c0_i32_0 = arith.constant 0 : i32
    %c0_i32_1 = arith.constant 0 : i32
    %c0_i32_2 = arith.constant 0 : i32
    return %c0_i32, %c0_i32_0, %c0_i32_1 : i32, i32, i32
  }
  func.func @transform_12(%arg0: i32) -> (i32, i32, i32) {
    %c0_i32 = arith.constant 0 : i32
    %c0_i32_0 = arith.constant 0 : i32
    %c0_i32_1 = arith.constant 0 : i32
    %c0_i32_2 = arith.constant 0 : i32
    return %c0_i32, %c0_i32_0, %c0_i32_1 : i32, i32, i32
  }
  func.func @transform_13(%arg0: i32) -> (i32, i32, i32) {
    %c0_i32 = arith.constant 0 : i32
    %c0_i32_0 = arith.constant 0 : i32
    %c0_i32_1 = arith.constant 0 : i32
    %c0_i32_2 = arith.constant 0 : i32
    return %c0_i32, %c0_i32_0, %c0_i32_1 : i32, i32, i32
  }
  func.func @transform_14(%arg0: i32) -> (i32, i32, i32) {
    %c0_i32 = arith.constant 0 : i32
    %c0_i32_0 = arith.constant 0 : i32
    %c0_i32_1 = arith.constant 0 : i32
    %c0_i32_2 = arith.constant 0 : i32
    return %c0_i32, %c0_i32_0, %c0_i32_1 : i32, i32, i32
  }
  func.func @transform_15(%arg0: i32) -> (i32, i32, i32) {
    %c0_i32 = arith.constant 0 : i32
    %c0_i32_0 = arith.constant 0 : i32
    %c0_i32_1 = arith.constant 0 : i32
    %c0_i32_2 = arith.constant 0 : i32
    return %c0_i32, %c0_i32_0, %c0_i32_1 : i32, i32, i32
  }
  func.func @transform_16(%arg0: i32) -> (i32, i32, i32) {
    %c0_i32 = arith.constant 0 : i32
    %c0_i32_0 = arith.constant 0 : i32
    %c0_i32_1 = arith.constant 0 : i32
    %c0_i32_2 = arith.constant 0 : i32
    return %c0_i32, %c0_i32_0, %c0_i32_1 : i32, i32, i32
  }
  func.func @transform_17(%arg0: i32) -> (i32, i32, i32) {
    %c0_i32 = arith.constant 0 : i32
    %c0_i32_0 = arith.constant 0 : i32
    %c0_i32_1 = arith.constant 0 : i32
    %c0_i32_2 = arith.constant 0 : i32
    return %c0_i32, %c0_i32_0, %c0_i32_1 : i32, i32, i32
  }
  func.func @transform_18(%arg0: i32) -> (i32, i32, i32) {
    %c0_i32 = arith.constant 0 : i32
    %c0_i32_0 = arith.constant 0 : i32
    %c0_i32_1 = arith.constant 0 : i32
    %c0_i32_2 = arith.constant 0 : i32
    return %c0_i32, %c0_i32_0, %c0_i32_1 : i32, i32, i32
  }
  func.func @transform_19(%arg0: i32) -> (i32, i32, i32) {
    %c0_i32 = arith.constant 0 : i32
    %c0_i32_0 = arith.constant 0 : i32
    %c0_i32_1 = arith.constant 0 : i32
    %c0_i32_2 = arith.constant 0 : i32
    return %c0_i32, %c0_i32_0, %c0_i32_1 : i32, i32, i32
  }
  func.func @transform_20(%arg0: i32) -> (i32, i32, i32) {
    %c0_i32 = arith.constant 0 : i32
    %c0_i32_0 = arith.constant 0 : i32
    %c0_i32_1 = arith.constant 0 : i32
    %c0_i32_2 = arith.constant 0 : i32
    return %c0_i32, %c0_i32_0, %c0_i32_1 : i32, i32, i32
  }
  func.func @transform_21(%arg0: i32) -> (i32, i32, i32) {
    %c0_i32 = arith.constant 0 : i32
    %c0_i32_0 = arith.constant 0 : i32
    %c0_i32_1 = arith.constant 0 : i32
    %c0_i32_2 = arith.constant 0 : i32
    return %c0_i32, %c0_i32_0, %c0_i32_1 : i32, i32, i32
  }
  func.func @transform_22(%arg0: i32) -> (i32, i32) {
    %c0_i32 = arith.constant 0 : i32
    %c0_i32_0 = arith.constant 0 : i32
    %c0_i32_1 = arith.constant 0 : i32
    return %c0_i32, %c0_i32_0 : i32, i32
  }
  func.func @transform_23(%arg0: i32) -> (i32, i32) {
    %c0_i32 = arith.constant 0 : i32
    %c0_i32_0 = arith.constant 0 : i32
    %c0_i32_1 = arith.constant 0 : i32
    return %c0_i32, %c0_i32_0 : i32, i32
  }
  func.func @transform_24(%arg0: i32) -> (i32, i32, i32) {
    %c0_i32 = arith.constant 0 : i32
    %c0_i32_0 = arith.constant 0 : i32
    %c0_i32_1 = arith.constant 0 : i32
    return %arg0, %c0_i32, %c0_i32_0 : i32, i32, i32
  }
}

</mosaic_0001>

<llo_original>
// kernel: decoder_forward.1
$region0: #{decoder_forward.1}
  #allocation0 [shape = 'u32[]', space=smem, size = 0x4, offset = 0x4, fixed_abs, tag = 'smem constant byte address 0x4 - core index']
  #allocation1 [shape = 'u32[144,128]{1,0:T(1,128)}', space=vmem, size = 0x12000, scoped, tag = 'internal scratch']
  %s0 = inlined_call_operand.vmem [shape: f32[2,8,32], index: 0, kind: input, shape index: {}]
  %s1 = inlined_call_operand.vmem [shape: f32[2,8,32], index: 1, kind: input, shape index: {}]
  %s2 = inlined_call_operand.vmem [shape: f32[2,8,8], index: 2, kind: input, shape index: {}]
  %s3 = inlined_call_operand.vmem [shape: f32[2,1,8], index: 3, kind: input, shape index: {}]
  %s4 = inlined_call_operand.vmem [shape: f32[2,32,32], index: 4, kind: input, shape index: {}]
  %s5 = inlined_call_operand.vmem [shape: f32[2,32,64], index: 5, kind: input, shape index: {}]
  %s6 = inlined_call_operand.vmem [shape: f32[2,32,32], index: 6, kind: input, shape index: {}]
  %s7 = inlined_call_operand.vmem [shape: f32[2,1,32], index: 7, kind: input, shape index: {}]
  %s8 = inlined_call_operand.vmem [shape: f32[2,1,32], index: 8, kind: input, shape index: {}]
  %s9 = inlined_call_operand.vmem [shape: f32[2,1,32], index: 9, kind: input, shape index: {}]
  %s10 = inlined_call_operand.vmem [shape: f32[2,32,32], index: 10, kind: input, shape index: {}]
  %s11 = inlined_call_operand.vmem [shape: f32[2,32,64], index: 11, kind: input, shape index: {}]
  %s12 = inlined_call_operand.vmem [shape: f32[2,32,32], index: 12, kind: input, shape index: {}]
  %s13 = inlined_call_operand.vmem [shape: f32[2,1,32], index: 13, kind: input, shape index: {}]
  %s14 = inlined_call_operand.vmem [shape: f32[2,1,32], index: 14, kind: input, shape index: {}]
  %s15 = inlined_call_operand.vmem [shape: f32[2,1,32], index: 15, kind: input, shape index: {}]
  %s16 = inlined_call_operand.vmem [shape: f32[2,32,128], index: 16, kind: input, shape index: {}]
  %s17 = inlined_call_operand.vmem [shape: f32[2,1,128], index: 17, kind: input, shape index: {}]
  %s18 = inlined_call_operand.vmem [shape: f32[2,128,32], index: 18, kind: input, shape index: {}]
  %s19 = inlined_call_operand.vmem [shape: f32[2,1,32], index: 19, kind: input, shape index: {}]
  %s20 = inlined_call_operand.vmem [shape: f32[2,1,32], index: 20, kind: input, shape index: {}]
  %s21 = inlined_call_operand.vmem [shape: f32[2,1,32], index: 21, kind: input, shape index: {}]
  %s22 = inlined_call_operand.vmem [shape: f32[32,128], index: 22, kind: input, shape index: {}]
  %s23 = inlined_call_operand.vmem [shape: f32[1,128], index: 23, kind: input, shape index: {}]
  %s24 = inlined_call_operand.hbm [shape: f32[2,8,128], index: 24, kind: output, shape index: {}]
  %s25 = sld [smem:[#allocation0]]
  $region129: #{decoder_forward.1} parent=0
    _
  %s27 = ssub.s32 1, %s25
  %s28 = scalar_select 0, %s27, %s25
  $region1: #{decoder_forward.1} parent=0
    #allocation2 [shape = 'u8[8192]{0}', space=vmem, size = 0x2000, scoped, tag = 'output window, operand 0']
    #allocation3 [shape = 's32[2]{0}', space=sflag, size = 0x8, scoped, tag = 'scoped memory for decoder_forward.1']
    %29 = vsyncpa [#allocation3], 0
    %s30 = scalar_lea.sflag [#allocation3], 1
    %31 = vsyncpa %s30, 0
    loop: start=0, step=1, limit=4
    $region2: #{decoder_forward.1} parent=1 // loop_pre_header
      _
    $region3: #{decoder_forward.1} parent=1 // loop_header
      %s33 = sphi 0, %s37
      %p34 = scmp.ge.s32.totalorder %s33, 4
      %s43 = sphi 0, %s45
      %s46 = sphi 0, %s43
      %s47 = sphi 0, %s46
      %s63 = sphi 0, %s47
      %s69 = sphi 0, %s71
      %s72 = sphi 0, %s69
      %s73 = sphi 0, %s72
      %s89 = sphi 0, %s73
      %s95 = sphi 0, %s97
      %s98 = sphi 0, %s95
      %s99 = sphi 0, %s98
      %s115 = sphi 0, %s99
      %s121 = sphi 0, %s123
      %s124 = sphi 0, %s121
      %s125 = sphi 0, %s124
      %s141 = sphi 0, %s125
      %s145 = sphi 0, %s145
      %s147 = sphi 0, %s145
      %s148 = sphi 0, %s147
      %s162 = sphi 0, %s148
      %s166 = sphi 0, %s166
      %s168 = sphi 0, %s166
      %s169 = sphi 0, %s168
      %s183 = sphi 0, %s169
      %s187 = sphi 0, %s187
      %s189 = sphi 0, %s187
      %s190 = sphi 0, %s189
      %s204 = sphi 0, %s190
      %s208 = sphi 0, %s208
      %s210 = sphi 0, %s208
      %s211 = sphi 0, %s210
      %s225 = sphi 0, %s211
      %s229 = sphi 0, %s229
      %s231 = sphi 0, %s229
      %s232 = sphi 0, %s231
      %s246 = sphi 0, %s232
      %s250 = sphi 0, %s250
      %s252 = sphi 0, %s250
      %s253 = sphi 0, %s252
      %s267 = sphi 0, %s253
      %s271 = sphi 0, %s271
      %s273 = sphi 0, %s271
      %s274 = sphi 0, %s273
      %s288 = sphi 0, %s274
      %s292 = sphi 0, %s292
      %s294 = sphi 0, %s292
      %s295 = sphi 0, %s294
      %s309 = sphi 0, %s295
      %s313 = sphi 0, %s313
      %s315 = sphi 0, %s313
      %s316 = sphi 0, %s315
      %s330 = sphi 0, %s316
      %s334 = sphi 0, %s334
      %s336 = sphi 0, %s334
      %s337 = sphi 0, %s336
      %s351 = sphi 0, %s337
      %s355 = sphi 0, %s355
      %s357 = sphi 0, %s355
      %s358 = sphi 0, %s357
      %s372 = sphi 0, %s358
      %s376 = sphi 0, %s376
      %s378 = sphi 0, %s376
      %s379 = sphi 0, %s378
      %s393 = sphi 0, %s379
      %s397 = sphi 0, %s397
      %s399 = sphi 0, %s397
      %s400 = sphi 0, %s399
      %s414 = sphi 0, %s400
      %s418 = sphi 0, %s418
      %s420 = sphi 0, %s418
      %s421 = sphi 0, %s420
      %s435 = sphi 0, %s421
      %s439 = sphi 0, %s439
      %s441 = sphi 0, %s439
      %s442 = sphi 0, %s441
      %s456 = sphi 0, %s442
      %s460 = sphi 0, %s460
      %s462 = sphi 0, %s460
      %s463 = sphi 0, %s462
      %s477 = sphi 0, %s463
      %s481 = sphi 0, %s481
      %s483 = sphi 0, %s481
      %s484 = sphi 0, %s483
      %s498 = sphi 0, %s484
      %s502 = sphi 0, %s502
      %s504 = sphi 0, %s502
      %s505 = sphi 0, %s504
      %s519 = sphi 0, %s505
      %s523 = sphi 0, %s523
      %s525 = sphi 0, %s523
      %s526 = sphi 0, %s525
      %s540 = sphi 0, %s526
      %s544 = sphi 0, %s544
      %s546 = sphi 0, %s544
      %s547 = sphi 0, %s546
      %s561 = sphi 0, %s547
      %s567 = sphi 0, %s569
      %s570 = sphi 0, %s567
      %s571 = sphi 0, %s570
      %s587 = sphi 0, %s571
    $region4: #{decoder_forward.1} parent=1 // loop_header_branch
      %36 = sbr.rel (%p34) target = $region8
    $region5: #{decoder_forward.1} parent=1 // loop_body
      %s38 = ssub.s32 %s33, 1
      %s39 = ssub.s32 %s33, 2
      %s40 = sadd.s32 %s33, 1
      %s41 = ssub.s32 %s33, %s40
      %p42 = scmp.eq.s32.totalorder %s41, 0
      %s44 = sadd.s32 %s43, 1
      %s45 = scalar_select %p42, %s43, %s44
      %p48 = pneg %p42
      %p49 = scmp.eq.s32.totalorder %s33, 1
      %p50 = por %p48, %p49
      %p51 = scmp.ne.s32.totalorder %s43, %s46
      %p52 = scmp.eq.s32.totalorder %s33, 0
      %p53 = por %p51, %p52
      %p54 = scmp.ne.s32.totalorder %s43, %s46
      %p55 = scmp.eq.s32.totalorder %s38, 1
      %p56 = por %p54, %p55
      %p57 = scmp.ne.s32.totalorder %s46, %s47
      %p58 = scmp.eq.s32.totalorder %s38, 0
      %p59 = por %p57, %p58
      %p60 = scmp.ne.s32.totalorder %s46, %s47
      %p61 = scmp.eq.s32.totalorder %s39, 1
      %p62 = por %p60, %p61
      %p64 = scmp.ne.s32.totalorder %s47, %s63
      %p65 = scmp.eq.s32.totalorder %s39, 0
      %p66 = por %p64, %p65
      %s67 = ssub.s32 %s33, %s40
      %p68 = scmp.eq.s32.totalorder %s67, 0
      %s70 = sadd.s32 %s69, 1
      %s71 = scalar_select %p68, %s69, %s70
      %p74 = pneg %p68
      %p75 = scmp.eq.s32.totalorder %s33, 1
      %p76 = por %p74, %p75
      %p77 = scmp.ne.s32.totalorder %s69, %s72
      %p78 = scmp.eq.s32.totalorder %s33, 0
      %p79 = por %p77, %p78
      %p80 = scmp.ne.s32.totalorder %s69, %s72
      %p81 = scmp.eq.s32.totalorder %s38, 1
      %p82 = por %p80, %p81
      %p83 = scmp.ne.s32.totalorder %s72, %s73
      %p84 = scmp.eq.s32.totalorder %s38, 0
      %p85 = por %p83, %p84
      %p86 = scmp.ne.s32.totalorder %s72, %s73
      %p87 = scmp.eq.s32.totalorder %s39, 1
      %p88 = por %p86, %p87
      %p90 = scmp.ne.s32.totalorder %s73, %s89
      %p91 = scmp.eq.s32.totalorder %s39, 0
      %p92 = por %p90, %p91
      %s93 = ssub.s32 %s33, %s40
      %p94 = scmp.eq.s32.totalorder %s93, 0
      %s96 = sadd.s32 %s95, 1
      %s97 = scalar_select %p94, %s95, %s96
      %p100 = pneg %p94
      %p101 = scmp.eq.s32.totalorder %s33, 1
      %p102 = por %p100, %p101
      %p103 = scmp.ne.s32.totalorder %s95, %s98
      %p104 = scmp.eq.s32.totalorder %s33, 0
      %p105 = por %p103, %p104
      %p106 = scmp.ne.s32.totalorder %s95, %s98
      %p107 = scmp.eq.s32.totalorder %s38, 1
      %p108 = por %p106, %p107
      %p109 = scmp.ne.s32.totalorder %s98, %s99
      %p110 = scmp.eq.s32.totalorder %s38, 0
      %p111 = por %p109, %p110
      %p112 = scmp.ne.s32.totalorder %s98, %s99
      %p113 = scmp.eq.s32.totalorder %s39, 1
      %p114 = por %p112, %p113
      %p116 = scmp.ne.s32.totalorder %s99, %s115
      %p117 = scmp.eq.s32.totalorder %s39, 0
      %p118 = por %p116, %p117
      %s119 = ssub.s32 %s33, %s40
      %p120 = scmp.eq.s32.totalorder %s119, 0
      %s122 = sadd.s32 %s121, 1
      %s123 = scalar_select %p120, %s121, %s122
      %p126 = pneg %p120
      %p127 = scmp.eq.s32.totalorder %s33, 1
      %p128 = por %p126, %p127
      %p129 = scmp.ne.s32.totalorder %s121, %s124
      %p130 = scmp.eq.s32.totalorder %s33, 0
      %p131 = por %p129, %p130
      %p132 = scmp.ne.s32.totalorder %s121, %s124
      %p133 = scmp.eq.s32.totalorder %s38, 1
      %p134 = por %p132, %p133
      %p135 = scmp.ne.s32.totalorder %s124, %s125
      %p136 = scmp.eq.s32.totalorder %s38, 0
      %p137 = por %p135, %p136
      %p138 = scmp.ne.s32.totalorder %s124, %s125
      %p139 = scmp.eq.s32.totalorder %s39, 1
      %p140 = por %p138, %p139
      %p142 = scmp.ne.s32.totalorder %s125, %s141
      %p143 = scmp.eq.s32.totalorder %s39, 0
      %p144 = por %p142, %p143
      %s146 = sadd.s32 %s145, 1
      %p149 = scmp.eq.s32.totalorder %s33, 1
      %p150 = scmp.ne.s32.totalorder %s145, %s147
      %p151 = scmp.eq.s32.totalorder %s33, 0
      %p152 = por %p150, %p151
      %p153 = scmp.ne.s32.totalorder %s145, %s147
      %p154 = scmp.eq.s32.totalorder %s38, 1
      %p155 = por %p153, %p154
      %p156 = scmp.ne.s32.totalorder %s147, %s148
      %p157 = scmp.eq.s32.totalorder %s38, 0
      %p158 = por %p156, %p157
      %p159 = scmp.ne.s32.totalorder %s147, %s148
      %p160 = scmp.eq.s32.totalorder %s39, 1
      %p161 = por %p159, %p160
      %p163 = scmp.ne.s32.totalorder %s148, %s162
      %p164 = scmp.eq.s32.totalorder %s39, 0
      %p165 = por %p163, %p164
      %s167 = sadd.s32 %s166, 1
      %p170 = scmp.eq.s32.totalorder %s33, 1
      %p171 = scmp.ne.s32.totalorder %s166, %s168
      %p172 = scmp.eq.s32.totalorder %s33, 0
      %p173 = por %p171, %p172
      %p174 = scmp.ne.s32.totalorder %s166, %s168
      %p175 = scmp.eq.s32.totalorder %s38, 1
      %p176 = por %p174, %p175
      %p177 = scmp.ne.s32.totalorder %s168, %s169
      %p178 = scmp.eq.s32.totalorder %s38, 0
      %p179 = por %p177, %p178
      %p180 = scmp.ne.s32.totalorder %s168, %s169
      %p181 = scmp.eq.s32.totalorder %s39, 1
      %p182 = por %p180, %p181
      %p184 = scmp.ne.s32.totalorder %s169, %s183
      %p185 = scmp.eq.s32.totalorder %s39, 0
      %p186 = por %p184, %p185
      %s188 = sadd.s32 %s187, 1
      %p191 = scmp.eq.s32.totalorder %s33, 1
      %p192 = scmp.ne.s32.totalorder %s187, %s189
      %p193 = scmp.eq.s32.totalorder %s33, 0
      %p194 = por %p192, %p193
      %p195 = scmp.ne.s32.totalorder %s187, %s189
      %p196 = scmp.eq.s32.totalorder %s38, 1
      %p197 = por %p195, %p196
      %p198 = scmp.ne.s32.totalorder %s189, %s190
      %p199 = scmp.eq.s32.totalorder %s38, 0
      %p200 = por %p198, %p199
      %p201 = scmp.ne.s32.totalorder %s189, %s190
      %p202 = scmp.eq.s32.totalorder %s39, 1
      %p203 = por %p201, %p202
      %p205 = scmp.ne.s32.totalorder %s190, %s204
      %p206 = scmp.eq.s32.totalorder %s39, 0
      %p207 = por %p205, %p206
      %s209 = sadd.s32 %s208, 1
      %p212 = scmp.eq.s32.totalorder %s33, 1
      %p213 = scmp.ne.s32.totalorder %s208, %s210
      %p214 = scmp.eq.s32.totalorder %s33, 0
      %p215 = por %p213, %p214
      %p216 = scmp.ne.s32.totalorder %s208, %s210
      %p217 = scmp.eq.s32.totalorder %s38, 1
      %p218 = por %p216, %p217
      %p219 = scmp.ne.s32.totalorder %s210, %s211
      %p220 = scmp.eq.s32.totalorder %s38, 0
      %p221 = por %p219, %p220
      %p222 = scmp.ne.s32.totalorder %s210, %s211
      %p223 = scmp.eq.s32.totalorder %s39, 1
      %p224 = por %p222, %p223
      %p226 = scmp.ne.s32.totalorder %s211, %s225
      %p227 = scmp.eq.s32.totalorder %s39, 0
      %p228 = por %p226, %p227
      %s230 = sadd.s32 %s229, 1
      %p233 = scmp.eq.s32.totalorder %s33, 1
      %p234 = scmp.ne.s32.totalorder %s229, %s231
      %p235 = scmp.eq.s32.totalorder %s33, 0
      %p236 = por %p234, %p235
      %p237 = scmp.ne.s32.totalorder %s229, %s231
      %p238 = scmp.eq.s32.totalorder %s38, 1
      %p239 = por %p237, %p238
      %p240 = scmp.ne.s32.totalorder %s231, %s232
      %p241 = scmp.eq.s32.totalorder %s38, 0
      %p242 = por %p240, %p241
      %p243 = scmp.ne.s32.totalorder %s231, %s232
      %p244 = scmp.eq.s32.totalorder %s39, 1
      %p245 = por %p243, %p244
      %p247 = scmp.ne.s32.totalorder %s232, %s246
      %p248 = scmp.eq.s32.totalorder %s39, 0
      %p249 = por %p247, %p248
      %s251 = sadd.s32 %s250, 1
      %p254 = scmp.eq.s32.totalorder %s33, 1
      %p255 = scmp.ne.s32.totalorder %s250, %s252
      %p256 = scmp.eq.s32.totalorder %s33, 0
      %p257 = por %p255, %p256
      %p258 = scmp.ne.s32.totalorder %s250, %s252
      %p259 = scmp.eq.s32.totalorder %s38, 1
      %p260 = por %p258, %p259
      %p261 = scmp.ne.s32.totalorder %s252, %s253
      %p262 = scmp.eq.s32.totalorder %s38, 0
      %p263 = por %p261, %p262
      %p264 = scmp.ne.s32.totalorder %s252, %s253
      %p265 = scmp.eq.s32.totalorder %s39, 1
      %p266 = por %p264, %p265
      %p268 = scmp.ne.s32.totalorder %s253, %s267
      %p269 = scmp.eq.s32.totalorder %s39, 0
      %p270 = por %p268, %p269
      %s272 = sadd.s32 %s271, 1
      %p275 = scmp.eq.s32.totalorder %s33, 1
      %p276 = scmp.ne.s32.totalorder %s271, %s273
      %p277 = scmp.eq.s32.totalorder %s33, 0
      %p278 = por %p276, %p277
      %p279 = scmp.ne.s32.totalorder %s271, %s273
      %p280 = scmp.eq.s32.totalorder %s38, 1
      %p281 = por %p279, %p280
      %p282 = scmp.ne.s32.totalorder %s273, %s274
      %p283 = scmp.eq.s32.totalorder %s38, 0
      %p284 = por %p282, %p283
      %p285 = scmp.ne.s32.totalorder %s273, %s274
      %p286 = scmp.eq.s32.totalorder %s39, 1
      %p287 = por %p285, %p286
      %p289 = scmp.ne.s32.totalorder %s274, %s288
      %p290 = scmp.eq.s32.totalorder %s39, 0
      %p291 = por %p289, %p290
      %s293 = sadd.s32 %s292, 1
      %p296 = scmp.eq.s32.totalorder %s33, 1
      %p297 = scmp.ne.s32.totalorder %s292, %s294
      %p298 = scmp.eq.s32.totalorder %s33, 0
      %p299 = por %p297, %p298
      %p300 = scmp.ne.s32.totalorder %s292, %s294
      %p301 = scmp.eq.s32.totalorder %s38, 1
      %p302 = por %p300, %p301
      %p303 = scmp.ne.s32.totalorder %s294, %s295
      %p304 = scmp.eq.s32.totalorder %s38, 0
      %p305 = por %p303, %p304
      %p306 = scmp.ne.s32.totalorder %s294, %s295
      %p307 = scmp.eq.s32.totalorder %s39, 1
      %p308 = por %p306, %p307
      %p310 = scmp.ne.s32.totalorder %s295, %s309
      %p311 = scmp.eq.s32.totalorder %s39, 0
      %p312 = por %p310, %p311
      %s314 = sadd.s32 %s313, 1
      %p317 = scmp.eq.s32.totalorder %s33, 1
      %p318 = scmp.ne.s32.totalorder %s313, %s315
      %p319 = scmp.eq.s32.totalorder %s33, 0
      %p320 = por %p318, %p319
      %p321 = scmp.ne.s32.totalorder %s313, %s315
      %p322 = scmp.eq.s32.totalorder %s38, 1
      %p323 = por %p321, %p322
      %p324 = scmp.ne.s32.totalorder %s315, %s316
      %p325 = scmp.eq.s32.totalorder %s38, 0
      %p326 = por %p324, %p325
      %p327 = scmp.ne.s32.totalorder %s315, %s316
      %p328 = scmp.eq.s32.totalorder %s39, 1
      %p329 = por %p327, %p328
      %p331 = scmp.ne.s32.totalorder %s316, %s330
      %p332 = scmp.eq.s32.totalorder %s39, 0
      %p333 = por %p331, %p332
      %s335 = sadd.s32 %s334, 1
      %p338 = scmp.eq.s32.totalorder %s33, 1
      %p339 = scmp.ne.s32.totalorder %s334, %s336
      %p340 = scmp.eq.s32.totalorder %s33, 0
      %p341 = por %p339, %p340
      %p342 = scmp.ne.s32.totalorder %s334, %s336
      %p343 = scmp.eq.s32.totalorder %s38, 1
      %p344 = por %p342, %p343
      %p345 = scmp.ne.s32.totalorder %s336, %s337
      %p346 = scmp.eq.s32.totalorder %s38, 0
      %p347 = por %p345, %p346
      %p348 = scmp.ne.s32.totalorder %s336, %s337
      %p349 = scmp.eq.s32.totalorder %s39, 1
      %p350 = por %p348, %p349
      %p352 = scmp.ne.s32.totalorder %s337, %s351
      %p353 = scmp.eq.s32.totalorder %s39, 0
      %p354 = por %p352, %p353
      %s356 = sadd.s32 %s355, 1
      %p359 = scmp.eq.s32.totalorder %s33, 1
      %p360 = scmp.ne.s32.totalorder %s355, %s357
      %p361 = scmp.eq.s32.totalorder %s33, 0
      %p362 = por %p360, %p361
      %p363 = scmp.ne.s32.totalorder %s355, %s357
      %p364 = scmp.eq.s32.totalorder %s38, 1
      %p365 = por %p363, %p364
      %p366 = scmp.ne.s32.totalorder %s357, %s358
      %p367 = scmp.eq.s32.totalorder %s38, 0
      %p368 = por %p366, %p367
      %p369 = scmp.ne.s32.totalorder %s357, %s358
      %p370 = scmp.eq.s32.totalorder %s39, 1
      %p371 = por %p369, %p370
      %p373 = scmp.ne.s32.totalorder %s358, %s372
      %p374 = scmp.eq.s32.totalorder %s39, 0
      %p375 = por %p373, %p374
      %s377 = sadd.s32 %s376, 1
      %p380 = scmp.eq.s32.totalorder %s33, 1
      %p381 = scmp.ne.s32.totalorder %s376, %s378
      %p382 = scmp.eq.s32.totalorder %s33, 0
      %p383 = por %p381, %p382
      %p384 = scmp.ne.s32.totalorder %s376, %s378
      %p385 = scmp.eq.s32.totalorder %s38, 1
      %p386 = por %p384, %p385
      %p387 = scmp.ne.s32.totalorder %s378, %s379
      %p388 = scmp.eq.s32.totalorder %s38, 0
      %p389 = por %p387, %p388
      %p390 = scmp.ne.s32.totalorder %s378, %s379
      %p391 = scmp.eq.s32.totalorder %s39, 1
      %p392 = por %p390, %p391
      %p394 = scmp.ne.s32.totalorder %s379, %s393
      %p395 = scmp.eq.s32.totalorder %s39, 0
      %p396 = por %p394, %p395
      %s398 = sadd.s32 %s397, 1
      %p401 = scmp.eq.s32.totalorder %s33, 1
      %p402 = scmp.ne.s32.totalorder %s397, %s399
      %p403 = scmp.eq.s32.totalorder %s33, 0
      %p404 = por %p402, %p403
      %p405 = scmp.ne.s32.totalorder %s397, %s399
      %p406 = scmp.eq.s32.totalorder %s38, 1
      %p407 = por %p405, %p406
      %p408 = scmp.ne.s32.totalorder %s399, %s400
      %p409 = scmp.eq.s32.totalorder %s38, 0
      %p410 = por %p408, %p409
      %p411 = scmp.ne.s32.totalorder %s399, %s400
      %p412 = scmp.eq.s32.totalorder %s39, 1
      %p413 = por %p411, %p412
      %p415 = scmp.ne.s32.totalorder %s400, %s414
      %p416 = scmp.eq.s32.totalorder %s39, 0
      %p417 = por %p415, %p416
      %s419 = sadd.s32 %s418, 1
      %p422 = scmp.eq.s32.totalorder %s33, 1
      %p423 = scmp.ne.s32.totalorder %s418, %s420
      %p424 = scmp.eq.s32.totalorder %s33, 0
      %p425 = por %p423, %p424
      %p426 = scmp.ne.s32.totalorder %s418, %s420
      %p427 = scmp.eq.s32.totalorder %s38, 1
      %p428 = por %p426, %p427
      %p429 = scmp.ne.s32.totalorder %s420, %s421
      %p430 = scmp.eq.s32.totalorder %s38, 0
      %p431 = por %p429, %p430
      %p432 = scmp.ne.s32.totalorder %s420, %s421
      %p433 = scmp.eq.s32.totalorder %s39, 1
      %p434 = por %p432, %p433
      %p436 = scmp.ne.s32.totalorder %s421, %s435
      %p437 = scmp.eq.s32.totalorder %s39, 0
      %p438 = por %p436, %p437
      %s440 = sadd.s32 %s439, 1
      %p443 = scmp.eq.s32.totalorder %s33, 1
      %p444 = scmp.ne.s32.totalorder %s439, %s441
      %p445 = scmp.eq.s32.totalorder %s33, 0
      %p446 = por %p444, %p445
      %p447 = scmp.ne.s32.totalorder %s439, %s441
      %p448 = scmp.eq.s32.totalorder %s38, 1
      %p449 = por %p447, %p448
      %p450 = scmp.ne.s32.totalorder %s441, %s442
      %p451 = scmp.eq.s32.totalorder %s38, 0
      %p452 = por %p450, %p451
      %p453 = scmp.ne.s32.totalorder %s441, %s442
      %p454 = scmp.eq.s32.totalorder %s39, 1
      %p455 = por %p453, %p454
      %p457 = scmp.ne.s32.totalorder %s442, %s456
      %p458 = scmp.eq.s32.totalorder %s39, 0
      %p459 = por %p457, %p458
      %s461 = sadd.s32 %s460, 1
      %p464 = scmp.eq.s32.totalorder %s33, 1
      %p465 = scmp.ne.s32.totalorder %s460, %s462
      %p466 = scmp.eq.s32.totalorder %s33, 0
      %p467 = por %p465, %p466
      %p468 = scmp.ne.s32.totalorder %s460, %s462
      %p469 = scmp.eq.s32.totalorder %s38, 1
      %p470 = por %p468, %p469
      %p471 = scmp.ne.s32.totalorder %s462, %s463
      %p472 = scmp.eq.s32.totalorder %s38, 0
      %p473 = por %p471, %p472
      %p474 = scmp.ne.s32.totalorder %s462, %s463
      %p475 = scmp.eq.s32.totalorder %s39, 1
      %p476 = por %p474, %p475
      %p478 = scmp.ne.s32.totalorder %s463, %s477
      %p479 = scmp.eq.s32.totalorder %s39, 0
      %p480 = por %p478, %p479
      %s482 = sadd.s32 %s481, 1
      %p485 = scmp.eq.s32.totalorder %s33, 1
      %p486 = scmp.ne.s32.totalorder %s481, %s483
      %p487 = scmp.eq.s32.totalorder %s33, 0
      %p488 = por %p486, %p487
      %p489 = scmp.ne.s32.totalorder %s481, %s483
      %p490 = scmp.eq.s32.totalorder %s38, 1
      %p491 = por %p489, %p490
      %p492 = scmp.ne.s32.totalorder %s483, %s484
      %p493 = scmp.eq.s32.totalorder %s38, 0
      %p494 = por %p492, %p493
      %p495 = scmp.ne.s32.totalorder %s483, %s484
      %p496 = scmp.eq.s32.totalorder %s39, 1
      %p497 = por %p495, %p496
      %p499 = scmp.ne.s32.totalorder %s484, %s498
      %p500 = scmp.eq.s32.totalorder %s39, 0
      %p501 = por %p499, %p500
      %s503 = sadd.s32 %s502, 1
      %p506 = scmp.eq.s32.totalorder %s33, 1
      %p507 = scmp.ne.s32.totalorder %s502, %s504
      %p508 = scmp.eq.s32.totalorder %s33, 0
      %p509 = por %p507, %p508
      %p510 = scmp.ne.s32.totalorder %s502, %s504
      %p511 = scmp.eq.s32.totalorder %s38, 1
      %p512 = por %p510, %p511
      %p513 = scmp.ne.s32.totalorder %s504, %s505
      %p514 = scmp.eq.s32.totalorder %s38, 0
      %p515 = por %p513, %p514
      %p516 = scmp.ne.s32.totalorder %s504, %s505
      %p517 = scmp.eq.s32.totalorder %s39, 1
      %p518 = por %p516, %p517
      %p520 = scmp.ne.s32.totalorder %s505, %s519
      %p521 = scmp.eq.s32.totalorder %s39, 0
      %p522 = por %p520, %p521
      %s524 = sadd.s32 %s523, 1
      %p527 = scmp.eq.s32.totalorder %s33, 1
      %p528 = scmp.ne.s32.totalorder %s523, %s525
      %p529 = scmp.eq.s32.totalorder %s33, 0
      %p530 = por %p528, %p529
      %p531 = scmp.ne.s32.totalorder %s523, %s525
      %p532 = scmp.eq.s32.totalorder %s38, 1
      %p533 = por %p531, %p532
      %p534 = scmp.ne.s32.totalorder %s525, %s526
      %p535 = scmp.eq.s32.totalorder %s38, 0
      %p536 = por %p534, %p535
      %p537 = scmp.ne.s32.totalorder %s525, %s526
      %p538 = scmp.eq.s32.totalorder %s39, 1
      %p539 = por %p537, %p538
      %p541 = scmp.ne.s32.totalorder %s526, %s540
      %p542 = scmp.eq.s32.totalorder %s39, 0
      %p543 = por %p541, %p542
      %s545 = sadd.s32 %s544, 1
      %p548 = scmp.eq.s32.totalorder %s33, 1
      %p549 = scmp.ne.s32.totalorder %s544, %s546
      %p550 = scmp.eq.s32.totalorder %s33, 0
      %p551 = por %p549, %p550
      %p552 = scmp.ne.s32.totalorder %s544, %s546
      %p553 = scmp.eq.s32.totalorder %s38, 1
      %p554 = por %p552, %p553
      %p555 = scmp.ne.s32.totalorder %s546, %s547
      %p556 = scmp.eq.s32.totalorder %s38, 0
      %p557 = por %p555, %p556
      %p558 = scmp.ne.s32.totalorder %s546, %s547
      %p559 = scmp.eq.s32.totalorder %s39, 1
      %p560 = por %p558, %p559
      %p562 = scmp.ne.s32.totalorder %s547, %s561
      %p563 = scmp.eq.s32.totalorder %s39, 0
      %p564 = por %p562, %p563
      %s565 = ssub.s32 %s33, %s40
      %p566 = scmp.eq.s32.totalorder %s565, 0
      %s568 = sadd.s32 %s567, 1
      %s569 = scalar_select %p566, %s567, %s568
      %p572 = pneg %p566
      %p573 = scmp.eq.s32.totalorder %s33, 1
      %p574 = por %p572, %p573
      %p575 = scmp.ne.s32.totalorder %s567, %s570
      %p576 = scmp.eq.s32.totalorder %s33, 0
      %p577 = por %p575, %p576
      %p578 = scmp.ne.s32.totalorder %s567, %s570
      %p579 = scmp.eq.s32.totalorder %s38, 1
      %p580 = por %p578, %p579
      %p581 = scmp.ne.s32.totalorder %s570, %s571
      %p582 = scmp.eq.s32.totalorder %s38, 0
      %p583 = por %p581, %p582
      %p584 = scmp.ne.s32.totalorder %s570, %s571
      %p585 = scmp.eq.s32.totalorder %s39, 1
      %p586 = por %p584, %p585
      %p588 = scmp.ne.s32.totalorder %s571, %s587
      %p589 = scmp.eq.s32.totalorder %s39, 0
      %p590 = por %p588, %p589
      %p591 = scmp.le.s32.totalorder 1, %s33
      %p592 = scmp.lt.s32.totalorder %s33, 3
      %p593 = pnand %p591, %p592
      %p594 = pneg %p593
      // Predicated region
      $region9: #{decoder_forward.1} parent=5 // pred_check
        _
      $region10: #{decoder_forward.1} parent=5 // pred_check_branch
        %596 = sbr.rel (%p593) target = $region12
      $region11: #{decoder_forward.1} parent=5 // pred_region
        %s597 = ssub.s32 %s33, 1
        // Predicated region
        $region13: #{decoder_forward.1} parent=11 // pred_check
          %p598 = pneg %p158
        $region14: #{decoder_forward.1} parent=11 // pred_check_branch
          %600 = sbr.rel (%p598) target = $region16
        $region15: #{decoder_forward.1} parent=11 // pred_region
          _
        $region16: #{decoder_forward.1} parent=11 // pred_fallthru
          _
        // Predicated region
        $region17: #{decoder_forward.1} parent=11 // pred_check
          %p601 = pneg %p179
        $region18: #{decoder_forward.1} parent=11 // pred_check_branch
          %603 = sbr.rel (%p601) target = $region20
        $region19: #{decoder_forward.1} parent=11 // pred_region
          _
        $region20: #{decoder_forward.1} parent=11 // pred_fallthru
          _
        // Predicated region
        $region21: #{decoder_forward.1} parent=11 // pred_check
          %p604 = pneg %p200
        $region22: #{decoder_forward.1} parent=11 // pred_check_branch
          %606 = sbr.rel (%p604) target = $region24
        $region23: #{decoder_forward.1} parent=11 // pred_region
          _
        $region24: #{decoder_forward.1} parent=11 // pred_fallthru
          _
        // Predicated region
        $region25: #{decoder_forward.1} parent=11 // pred_check
          %p607 = pneg %p221
        $region26: #{decoder_forward.1} parent=11 // pred_check_branch
          %609 = sbr.rel (%p607) target = $region28
        $region27: #{decoder_forward.1} parent=11 // pred_region
          _
        $region28: #{decoder_forward.1} parent=11 // pred_fallthru
          _
        // Predicated region
        $region29: #{decoder_forward.1} parent=11 // pred_check
          %p610 = pneg %p242
        $region30: #{decoder_forward.1} parent=11 // pred_check_branch
          %612 = sbr.rel (%p610) target = $region32
        $region31: #{decoder_forward.1} parent=11 // pred_region
          _
        $region32: #{decoder_forward.1} parent=11 // pred_fallthru
          _
        // Predicated region
        $region33: #{decoder_forward.1} parent=11 // pred_check
          %p613 = pneg %p263
        $region34: #{decoder_forward.1} parent=11 // pred_check_branch
          %615 = sbr.rel (%p613) target = $region36
        $region35: #{decoder_forward.1} parent=11 // pred_region
          _
        $region36: #{decoder_forward.1} parent=11 // pred_fallthru
          _
        // Predicated region
        $region37: #{decoder_forward.1} parent=11 // pred_check
          %p616 = pneg %p284
        $region38: #{decoder_forward.1} parent=11 // pred_check_branch
          %618 = sbr.rel (%p616) target = $region40
        $region39: #{decoder_forward.1} parent=11 // pred_region
          _
        $region40: #{decoder_forward.1} parent=11 // pred_fallthru
          _
        // Predicated region
        $region41: #{decoder_forward.1} parent=11 // pred_check
          %p619 = pneg %p305
        $region42: #{decoder_forward.1} parent=11 // pred_check_branch
          %621 = sbr.rel (%p619) target = $region44
        $region43: #{decoder_forward.1} parent=11 // pred_region
          _
        $region44: #{decoder_forward.1} parent=11 // pred_fallthru
          _
        // Predicated region
        $region45: #{decoder_forward.1} parent=11 // pred_check
          %p622 = pneg %p326
        $region46: #{decoder_forward.1} parent=11 // pred_check_branch
          %624 = sbr.rel (%p622) target = $region48
        $region47: #{decoder_forward.1} parent=11 // pred_region
          _
        $region48: #{decoder_forward.1} parent=11 // pred_fallthru
          _
        // Predicated region
        $region49: #{decoder_forward.1} parent=11 // pred_check
          %p625 = pneg %p347
        $region50: #{decoder_forward.1} parent=11 // pred_check_branch
          %627 = sbr.rel (%p625) target = $region52
        $region51: #{decoder_forward.1} parent=11 // pred_region
          _
        $region52: #{decoder_forward.1} parent=11 // pred_fallthru
          _
        // Predicated region
        $region53: #{decoder_forward.1} parent=11 // pred_check
          %p628 = pneg %p368
        $region54: #{decoder_forward.1} parent=11 // pred_check_branch
          %630 = sbr.rel (%p628) target = $region56
        $region55: #{decoder_forward.1} parent=11 // pred_region
          _
        $region56: #{decoder_forward.1} parent=11 // pred_fallthru
          _
        // Predicated region
        $region57: #{decoder_forward.1} parent=11 // pred_check
          %p631 = pneg %p389
        $region58: #{decoder_forward.1} parent=11 // pred_check_branch
          %633 = sbr.rel (%p631) target = $region60
        $region59: #{decoder_forward.1} parent=11 // pred_region
          _
        $region60: #{decoder_forward.1} parent=11 // pred_fallthru
          _
        // Predicated region
        $region61: #{decoder_forward.1} parent=11 // pred_check
          %p634 = pneg %p410
        $region62: #{decoder_forward.1} parent=11 // pred_check_branch
          %636 = sbr.rel (%p634) target = $region64
        $region63: #{decoder_forward.1} parent=11 // pred_region
          _
        $region64: #{decoder_forward.1} parent=11 // pred_fallthru
          _
        // Predicated region
        $region65: #{decoder_forward.1} parent=11 // pred_check
          %p637 = pneg %p431
        $region66: #{decoder_forward.1} parent=11 // pred_check_branch
          %639 = sbr.rel (%p637) target = $region68
        $region67: #{decoder_forward.1} parent=11 // pred_region
          _
        $region68: #{decoder_forward.1} parent=11 // pred_fallthru
          _
        // Predicated region
        $region69: #{decoder_forward.1} parent=11 // pred_check
          %p640 = pneg %p452
        $region70: #{decoder_forward.1} parent=11 // pred_check_branch
          %642 = sbr.rel (%p640) target = $region72
        $region71: #{decoder_forward.1} parent=11 // pred_region
          _
        $region72: #{decoder_forward.1} parent=11 // pred_fallthru
          _
        // Predicated region
        $region73: #{decoder_forward.1} parent=11 // pred_check
          %p643 = pneg %p473
        $region74: #{decoder_forward.1} parent=11 // pred_check_branch
          %645 = sbr.rel (%p643) target = $region76
        $region75: #{decoder_forward.1} parent=11 // pred_region
          _
        $region76: #{decoder_forward.1} parent=11 // pred_fallthru
          _
        // Predicated region
        $region77: #{decoder_forward.1} parent=11 // pred_check
          %p646 = pneg %p494
        $region78: #{decoder_forward.1} parent=11 // pred_check_branch
          %648 = sbr.rel (%p646) target = $region80
        $region79: #{decoder_forward.1} parent=11 // pred_region
          _
        $region80: #{decoder_forward.1} parent=11 // pred_fallthru
          _
        // Predicated region
        $region81: #{decoder_forward.1} parent=11 // pred_check
          %p649 = pneg %p515
        $region82: #{decoder_forward.1} parent=11 // pred_check_branch
          %651 = sbr.rel (%p649) target = $region84
        $region83: #{decoder_forward.1} parent=11 // pred_region
          _
        $region84: #{decoder_forward.1} parent=11 // pred_fallthru
          _
        // Predicated region
        $region85: #{decoder_forward.1} parent=11 // pred_check
          %p652 = pneg %p536
        $region86: #{decoder_forward.1} parent=11 // pred_check_branch
          %654 = sbr.rel (%p652) target = $region88
        $region87: #{decoder_forward.1} parent=11 // pred_region
          _
        $region88: #{decoder_forward.1} parent=11 // pred_fallthru
          _
        // Predicated region
        $region89: #{decoder_forward.1} parent=11 // pred_check
          %p655 = pneg %p557
        $region90: #{decoder_forward.1} parent=11 // pred_check_branch
          %657 = sbr.rel (%p655) target = $region92
        $region91: #{decoder_forward.1} parent=11 // pred_region
          _
        $region92: #{decoder_forward.1} parent=11 // pred_fallthru
          _
      $region12: #{decoder_forward.1} parent=5 // pred_fallthru
        _
      %p658 = scmp.lt.s32.totalorder %s33, 2
      // Predicated region
      $region93: #{decoder_forward.1} parent=5 // pred_check
        %p659 = pneg %p658
      $region94: #{decoder_forward.1} parent=5 // pred_check_branch
        %661 = sbr.rel (%p659) target = $region96
      $region95: #{decoder_forward.1} parent=5 // pred_region
        // Predicated region
        $region97: #{decoder_forward.1} parent=95 // pred_check
          %p662 = pneg %p53
        $region98: #{decoder_forward.1} parent=95 // pred_check_branch
          %664 = sbr.rel (%p662) target = $region100
        $region99: #{decoder_forward.1} parent=95 // pred_region
          %p665 = scmp.lt.s32.totalorder %s33, 1
          %s666 = scalar_select %p665, %s33, 1
          %s667 = smul.addr %s666, 8
          %s668 = scalar_lea.vmem %s0, %s667
        $region100: #{decoder_forward.1} parent=95 // pred_fallthru
          _
        // Predicated region
        $region101: #{decoder_forward.1} parent=95 // pred_check
          %p669 = pneg %p79
        $region102: #{decoder_forward.1} parent=95 // pred_check_branch
          %671 = sbr.rel (%p669) target = $region104
        $region103: #{decoder_forward.1} parent=95 // pred_region
          %p672 = scmp.lt.s32.totalorder %s33, 1
          %s673 = scalar_select %p672, %s33, 1
          %s674 = smul.addr %s673, 8
          %s675 = scalar_lea.vmem %s1, %s674
        $region104: #{decoder_forward.1} parent=95 // pred_fallthru
          _
        // Predicated region
        $region105: #{decoder_forward.1} parent=95 // pred_check
          %p676 = pneg %p105
        $region106: #{decoder_forward.1} parent=95 // pred_check_branch
          %678 = sbr.rel (%p676) target = $region108
        $region107: #{decoder_forward.1} parent=95 // pred_region
          %p679 = scmp.lt.s32.totalorder %s33, 1
          %s680 = scalar_select %p679, %s33, 1
          %s681 = smul.addr %s680, 8
          %s682 = scalar_lea.vmem %s2, %s681
        $region108: #{decoder_forward.1} parent=95 // pred_fallthru
          _
        // Predicated region
        $region109: #{decoder_forward.1} parent=95 // pred_check
          %p683 = pneg %p131
        $region110: #{decoder_forward.1} parent=95 // pred_check_branch
          %685 = sbr.rel (%p683) target = $region112
        $region111: #{decoder_forward.1} parent=95 // pred_region
          %p686 = scmp.lt.s32.totalorder %s33, 1
          %s687 = scalar_select %p686, %s33, 1
          %s688 = scalar_lea.vmem %s3, %s687
        $region112: #{decoder_forward.1} parent=95 // pred_fallthru
          _
      $region96: #{decoder_forward.1} parent=5 // pred_fallthru
        _
      %p689 = scmp.le.s32.totalorder 1, %s33
      %p690 = scmp.lt.s32.totalorder %s33, 3
      %p691 = pnand %p689, %p690
      %p692 = pneg %p691
      // Predicated region
      $region113: #{decoder_forward.1} parent=5 // pred_check
        _
      $region114: #{decoder_forward.1} parent=5 // pred_check_branch
        %694 = sbr.rel (%p691) target = $region116
      $region115: #{decoder_forward.1} parent=5 // pred_region
        %s695 = ssub.s32 %s33, 1
        %p696 = scmp.lt.s32.totalorder %s38, 1
        %s697 = scalar_select %p696, %s38, 1
        %s698 = smul.addr %s697, 8
        %s699 = scalar_lea.vmem %s0, %s698
        %p700 = pneg %p59
        %p701 = pneg %p56
        %p702 = scmp.lt.s32.totalorder %s38, 1
        %s703 = scalar_select %p702, %s38, 1
        %s704 = smul.addr %s703, 8
        %s705 = scalar_lea.vmem %s1, %s704
        %p706 = pneg %p85
        %p707 = pneg %p82
        %p708 = scmp.lt.s32.totalorder %s38, 1
        %s709 = scalar_select %p708, %s38, 1
        %s710 = smul.addr %s709, 8
        %s711 = scalar_lea.vmem %s2, %s710
        %p712 = pneg %p111
        %p713 = pneg %p108
        %p714 = scmp.lt.s32.totalorder %s38, 1
        %s715 = scalar_select %p714, %s38, 1
        %s716 = scalar_lea.vmem %s3, %s715
        %p717 = pneg %p137
        %p718 = pneg %p134
        %p719 = pneg %p158
        %p720 = pneg %p155
        %p721 = pneg %p179
        %p722 = pneg %p176
        %p723 = pneg %p200
        %p724 = pneg %p197
        %p725 = pneg %p221
        %p726 = pneg %p218
        %p727 = pneg %p242
        %p728 = pneg %p239
        %p729 = pneg %p263
        %p730 = pneg %p260
        %p731 = pneg %p284
        %p732 = pneg %p281
        %p733 = pneg %p305
        %p734 = pneg %p302
        %p735 = pneg %p326
        %p736 = pneg %p323
        %p737 = pneg %p347
        %p738 = pneg %p344
        %p739 = pneg %p368
        %p740 = pneg %p365
        %p741 = pneg %p389
        %p742 = pneg %p386
        %p743 = pneg %p410
        %p744 = pneg %p407
        %p745 = pneg %p431
        %p746 = pneg %p428
        %p747 = pneg %p452
        %p748 = pneg %p449
        %p749 = pneg %p473
        %p750 = pneg %p470
        %p751 = pneg %p494
        %p752 = pneg %p491
        %p753 = pneg %p515
        %p754 = pneg %p512
        %p755 = pneg %p536
        %p756 = pneg %p533
        %p757 = pneg %p557
        %p758 = pneg %p554
        %p759 = pneg %p583
        %p760 = pneg %p580
        %s761 = sand.u32 %s570, 1
        %s762 = scalar_lea.sflag [#allocation3], %s761
        %s763 = sand.u32 %s570, 1
        %s764 = smul.addr %s763, 8
        %s765 = scalar_lea.vmem [#allocation2], %s764
        %p766 = scmp.lt.s32.totalorder %s38, 1
        %s767 = scalar_select %p766, %s38, 1
        %s768 = smul.addr %s767, 8
        %s769 = scalar_lea.vmem %s0, %s768
        %p770 = scmp.lt.s32.totalorder %s38, 1
        %s771 = scalar_select %p770, %s38, 1
        %s772 = smul.addr %s771, 8
        %s773 = scalar_lea.vmem %s1, %s772
        %p774 = scmp.lt.s32.totalorder %s38, 1
        %s775 = scalar_select %p774, %s38, 1
        %s776 = smul.addr %s775, 8
        %s777 = scalar_lea.vmem %s2, %s776
        %p778 = scmp.lt.s32.totalorder %s38, 1
        %s779 = scalar_select %p778, %s38, 1
        %s780 = scalar_lea.vmem %s3, %s779
        %v781 = vld [vmem:[%s769] sm:$0xff]
        %v782 = vld [vmem:[%s773] sm:$0xff]
        %v783 = vld [vmem:[%s777] sm:$0xff]
        %v784 = vld [vmem:[%s780] sm:$0x1]
        %v785 = vld [vmem:[%s4] sm:$0xff]
        %v786 = vld [vmem:[%s4 + $0x8] sm:$0xff]
        %v787 = vld [vmem:[%s4 + $0x10] sm:$0xff]
        %v788 = vld [vmem:[%s4 + $0x18] sm:$0xff]
        %v789 = vld [vmem:[%s5] sm:$0xff]
        %v790 = vld [vmem:[%s5 + $0x8] sm:$0xff]
        %v791 = vld [vmem:[%s5 + $0x10] sm:$0xff]
        %v792 = vld [vmem:[%s5 + $0x18] sm:$0xff]
        %v793 = vld [vmem:[%s6] sm:$0xff]
        %v794 = vld [vmem:[%s6 + $0x8] sm:$0xff]
        %v795 = vld [vmem:[%s6 + $0x10] sm:$0xff]
        %v796 = vld [vmem:[%s6 + $0x18] sm:$0xff]
        %v797 = vld [vmem:[%s7] sm:$0x1]
        %vm798 = vcmask 261120
        %v800 = vsel %vm798, %v781, 0
        %802 = vmatprep.subr.mxu0 0.0
        %803 = vmatpush1.msra.mxu0 0.0
        %804 = vmatprep.subr.mxu0 0.0
        %805 = vmatpush1.msra.mxu0 0.0
        %806 = vmatprep.subr.mxu0 0.0
        %807 = vmatpush1.msra.mxu0 0.0
        %808 = vmatprep.subr.mxu0 0.0
        %809 = vmatpush1.msra.mxu0 0.0
        %810 = vmatprep.subr.mxu0 0.0
        %811 = vmatpush1.msra.mxu0 0.0
        %812 = vmatprep.subr.mxu0 0.0
        %813 = vmatpush1.msra.mxu0 0.0
        %814 = vmatprep.subr.mxu0 0.0
        %815 = vmatpush1.msra.mxu0 0.0
        %816 = vmatprep.subr.mxu0 0.0
        %817 = vmatpush1.msra.mxu0 0.0
        %818 = vmatprep.subr.mxu0 0.0
        %819 = vmatpush1.msra.mxu0 0.0
        %820 = vmatprep.subr.mxu0 0.0
        %821 = vmatpush1.msra.mxu0 0.0
        %822 = vmatprep.subr.mxu0 0.0
        %823 = vmatpush1.msra.mxu0 0.0
        %824 = vmatprep.subr.mxu0 0.0
        %825 = vmatpush1.msra.mxu0 0.0
        %826 = vmatprep.subr.mxu0 0.0
        %827 = vmatpush1.msra.mxu0 %v788
        %828 = vmatprep.subr.mxu0 0.0
        %829 = vmatpush1.msra.mxu0 %v787
        %830 = vmatprep.subr.mxu0 0.0
        %831 = vmatpush1.msra.mxu0 %v786
        %832 = vmatprep.subr.mxu0 0.0
        %833 = vmatpush1.msra.mxu0 %v785
        %834 = vmatprep.subr.mxu0 0.0
        %835 = vmatpush2.msra.mxu0 0.0
        %836 = vmatprep.subr.mxu0 0.0
        %837 = vmatpush2.msra.mxu0 0.0
        %838 = vmatprep.subr.mxu0 0.0
        %839 = vmatpush2.msra.mxu0 0.0
        %840 = vmatprep.subr.mxu0 0.0
        %841 = vmatpush2.msra.mxu0 0.0
        %842 = vmatprep.subr.mxu0 0.0
        %843 = vmatpush2.msra.mxu0 0.0
        %844 = vmatprep.subr.mxu0 0.0
        %845 = vmatpush2.msra.mxu0 0.0
        %846 = vmatprep.subr.mxu0 0.0
        %847 = vmatpush2.msra.mxu0 0.0
        %848 = vmatprep.subr.mxu0 0.0
        %849 = vmatpush2.msra.mxu0 0.0
        %850 = vmatprep.subr.mxu0 0.0
        %851 = vmatpush2.msra.mxu0 0.0
        %852 = vmatprep.subr.mxu0 0.0
        %853 = vmatpush2.msra.mxu0 0.0
        %854 = vmatprep.subr.mxu0 0.0
        %855 = vmatpush2.msra.mxu0 0.0
        %856 = vmatprep.subr.mxu0 0.0
        %857 = vmatpush2.msra.mxu0 0.0
        %858 = vmatprep.subr.mxu0 0.0
        %859 = vmatpush2.msra.mxu0 0.0
        %860 = vmatprep.subr.mxu0 0.0
        %861 = vmatpush2.msra.mxu0 0.0
        %862 = vmatprep.subr.mxu0 0.0
        %863 = vmatpush2.msra.mxu0 0.0
        %864 = vmatprep.subr.mxu0 0.0
        %865 = vmatpush2.msra.mxu0 0.0
        %866 = vmatprep.mubr.f32.mxu0 0.0
        %867 = vmatmul.mubr.f32.gmra.mxu0 %v800
        %v868 = vpop.f32.mrf.mxu0
        %v869 = vadd.f32 0.0, %v868
        %v870 = vpop.f32.mrf.mxu0
        %871 = vdwg.mxu0
        %v872 = vmul.f32 %v869, 0.17677669
        %873 = vmatprep.subr.mxu0 0.0
        %874 = vmatpush1.msra.mxu0 0.0
        %875 = vmatprep.subr.mxu0 0.0
        %876 = vmatpush1.msra.mxu0 0.0
        %877 = vmatprep.subr.mxu0 0.0
        %878 = vmatpush1.msra.mxu0 0.0
        %879 = vmatprep.subr.mxu0 0.0
        %880 = vmatpush1.msra.mxu0 0.0
        %881 = vmatprep.subr.mxu0 0.0
        %882 = vmatpush1.msra.mxu0 0.0
        %883 = vmatprep.subr.mxu0 0.0
        %884 = vmatpush1.msra.mxu0 0.0
        %885 = vmatprep.subr.mxu0 0.0
        %886 = vmatpush1.msra.mxu0 0.0
        %887 = vmatprep.subr.mxu0 0.0
        %888 = vmatpush1.msra.mxu0 0.0
        %889 = vmatprep.subr.mxu0 0.0
        %890 = vmatpush1.msra.mxu0 0.0
        %891 = vmatprep.subr.mxu0 0.0
        %892 = vmatpush1.msra.mxu0 0.0
        %893 = vmatprep.subr.mxu0 0.0
        %894 = vmatpush1.msra.mxu0 0.0
        %895 = vmatprep.subr.mxu0 0.0
        %896 = vmatpush1.msra.mxu0 0.0
        %897 = vmatprep.subr.mxu0 0.0
        %898 = vmatpush1.msra.mxu0 %v792
        %899 = vmatprep.subr.mxu0 0.0
        %900 = vmatpush1.msra.mxu0 %v791
        %901 = vmatprep.subr.mxu0 0.0
        %902 = vmatpush1.msra.mxu0 %v790
        %903 = vmatprep.subr.mxu0 0.0
        %904 = vmatpush1.msra.mxu0 %v789
        %905 = vmatprep.subr.mxu0 0.0
        %906 = vmatpush2.msra.mxu0 0.0
        %907 = vmatprep.subr.mxu0 0.0
        %908 = vmatpush2.msra.mxu0 0.0
        %909 = vmatprep.subr.mxu0 0.0
        %910 = vmatpush2.msra.mxu0 0.0
        %911 = vmatprep.subr.mxu0 0.0
        %912 = vmatpush2.msra.mxu0 0.0
        %913 = vmatprep.subr.mxu0 0.0
        %914 = vmatpush2.msra.mxu0 0.0
        %915 = vmatprep.subr.mxu0 0.0
        %916 = vmatpush2.msra.mxu0 0.0
        %917 = vmatprep.subr.mxu0 0.0
        %918 = vmatpush2.msra.mxu0 0.0
        %919 = vmatprep.subr.mxu0 0.0
        %920 = vmatpush2.msra.mxu0 0.0
        %921 = vmatprep.subr.mxu0 0.0
        %922 = vmatpush2.msra.mxu0 0.0
        %923 = vmatprep.subr.mxu0 0.0
        %924 = vmatpush2.msra.mxu0 0.0
        %925 = vmatprep.subr.mxu0 0.0
        %926 = vmatpush2.msra.mxu0 0.0
        %927 = vmatprep.subr.mxu0 0.0
        %928 = vmatpush2.msra.mxu0 0.0
        %929 = vmatprep.subr.mxu0 0.0
        %930 = vmatpush2.msra.mxu0 0.0
        %931 = vmatprep.subr.mxu0 0.0
        %932 = vmatpush2.msra.mxu0 0.0
        %933 = vmatprep.subr.mxu0 0.0
        %934 = vmatpush2.msra.mxu0 0.0
        %935 = vmatprep.subr.mxu0 0.0
        %936 = vmatpush2.msra.mxu0 0.0
        %937 = vmatprep.mubr.f32.mxu0 0.0
        %938 = vmatmul.mubr.f32.gmra.mxu0 %v800
        %v939 = vpop.f32.mrf.mxu0
        %v940 = vadd.f32 0.0, %v939
        %v941 = vpop.f32.mrf.mxu0
        %942 = vdwg.mxu0
        %vm943 = vcmask 64512
        %v945 = vsel %vm943, %v872, 0
        %v948 = vsel %vm943, %v940, 0
        %950 = vmatprep.subr.mxu0 0.0
        %951 = vmatpush1.xpose.msra.mxu0 0.0
        %952 = vmatprep.subr.mxu0 0.0
        %953 = vmatpush1.xpose.msra.mxu0 0.0
        %954 = vmatprep.subr.mxu0 0.0
        %955 = vmatpush1.xpose.msra.mxu0 0.0
        %956 = vmatprep.subr.mxu0 0.0
        %957 = vmatpush1.xpose.msra.mxu0 0.0
        %958 = vmatprep.subr.mxu0 0.0
        %959 = vmatpush1.xpose.msra.mxu0 0.0
        %960 = vmatprep.subr.mxu0 0.0
        %961 = vmatpush1.xpose.msra.mxu0 0.0
        %962 = vmatprep.subr.mxu0 0.0
        %963 = vmatpush1.xpose.msra.mxu0 0.0
        %964 = vmatprep.subr.mxu0 0.0
        %965 = vmatpush1.xpose.msra.mxu0 0.0
        %966 = vmatprep.subr.mxu0 0.0
        %967 = vmatpush1.xpose.msra.mxu0 0.0
        %968 = vmatprep.subr.mxu0 0.0
        %969 = vmatpush1.xpose.msra.mxu0 0.0
        %970 = vmatprep.subr.mxu0 0.0
        %971 = vmatpush1.xpose.msra.mxu0 0.0
        %972 = vmatprep.subr.mxu0 0.0
        %973 = vmatpush1.xpose.msra.mxu0 0.0
        %974 = vmatprep.subr.mxu0 0.0
        %975 = vmatpush1.xpose.msra.mxu0 0.0
        %976 = vmatprep.subr.mxu0 0.0
        %977 = vmatpush1.xpose.msra.mxu0 0.0
        %978 = vmatprep.subr.mxu0 0.0
        %979 = vmatpush1.xpose.msra.mxu0 0.0
        %980 = vmatprep.subr.mxu0 0.0
        %981 = vmatpush1.xpose.msra.mxu0 %v948
        %982 = vmatprep.subr.mxu0 0.0
        %983 = vmatpush2.xpose.msra.mxu0 0.0
        %984 = vmatprep.subr.mxu0 0.0
        %985 = vmatpush2.xpose.msra.mxu0 0.0
        %986 = vmatprep.subr.mxu0 0.0
        %987 = vmatpush2.xpose.msra.mxu0 0.0
        %988 = vmatprep.subr.mxu0 0.0
        %989 = vmatpush2.xpose.msra.mxu0 0.0
        %990 = vmatprep.subr.mxu0 0.0
        %991 = vmatpush2.xpose.msra.mxu0 0.0
        %992 = vmatprep.subr.mxu0 0.0
        %993 = vmatpush2.xpose.msra.mxu0 0.0
        %994 = vmatprep.subr.mxu0 0.0
        %995 = vmatpush2.xpose.msra.mxu0 0.0
        %996 = vmatprep.subr.mxu0 0.0
        %997 = vmatpush2.xpose.msra.mxu0 0.0
        %998 = vmatprep.subr.mxu0 0.0
        %999 = vmatpush2.xpose.msra.mxu0 0.0
        %1000 = vmatprep.subr.mxu0 0.0
        %1001 = vmatpush2.xpose.msra.mxu0 0.0
        %1002 = vmatprep.subr.mxu0 0.0
        %1003 = vmatpush2.xpose.msra.mxu0 0.0
        %1004 = vmatprep.subr.mxu0 0.0
        %1005 = vmatpush2.xpose.msra.mxu0 0.0
        %1006 = vmatprep.subr.mxu0 0.0
        %1007 = vmatpush2.xpose.msra.mxu0 0.0
        %1008 = vmatprep.subr.mxu0 0.0
        %1009 = vmatpush2.xpose.msra.mxu0 0.0
        %1010 = vmatprep.subr.mxu0 0.0
        %1011 = vmatpush2.xpose.msra.mxu0 0.0
        %1012 = vmatprep.subr.mxu0 0.0
        %1013 = vmatpush2.xpose.msra.mxu0 0.0
        %1014 = vmatprep.mubr.f32.mxu0 0.0
        %1015 = vmatmul.mubr.f32.gmra.mxu0 %v945
        %v1016 = vpop.f32.mrf.mxu0
        %v1017 = vadd.f32 %v783, %v1016
        %v1018 = vpop.f32.mrf.mxu0
        %1019 = vdwg.mxu0
        %v1020 = vsel %vm943, %v1017, -inf
        %1021 = vmax.xlane.f32.xlu0 %v1020
        %v1022 = vpop.xlane.xlu0 %1021
        %v1023 = vsub.f32 %v1017, %v1022
        %v1024 = vmul.f32 %v1023, 1.442695
        %v1025 = vpow.pop %v1024
        %v1026 = vsel %vm943, %v1025, 0.0
        %1027 = vadd.xlane.f32.xlu0 %v1026
        %v1028 = vpop.xlane.xlu0 %1027
        %v1029 = vrcp.pop %v1028
        %v1030 = vmul.f32 %v1025, %v1029
        %1031 = vrot.lane.b32.xlu0 %v940, 96
        %v1032 = vpop.permute.xlu0 %1031
        %v1035 = vsel %vm943, %v1030, 0
        %1037 = vmatprep.subr.mxu0 0.0
        %1038 = vmatpush1.msra.mxu0 0.0
        %1039 = vmatprep.subr.mxu0 0.0
        %1040 = vmatpush1.msra.mxu0 0.0
        %1041 = vmatprep.subr.mxu0 0.0
        %1042 = vmatpush1.msra.mxu0 0.0
        %1043 = vmatprep.subr.mxu0 0.0
        %1044 = vmatpush1.msra.mxu0 0.0
        %1045 = vmatprep.subr.mxu0 0.0
        %1046 = vmatpush1.msra.mxu0 0.0
        %1047 = vmatprep.subr.mxu0 0.0
        %1048 = vmatpush1.msra.mxu0 0.0
        %1049 = vmatprep.subr.mxu0 0.0
        %1050 = vmatpush1.msra.mxu0 0.0
        %1051 = vmatprep.subr.mxu0 0.0
        %1052 = vmatpush1.msra.mxu0 0.0
        %1053 = vmatprep.subr.mxu0 0.0
        %1054 = vmatpush1.msra.mxu0 0.0
        %1055 = vmatprep.subr.mxu0 0.0
        %1056 = vmatpush1.msra.mxu0 0.0
        %1057 = vmatprep.subr.mxu0 0.0
        %1058 = vmatpush1.msra.mxu0 0.0
        %1059 = vmatprep.subr.mxu0 0.0
        %1060 = vmatpush1.msra.mxu0 0.0
        %1061 = vmatprep.subr.mxu0 0.0
        %1062 = vmatpush1.msra.mxu0 0.0
        %1063 = vmatprep.subr.mxu0 0.0
        %1064 = vmatpush1.msra.mxu0 0.0
        %1065 = vmatprep.subr.mxu0 0.0
        %1066 = vmatpush1.msra.mxu0 0.0
        %1067 = vmatprep.subr.mxu0 0.0
        %1068 = vmatpush1.msra.mxu0 %v1032
        %1069 = vmatprep.subr.mxu0 0.0
        %1070 = vmatpush2.msra.mxu0 0.0
        %1071 = vmatprep.subr.mxu0 0.0
        %1072 = vmatpush2.msra.mxu0 0.0
        %1073 = vmatprep.subr.mxu0 0.0
        %1074 = vmatpush2.msra.mxu0 0.0
        %1075 = vmatprep.subr.mxu0 0.0
        %1076 = vmatpush2.msra.mxu0 0.0
        %1077 = vmatprep.subr.mxu0 0.0
        %1078 = vmatpush2.msra.mxu0 0.0
        %1079 = vmatprep.subr.mxu0 0.0
        %1080 = vmatpush2.msra.mxu0 0.0
        %1081 = vmatprep.subr.mxu0 0.0
        %1082 = vmatpush2.msra.mxu0 0.0
        %1083 = vmatprep.subr.mxu0 0.0
        %1084 = vmatpush2.msra.mxu0 0.0
        %1085 = vmatprep.subr.mxu0 0.0
        %1086 = vmatpush2.msra.mxu0 0.0
        %1087 = vmatprep.subr.mxu0 0.0
        %1088 = vmatpush2.msra.mxu0 0.0
        %1089 = vmatprep.subr.mxu0 0.0
        %1090 = vmatpush2.msra.mxu0 0.0
        %1091 = vmatprep.subr.mxu0 0.0
        %1092 = vmatpush2.msra.mxu0 0.0
        %1093 = vmatprep.subr.mxu0 0.0
        %1094 = vmatpush2.msra.mxu0 0.0
        %1095 = vmatprep.subr.mxu0 0.0
        %1096 = vmatpush2.msra.mxu0 0.0
        %1097 = vmatprep.subr.mxu0 0.0
        %1098 = vmatpush2.msra.mxu0 0.0
        %1099 = vmatprep.subr.mxu0 0.0
        %1100 = vmatpush2.msra.mxu0 0.0
        %1101 = vmatprep.mubr.f32.mxu0 0.0
        %1102 = vmatmul.mubr.f32.gmra.mxu0 %v1035
        %v1103 = vpop.f32.mrf.mxu0
        %v1104 = vadd.f32 0.0, %v1103
        %v1105 = vpop.f32.mrf.mxu0
        %1106 = vdwg.mxu0
        %1107 = vrot.lane.b32.xlu0 %v872, 120
        %v1108 = vpop.permute.xlu0 %1107
        %1109 = vrot.lane.b32.xlu0 %v940, 120
        %v1110 = vpop.permute.xlu0 %1109
        %v1111 = vsel %vm943, %v1108, 0
        %v1113 = vsel %vm943, %v1110, 0
        %1115 = vmatprep.subr.mxu0 0.0
        %1116 = vmatpush1.xpose.msra.mxu0 0.0
        %1117 = vmatprep.subr.mxu0 0.0
        %1118 = vmatpush1.xpose.msra.mxu0 0.0
        %1119 = vmatprep.subr.mxu0 0.0
        %1120 = vmatpush1.xpose.msra.mxu0 0.0
        %1121 = vmatprep.subr.mxu0 0.0
        %1122 = vmatpush1.xpose.msra.mxu0 0.0
        %1123 = vmatprep.subr.mxu0 0.0
        %1124 = vmatpush1.xpose.msra.mxu0 0.0
        %1125 = vmatprep.subr.mxu0 0.0
        %1126 = vmatpush1.xpose.msra.mxu0 0.0
        %1127 = vmatprep.subr.mxu0 0.0
        %1128 = vmatpush1.xpose.msra.mxu0 0.0
        %1129 = vmatprep.subr.mxu0 0.0
        %1130 = vmatpush1.xpose.msra.mxu0 0.0
        %1131 = vmatprep.subr.mxu0 0.0
        %1132 = vmatpush1.xpose.msra.mxu0 0.0
        %1133 = vmatprep.subr.mxu0 0.0
        %1134 = vmatpush1.xpose.msra.mxu0 0.0
        %1135 = vmatprep.subr.mxu0 0.0
        %1136 = vmatpush1.xpose.msra.mxu0 0.0
        %1137 = vmatprep.subr.mxu0 0.0
        %1138 = vmatpush1.xpose.msra.mxu0 0.0
        %1139 = vmatprep.subr.mxu0 0.0
        %1140 = vmatpush1.xpose.msra.mxu0 0.0
        %1141 = vmatprep.subr.mxu0 0.0
        %1142 = vmatpush1.xpose.msra.mxu0 0.0
        %1143 = vmatprep.subr.mxu0 0.0
        %1144 = vmatpush1.xpose.msra.mxu0 0.0
        %1145 = vmatprep.subr.mxu0 0.0
        %1146 = vmatpush1.xpose.msra.mxu0 %v1113
        %1147 = vmatprep.subr.mxu0 0.0
        %1148 = vmatpush2.xpose.msra.mxu0 0.0
        %1149 = vmatprep.subr.mxu0 0.0
        %1150 = vmatpush2.xpose.msra.mxu0 0.0
        %1151 = vmatprep.subr.mxu0 0.0
        %1152 = vmatpush2.xpose.msra.mxu0 0.0
        %1153 = vmatprep.subr.mxu0 0.0
        %1154 = vmatpush2.xpose.msra.mxu0 0.0
        %1155 = vmatprep.subr.mxu0 0.0
        %1156 = vmatpush2.xpose.msra.mxu0 0.0
        %1157 = vmatprep.subr.mxu0 0.0
        %1158 = vmatpush2.xpose.msra.mxu0 0.0
        %1159 = vmatprep.subr.mxu0 0.0
        %1160 = vmatpush2.xpose.msra.mxu0 0.0
        %1161 = vmatprep.subr.mxu0 0.0
        %1162 = vmatpush2.xpose.msra.mxu0 0.0
        %1163 = vmatprep.subr.mxu0 0.0
        %1164 = vmatpush2.xpose.msra.mxu0 0.0
        %1165 = vmatprep.subr.mxu0 0.0
        %1166 = vmatpush2.xpose.msra.mxu0 0.0
        %1167 = vmatprep.subr.mxu0 0.0
        %1168 = vmatpush2.xpose.msra.mxu0 0.0
        %1169 = vmatprep.subr.mxu0 0.0
        %1170 = vmatpush2.xpose.msra.mxu0 0.0
        %1171 = vmatprep.subr.mxu0 0.0
        %1172 = vmatpush2.xpose.msra.mxu0 0.0
        %1173 = vmatprep.subr.mxu0 0.0
        %1174 = vmatpush2.xpose.msra.mxu0 0.0
        %1175 = vmatprep.subr.mxu0 0.0
        %1176 = vmatpush2.xpose.msra.mxu0 0.0
        %1177 = vmatprep.subr.mxu0 0.0
        %1178 = vmatpush2.xpose.msra.mxu0 0.0
        %1179 = vmatprep.mubr.f32.mxu0 0.0
        %1180 = vmatmul.mubr.f32.gmra.mxu0 %v1111
        %v1181 = vpop.f32.mrf.mxu0
        %v1182 = vadd.f32 %v783, %v1181
        %v1183 = vpop.f32.mrf.mxu0
        %1184 = vdwg.mxu0
        %v1185 = vsel %vm943, %v1182, -inf
        %1186 = vmax.xlane.f32.xlu0 %v1185
        %v1187 = vpop.xlane.xlu0 %1186
        %v1188 = vsub.f32 %v1182, %v1187
        %v1189 = vmul.f32 %v1188, 1.442695
        %v1190 = vpow.pop %v1189
        %v1191 = vsel %vm943, %v1190, 0.0
        %1192 = vadd.xlane.f32.xlu0 %v1191
        %v1193 = vpop.xlane.xlu0 %1192
        %v1194 = vrcp.pop %v1193
        %v1195 = vmul.f32 %v1190, %v1194
        %1196 = vrot.lane.b32.xlu0 %v940, 88
        %v1197 = vpop.permute.xlu0 %1196
        %v1200 = vsel %vm943, %v1195, 0
        %1202 = vmatprep.subr.mxu0 0.0
        %1203 = vmatpush1.msra.mxu0 0.0
        %1204 = vmatprep.subr.mxu0 0.0
        %1205 = vmatpush1.msra.mxu0 0.0
        %1206 = vmatprep.subr.mxu0 0.0
        %1207 = vmatpush1.msra.mxu0 0.0
        %1208 = vmatprep.subr.mxu0 0.0
        %1209 = vmatpush1.msra.mxu0 0.0
        %1210 = vmatprep.subr.mxu0 0.0
        %1211 = vmatpush1.msra.mxu0 0.0
        %1212 = vmatprep.subr.mxu0 0.0
        %1213 = vmatpush1.msra.mxu0 0.0
        %1214 = vmatprep.subr.mxu0 0.0
        %1215 = vmatpush1.msra.mxu0 0.0
        %1216 = vmatprep.subr.mxu0 0.0
        %1217 = vmatpush1.msra.mxu0 0.0
        %1218 = vmatprep.subr.mxu0 0.0
        %1219 = vmatpush1.msra.mxu0 0.0
        %1220 = vmatprep.subr.mxu0 0.0
        %1221 = vmatpush1.msra.mxu0 0.0
        %1222 = vmatprep.subr.mxu0 0.0
        %1223 = vmatpush1.msra.mxu0 0.0
        %1224 = vmatprep.subr.mxu0 0.0
        %1225 = vmatpush1.msra.mxu0 0.0
        %1226 = vmatprep.subr.mxu0 0.0
        %1227 = vmatpush1.msra.mxu0 0.0
        %1228 = vmatprep.subr.mxu0 0.0
        %1229 = vmatpush1.msra.mxu0 0.0
        %1230 = vmatprep.subr.mxu0 0.0
        %1231 = vmatpush1.msra.mxu0 0.0
        %1232 = vmatprep.subr.mxu0 0.0
        %1233 = vmatpush1.msra.mxu0 %v1197
        %1234 = vmatprep.subr.mxu0 0.0
        %1235 = vmatpush2.msra.mxu0 0.0
        %1236 = vmatprep.subr.mxu0 0.0
        %1237 = vmatpush2.msra.mxu0 0.0
        %1238 = vmatprep.subr.mxu0 0.0
        %1239 = vmatpush2.msra.mxu0 0.0
        %1240 = vmatprep.subr.mxu0 0.0
        %1241 = vmatpush2.msra.mxu0 0.0
        %1242 = vmatprep.subr.mxu0 0.0
        %1243 = vmatpush2.msra.mxu0 0.0
        %1244 = vmatprep.subr.mxu0 0.0
        %1245 = vmatpush2.msra.mxu0 0.0
        %1246 = vmatprep.subr.mxu0 0.0
        %1247 = vmatpush2.msra.mxu0 0.0
        %1248 = vmatprep.subr.mxu0 0.0
        %1249 = vmatpush2.msra.mxu0 0.0
        %1250 = vmatprep.subr.mxu0 0.0
        %1251 = vmatpush2.msra.mxu0 0.0
        %1252 = vmatprep.subr.mxu0 0.0
        %1253 = vmatpush2.msra.mxu0 0.0
        %1254 = vmatprep.subr.mxu0 0.0
        %1255 = vmatpush2.msra.mxu0 0.0
        %1256 = vmatprep.subr.mxu0 0.0
        %1257 = vmatpush2.msra.mxu0 0.0
        %1258 = vmatprep.subr.mxu0 0.0
        %1259 = vmatpush2.msra.mxu0 0.0
        %1260 = vmatprep.subr.mxu0 0.0
        %1261 = vmatpush2.msra.mxu0 0.0
        %1262 = vmatprep.subr.mxu0 0.0
        %1263 = vmatpush2.msra.mxu0 0.0
        %1264 = vmatprep.subr.mxu0 0.0
        %1265 = vmatpush2.msra.mxu0 0.0
        %1266 = vmatprep.mubr.f32.mxu0 0.0
        %1267 = vmatmul.mubr.f32.gmra.mxu0 %v1200
        %v1268 = vpop.f32.mrf.mxu0
        %v1269 = vadd.f32 0.0, %v1268
        %v1270 = vpop.f32.mrf.mxu0
        %1271 = vdwg.mxu0
        %v1273 = vsel %vm943, %v1269, 0
        %1275 = vmatprep.subr.mxu0 0.0
        %1276 = vmatpush1.msra.mxu0 0.0
        %1277 = vmatprep.subr.mxu0 0.0
        %1278 = vmatpush1.msra.mxu0 0.0
        %1279 = vmatprep.subr.mxu0 0.0
        %1280 = vmatpush1.msra.mxu0 0.0
        %1281 = vmatprep.subr.mxu0 0.0
        %1282 = vmatpush1.msra.mxu0 0.0
        %1283 = vmatprep.subr.mxu0 0.0
        %1284 = vmatpush1.msra.mxu0 0.0
        %1285 = vmatprep.subr.mxu0 0.0
        %1286 = vmatpush1.msra.mxu0 0.0
        %1287 = vmatprep.subr.mxu0 0.0
        %1288 = vmatpush1.msra.mxu0 0.0
        %1289 = vmatprep.subr.mxu0 0.0
        %1290 = vmatpush1.msra.mxu0 0.0
        %1291 = vmatprep.subr.mxu0 0.0
        %1292 = vmatpush1.msra.mxu0 0.0
        %1293 = vmatprep.subr.mxu0 0.0
        %1294 = vmatpush1.msra.mxu0 0.0
        %1295 = vmatprep.subr.mxu0 0.0
        %1296 = vmatpush1.msra.mxu0 0.0
        %1297 = vmatprep.subr.mxu0 0.0
        %1298 = vmatpush1.msra.mxu0 0.0
        %1299 = vmatprep.subr.mxu0 0.0
        %1300 = vmatpush1.msra.mxu0 0.0
        %1301 = vmatprep.subr.mxu0 0.0
        %1302 = vmatpush1.msra.mxu0 0.0
        %1303 = vmatprep.subr.mxu0 0.0
        %1304 = vmatpush1.msra.mxu0 0.0
        %1305 = vmatprep.subr.mxu0 0.0
        %1306 = vmatpush1.msra.mxu0 %v794
        %1307 = vmatprep.subr.mxu0 0.0
        %1308 = vmatpush2.msra.mxu0 0.0
        %1309 = vmatprep.subr.mxu0 0.0
        %1310 = vmatpush2.msra.mxu0 0.0
        %1311 = vmatprep.subr.mxu0 0.0
        %1312 = vmatpush2.msra.mxu0 0.0
        %1313 = vmatprep.subr.mxu0 0.0
        %1314 = vmatpush2.msra.mxu0 0.0
        %1315 = vmatprep.subr.mxu0 0.0
        %1316 = vmatpush2.msra.mxu0 0.0
        %1317 = vmatprep.subr.mxu0 0.0
        %1318 = vmatpush2.msra.mxu0 0.0
        %1319 = vmatprep.subr.mxu0 0.0
        %1320 = vmatpush2.msra.mxu0 0.0
        %1321 = vmatprep.subr.mxu0 0.0
        %1322 = vmatpush2.msra.mxu0 0.0
        %1323 = vmatprep.subr.mxu0 0.0
        %1324 = vmatpush2.msra.mxu0 0.0
        %1325 = vmatprep.subr.mxu0 0.0
        %1326 = vmatpush2.msra.mxu0 0.0
        %1327 = vmatprep.subr.mxu0 0.0
        %1328 = vmatpush2.msra.mxu0 0.0
        %1329 = vmatprep.subr.mxu0 0.0
        %1330 = vmatpush2.msra.mxu0 0.0
        %1331 = vmatprep.subr.mxu0 0.0
        %1332 = vmatpush2.msra.mxu0 0.0
        %1333 = vmatprep.subr.mxu0 0.0
        %1334 = vmatpush2.msra.mxu0 0.0
        %1335 = vmatprep.subr.mxu0 0.0
        %1336 = vmatpush2.msra.mxu0 0.0
        %1337 = vmatprep.subr.mxu0 0.0
        %1338 = vmatpush2.msra.mxu0 0.0
        %1339 = vmatprep.mubr.f32.mxu0 0.0
        %1340 = vmatmul.mubr.f32.gmra.mxu0 %v1273
        %v1341 = vpop.f32.mrf.mxu0
        %v1342 = vadd.f32 0.0, %v1341
        %v1343 = vpop.f32.mrf.mxu0
        %1344 = vdwg.mxu0
        %v1346 = vsel %vm943, %v1104, 0
        %1348 = vmatprep.subr.mxu0 0.0
        %1349 = vmatpush1.msra.mxu0 0.0
        %1350 = vmatprep.subr.mxu0 0.0
        %1351 = vmatpush1.msra.mxu0 0.0
        %1352 = vmatprep.subr.mxu0 0.0
        %1353 = vmatpush1.msra.mxu0 0.0
        %1354 = vmatprep.subr.mxu0 0.0
        %1355 = vmatpush1.msra.mxu0 0.0
        %1356 = vmatprep.subr.mxu0 0.0
        %1357 = vmatpush1.msra.mxu0 0.0
        %1358 = vmatprep.subr.mxu0 0.0
        %1359 = vmatpush1.msra.mxu0 0.0
        %1360 = vmatprep.subr.mxu0 0.0
        %1361 = vmatpush1.msra.mxu0 0.0
        %1362 = vmatprep.subr.mxu0 0.0
        %1363 = vmatpush1.msra.mxu0 0.0
        %1364 = vmatprep.subr.mxu0 0.0
        %1365 = vmatpush1.msra.mxu0 0.0
        %1366 = vmatprep.subr.mxu0 0.0
        %1367 = vmatpush1.msra.mxu0 0.0
        %1368 = vmatprep.subr.mxu0 0.0
        %1369 = vmatpush1.msra.mxu0 0.0
        %1370 = vmatprep.subr.mxu0 0.0
        %1371 = vmatpush1.msra.mxu0 0.0
        %1372 = vmatprep.subr.mxu0 0.0
        %1373 = vmatpush1.msra.mxu0 0.0
        %1374 = vmatprep.subr.mxu0 0.0
        %1375 = vmatpush1.msra.mxu0 0.0
        %1376 = vmatprep.subr.mxu0 0.0
        %1377 = vmatpush1.msra.mxu0 0.0
        %1378 = vmatprep.subr.mxu0 0.0
        %1379 = vmatpush1.msra.mxu0 %v793
        %1380 = vmatprep.subr.mxu0 0.0
        %1381 = vmatpush2.msra.mxu0 0.0
        %1382 = vmatprep.subr.mxu0 0.0
        %1383 = vmatpush2.msra.mxu0 0.0
        %1384 = vmatprep.subr.mxu0 0.0
        %1385 = vmatpush2.msra.mxu0 0.0
        %1386 = vmatprep.subr.mxu0 0.0
        %1387 = vmatpush2.msra.mxu0 0.0
        %1388 = vmatprep.subr.mxu0 0.0
        %1389 = vmatpush2.msra.mxu0 0.0
        %1390 = vmatprep.subr.mxu0 0.0
        %1391 = vmatpush2.msra.mxu0 0.0
        %1392 = vmatprep.subr.mxu0 0.0
        %1393 = vmatpush2.msra.mxu0 0.0
        %1394 = vmatprep.subr.mxu0 0.0
        %1395 = vmatpush2.msra.mxu0 0.0
        %1396 = vmatprep.subr.mxu0 0.0
        %1397 = vmatpush2.msra.mxu0 0.0
        %1398 = vmatprep.subr.mxu0 0.0
        %1399 = vmatpush2.msra.mxu0 0.0
        %1400 = vmatprep.subr.mxu0 0.0
        %1401 = vmatpush2.msra.mxu0 0.0
        %1402 = vmatprep.subr.mxu0 0.0
        %1403 = vmatpush2.msra.mxu0 0.0
        %1404 = vmatprep.subr.mxu0 0.0
        %1405 = vmatpush2.msra.mxu0 0.0
        %1406 = vmatprep.subr.mxu0 0.0
        %1407 = vmatpush2.msra.mxu0 0.0
        %1408 = vmatprep.subr.mxu0 0.0
        %1409 = vmatpush2.msra.mxu0 0.0
        %1410 = vmatprep.subr.mxu0 0.0
        %1411 = vmatpush2.msra.mxu0 0.0
        %1412 = vmatprep.mubr.f32.mxu0 0.0
        %1413 = vmatmul.mubr.f32.gmra.mxu0 %v1346
        %v1414 = vpop.f32.mrf.mxu0
        %v1415 = vadd.f32 %v1342, %v1414
        %v1416 = vpop.f32.mrf.mxu0
        %1417 = vdwg.mxu0
        %1418 = vrot.lane.b32.xlu0 %v872, 112
        %v1419 = vpop.permute.xlu0 %1418
        %1420 = vrot.lane.b32.xlu0 %v940, 112
        %v1421 = vpop.permute.xlu0 %1420
        %v1422 = vsel %vm943, %v1419, 0
        %v1424 = vsel %vm943, %v1421, 0
        %1426 = vmatprep.subr.mxu0 0.0
        %1427 = vmatpush1.xpose.msra.mxu0 0.0
        %1428 = vmatprep.subr.mxu0 0.0
        %1429 = vmatpush1.xpose.msra.mxu0 0.0
        %1430 = vmatprep.subr.mxu0 0.0
        %1431 = vmatpush1.xpose.msra.mxu0 0.0
        %1432 = vmatprep.subr.mxu0 0.0
        %1433 = vmatpush1.xpose.msra.mxu0 0.0
        %1434 = vmatprep.subr.mxu0 0.0
        %1435 = vmatpush1.xpose.msra.mxu0 0.0
        %1436 = vmatprep.subr.mxu0 0.0
        %1437 = vmatpush1.xpose.msra.mxu0 0.0
        %1438 = vmatprep.subr.mxu0 0.0
        %1439 = vmatpush1.xpose.msra.mxu0 0.0
        %1440 = vmatprep.subr.mxu0 0.0
        %1441 = vmatpush1.xpose.msra.mxu0 0.0
        %1442 = vmatprep.subr.mxu0 0.0
        %1443 = vmatpush1.xpose.msra.mxu0 0.0
        %1444 = vmatprep.subr.mxu0 0.0
        %1445 = vmatpush1.xpose.msra.mxu0 0.0
        %1446 = vmatprep.subr.mxu0 0.0
        %1447 = vmatpush1.xpose.msra.mxu0 0.0
        %1448 = vmatprep.subr.mxu0 0.0
        %1449 = vmatpush1.xpose.msra.mxu0 0.0
        %1450 = vmatprep.subr.mxu0 0.0
        %1451 = vmatpush1.xpose.msra.mxu0 0.0
        %1452 = vmatprep.subr.mxu0 0.0
        %1453 = vmatpush1.xpose.msra.mxu0 0.0
        %1454 = vmatprep.subr.mxu0 0.0
        %1455 = vmatpush1.xpose.msra.mxu0 0.0
        %1456 = vmatprep.subr.mxu0 0.0
        %1457 = vmatpush1.xpose.msra.mxu0 %v1424
        %1458 = vmatprep.subr.mxu0 0.0
        %1459 = vmatpush2.xpose.msra.mxu0 0.0
        %1460 = vmatprep.subr.mxu0 0.0
        %1461 = vmatpush2.xpose.msra.mxu0 0.0
        %1462 = vmatprep.subr.mxu0 0.0
        %1463 = vmatpush2.xpose.msra.mxu0 0.0
        %1464 = vmatprep.subr.mxu0 0.0
        %1465 = vmatpush2.xpose.msra.mxu0 0.0
        %1466 = vmatprep.subr.mxu0 0.0
        %1467 = vmatpush2.xpose.msra.mxu0 0.0
        %1468 = vmatprep.subr.mxu0 0.0
        %1469 = vmatpush2.xpose.msra.mxu0 0.0
        %1470 = vmatprep.subr.mxu0 0.0
        %1471 = vmatpush2.xpose.msra.mxu0 0.0
        %1472 = vmatprep.subr.mxu0 0.0
        %1473 = vmatpush2.xpose.msra.mxu0 0.0
        %1474 = vmatprep.subr.mxu0 0.0
        %1475 = vmatpush2.xpose.msra.mxu0 0.0
        %1476 = vmatprep.subr.mxu0 0.0
        %1477 = vmatpush2.xpose.msra.mxu0 0.0
        %1478 = vmatprep.subr.mxu0 0.0
        %1479 = vmatpush2.xpose.msra.mxu0 0.0
        %1480 = vmatprep.subr.mxu0 0.0
        %1481 = vmatpush2.xpose.msra.mxu0 0.0
        %1482 = vmatprep.subr.mxu0 0.0
        %1483 = vmatpush2.xpose.msra.mxu0 0.0
        %1484 = vmatprep.subr.mxu0 0.0
        %1485 = vmatpush2.xpose.msra.mxu0 0.0
        %1486 = vmatprep.subr.mxu0 0.0
        %1487 = vmatpush2.xpose.msra.mxu0 0.0
        %1488 = vmatprep.subr.mxu0 0.0
        %1489 = vmatpush2.xpose.msra.mxu0 0.0
        %1490 = vmatprep.mubr.f32.mxu0 0.0
        %1491 = vmatmul.mubr.f32.gmra.mxu0 %v1422
        %v1492 = vpop.f32.mrf.mxu0
        %v1493 = vadd.f32 %v783, %v1492
        %v1494 = vpop.f32.mrf.mxu0
        %1495 = vdwg.mxu0
        %v1496 = vsel %vm943, %v1493, -inf
        %1497 = vmax.xlane.f32.xlu0 %v1496
        %v1498 = vpop.xlane.xlu0 %1497
        %v1499 = vsub.f32 %v1493, %v1498
        %v1500 = vmul.f32 %v1499, 1.442695
        %v1501 = vpow.pop %v1500
        %v1502 = vsel %vm943, %v1501, 0.0
        %1503 = vadd.xlane.f32.xlu0 %v1502
        %v1504 = vpop.xlane.xlu0 %1503
        %v1505 = vrcp.pop %v1504
        %v1506 = vmul.f32 %v1501, %v1505
        %1507 = vrot.lane.b32.xlu0 %v940, 80
        %v1508 = vpop.permute.xlu0 %1507
        %v1511 = vsel %vm943, %v1506, 0
        %1513 = vmatprep.subr.mxu0 0.0
        %1514 = vmatpush1.msra.mxu0 0.0
        %1515 = vmatprep.subr.mxu0 0.0
        %1516 = vmatpush1.msra.mxu0 0.0
        %1517 = vmatprep.subr.mxu0 0.0
        %1518 = vmatpush1.msra.mxu0 0.0
        %1519 = vmatprep.subr.mxu0 0.0
        %1520 = vmatpush1.msra.mxu0 0.0
        %1521 = vmatprep.subr.mxu0 0.0
        %1522 = vmatpush1.msra.mxu0 0.0
        %1523 = vmatprep.subr.mxu0 0.0
        %1524 = vmatpush1.msra.mxu0 0.0
        %1525 = vmatprep.subr.mxu0 0.0
        %1526 = vmatpush1.msra.mxu0 0.0
        %1527 = vmatprep.subr.mxu0 0.0
        %1528 = vmatpush1.msra.mxu0 0.0
        %1529 = vmatprep.subr.mxu0 0.0
        %1530 = vmatpush1.msra.mxu0 0.0
        %1531 = vmatprep.subr.mxu0 0.0
        %1532 = vmatpush1.msra.mxu0 0.0
        %1533 = vmatprep.subr.mxu0 0.0
        %1534 = vmatpush1.msra.mxu0 0.0
        %1535 = vmatprep.subr.mxu0 0.0
        %1536 = vmatpush1.msra.mxu0 0.0
        %1537 = vmatprep.subr.mxu0 0.0
        %1538 = vmatpush1.msra.mxu0 0.0
        %1539 = vmatprep.subr.mxu0 0.0
        %1540 = vmatpush1.msra.mxu0 0.0
        %1541 = vmatprep.subr.mxu0 0.0
        %1542 = vmatpush1.msra.mxu0 0.0
        %1543 = vmatprep.subr.mxu0 0.0
        %1544 = vmatpush1.msra.mxu0 %v1508
        %1545 = vmatprep.subr.mxu0 0.0
        %1546 = vmatpush2.msra.mxu0 0.0
        %1547 = vmatprep.subr.mxu0 0.0
        %1548 = vmatpush2.msra.mxu0 0.0
        %1549 = vmatprep.subr.mxu0 0.0
        %1550 = vmatpush2.msra.mxu0 0.0
        %1551 = vmatprep.subr.mxu0 0.0
        %1552 = vmatpush2.msra.mxu0 0.0
        %1553 = vmatprep.subr.mxu0 0.0
        %1554 = vmatpush2.msra.mxu0 0.0
        %1555 = vmatprep.subr.mxu0 0.0
        %1556 = vmatpush2.msra.mxu0 0.0
        %1557 = vmatprep.subr.mxu0 0.0
        %1558 = vmatpush2.msra.mxu0 0.0
        %1559 = vmatprep.subr.mxu0 0.0
        %1560 = vmatpush2.msra.mxu0 0.0
        %1561 = vmatprep.subr.mxu0 0.0
        %1562 = vmatpush2.msra.mxu0 0.0
        %1563 = vmatprep.subr.mxu0 0.0
        %1564 = vmatpush2.msra.mxu0 0.0
        %1565 = vmatprep.subr.mxu0 0.0
        %1566 = vmatpush2.msra.mxu0 0.0
        %1567 = vmatprep.subr.mxu0 0.0
        %1568 = vmatpush2.msra.mxu0 0.0
        %1569 = vmatprep.subr.mxu0 0.0
        %1570 = vmatpush2.msra.mxu0 0.0
        %1571 = vmatprep.subr.mxu0 0.0
        %1572 = vmatpush2.msra.mxu0 0.0
        %1573 = vmatprep.subr.mxu0 0.0
        %1574 = vmatpush2.msra.mxu0 0.0
        %1575 = vmatprep.subr.mxu0 0.0
        %1576 = vmatpush2.msra.mxu0 0.0
        %1577 = vmatprep.mubr.f32.mxu0 0.0
        %1578 = vmatmul.mubr.f32.gmra.mxu0 %v1511
        %v1579 = vpop.f32.mrf.mxu0
        %v1580 = vadd.f32 0.0, %v1579
        %v1581 = vpop.f32.mrf.mxu0
        %1582 = vdwg.mxu0
        %v1584 = vsel %vm943, %v1580, 0
        %1586 = vmatprep.subr.mxu0 0.0
        %1587 = vmatpush1.msra.mxu0 0.0
        %1588 = vmatprep.subr.mxu0 0.0
        %1589 = vmatpush1.msra.mxu0 0.0
        %1590 = vmatprep.subr.mxu0 0.0
        %1591 = vmatpush1.msra.mxu0 0.0
        %1592 = vmatprep.subr.mxu0 0.0
        %1593 = vmatpush1.msra.mxu0 0.0
        %1594 = vmatprep.subr.mxu0 0.0
        %1595 = vmatpush1.msra.mxu0 0.0
        %1596 = vmatprep.subr.mxu0 0.0
        %1597 = vmatpush1.msra.mxu0 0.0
        %1598 = vmatprep.subr.mxu0 0.0
        %1599 = vmatpush1.msra.mxu0 0.0
        %1600 = vmatprep.subr.mxu0 0.0
        %1601 = vmatpush1.msra.mxu0 0.0
        %1602 = vmatprep.subr.mxu0 0.0
        %1603 = vmatpush1.msra.mxu0 0.0
        %1604 = vmatprep.subr.mxu0 0.0
        %1605 = vmatpush1.msra.mxu0 0.0
        %1606 = vmatprep.subr.mxu0 0.0
        %1607 = vmatpush1.msra.mxu0 0.0
        %1608 = vmatprep.subr.mxu0 0.0
        %1609 = vmatpush1.msra.mxu0 0.0
        %1610 = vmatprep.subr.mxu0 0.0
        %1611 = vmatpush1.msra.mxu0 0.0
        %1612 = vmatprep.subr.mxu0 0.0
        %1613 = vmatpush1.msra.mxu0 0.0
        %1614 = vmatprep.subr.mxu0 0.0
        %1615 = vmatpush1.msra.mxu0 0.0
        %1616 = vmatprep.subr.mxu0 0.0
        %1617 = vmatpush1.msra.mxu0 %v795
        %1618 = vmatprep.subr.mxu0 0.0
        %1619 = vmatpush2.msra.mxu0 0.0
        %1620 = vmatprep.subr.mxu0 0.0
        %1621 = vmatpush2.msra.mxu0 0.0
        %1622 = vmatprep.subr.mxu0 0.0
        %1623 = vmatpush2.msra.mxu0 0.0
        %1624 = vmatprep.subr.mxu0 0.0
        %1625 = vmatpush2.msra.mxu0 0.0
        %1626 = vmatprep.subr.mxu0 0.0
        %1627 = vmatpush2.msra.mxu0 0.0
        %1628 = vmatprep.subr.mxu0 0.0
        %1629 = vmatpush2.msra.mxu0 0.0
        %1630 = vmatprep.subr.mxu0 0.0
        %1631 = vmatpush2.msra.mxu0 0.0
        %1632 = vmatprep.subr.mxu0 0.0
        %1633 = vmatpush2.msra.mxu0 0.0
        %1634 = vmatprep.subr.mxu0 0.0
        %1635 = vmatpush2.msra.mxu0 0.0
        %1636 = vmatprep.subr.mxu0 0.0
        %1637 = vmatpush2.msra.mxu0 0.0
        %1638 = vmatprep.subr.mxu0 0.0
        %1639 = vmatpush2.msra.mxu0 0.0
        %1640 = vmatprep.subr.mxu0 0.0
        %1641 = vmatpush2.msra.mxu0 0.0
        %1642 = vmatprep.subr.mxu0 0.0
        %1643 = vmatpush2.msra.mxu0 0.0
        %1644 = vmatprep.subr.mxu0 0.0
        %1645 = vmatpush2.msra.mxu0 0.0
        %1646 = vmatprep.subr.mxu0 0.0
        %1647 = vmatpush2.msra.mxu0 0.0
        %1648 = vmatprep.subr.mxu0 0.0
        %1649 = vmatpush2.msra.mxu0 0.0
        %1650 = vmatprep.mubr.f32.mxu0 0.0
        %1651 = vmatmul.mubr.f32.gmra.mxu0 %v1584
        %v1652 = vpop.f32.mrf.mxu0
        %v1653 = vadd.f32 0.0, %v1652
        %v1654 = vpop.f32.mrf.mxu0
        %1655 = vdwg.mxu0
        %v1656 = vadd.f32 %v1415, %v1653
        %1657 = vrot.lane.b32.xlu0 %v872, 104
        %v1658 = vpop.permute.xlu0 %1657
        %1659 = vrot.lane.b32.xlu0 %v940, 104
        %v1660 = vpop.permute.xlu0 %1659
        %v1661 = vsel %vm943, %v1658, 0
        %v1663 = vsel %vm943, %v1660, 0
        %1665 = vmatprep.subr.mxu0 0.0
        %1666 = vmatpush1.xpose.msra.mxu0 0.0
        %1667 = vmatprep.subr.mxu0 0.0
        %1668 = vmatpush1.xpose.msra.mxu0 0.0
        %1669 = vmatprep.subr.mxu0 0.0
        %1670 = vmatpush1.xpose.msra.mxu0 0.0
        %1671 = vmatprep.subr.mxu0 0.0
        %1672 = vmatpush1.xpose.msra.mxu0 0.0
        %1673 = vmatprep.subr.mxu0 0.0
        %1674 = vmatpush1.xpose.msra.mxu0 0.0
        %1675 = vmatprep.subr.mxu0 0.0
        %1676 = vmatpush1.xpose.msra.mxu0 0.0
        %1677 = vmatprep.subr.mxu0 0.0
        %1678 = vmatpush1.xpose.msra.mxu0 0.0
        %1679 = vmatprep.subr.mxu0 0.0
        %1680 = vmatpush1.xpose.msra.mxu0 0.0
        %1681 = vmatprep.subr.mxu0 0.0
        %1682 = vmatpush1.xpose.msra.mxu0 0.0
        %1683 = vmatprep.subr.mxu0 0.0
        %1684 = vmatpush1.xpose.msra.mxu0 0.0
        %1685 = vmatprep.subr.mxu0 0.0
        %1686 = vmatpush1.xpose.msra.mxu0 0.0
        %1687 = vmatprep.subr.mxu0 0.0
        %1688 = vmatpush1.xpose.msra.mxu0 0.0
        %1689 = vmatprep.subr.mxu0 0.0
        %1690 = vmatpush1.xpose.msra.mxu0 0.0
        %1691 = vmatprep.subr.mxu0 0.0
        %1692 = vmatpush1.xpose.msra.mxu0 0.0
        %1693 = vmatprep.subr.mxu0 0.0
        %1694 = vmatpush1.xpose.msra.mxu0 0.0
        %1695 = vmatprep.subr.mxu0 0.0
        %1696 = vmatpush1.xpose.msra.mxu0 %v1663
        %1697 = vmatprep.subr.mxu0 0.0
        %1698 = vmatpush2.xpose.msra.mxu0 0.0
        %1699 = vmatprep.subr.mxu0 0.0
        %1700 = vmatpush2.xpose.msra.mxu0 0.0
        %1701 = vmatprep.subr.mxu0 0.0
        %1702 = vmatpush2.xpose.msra.mxu0 0.0
        %1703 = vmatprep.subr.mxu0 0.0
        %1704 = vmatpush2.xpose.msra.mxu0 0.0
        %1705 = vmatprep.subr.mxu0 0.0
        %1706 = vmatpush2.xpose.msra.mxu0 0.0
        %1707 = vmatprep.subr.mxu0 0.0
        %1708 = vmatpush2.xpose.msra.mxu0 0.0
        %1709 = vmatprep.subr.mxu0 0.0
        %1710 = vmatpush2.xpose.msra.mxu0 0.0
        %1711 = vmatprep.subr.mxu0 0.0
        %1712 = vmatpush2.xpose.msra.mxu0 0.0
        %1713 = vmatprep.subr.mxu0 0.0
        %1714 = vmatpush2.xpose.msra.mxu0 0.0
        %1715 = vmatprep.subr.mxu0 0.0
        %1716 = vmatpush2.xpose.msra.mxu0 0.0
        %1717 = vmatprep.subr.mxu0 0.0
        %1718 = vmatpush2.xpose.msra.mxu0 0.0
        %1719 = vmatprep.subr.mxu0 0.0
        %1720 = vmatpush2.xpose.msra.mxu0 0.0
        %1721 = vmatprep.subr.mxu0 0.0
        %1722 = vmatpush2.xpose.msra.mxu0 0.0
        %1723 = vmatprep.subr.mxu0 0.0
        %1724 = vmatpush2.xpose.msra.mxu0 0.0
        %1725 = vmatprep.subr.mxu0 0.0
        %1726 = vmatpush2.xpose.msra.mxu0 0.0
        %1727 = vmatprep.subr.mxu0 0.0
        %1728 = vmatpush2.xpose.msra.mxu0 0.0
        %1729 = vmatprep.mubr.f32.mxu0 0.0
        %1730 = vmatmul.mubr.f32.gmra.mxu0 %v1661
        %v1731 = vpop.f32.mrf.mxu0
        %v1732 = vadd.f32 %v783, %v1731
        %v1733 = vpop.f32.mrf.mxu0
        %1734 = vdwg.mxu0
        %v1735 = vsel %vm943, %v1732, -inf
        %1736 = vmax.xlane.f32.xlu0 %v1735
        %v1737 = vpop.xlane.xlu0 %1736
        %v1738 = vsub.f32 %v1732, %v1737
        %v1739 = vmul.f32 %v1738, 1.442695
        %v1740 = vpow.pop %v1739
        %v1741 = vsel %vm943, %v1740, 0.0
        %1742 = vadd.xlane.f32.xlu0 %v1741
        %v1743 = vpop.xlane.xlu0 %1742
        %v1744 = vrcp.pop %v1743
        %v1745 = vmul.f32 %v1740, %v1744
        %1746 = vrot.lane.b32.xlu0 %v940, 72
        %v1747 = vpop.permute.xlu0 %1746
        %v1750 = vsel %vm943, %v1745, 0
        %1752 = vmatprep.subr.mxu0 0.0
        %1753 = vmatpush1.msra.mxu0 0.0
        %1754 = vmatprep.subr.mxu0 0.0
        %1755 = vmatpush1.msra.mxu0 0.0
        %1756 = vmatprep.subr.mxu0 0.0
        %1757 = vmatpush1.msra.mxu0 0.0
        %1758 = vmatprep.subr.mxu0 0.0
        %1759 = vmatpush1.msra.mxu0 0.0
        %1760 = vmatprep.subr.mxu0 0.0
        %1761 = vmatpush1.msra.mxu0 0.0
        %1762 = vmatprep.subr.mxu0 0.0
        %1763 = vmatpush1.msra.mxu0 0.0
        %1764 = vmatprep.subr.mxu0 0.0
        %1765 = vmatpush1.msra.mxu0 0.0
        %1766 = vmatprep.subr.mxu0 0.0
        %1767 = vmatpush1.msra.mxu0 0.0
        %1768 = vmatprep.subr.mxu0 0.0
        %1769 = vmatpush1.msra.mxu0 0.0
        %1770 = vmatprep.subr.mxu0 0.0
        %1771 = vmatpush1.msra.mxu0 0.0
        %1772 = vmatprep.subr.mxu0 0.0
        %1773 = vmatpush1.msra.mxu0 0.0
        %1774 = vmatprep.subr.mxu0 0.0
        %1775 = vmatpush1.msra.mxu0 0.0
        %1776 = vmatprep.subr.mxu0 0.0
        %1777 = vmatpush1.msra.mxu0 0.0
        %1778 = vmatprep.subr.mxu0 0.0
        %1779 = vmatpush1.msra.mxu0 0.0
        %1780 = vmatprep.subr.mxu0 0.0
        %1781 = vmatpush1.msra.mxu0 0.0
        %1782 = vmatprep.subr.mxu0 0.0
        %1783 = vmatpush1.msra.mxu0 %v1747
        %1784 = vmatprep.subr.mxu0 0.0
        %1785 = vmatpush2.msra.mxu0 0.0
        %1786 = vmatprep.subr.mxu0 0.0
        %1787 = vmatpush2.msra.mxu0 0.0
        %1788 = vmatprep.subr.mxu0 0.0
        %1789 = vmatpush2.msra.mxu0 0.0
        %1790 = vmatprep.subr.mxu0 0.0
        %1791 = vmatpush2.msra.mxu0 0.0
        %1792 = vmatprep.subr.mxu0 0.0
        %1793 = vmatpush2.msra.mxu0 0.0
        %1794 = vmatprep.subr.mxu0 0.0
        %1795 = vmatpush2.msra.mxu0 0.0
        %1796 = vmatprep.subr.mxu0 0.0
        %1797 = vmatpush2.msra.mxu0 0.0
        %1798 = vmatprep.subr.mxu0 0.0
        %1799 = vmatpush2.msra.mxu0 0.0
        %1800 = vmatprep.subr.mxu0 0.0
        %1801 = vmatpush2.msra.mxu0 0.0
        %1802 = vmatprep.subr.mxu0 0.0
        %1803 = vmatpush2.msra.mxu0 0.0
        %1804 = vmatprep.subr.mxu0 0.0
        %1805 = vmatpush2.msra.mxu0 0.0
        %1806 = vmatprep.subr.mxu0 0.0
        %1807 = vmatpush2.msra.mxu0 0.0
        %1808 = vmatprep.subr.mxu0 0.0
        %1809 = vmatpush2.msra.mxu0 0.0
        %1810 = vmatprep.subr.mxu0 0.0
        %1811 = vmatpush2.msra.mxu0 0.0
        %1812 = vmatprep.subr.mxu0 0.0
        %1813 = vmatpush2.msra.mxu0 0.0
        %1814 = vmatprep.subr.mxu0 0.0
        %1815 = vmatpush2.msra.mxu0 0.0
        %1816 = vmatprep.mubr.f32.mxu0 0.0
        %1817 = vmatmul.mubr.f32.gmra.mxu0 %v1750
        %v1818 = vpop.f32.mrf.mxu0
        %v1819 = vadd.f32 0.0, %v1818
        %v1820 = vpop.f32.mrf.mxu0
        %1821 = vdwg.mxu0
        %v1823 = vsel %vm943, %v1819, 0
        %1825 = vmatprep.subr.mxu0 0.0
        %1826 = vmatpush1.msra.mxu0 0.0
        %1827 = vmatprep.subr.mxu0 0.0
        %1828 = vmatpush1.msra.mxu0 0.0
        %1829 = vmatprep.subr.mxu0 0.0
        %1830 = vmatpush1.msra.mxu0 0.0
        %1831 = vmatprep.subr.mxu0 0.0
        %1832 = vmatpush1.msra.mxu0 0.0
        %1833 = vmatprep.subr.mxu0 0.0
        %1834 = vmatpush1.msra.mxu0 0.0
        %1835 = vmatprep.subr.mxu0 0.0
        %1836 = vmatpush1.msra.mxu0 0.0
        %1837 = vmatprep.subr.mxu0 0.0
        %1838 = vmatpush1.msra.mxu0 0.0
        %1839 = vmatprep.subr.mxu0 0.0
        %1840 = vmatpush1.msra.mxu0 0.0
        %1841 = vmatprep.subr.mxu0 0.0
        %1842 = vmatpush1.msra.mxu0 0.0
        %1843 = vmatprep.subr.mxu0 0.0
        %1844 = vmatpush1.msra.mxu0 0.0
        %1845 = vmatprep.subr.mxu0 0.0
        %1846 = vmatpush1.msra.mxu0 0.0
        %1847 = vmatprep.subr.mxu0 0.0
        %1848 = vmatpush1.msra.mxu0 0.0
        %1849 = vmatprep.subr.mxu0 0.0
        %1850 = vmatpush1.msra.mxu0 0.0
        %1851 = vmatprep.subr.mxu0 0.0
        %1852 = vmatpush1.msra.mxu0 0.0
        %1853 = vmatprep.subr.mxu0 0.0
        %1854 = vmatpush1.msra.mxu0 0.0
        %1855 = vmatprep.subr.mxu0 0.0
        %1856 = vmatpush1.msra.mxu0 %v796
        %1857 = vmatprep.subr.mxu0 0.0
        %1858 = vmatpush2.msra.mxu0 0.0
        %1859 = vmatprep.subr.mxu0 0.0
        %1860 = vmatpush2.msra.mxu0 0.0
        %1861 = vmatprep.subr.mxu0 0.0
        %1862 = vmatpush2.msra.mxu0 0.0
        %1863 = vmatprep.subr.mxu0 0.0
        %1864 = vmatpush2.msra.mxu0 0.0
        %1865 = vmatprep.subr.mxu0 0.0
        %1866 = vmatpush2.msra.mxu0 0.0
        %1867 = vmatprep.subr.mxu0 0.0
        %1868 = vmatpush2.msra.mxu0 0.0
        %1869 = vmatprep.subr.mxu0 0.0
        %1870 = vmatpush2.msra.mxu0 0.0
        %1871 = vmatprep.subr.mxu0 0.0
        %1872 = vmatpush2.msra.mxu0 0.0
        %1873 = vmatprep.subr.mxu0 0.0
        %1874 = vmatpush2.msra.mxu0 0.0
        %1875 = vmatprep.subr.mxu0 0.0
        %1876 = vmatpush2.msra.mxu0 0.0
        %1877 = vmatprep.subr.mxu0 0.0
        %1878 = vmatpush2.msra.mxu0 0.0
        %1879 = vmatprep.subr.mxu0 0.0
        %1880 = vmatpush2.msra.mxu0 0.0
        %1881 = vmatprep.subr.mxu0 0.0
        %1882 = vmatpush2.msra.mxu0 0.0
        %1883 = vmatprep.subr.mxu0 0.0
        %1884 = vmatpush2.msra.mxu0 0.0
        %1885 = vmatprep.subr.mxu0 0.0
        %1886 = vmatpush2.msra.mxu0 0.0
        %1887 = vmatprep.subr.mxu0 0.0
        %1888 = vmatpush2.msra.mxu0 0.0
        %1889 = vmatprep.mubr.f32.mxu0 0.0
        %1890 = vmatmul.mubr.f32.gmra.mxu0 %v1823
        %v1891 = vpop.f32.mrf.mxu0
        %v1892 = vadd.f32 0.0, %v1891
        %v1893 = vpop.f32.mrf.mxu0
        %1894 = vdwg.mxu0
        %v1895 = vadd.f32 %v1656, %v1892
        %v1897 = vlaneseq
        %v1898 = vshrl.u32 %v1897, 7
        %v1899 = vsub.s32 0, %v1898
        %v1900 = vrot.slane %v797, %v1899
        %v1902 = vadd.f32 %v1895, %v1900
        %v1903 = vadd.f32 %v1902, %v781
        %v1904 = vld [vmem:[%s8] sm:$0x1]
        %v1905 = vld [vmem:[%s9] sm:$0x1]
        %v1906 = vsel %vm798, %v1903, 0.0
        %1907 = vadd.xlane.f32.xlu0 %v1906
        %v1908 = vpop.xlane.xlu0 %1907
        %v1909 = vrcp.pop 32.0
        %v1910 = vmul.f32 %v1908, %v1909
        %v1911 = vsub.f32 %v1903, %v1910
        %v1912 = vmul.f32 %v1911, %v1911
        %v1913 = vsel %vm798, %v1912, 0.0
        %1914 = vadd.xlane.f32.xlu0 %v1913
        %v1915 = vpop.xlane.xlu0 %1914
        %v1916 = vmul.f32 %v1915, %v1909
        %v1917 = vadd.f32 %v1916, 1e-05
        %v1918 = vrsqrt.pop %v1917
        %v1919 = vmul.f32 %v1911, %v1918
        %v1921 = vlaneseq
        %v1922 = vshrl.u32 %v1921, 7
        %v1923 = vsub.s32 0, %v1922
        %v1924 = vrot.slane %v1904, %v1923
        %v1926 = vmul.f32 %v1919, %v1924
        %v1928 = vlaneseq
        %v1929 = vshrl.u32 %v1928, 7
        %v1930 = vsub.s32 0, %v1929
        %v1931 = vrot.slane %v1905, %v1930
        %v1933 = vadd.f32 %v1926, %v1931
        %v1934 = vld [vmem:[%s10] sm:$0xff]
        %v1935 = vld [vmem:[%s10 + $0x8] sm:$0xff]
        %v1936 = vld [vmem:[%s10 + $0x10] sm:$0xff]
        %v1937 = vld [vmem:[%s10 + $0x18] sm:$0xff]
        %v1938 = vld [vmem:[%s11] sm:$0xff]
        %v1939 = vld [vmem:[%s11 + $0x8] sm:$0xff]
        %v1940 = vld [vmem:[%s11 + $0x10] sm:$0xff]
        %v1941 = vld [vmem:[%s11 + $0x18] sm:$0xff]
        %v1942 = vld [vmem:[%s12] sm:$0xff]
        %v1943 = vld [vmem:[%s12 + $0x8] sm:$0xff]
        %v1944 = vld [vmem:[%s12 + $0x10] sm:$0xff]
        %v1945 = vld [vmem:[%s12 + $0x18] sm:$0xff]
        %v1946 = vld [vmem:[%s13] sm:$0x1]
        %v1948 = vsel %vm798, %v1933, 0
        %1950 = vmatprep.subr.mxu0 0.0
        %1951 = vmatpush1.msra.mxu0 0.0
        %1952 = vmatprep.subr.mxu0 0.0
        %1953 = vmatpush1.msra.mxu0 0.0
        %1954 = vmatprep.subr.mxu0 0.0
        %1955 = vmatpush1.msra.mxu0 0.0
        %1956 = vmatprep.subr.mxu0 0.0
        %1957 = vmatpush1.msra.mxu0 0.0
        %1958 = vmatprep.subr.mxu0 0.0
        %1959 = vmatpush1.msra.mxu0 0.0
        %1960 = vmatprep.subr.mxu0 0.0
        %1961 = vmatpush1.msra.mxu0 0.0
        %1962 = vmatprep.subr.mxu0 0.0
        %1963 = vmatpush1.msra.mxu0 0.0
        %1964 = vmatprep.subr.mxu0 0.0
        %1965 = vmatpush1.msra.mxu0 0.0
        %1966 = vmatprep.subr.mxu0 0.0
        %1967 = vmatpush1.msra.mxu0 0.0
        %1968 = vmatprep.subr.mxu0 0.0
        %1969 = vmatpush1.msra.mxu0 0.0
        %1970 = vmatprep.subr.mxu0 0.0
        %1971 = vmatpush1.msra.mxu0 0.0
        %1972 = vmatprep.subr.mxu0 0.0
        %1973 = vmatpush1.msra.mxu0 0.0
        %1974 = vmatprep.subr.mxu0 0.0
        %1975 = vmatpush1.msra.mxu0 %v1937
        %1976 = vmatprep.subr.mxu0 0.0
        %1977 = vmatpush1.msra.mxu0 %v1936
        %1978 = vmatprep.subr.mxu0 0.0
        %1979 = vmatpush1.msra.mxu0 %v1935
        %1980 = vmatprep.subr.mxu0 0.0
        %1981 = vmatpush1.msra.mxu0 %v1934
        %1982 = vmatprep.subr.mxu0 0.0
        %1983 = vmatpush2.msra.mxu0 0.0
        %1984 = vmatprep.subr.mxu0 0.0
        %1985 = vmatpush2.msra.mxu0 0.0
        %1986 = vmatprep.subr.mxu0 0.0
        %1987 = vmatpush2.msra.mxu0 0.0
        %1988 = vmatprep.subr.mxu0 0.0
        %1989 = vmatpush2.msra.mxu0 0.0
        %1990 = vmatprep.subr.mxu0 0.0
        %1991 = vmatpush2.msra.mxu0 0.0
        %1992 = vmatprep.subr.mxu0 0.0
        %1993 = vmatpush2.msra.mxu0 0.0
        %1994 = vmatprep.subr.mxu0 0.0
        %1995 = vmatpush2.msra.mxu0 0.0
        %1996 = vmatprep.subr.mxu0 0.0
        %1997 = vmatpush2.msra.mxu0 0.0
        %1998 = vmatprep.subr.mxu0 0.0
        %1999 = vmatpush2.msra.mxu0 0.0
        %2000 = vmatprep.subr.mxu0 0.0
        %2001 = vmatpush2.msra.mxu0 0.0
        %2002 = vmatprep.subr.mxu0 0.0
        %2003 = vmatpush2.msra.mxu0 0.0
        %2004 = vmatprep.subr.mxu0 0.0
        %2005 = vmatpush2.msra.mxu0 0.0
        %2006 = vmatprep.subr.mxu0 0.0
        %2007 = vmatpush2.msra.mxu0 0.0
        %2008 = vmatprep.subr.mxu0 0.0
        %2009 = vmatpush2.msra.mxu0 0.0
        %2010 = vmatprep.subr.mxu0 0.0
        %2011 = vmatpush2.msra.mxu0 0.0
        %2012 = vmatprep.subr.mxu0 0.0
        %2013 = vmatpush2.msra.mxu0 0.0
        %2014 = vmatprep.mubr.f32.mxu0 0.0
        %2015 = vmatmul.mubr.f32.gmra.mxu0 %v1948
        %v2016 = vpop.f32.mrf.mxu0
        %v2017 = vadd.f32 0.0, %v2016
        %v2018 = vpop.f32.mrf.mxu0
        %2019 = vdwg.mxu0
        %v2020 = vmul.f32 %v2017, 0.17677669
        %v2022 = vsel %vm798, %v782, 0
        %2024 = vmatprep.subr.mxu0 0.0
        %2025 = vmatpush1.msra.mxu0 0.0
        %2026 = vmatprep.subr.mxu0 0.0
        %2027 = vmatpush1.msra.mxu0 0.0
        %2028 = vmatprep.subr.mxu0 0.0
        %2029 = vmatpush1.msra.mxu0 0.0
        %2030 = vmatprep.subr.mxu0 0.0
        %2031 = vmatpush1.msra.mxu0 0.0
        %2032 = vmatprep.subr.mxu0 0.0
        %2033 = vmatpush1.msra.mxu0 0.0
        %2034 = vmatprep.subr.mxu0 0.0
        %2035 = vmatpush1.msra.mxu0 0.0
        %2036 = vmatprep.subr.mxu0 0.0
        %2037 = vmatpush1.msra.mxu0 0.0
        %2038 = vmatprep.subr.mxu0 0.0
        %2039 = vmatpush1.msra.mxu0 0.0
        %2040 = vmatprep.subr.mxu0 0.0
        %2041 = vmatpush1.msra.mxu0 0.0
        %2042 = vmatprep.subr.mxu0 0.0
        %2043 = vmatpush1.msra.mxu0 0.0
        %2044 = vmatprep.subr.mxu0 0.0
        %2045 = vmatpush1.msra.mxu0 0.0
        %2046 = vmatprep.subr.mxu0 0.0
        %2047 = vmatpush1.msra.mxu0 0.0
        %2048 = vmatprep.subr.mxu0 0.0
        %2049 = vmatpush1.msra.mxu0 %v1941
        %2050 = vmatprep.subr.mxu0 0.0
        %2051 = vmatpush1.msra.mxu0 %v1940
        %2052 = vmatprep.subr.mxu0 0.0
        %2053 = vmatpush1.msra.mxu0 %v1939
        %2054 = vmatprep.subr.mxu0 0.0
        %2055 = vmatpush1.msra.mxu0 %v1938
        %2056 = vmatprep.subr.mxu0 0.0
        %2057 = vmatpush2.msra.mxu0 0.0
        %2058 = vmatprep.subr.mxu0 0.0
        %2059 = vmatpush2.msra.mxu0 0.0
        %2060 = vmatprep.subr.mxu0 0.0
        %2061 = vmatpush2.msra.mxu0 0.0
        %2062 = vmatprep.subr.mxu0 0.0
        %2063 = vmatpush2.msra.mxu0 0.0
        %2064 = vmatprep.subr.mxu0 0.0
        %2065 = vmatpush2.msra.mxu0 0.0
        %2066 = vmatprep.subr.mxu0 0.0
        %2067 = vmatpush2.msra.mxu0 0.0
        %2068 = vmatprep.subr.mxu0 0.0
        %2069 = vmatpush2.msra.mxu0 0.0
        %2070 = vmatprep.subr.mxu0 0.0
        %2071 = vmatpush2.msra.mxu0 0.0
        %2072 = vmatprep.subr.mxu0 0.0
        %2073 = vmatpush2.msra.mxu0 0.0
        %2074 = vmatprep.subr.mxu0 0.0
        %2075 = vmatpush2.msra.mxu0 0.0
        %2076 = vmatprep.subr.mxu0 0.0
        %2077 = vmatpush2.msra.mxu0 0.0
        %2078 = vmatprep.subr.mxu0 0.0
        %2079 = vmatpush2.msra.mxu0 0.0
        %2080 = vmatprep.subr.mxu0 0.0
        %2081 = vmatpush2.msra.mxu0 0.0
        %2082 = vmatprep.subr.mxu0 0.0
        %2083 = vmatpush2.msra.mxu0 0.0
        %2084 = vmatprep.subr.mxu0 0.0
        %2085 = vmatpush2.msra.mxu0 0.0
        %2086 = vmatprep.subr.mxu0 0.0
        %2087 = vmatpush2.msra.mxu0 0.0
        %2088 = vmatprep.mubr.f32.mxu0 0.0
        %2089 = vmatmul.mubr.f32.gmra.mxu0 %v2022
        %v2090 = vpop.f32.mrf.mxu0
        %v2091 = vadd.f32 0.0, %v2090
        %v2092 = vpop.f32.mrf.mxu0
        %2093 = vdwg.mxu0
        %v2095 = vlaneseq
        %v2096 = vshrl.u32 %v2095, 7
        %v2097 = vsub.s32 0, %v2096
        %v2098 = vrot.slane %v784, %v2097
        %v2101 = vsel %vm943, %v2020, 0
        %v2104 = vsel %vm943, %v2091, 0
        %2106 = vmatprep.subr.mxu0 0.0
        %2107 = vmatpush1.xpose.msra.mxu0 0.0
        %2108 = vmatprep.subr.mxu0 0.0
        %2109 = vmatpush1.xpose.msra.mxu0 0.0
        %2110 = vmatprep.subr.mxu0 0.0
        %2111 = vmatpush1.xpose.msra.mxu0 0.0
        %2112 = vmatprep.subr.mxu0 0.0
        %2113 = vmatpush1.xpose.msra.mxu0 0.0
        %2114 = vmatprep.subr.mxu0 0.0
        %2115 = vmatpush1.xpose.msra.mxu0 0.0
        %2116 = vmatprep.subr.mxu0 0.0
        %2117 = vmatpush1.xpose.msra.mxu0 0.0
        %2118 = vmatprep.subr.mxu0 0.0
        %2119 = vmatpush1.xpose.msra.mxu0 0.0
        %2120 = vmatprep.subr.mxu0 0.0
        %2121 = vmatpush1.xpose.msra.mxu0 0.0
        %2122 = vmatprep.subr.mxu0 0.0
        %2123 = vmatpush1.xpose.msra.mxu0 0.0
        %2124 = vmatprep.subr.mxu0 0.0
        %2125 = vmatpush1.xpose.msra.mxu0 0.0
        %2126 = vmatprep.subr.mxu0 0.0
        %2127 = vmatpush1.xpose.msra.mxu0 0.0
        %2128 = vmatprep.subr.mxu0 0.0
        %2129 = vmatpush1.xpose.msra.mxu0 0.0
        %2130 = vmatprep.subr.mxu0 0.0
        %2131 = vmatpush1.xpose.msra.mxu0 0.0
        %2132 = vmatprep.subr.mxu0 0.0
        %2133 = vmatpush1.xpose.msra.mxu0 0.0
        %2134 = vmatprep.subr.mxu0 0.0
        %2135 = vmatpush1.xpose.msra.mxu0 0.0
        %2136 = vmatprep.subr.mxu0 0.0
        %2137 = vmatpush1.xpose.msra.mxu0 %v2104
        %2138 = vmatprep.subr.mxu0 0.0
        %2139 = vmatpush2.xpose.msra.mxu0 0.0
        %2140 = vmatprep.subr.mxu0 0.0
        %2141 = vmatpush2.xpose.msra.mxu0 0.0
        %2142 = vmatprep.subr.mxu0 0.0
        %2143 = vmatpush2.xpose.msra.mxu0 0.0
        %2144 = vmatprep.subr.mxu0 0.0
        %2145 = vmatpush2.xpose.msra.mxu0 0.0
        %2146 = vmatprep.subr.mxu0 0.0
        %2147 = vmatpush2.xpose.msra.mxu0 0.0
        %2148 = vmatprep.subr.mxu0 0.0
        %2149 = vmatpush2.xpose.msra.mxu0 0.0
        %2150 = vmatprep.subr.mxu0 0.0
        %2151 = vmatpush2.xpose.msra.mxu0 0.0
        %2152 = vmatprep.subr.mxu0 0.0
        %2153 = vmatpush2.xpose.msra.mxu0 0.0
        %2154 = vmatprep.subr.mxu0 0.0
        %2155 = vmatpush2.xpose.msra.mxu0 0.0
        %2156 = vmatprep.subr.mxu0 0.0
        %2157 = vmatpush2.xpose.msra.mxu0 0.0
        %2158 = vmatprep.subr.mxu0 0.0
        %2159 = vmatpush2.xpose.msra.mxu0 0.0
        %2160 = vmatprep.subr.mxu0 0.0
        %2161 = vmatpush2.xpose.msra.mxu0 0.0
        %2162 = vmatprep.subr.mxu0 0.0
        %2163 = vmatpush2.xpose.msra.mxu0 0.0
        %2164 = vmatprep.subr.mxu0 0.0
        %2165 = vmatpush2.xpose.msra.mxu0 0.0
        %2166 = vmatprep.subr.mxu0 0.0
        %2167 = vmatpush2.xpose.msra.mxu0 0.0
        %2168 = vmatprep.subr.mxu0 0.0
        %2169 = vmatpush2.xpose.msra.mxu0 0.0
        %2170 = vmatprep.mubr.f32.mxu0 0.0
        %2171 = vmatmul.mubr.f32.gmra.mxu0 %v2101
        %v2172 = vpop.f32.mrf.mxu0
        %v2173 = vadd.f32 %v2098, %v2172
        %v2174 = vpop.f32.mrf.mxu0
        %2175 = vdwg.mxu0
        %v2176 = vsel %vm943, %v2173, -inf
        %2177 = vmax.xlane.f32.xlu0 %v2176
        %v2178 = vpop.xlane.xlu0 %2177
        %v2179 = vsub.f32 %v2173, %v2178
        %v2180 = vmul.f32 %v2179, 1.442695
        %v2181 = vpow.pop %v2180
        %v2182 = vsel %vm943, %v2181, 0.0
        %2183 = vadd.xlane.f32.xlu0 %v2182
        %v2184 = vpop.xlane.xlu0 %2183
        %v2185 = vrcp.pop %v2184
        %v2186 = vmul.f32 %v2181, %v2185
        %2187 = vrot.lane.b32.xlu0 %v2091, 96
        %v2188 = vpop.permute.xlu0 %2187
        %v2191 = vsel %vm943, %v2186, 0
        %2193 = vmatprep.subr.mxu0 0.0
        %2194 = vmatpush1.msra.mxu0 0.0
        %2195 = vmatprep.subr.mxu0 0.0
        %2196 = vmatpush1.msra.mxu0 0.0
        %2197 = vmatprep.subr.mxu0 0.0
        %2198 = vmatpush1.msra.mxu0 0.0
        %2199 = vmatprep.subr.mxu0 0.0
        %2200 = vmatpush1.msra.mxu0 0.0
        %2201 = vmatprep.subr.mxu0 0.0
        %2202 = vmatpush1.msra.mxu0 0.0
        %2203 = vmatprep.subr.mxu0 0.0
        %2204 = vmatpush1.msra.mxu0 0.0
        %2205 = vmatprep.subr.mxu0 0.0
        %2206 = vmatpush1.msra.mxu0 0.0
        %2207 = vmatprep.subr.mxu0 0.0
        %2208 = vmatpush1.msra.mxu0 0.0
        %2209 = vmatprep.subr.mxu0 0.0
        %2210 = vmatpush1.msra.mxu0 0.0
        %2211 = vmatprep.subr.mxu0 0.0
        %2212 = vmatpush1.msra.mxu0 0.0
        %2213 = vmatprep.subr.mxu0 0.0
        %2214 = vmatpush1.msra.mxu0 0.0
        %2215 = vmatprep.subr.mxu0 0.0
        %2216 = vmatpush1.msra.mxu0 0.0
        %2217 = vmatprep.subr.mxu0 0.0
        %2218 = vmatpush1.msra.mxu0 0.0
        %2219 = vmatprep.subr.mxu0 0.0
        %2220 = vmatpush1.msra.mxu0 0.0
        %2221 = vmatprep.subr.mxu0 0.0
        %2222 = vmatpush1.msra.mxu0 0.0
        %2223 = vmatprep.subr.mxu0 0.0
        %2224 = vmatpush1.msra.mxu0 %v2188
        %2225 = vmatprep.subr.mxu0 0.0
        %2226 = vmatpush2.msra.mxu0 0.0
        %2227 = vmatprep.subr.mxu0 0.0
        %2228 = vmatpush2.msra.mxu0 0.0
        %2229 = vmatprep.subr.mxu0 0.0
        %2230 = vmatpush2.msra.mxu0 0.0
        %2231 = vmatprep.subr.mxu0 0.0
        %2232 = vmatpush2.msra.mxu0 0.0
        %2233 = vmatprep.subr.mxu0 0.0
        %2234 = vmatpush2.msra.mxu0 0.0
        %2235 = vmatprep.subr.mxu0 0.0
        %2236 = vmatpush2.msra.mxu0 0.0
        %2237 = vmatprep.subr.mxu0 0.0
        %2238 = vmatpush2.msra.mxu0 0.0
        %2239 = vmatprep.subr.mxu0 0.0
        %2240 = vmatpush2.msra.mxu0 0.0
        %2241 = vmatprep.subr.mxu0 0.0
        %2242 = vmatpush2.msra.mxu0 0.0
        %2243 = vmatprep.subr.mxu0 0.0
        %2244 = vmatpush2.msra.mxu0 0.0
        %2245 = vmatprep.subr.mxu0 0.0
        %2246 = vmatpush2.msra.mxu0 0.0
        %2247 = vmatprep.subr.mxu0 0.0
        %2248 = vmatpush2.msra.mxu0 0.0
        %2249 = vmatprep.subr.mxu0 0.0
        %2250 = vmatpush2.msra.mxu0 0.0
        %2251 = vmatprep.subr.mxu0 0.0
        %2252 = vmatpush2.msra.mxu0 0.0
        %2253 = vmatprep.subr.mxu0 0.0
        %2254 = vmatpush2.msra.mxu0 0.0
        %2255 = vmatprep.subr.mxu0 0.0
        %2256 = vmatpush2.msra.mxu0 0.0
        %2257 = vmatprep.mubr.f32.mxu0 0.0
        %2258 = vmatmul.mubr.f32.gmra.mxu0 %v2191
        %v2259 = vpop.f32.mrf.mxu0
        %v2260 = vadd.f32 0.0, %v2259
        %v2261 = vpop.f32.mrf.mxu0
        %2262 = vdwg.mxu0
        %2263 = vrot.lane.b32.xlu0 %v2020, 120
        %v2264 = vpop.permute.xlu0 %2263
        %2265 = vrot.lane.b32.xlu0 %v2091, 120
        %v2266 = vpop.permute.xlu0 %2265
        %v2267 = vsel %vm943, %v2264, 0
        %v2269 = vsel %vm943, %v2266, 0
        %2271 = vmatprep.subr.mxu0 0.0
        %2272 = vmatpush1.xpose.msra.mxu0 0.0
        %2273 = vmatprep.subr.mxu0 0.0
        %2274 = vmatpush1.xpose.msra.mxu0 0.0
        %2275 = vmatprep.subr.mxu0 0.0
        %2276 = vmatpush1.xpose.msra.mxu0 0.0
        %2277 = vmatprep.subr.mxu0 0.0
        %2278 = vmatpush1.xpose.msra.mxu0 0.0
        %2279 = vmatprep.subr.mxu0 0.0
        %2280 = vmatpush1.xpose.msra.mxu0 0.0
        %2281 = vmatprep.subr.mxu0 0.0
        %2282 = vmatpush1.xpose.msra.mxu0 0.0
        %2283 = vmatprep.subr.mxu0 0.0
        %2284 = vmatpush1.xpose.msra.mxu0 0.0
        %2285 = vmatprep.subr.mxu0 0.0
        %2286 = vmatpush1.xpose.msra.mxu0 0.0
        %2287 = vmatprep.subr.mxu0 0.0
        %2288 = vmatpush1.xpose.msra.mxu0 0.0
        %2289 = vmatprep.subr.mxu0 0.0
        %2290 = vmatpush1.xpose.msra.mxu0 0.0
        %2291 = vmatprep.subr.mxu0 0.0
        %2292 = vmatpush1.xpose.msra.mxu0 0.0
        %2293 = vmatprep.subr.mxu0 0.0
        %2294 = vmatpush1.xpose.msra.mxu0 0.0
        %2295 = vmatprep.subr.mxu0 0.0
        %2296 = vmatpush1.xpose.msra.mxu0 0.0
        %2297 = vmatprep.subr.mxu0 0.0
        %2298 = vmatpush1.xpose.msra.mxu0 0.0
        %2299 = vmatprep.subr.mxu0 0.0
        %2300 = vmatpush1.xpose.msra.mxu0 0.0
        %2301 = vmatprep.subr.mxu0 0.0
        %2302 = vmatpush1.xpose.msra.mxu0 %v2269
        %2303 = vmatprep.subr.mxu0 0.0
        %2304 = vmatpush2.xpose.msra.mxu0 0.0
        %2305 = vmatprep.subr.mxu0 0.0
        %2306 = vmatpush2.xpose.msra.mxu0 0.0
        %2307 = vmatprep.subr.mxu0 0.0
        %2308 = vmatpush2.xpose.msra.mxu0 0.0
        %2309 = vmatprep.subr.mxu0 0.0
        %2310 = vmatpush2.xpose.msra.mxu0 0.0
        %2311 = vmatprep.subr.mxu0 0.0
        %2312 = vmatpush2.xpose.msra.mxu0 0.0
        %2313 = vmatprep.subr.mxu0 0.0
        %2314 = vmatpush2.xpose.msra.mxu0 0.0
        %2315 = vmatprep.subr.mxu0 0.0
        %2316 = vmatpush2.xpose.msra.mxu0 0.0
        %2317 = vmatprep.subr.mxu0 0.0
        %2318 = vmatpush2.xpose.msra.mxu0 0.0
        %2319 = vmatprep.subr.mxu0 0.0
        %2320 = vmatpush2.xpose.msra.mxu0 0.0
        %2321 = vmatprep.subr.mxu0 0.0
        %2322 = vmatpush2.xpose.msra.mxu0 0.0
        %2323 = vmatprep.subr.mxu0 0.0
        %2324 = vmatpush2.xpose.msra.mxu0 0.0
        %2325 = vmatprep.subr.mxu0 0.0
        %2326 = vmatpush2.xpose.msra.mxu0 0.0
        %2327 = vmatprep.subr.mxu0 0.0
        %2328 = vmatpush2.xpose.msra.mxu0 0.0
        %2329 = vmatprep.subr.mxu0 0.0
        %2330 = vmatpush2.xpose.msra.mxu0 0.0
        %2331 = vmatprep.subr.mxu0 0.0
        %2332 = vmatpush2.xpose.msra.mxu0 0.0
        %2333 = vmatprep.subr.mxu0 0.0
        %2334 = vmatpush2.xpose.msra.mxu0 0.0
        %2335 = vmatprep.mubr.f32.mxu0 0.0
        %2336 = vmatmul.mubr.f32.gmra.mxu0 %v2267
        %v2337 = vpop.f32.mrf.mxu0
        %v2338 = vadd.f32 %v2098, %v2337
        %v2339 = vpop.f32.mrf.mxu0
        %2340 = vdwg.mxu0
        %v2341 = vsel %vm943, %v2338, -inf
        %2342 = vmax.xlane.f32.xlu0 %v2341
        %v2343 = vpop.xlane.xlu0 %2342
        %v2344 = vsub.f32 %v2338, %v2343
        %v2345 = vmul.f32 %v2344, 1.442695
        %v2346 = vpow.pop %v2345
        %v2347 = vsel %vm943, %v2346, 0.0
        %2348 = vadd.xlane.f32.xlu0 %v2347
        %v2349 = vpop.xlane.xlu0 %2348
        %v2350 = vrcp.pop %v2349
        %v2351 = vmul.f32 %v2346, %v2350
        %2352 = vrot.lane.b32.xlu0 %v2091, 88
        %v2353 = vpop.permute.xlu0 %2352
        %v2356 = vsel %vm943, %v2351, 0
        %2358 = vmatprep.subr.mxu0 0.0
        %2359 = vmatpush1.msra.mxu0 0.0
        %2360 = vmatprep.subr.mxu0 0.0
        %2361 = vmatpush1.msra.mxu0 0.0
        %2362 = vmatprep.subr.mxu0 0.0
        %2363 = vmatpush1.msra.mxu0 0.0
        %2364 = vmatprep.subr.mxu0 0.0
        %2365 = vmatpush1.msra.mxu0 0.0
        %2366 = vmatprep.subr.mxu0 0.0
        %2367 = vmatpush1.msra.mxu0 0.0
        %2368 = vmatprep.subr.mxu0 0.0
        %2369 = vmatpush1.msra.mxu0 0.0
        %2370 = vmatprep.subr.mxu0 0.0
        %2371 = vmatpush1.msra.mxu0 0.0
        %2372 = vmatprep.subr.mxu0 0.0
        %2373 = vmatpush1.msra.mxu0 0.0
        %2374 = vmatprep.subr.mxu0 0.0
        %2375 = vmatpush1.msra.mxu0 0.0
        %2376 = vmatprep.subr.mxu0 0.0
        %2377 = vmatpush1.msra.mxu0 0.0
        %2378 = vmatprep.subr.mxu0 0.0
        %2379 = vmatpush1.msra.mxu0 0.0
        %2380 = vmatprep.subr.mxu0 0.0
        %2381 = vmatpush1.msra.mxu0 0.0
        %2382 = vmatprep.subr.mxu0 0.0
        %2383 = vmatpush1.msra.mxu0 0.0
        %2384 = vmatprep.subr.mxu0 0.0
        %2385 = vmatpush1.msra.mxu0 0.0
        %2386 = vmatprep.subr.mxu0 0.0
        %2387 = vmatpush1.msra.mxu0 0.0
        %2388 = vmatprep.subr.mxu0 0.0
        %2389 = vmatpush1.msra.mxu0 %v2353
        %2390 = vmatprep.subr.mxu0 0.0
        %2391 = vmatpush2.msra.mxu0 0.0
        %2392 = vmatprep.subr.mxu0 0.0
        %2393 = vmatpush2.msra.mxu0 0.0
        %2394 = vmatprep.subr.mxu0 0.0
        %2395 = vmatpush2.msra.mxu0 0.0
        %2396 = vmatprep.subr.mxu0 0.0
        %2397 = vmatpush2.msra.mxu0 0.0
        %2398 = vmatprep.subr.mxu0 0.0
        %2399 = vmatpush2.msra.mxu0 0.0
        %2400 = vmatprep.subr.mxu0 0.0
        %2401 = vmatpush2.msra.mxu0 0.0
        %2402 = vmatprep.subr.mxu0 0.0
        %2403 = vmatpush2.msra.mxu0 0.0
        %2404 = vmatprep.subr.mxu0 0.0
        %2405 = vmatpush2.msra.mxu0 0.0
        %2406 = vmatprep.subr.mxu0 0.0
        %2407 = vmatpush2.msra.mxu0 0.0
        %2408 = vmatprep.subr.mxu0 0.0
        %2409 = vmatpush2.msra.mxu0 0.0
        %2410 = vmatprep.subr.mxu0 0.0
        %2411 = vmatpush2.msra.mxu0 0.0
        %2412 = vmatprep.subr.mxu0 0.0
        %2413 = vmatpush2.msra.mxu0 0.0
        %2414 = vmatprep.subr.mxu0 0.0
        %2415 = vmatpush2.msra.mxu0 0.0
        %2416 = vmatprep.subr.mxu0 0.0
        %2417 = vmatpush2.msra.mxu0 0.0
        %2418 = vmatprep.subr.mxu0 0.0
        %2419 = vmatpush2.msra.mxu0 0.0
        %2420 = vmatprep.subr.mxu0 0.0
        %2421 = vmatpush2.msra.mxu0 0.0
        %2422 = vmatprep.mubr.f32.mxu0 0.0
        %2423 = vmatmul.mubr.f32.gmra.mxu0 %v2356
        %v2424 = vpop.f32.mrf.mxu0
        %v2425 = vadd.f32 0.0, %v2424
        %v2426 = vpop.f32.mrf.mxu0
        %2427 = vdwg.mxu0
        %v2429 = vsel %vm943, %v2425, 0
        %2431 = vmatprep.subr.mxu0 0.0
        %2432 = vmatpush1.msra.mxu0 0.0
        %2433 = vmatprep.subr.mxu0 0.0
        %2434 = vmatpush1.msra.mxu0 0.0
        %2435 = vmatprep.subr.mxu0 0.0
        %2436 = vmatpush1.msra.mxu0 0.0
        %2437 = vmatprep.subr.mxu0 0.0
        %2438 = vmatpush1.msra.mxu0 0.0
        %2439 = vmatprep.subr.mxu0 0.0
        %2440 = vmatpush1.msra.mxu0 0.0
        %2441 = vmatprep.subr.mxu0 0.0
        %2442 = vmatpush1.msra.mxu0 0.0
        %2443 = vmatprep.subr.mxu0 0.0
        %2444 = vmatpush1.msra.mxu0 0.0
        %2445 = vmatprep.subr.mxu0 0.0
        %2446 = vmatpush1.msra.mxu0 0.0
        %2447 = vmatprep.subr.mxu0 0.0
        %2448 = vmatpush1.msra.mxu0 0.0
        %2449 = vmatprep.subr.mxu0 0.0
        %2450 = vmatpush1.msra.mxu0 0.0
        %2451 = vmatprep.subr.mxu0 0.0
        %2452 = vmatpush1.msra.mxu0 0.0
        %2453 = vmatprep.subr.mxu0 0.0
        %2454 = vmatpush1.msra.mxu0 0.0
        %2455 = vmatprep.subr.mxu0 0.0
        %2456 = vmatpush1.msra.mxu0 0.0
        %2457 = vmatprep.subr.mxu0 0.0
        %2458 = vmatpush1.msra.mxu0 0.0
        %2459 = vmatprep.subr.mxu0 0.0
        %2460 = vmatpush1.msra.mxu0 0.0
        %2461 = vmatprep.subr.mxu0 0.0
        %2462 = vmatpush1.msra.mxu0 %v1943
        %2463 = vmatprep.subr.mxu0 0.0
        %2464 = vmatpush2.msra.mxu0 0.0
        %2465 = vmatprep.subr.mxu0 0.0
        %2466 = vmatpush2.msra.mxu0 0.0
        %2467 = vmatprep.subr.mxu0 0.0
        %2468 = vmatpush2.msra.mxu0 0.0
        %2469 = vmatprep.subr.mxu0 0.0
        %2470 = vmatpush2.msra.mxu0 0.0
        %2471 = vmatprep.subr.mxu0 0.0
        %2472 = vmatpush2.msra.mxu0 0.0
        %2473 = vmatprep.subr.mxu0 0.0
        %2474 = vmatpush2.msra.mxu0 0.0
        %2475 = vmatprep.subr.mxu0 0.0
        %2476 = vmatpush2.msra.mxu0 0.0
        %2477 = vmatprep.subr.mxu0 0.0
        %2478 = vmatpush2.msra.mxu0 0.0
        %2479 = vmatprep.subr.mxu0 0.0
        %2480 = vmatpush2.msra.mxu0 0.0
        %2481 = vmatprep.subr.mxu0 0.0
        %2482 = vmatpush2.msra.mxu0 0.0
        %2483 = vmatprep.subr.mxu0 0.0
        %2484 = vmatpush2.msra.mxu0 0.0
        %2485 = vmatprep.subr.mxu0 0.0
        %2486 = vmatpush2.msra.mxu0 0.0
        %2487 = vmatprep.subr.mxu0 0.0
        %2488 = vmatpush2.msra.mxu0 0.0
        %2489 = vmatprep.subr.mxu0 0.0
        %2490 = vmatpush2.msra.mxu0 0.0
        %2491 = vmatprep.subr.mxu0 0.0
        %2492 = vmatpush2.msra.mxu0 0.0
        %2493 = vmatprep.subr.mxu0 0.0
        %2494 = vmatpush2.msra.mxu0 0.0
        %2495 = vmatprep.mubr.f32.mxu0 0.0
        %2496 = vmatmul.mubr.f32.gmra.mxu0 %v2429
        %v2497 = vpop.f32.mrf.mxu0
        %v2498 = vadd.f32 0.0, %v2497
        %v2499 = vpop.f32.mrf.mxu0
        %2500 = vdwg.mxu0
        %v2502 = vsel %vm943, %v2260, 0
        %2504 = vmatprep.subr.mxu0 0.0
        %2505 = vmatpush1.msra.mxu0 0.0
        %2506 = vmatprep.subr.mxu0 0.0
        %2507 = vmatpush1.msra.mxu0 0.0
        %2508 = vmatprep.subr.mxu0 0.0
        %2509 = vmatpush1.msra.mxu0 0.0
        %2510 = vmatprep.subr.mxu0 0.0
        %2511 = vmatpush1.msra.mxu0 0.0
        %2512 = vmatprep.subr.mxu0 0.0
        %2513 = vmatpush1.msra.mxu0 0.0
        %2514 = vmatprep.subr.mxu0 0.0
        %2515 = vmatpush1.msra.mxu0 0.0
        %2516 = vmatprep.subr.mxu0 0.0
        %2517 = vmatpush1.msra.mxu0 0.0
        %2518 = vmatprep.subr.mxu0 0.0
        %2519 = vmatpush1.msra.mxu0 0.0
        %2520 = vmatprep.subr.mxu0 0.0
        %2521 = vmatpush1.msra.mxu0 0.0
        %2522 = vmatprep.subr.mxu0 0.0
        %2523 = vmatpush1.msra.mxu0 0.0
        %2524 = vmatprep.subr.mxu0 0.0
        %2525 = vmatpush1.msra.mxu0 0.0
        %2526 = vmatprep.subr.mxu0 0.0
        %2527 = vmatpush1.msra.mxu0 0.0
        %2528 = vmatprep.subr.mxu0 0.0
        %2529 = vmatpush1.msra.mxu0 0.0
        %2530 = vmatprep.subr.mxu0 0.0
        %2531 = vmatpush1.msra.mxu0 0.0
        %2532 = vmatprep.subr.mxu0 0.0
        %2533 = vmatpush1.msra.mxu0 0.0
        %2534 = vmatprep.subr.mxu0 0.0
        %2535 = vmatpush1.msra.mxu0 %v1942
        %2536 = vmatprep.subr.mxu0 0.0
        %2537 = vmatpush2.msra.mxu0 0.0
        %2538 = vmatprep.subr.mxu0 0.0
        %2539 = vmatpush2.msra.mxu0 0.0
        %2540 = vmatprep.subr.mxu0 0.0
        %2541 = vmatpush2.msra.mxu0 0.0
        %2542 = vmatprep.subr.mxu0 0.0
        %2543 = vmatpush2.msra.mxu0 0.0
        %2544 = vmatprep.subr.mxu0 0.0
        %2545 = vmatpush2.msra.mxu0 0.0
        %2546 = vmatprep.subr.mxu0 0.0
        %2547 = vmatpush2.msra.mxu0 0.0
        %2548 = vmatprep.subr.mxu0 0.0
        %2549 = vmatpush2.msra.mxu0 0.0
        %2550 = vmatprep.subr.mxu0 0.0
        %2551 = vmatpush2.msra.mxu0 0.0
        %2552 = vmatprep.subr.mxu0 0.0
        %2553 = vmatpush2.msra.mxu0 0.0
        %2554 = vmatprep.subr.mxu0 0.0
        %2555 = vmatpush2.msra.mxu0 0.0
        %2556 = vmatprep.subr.mxu0 0.0
        %2557 = vmatpush2.msra.mxu0 0.0
        %2558 = vmatprep.subr.mxu0 0.0
        %2559 = vmatpush2.msra.mxu0 0.0
        %2560 = vmatprep.subr.mxu0 0.0
        %2561 = vmatpush2.msra.mxu0 0.0
        %2562 = vmatprep.subr.mxu0 0.0
        %2563 = vmatpush2.msra.mxu0 0.0
        %2564 = vmatprep.subr.mxu0 0.0
        %2565 = vmatpush2.msra.mxu0 0.0
        %2566 = vmatprep.subr.mxu0 0.0
        %2567 = vmatpush2.msra.mxu0 0.0
        %2568 = vmatprep.mubr.f32.mxu0 0.0
        %2569 = vmatmul.mubr.f32.gmra.mxu0 %v2502
        %v2570 = vpop.f32.mrf.mxu0
        %v2571 = vadd.f32 %v2498, %v2570
        %v2572 = vpop.f32.mrf.mxu0
        %2573 = vdwg.mxu0
        %2574 = vrot.lane.b32.xlu0 %v2020, 112
        %v2575 = vpop.permute.xlu0 %2574
        %2576 = vrot.lane.b32.xlu0 %v2091, 112
        %v2577 = vpop.permute.xlu0 %2576
        %v2578 = vsel %vm943, %v2575, 0
        %v2580 = vsel %vm943, %v2577, 0
        %2582 = vmatprep.subr.mxu0 0.0
        %2583 = vmatpush1.xpose.msra.mxu0 0.0
        %2584 = vmatprep.subr.mxu0 0.0
        %2585 = vmatpush1.xpose.msra.mxu0 0.0
        %2586 = vmatprep.subr.mxu0 0.0
        %2587 = vmatpush1.xpose.msra.mxu0 0.0
        %2588 = vmatprep.subr.mxu0 0.0
        %2589 = vmatpush1.xpose.msra.mxu0 0.0
        %2590 = vmatprep.subr.mxu0 0.0
        %2591 = vmatpush1.xpose.msra.mxu0 0.0
        %2592 = vmatprep.subr.mxu0 0.0
        %2593 = vmatpush1.xpose.msra.mxu0 0.0
        %2594 = vmatprep.subr.mxu0 0.0
        %2595 = vmatpush1.xpose.msra.mxu0 0.0
        %2596 = vmatprep.subr.mxu0 0.0
        %2597 = vmatpush1.xpose.msra.mxu0 0.0
        %2598 = vmatprep.subr.mxu0 0.0
        %2599 = vmatpush1.xpose.msra.mxu0 0.0
        %2600 = vmatprep.subr.mxu0 0.0
        %2601 = vmatpush1.xpose.msra.mxu0 0.0
        %2602 = vmatprep.subr.mxu0 0.0
        %2603 = vmatpush1.xpose.msra.mxu0 0.0
        %2604 = vmatprep.subr.mxu0 0.0
        %2605 = vmatpush1.xpose.msra.mxu0 0.0
        %2606 = vmatprep.subr.mxu0 0.0
        %2607 = vmatpush1.xpose.msra.mxu0 0.0
        %2608 = vmatprep.subr.mxu0 0.0
        %2609 = vmatpush1.xpose.msra.mxu0 0.0
        %2610 = vmatprep.subr.mxu0 0.0
        %2611 = vmatpush1.xpose.msra.mxu0 0.0
        %2612 = vmatprep.subr.mxu0 0.0
        %2613 = vmatpush1.xpose.msra.mxu0 %v2580
        %2614 = vmatprep.subr.mxu0 0.0
        %2615 = vmatpush2.xpose.msra.mxu0 0.0
        %2616 = vmatprep.subr.mxu0 0.0
        %2617 = vmatpush2.xpose.msra.mxu0 0.0
        %2618 = vmatprep.subr.mxu0 0.0
        %2619 = vmatpush2.xpose.msra.mxu0 0.0
        %2620 = vmatprep.subr.mxu0 0.0
        %2621 = vmatpush2.xpose.msra.mxu0 0.0
        %2622 = vmatprep.subr.mxu0 0.0
        %2623 = vmatpush2.xpose.msra.mxu0 0.0
        %2624 = vmatprep.subr.mxu0 0.0
        %2625 = vmatpush2.xpose.msra.mxu0 0.0
        %2626 = vmatprep.subr.mxu0 0.0
        %2627 = vmatpush2.xpose.msra.mxu0 0.0
        %2628 = vmatprep.subr.mxu0 0.0
        %2629 = vmatpush2.xpose.msra.mxu0 0.0
        %2630 = vmatprep.subr.mxu0 0.0
        %2631 = vmatpush2.xpose.msra.mxu0 0.0
        %2632 = vmatprep.subr.mxu0 0.0
        %2633 = vmatpush2.xpose.msra.mxu0 0.0
        %2634 = vmatprep.subr.mxu0 0.0
        %2635 = vmatpush2.xpose.msra.mxu0 0.0
        %2636 = vmatprep.subr.mxu0 0.0
        %2637 = vmatpush2.xpose.msra.mxu0 0.0
        %2638 = vmatprep.subr.mxu0 0.0
        %2639 = vmatpush2.xpose.msra.mxu0 0.0
        %2640 = vmatprep.subr.mxu0 0.0
        %2641 = vmatpush2.xpose.msra.mxu0 0.0
        %2642 = vmatprep.subr.mxu0 0.0
        %2643 = vmatpush2.xpose.msra.mxu0 0.0
        %2644 = vmatprep.subr.mxu0 0.0
        %2645 = vmatpush2.xpose.msra.mxu0 0.0
        %2646 = vmatprep.mubr.f32.mxu0 0.0
        %2647 = vmatmul.mubr.f32.gmra.mxu0 %v2578
        %v2648 = vpop.f32.mrf.mxu0
        %v2649 = vadd.f32 %v2098, %v2648
        %v2650 = vpop.f32.mrf.mxu0
        %2651 = vdwg.mxu0
        %v2652 = vsel %vm943, %v2649, -inf
        %2653 = vmax.xlane.f32.xlu0 %v2652
        %v2654 = vpop.xlane.xlu0 %2653
        %v2655 = vsub.f32 %v2649, %v2654
        %v2656 = vmul.f32 %v2655, 1.442695
        %v2657 = vpow.pop %v2656
        %v2658 = vsel %vm943, %v2657, 0.0
        %2659 = vadd.xlane.f32.xlu0 %v2658
        %v2660 = vpop.xlane.xlu0 %2659
        %v2661 = vrcp.pop %v2660
        %v2662 = vmul.f32 %v2657, %v2661
        %2663 = vrot.lane.b32.xlu0 %v2091, 80
        %v2664 = vpop.permute.xlu0 %2663
        %v2667 = vsel %vm943, %v2662, 0
        %2669 = vmatprep.subr.mxu0 0.0
        %2670 = vmatpush1.msra.mxu0 0.0
        %2671 = vmatprep.subr.mxu0 0.0
        %2672 = vmatpush1.msra.mxu0 0.0
        %2673 = vmatprep.subr.mxu0 0.0
        %2674 = vmatpush1.msra.mxu0 0.0
        %2675 = vmatprep.subr.mxu0 0.0
        %2676 = vmatpush1.msra.mxu0 0.0
        %2677 = vmatprep.subr.mxu0 0.0
        %2678 = vmatpush1.msra.mxu0 0.0
        %2679 = vmatprep.subr.mxu0 0.0
        %2680 = vmatpush1.msra.mxu0 0.0
        %2681 = vmatprep.subr.mxu0 0.0
        %2682 = vmatpush1.msra.mxu0 0.0
        %2683 = vmatprep.subr.mxu0 0.0
        %2684 = vmatpush1.msra.mxu0 0.0
        %2685 = vmatprep.subr.mxu0 0.0
        %2686 = vmatpush1.msra.mxu0 0.0
        %2687 = vmatprep.subr.mxu0 0.0
        %2688 = vmatpush1.msra.mxu0 0.0
        %2689 = vmatprep.subr.mxu0 0.0
        %2690 = vmatpush1.msra.mxu0 0.0
        %2691 = vmatprep.subr.mxu0 0.0
        %2692 = vmatpush1.msra.mxu0 0.0
        %2693 = vmatprep.subr.mxu0 0.0
        %2694 = vmatpush1.msra.mxu0 0.0
        %2695 = vmatprep.subr.mxu0 0.0
        %2696 = vmatpush1.msra.mxu0 0.0
        %2697 = vmatprep.subr.mxu0 0.0
        %2698 = vmatpush1.msra.mxu0 0.0
        %2699 = vmatprep.subr.mxu0 0.0
        %2700 = vmatpush1.msra.mxu0 %v2664
        %2701 = vmatprep.subr.mxu0 0.0
        %2702 = vmatpush2.msra.mxu0 0.0
        %2703 = vmatprep.subr.mxu0 0.0
        %2704 = vmatpush2.msra.mxu0 0.0
        %2705 = vmatprep.subr.mxu0 0.0
        %2706 = vmatpush2.msra.mxu0 0.0
        %2707 = vmatprep.subr.mxu0 0.0
        %2708 = vmatpush2.msra.mxu0 0.0
        %2709 = vmatprep.subr.mxu0 0.0
        %2710 = vmatpush2.msra.mxu0 0.0
        %2711 = vmatprep.subr.mxu0 0.0
        %2712 = vmatpush2.msra.mxu0 0.0
        %2713 = vmatprep.subr.mxu0 0.0
        %2714 = vmatpush2.msra.mxu0 0.0
        %2715 = vmatprep.subr.mxu0 0.0
        %2716 = vmatpush2.msra.mxu0 0.0
        %2717 = vmatprep.subr.mxu0 0.0
        %2718 = vmatpush2.msra.mxu0 0.0
        %2719 = vmatprep.subr.mxu0 0.0
        %2720 = vmatpush2.msra.mxu0 0.0
        %2721 = vmatprep.subr.mxu0 0.0
        %2722 = vmatpush2.msra.mxu0 0.0
        %2723 = vmatprep.subr.mxu0 0.0
        %2724 = vmatpush2.msra.mxu0 0.0
        %2725 = vmatprep.subr.mxu0 0.0
        %2726 = vmatpush2.msra.mxu0 0.0
        %2727 = vmatprep.subr.mxu0 0.0
        %2728 = vmatpush2.msra.mxu0 0.0
        %2729 = vmatprep.subr.mxu0 0.0
        %2730 = vmatpush2.msra.mxu0 0.0
        %2731 = vmatprep.subr.mxu0 0.0
        %2732 = vmatpush2.msra.mxu0 0.0
        %2733 = vmatprep.mubr.f32.mxu0 0.0
        %2734 = vmatmul.mubr.f32.gmra.mxu0 %v2667
        %v2735 = vpop.f32.mrf.mxu0
        %v2736 = vadd.f32 0.0, %v2735
        %v2737 = vpop.f32.mrf.mxu0
        %2738 = vdwg.mxu0
        %v2740 = vsel %vm943, %v2736, 0
        %2742 = vmatprep.subr.mxu0 0.0
        %2743 = vmatpush1.msra.mxu0 0.0
        %2744 = vmatprep.subr.mxu0 0.0
        %2745 = vmatpush1.msra.mxu0 0.0
        %2746 = vmatprep.subr.mxu0 0.0
        %2747 = vmatpush1.msra.mxu0 0.0
        %2748 = vmatprep.subr.mxu0 0.0
        %2749 = vmatpush1.msra.mxu0 0.0
        %2750 = vmatprep.subr.mxu0 0.0
        %2751 = vmatpush1.msra.mxu0 0.0
        %2752 = vmatprep.subr.mxu0 0.0
        %2753 = vmatpush1.msra.mxu0 0.0
        %2754 = vmatprep.subr.mxu0 0.0
        %2755 = vmatpush1.msra.mxu0 0.0
        %2756 = vmatprep.subr.mxu0 0.0
        %2757 = vmatpush1.msra.mxu0 0.0
        %2758 = vmatprep.subr.mxu0 0.0
        %2759 = vmatpush1.msra.mxu0 0.0
        %2760 = vmatprep.subr.mxu0 0.0
        %2761 = vmatpush1.msra.mxu0 0.0
        %2762 = vmatprep.subr.mxu0 0.0
        %2763 = vmatpush1.msra.mxu0 0.0
        %2764 = vmatprep.subr.mxu0 0.0
        %2765 = vmatpush1.msra.mxu0 0.0
        %2766 = vmatprep.subr.mxu0 0.0
        %2767 = vmatpush1.msra.mxu0 0.0
        %2768 = vmatprep.subr.mxu0 0.0
        %2769 = vmatpush1.msra.mxu0 0.0
        %2770 = vmatprep.subr.mxu0 0.0
        %2771 = vmatpush1.msra.mxu0 0.0
        %2772 = vmatprep.subr.mxu0 0.0
        %2773 = vmatpush1.msra.mxu0 %v1944
        %2774 = vmatprep.subr.mxu0 0.0
        %2775 = vmatpush2.msra.mxu0 0.0
        %2776 = vmatprep.subr.mxu0 0.0
        %2777 = vmatpush2.msra.mxu0 0.0
        %2778 = vmatprep.subr.mxu0 0.0
        %2779 = vmatpush2.msra.mxu0 0.0
        %2780 = vmatprep.subr.mxu0 0.0
        %2781 = vmatpush2.msra.mxu0 0.0
        %2782 = vmatprep.subr.mxu0 0.0
        %2783 = vmatpush2.msra.mxu0 0.0
        %2784 = vmatprep.subr.mxu0 0.0
        %2785 = vmatpush2.msra.mxu0 0.0
        %2786 = vmatprep.subr.mxu0 0.0
        %2787 = vmatpush2.msra.mxu0 0.0
        %2788 = vmatprep.subr.mxu0 0.0
        %2789 = vmatpush2.msra.mxu0 0.0
        %2790 = vmatprep.subr.mxu0 0.0
        %2791 = vmatpush2.msra.mxu0 0.0
        %2792 = vmatprep.subr.mxu0 0.0
        %2793 = vmatpush2.msra.mxu0 0.0
        %2794 = vmatprep.subr.mxu0 0.0
        %2795 = vmatpush2.msra.mxu0 0.0
        %2796 = vmatprep.subr.mxu0 0.0
        %2797 = vmatpush2.msra.mxu0 0.0
        %2798 = vmatprep.subr.mxu0 0.0
        %2799 = vmatpush2.msra.mxu0 0.0
        %2800 = vmatprep.subr.mxu0 0.0
        %2801 = vmatpush2.msra.mxu0 0.0
        %2802 = vmatprep.subr.mxu0 0.0
        %2803 = vmatpush2.msra.mxu0 0.0
        %2804 = vmatprep.subr.mxu0 0.0
        %2805 = vmatpush2.msra.mxu0 0.0
        %2806 = vmatprep.mubr.f32.mxu0 0.0
        %2807 = vmatmul.mubr.f32.gmra.mxu0 %v2740
        %v2808 = vpop.f32.mrf.mxu0
        %v2809 = vadd.f32 0.0, %v2808
        %v2810 = vpop.f32.mrf.mxu0
        %2811 = vdwg.mxu0
        %v2812 = vadd.f32 %v2571, %v2809
        %2813 = vrot.lane.b32.xlu0 %v2020, 104
        %v2814 = vpop.permute.xlu0 %2813
        %2815 = vrot.lane.b32.xlu0 %v2091, 104
        %v2816 = vpop.permute.xlu0 %2815
        %v2817 = vsel %vm943, %v2814, 0
        %v2819 = vsel %vm943, %v2816, 0
        %2821 = vmatprep.subr.mxu0 0.0
        %2822 = vmatpush1.xpose.msra.mxu0 0.0
        %2823 = vmatprep.subr.mxu0 0.0
        %2824 = vmatpush1.xpose.msra.mxu0 0.0
        %2825 = vmatprep.subr.mxu0 0.0
        %2826 = vmatpush1.xpose.msra.mxu0 0.0
        %2827 = vmatprep.subr.mxu0 0.0
        %2828 = vmatpush1.xpose.msra.mxu0 0.0
        %2829 = vmatprep.subr.mxu0 0.0
        %2830 = vmatpush1.xpose.msra.mxu0 0.0
        %2831 = vmatprep.subr.mxu0 0.0
        %2832 = vmatpush1.xpose.msra.mxu0 0.0
        %2833 = vmatprep.subr.mxu0 0.0
        %2834 = vmatpush1.xpose.msra.mxu0 0.0
        %2835 = vmatprep.subr.mxu0 0.0
        %2836 = vmatpush1.xpose.msra.mxu0 0.0
        %2837 = vmatprep.subr.mxu0 0.0
        %2838 = vmatpush1.xpose.msra.mxu0 0.0
        %2839 = vmatprep.subr.mxu0 0.0
        %2840 = vmatpush1.xpose.msra.mxu0 0.0
        %2841 = vmatprep.subr.mxu0 0.0
        %2842 = vmatpush1.xpose.msra.mxu0 0.0
        %2843 = vmatprep.subr.mxu0 0.0
        %2844 = vmatpush1.xpose.msra.mxu0 0.0
        %2845 = vmatprep.subr.mxu0 0.0
        %2846 = vmatpush1.xpose.msra.mxu0 0.0
        %2847 = vmatprep.subr.mxu0 0.0
        %2848 = vmatpush1.xpose.msra.mxu0 0.0
        %2849 = vmatprep.subr.mxu0 0.0
        %2850 = vmatpush1.xpose.msra.mxu0 0.0
        %2851 = vmatprep.subr.mxu0 0.0
        %2852 = vmatpush1.xpose.msra.mxu0 %v2819
        %2853 = vmatprep.subr.mxu0 0.0
        %2854 = vmatpush2.xpose.msra.mxu0 0.0
        %2855 = vmatprep.subr.mxu0 0.0
        %2856 = vmatpush2.xpose.msra.mxu0 0.0
        %2857 = vmatprep.subr.mxu0 0.0
        %2858 = vmatpush2.xpose.msra.mxu0 0.0
        %2859 = vmatprep.subr.mxu0 0.0
        %2860 = vmatpush2.xpose.msra.mxu0 0.0
        %2861 = vmatprep.subr.mxu0 0.0
        %2862 = vmatpush2.xpose.msra.mxu0 0.0
        %2863 = vmatprep.subr.mxu0 0.0
        %2864 = vmatpush2.xpose.msra.mxu0 0.0
        %2865 = vmatprep.subr.mxu0 0.0
        %2866 = vmatpush2.xpose.msra.mxu0 0.0
        %2867 = vmatprep.subr.mxu0 0.0
        %2868 = vmatpush2.xpose.msra.mxu0 0.0
        %2869 = vmatprep.subr.mxu0 0.0
        %2870 = vmatpush2.xpose.msra.mxu0 0.0
        %2871 = vmatprep.subr.mxu0 0.0
        %2872 = vmatpush2.xpose.msra.mxu0 0.0
        %2873 = vmatprep.subr.mxu0 0.0
        %2874 = vmatpush2.xpose.msra.mxu0 0.0
        %2875 = vmatprep.subr.mxu0 0.0
        %2876 = vmatpush2.xpose.msra.mxu0 0.0
        %2877 = vmatprep.subr.mxu0 0.0
        %2878 = vmatpush2.xpose.msra.mxu0 0.0
        %2879 = vmatprep.subr.mxu0 0.0
        %2880 = vmatpush2.xpose.msra.mxu0 0.0
        %2881 = vmatprep.subr.mxu0 0.0
        %2882 = vmatpush2.xpose.msra.mxu0 0.0
        %2883 = vmatprep.subr.mxu0 0.0
        %2884 = vmatpush2.xpose.msra.mxu0 0.0
        %2885 = vmatprep.mubr.f32.mxu0 0.0
        %2886 = vmatmul.mubr.f32.gmra.mxu0 %v2817
        %v2887 = vpop.f32.mrf.mxu0
        %v2888 = vadd.f32 %v2098, %v2887
        %v2889 = vpop.f32.mrf.mxu0
        %2890 = vdwg.mxu0
        %v2891 = vsel %vm943, %v2888, -inf
        %2892 = vmax.xlane.f32.xlu0 %v2891
        %v2893 = vpop.xlane.xlu0 %2892
        %v2894 = vsub.f32 %v2888, %v2893
        %v2895 = vmul.f32 %v2894, 1.442695
        %v2896 = vpow.pop %v2895
        %v2897 = vsel %vm943, %v2896, 0.0
        %2898 = vadd.xlane.f32.xlu0 %v2897
        %v2899 = vpop.xlane.xlu0 %2898
        %v2900 = vrcp.pop %v2899
        %v2901 = vmul.f32 %v2896, %v2900
        %2902 = vrot.lane.b32.xlu0 %v2091, 72
        %v2903 = vpop.permute.xlu0 %2902
        %v2906 = vsel %vm943, %v2901, 0
        %2908 = vmatprep.subr.mxu0 0.0
        %2909 = vmatpush1.msra.mxu0 0.0
        %2910 = vmatprep.subr.mxu0 0.0
        %2911 = vmatpush1.msra.mxu0 0.0
        %2912 = vmatprep.subr.mxu0 0.0
        %2913 = vmatpush1.msra.mxu0 0.0
        %2914 = vmatprep.subr.mxu0 0.0
        %2915 = vmatpush1.msra.mxu0 0.0
        %2916 = vmatprep.subr.mxu0 0.0
        %2917 = vmatpush1.msra.mxu0 0.0
        %2918 = vmatprep.subr.mxu0 0.0
        %2919 = vmatpush1.msra.mxu0 0.0
        %2920 = vmatprep.subr.mxu0 0.0
        %2921 = vmatpush1.msra.mxu0 0.0
        %2922 = vmatprep.subr.mxu0 0.0
        %2923 = vmatpush1.msra.mxu0 0.0
        %2924 = vmatprep.subr.mxu0 0.0
        %2925 = vmatpush1.msra.mxu0 0.0
        %2926 = vmatprep.subr.mxu0 0.0
        %2927 = vmatpush1.msra.mxu0 0.0
        %2928 = vmatprep.subr.mxu0 0.0
        %2929 = vmatpush1.msra.mxu0 0.0
        %2930 = vmatprep.subr.mxu0 0.0
        %2931 = vmatpush1.msra.mxu0 0.0
        %2932 = vmatprep.subr.mxu0 0.0
        %2933 = vmatpush1.msra.mxu0 0.0
        %2934 = vmatprep.subr.mxu0 0.0
        %2935 = vmatpush1.msra.mxu0 0.0
        %2936 = vmatprep.subr.mxu0 0.0
        %2937 = vmatpush1.msra.mxu0 0.0
        %2938 = vmatprep.subr.mxu0 0.0
        %2939 = vmatpush1.msra.mxu0 %v2903
        %2940 = vmatprep.subr.mxu0 0.0
        %2941 = vmatpush2.msra.mxu0 0.0
        %2942 = vmatprep.subr.mxu0 0.0
        %2943 = vmatpush2.msra.mxu0 0.0
        %2944 = vmatprep.subr.mxu0 0.0
        %2945 = vmatpush2.msra.mxu0 0.0
        %2946 = vmatprep.subr.mxu0 0.0
        %2947 = vmatpush2.msra.mxu0 0.0
        %2948 = vmatprep.subr.mxu0 0.0
        %2949 = vmatpush2.msra.mxu0 0.0
        %2950 = vmatprep.subr.mxu0 0.0
        %2951 = vmatpush2.msra.mxu0 0.0
        %2952 = vmatprep.subr.mxu0 0.0
        %2953 = vmatpush2.msra.mxu0 0.0
        %2954 = vmatprep.subr.mxu0 0.0
        %2955 = vmatpush2.msra.mxu0 0.0
        %2956 = vmatprep.subr.mxu0 0.0
        %2957 = vmatpush2.msra.mxu0 0.0
        %2958 = vmatprep.subr.mxu0 0.0
        %2959 = vmatpush2.msra.mxu0 0.0
        %2960 = vmatprep.subr.mxu0 0.0
        %2961 = vmatpush2.msra.mxu0 0.0
        %2962 = vmatprep.subr.mxu0 0.0
        %2963 = vmatpush2.msra.mxu0 0.0
        %2964 = vmatprep.subr.mxu0 0.0
        %2965 = vmatpush2.msra.mxu0 0.0
        %2966 = vmatprep.subr.mxu0 0.0
        %2967 = vmatpush2.msra.mxu0 0.0
        %2968 = vmatprep.subr.mxu0 0.0
        %2969 = vmatpush2.msra.mxu0 0.0
        %2970 = vmatprep.subr.mxu0 0.0
        %2971 = vmatpush2.msra.mxu0 0.0
        %2972 = vmatprep.mubr.f32.mxu0 0.0
        %2973 = vmatmul.mubr.f32.gmra.mxu0 %v2906
        %v2974 = vpop.f32.mrf.mxu0
        %v2975 = vadd.f32 0.0, %v2974
        %v2976 = vpop.f32.mrf.mxu0
        %2977 = vdwg.mxu0
        %v2979 = vsel %vm943, %v2975, 0
        %2981 = vmatprep.subr.mxu0 0.0
        %2982 = vmatpush1.msra.mxu0 0.0
        %2983 = vmatprep.subr.mxu0 0.0
        %2984 = vmatpush1.msra.mxu0 0.0
        %2985 = vmatprep.subr.mxu0 0.0
        %2986 = vmatpush1.msra.mxu0 0.0
        %2987 = vmatprep.subr.mxu0 0.0
        %2988 = vmatpush1.msra.mxu0 0.0
        %2989 = vmatprep.subr.mxu0 0.0
        %2990 = vmatpush1.msra.mxu0 0.0
        %2991 = vmatprep.subr.mxu0 0.0
        %2992 = vmatpush1.msra.mxu0 0.0
        %2993 = vmatprep.subr.mxu0 0.0
        %2994 = vmatpush1.msra.mxu0 0.0
        %2995 = vmatprep.subr.mxu0 0.0
        %2996 = vmatpush1.msra.mxu0 0.0
        %2997 = vmatprep.subr.mxu0 0.0
        %2998 = vmatpush1.msra.mxu0 0.0
        %2999 = vmatprep.subr.mxu0 0.0
        %3000 = vmatpush1.msra.mxu0 0.0
        %3001 = vmatprep.subr.mxu0 0.0
        %3002 = vmatpush1.msra.mxu0 0.0
        %3003 = vmatprep.subr.mxu0 0.0
        %3004 = vmatpush1.msra.mxu0 0.0
        %3005 = vmatprep.subr.mxu0 0.0
        %3006 = vmatpush1.msra.mxu0 0.0
        %3007 = vmatprep.subr.mxu0 0.0
        %3008 = vmatpush1.msra.mxu0 0.0
        %3009 = vmatprep.subr.mxu0 0.0
        %3010 = vmatpush1.msra.mxu0 0.0
        %3011 = vmatprep.subr.mxu0 0.0
        %3012 = vmatpush1.msra.mxu0 %v1945
        %3013 = vmatprep.subr.mxu0 0.0
        %3014 = vmatpush2.msra.mxu0 0.0
        %3015 = vmatprep.subr.mxu0 0.0
        %3016 = vmatpush2.msra.mxu0 0.0
        %3017 = vmatprep.subr.mxu0 0.0
        %3018 = vmatpush2.msra.mxu0 0.0
        %3019 = vmatprep.subr.mxu0 0.0
        %3020 = vmatpush2.msra.mxu0 0.0
        %3021 = vmatprep.subr.mxu0 0.0
        %3022 = vmatpush2.msra.mxu0 0.0
        %3023 = vmatprep.subr.mxu0 0.0
        %3024 = vmatpush2.msra.mxu0 0.0
        %3025 = vmatprep.subr.mxu0 0.0
        %3026 = vmatpush2.msra.mxu0 0.0
        %3027 = vmatprep.subr.mxu0 0.0
        %3028 = vmatpush2.msra.mxu0 0.0
        %3029 = vmatprep.subr.mxu0 0.0
        %3030 = vmatpush2.msra.mxu0 0.0
        %3031 = vmatprep.subr.mxu0 0.0
        %3032 = vmatpush2.msra.mxu0 0.0
        %3033 = vmatprep.subr.mxu0 0.0
        %3034 = vmatpush2.msra.mxu0 0.0
        %3035 = vmatprep.subr.mxu0 0.0
        %3036 = vmatpush2.msra.mxu0 0.0
        %3037 = vmatprep.subr.mxu0 0.0
        %3038 = vmatpush2.msra.mxu0 0.0
        %3039 = vmatprep.subr.mxu0 0.0
        %3040 = vmatpush2.msra.mxu0 0.0
        %3041 = vmatprep.subr.mxu0 0.0
        %3042 = vmatpush2.msra.mxu0 0.0
        %3043 = vmatprep.subr.mxu0 0.0
        %3044 = vmatpush2.msra.mxu0 0.0
        %3045 = vmatprep.mubr.f32.mxu0 0.0
        %3046 = vmatmul.mubr.f32.gmra.mxu0 %v2979
        %v3047 = vpop.f32.mrf.mxu0
        %v3048 = vadd.f32 0.0, %v3047
        %v3049 = vpop.f32.mrf.mxu0
        %3050 = vdwg.mxu0
        %v3051 = vadd.f32 %v2812, %v3048
        %v3053 = vlaneseq
        %v3054 = vshrl.u32 %v3053, 7
        %v3055 = vsub.s32 0, %v3054
        %v3056 = vrot.slane %v1946, %v3055
        %v3058 = vadd.f32 %v3051, %v3056
        %v3059 = vadd.f32 %v3058, %v1933
        %v3060 = vld [vmem:[%s14] sm:$0x1]
        %v3061 = vld [vmem:[%s15] sm:$0x1]
        %v3062 = vsel %vm798, %v3059, 0.0
        %3063 = vadd.xlane.f32.xlu0 %v3062
        %v3064 = vpop.xlane.xlu0 %3063
        %v3065 = vmul.f32 %v3064, %v1909
        %v3066 = vsub.f32 %v3059, %v3065
        %v3067 = vmul.f32 %v3066, %v3066
        %v3068 = vsel %vm798, %v3067, 0.0
        %3069 = vadd.xlane.f32.xlu0 %v3068
        %v3070 = vpop.xlane.xlu0 %3069
        %v3071 = vmul.f32 %v3070, %v1909
        %v3072 = vadd.f32 %v3071, 1e-05
        %v3073 = vrsqrt.pop %v3072
        %v3074 = vmul.f32 %v3066, %v3073
        %v3076 = vlaneseq
        %v3077 = vshrl.u32 %v3076, 7
        %v3078 = vsub.s32 0, %v3077
        %v3079 = vrot.slane %v3060, %v3078
        %v3081 = vmul.f32 %v3074, %v3079
        %v3083 = vlaneseq
        %v3084 = vshrl.u32 %v3083, 7
        %v3085 = vsub.s32 0, %v3084
        %v3086 = vrot.slane %v3061, %v3085
        %v3088 = vadd.f32 %v3081, %v3086
        %v3089 = vld [vmem:[%s16] sm:$0xff]
        %v3090 = vld [vmem:[%s16 + $0x8] sm:$0xff]
        %v3091 = vld [vmem:[%s16 + $0x10] sm:$0xff]
        %v3092 = vld [vmem:[%s16 + $0x18] sm:$0xff]
        %v3093 = vld [vmem:[%s17] sm:$0x1]
        %v3095 = vlaneseq
        %v3096 = vshrl.u32 %v3095, 7
        %v3097 = vsub.s32 0, %v3096
        %v3098 = vrot.slane %v3093, %v3097
        %v3101 = vsel %vm798, %v3088, 0
        %3103 = vmatprep.subr.mxu0 0.0
        %3104 = vmatpush1.msra.mxu0 0.0
        %3105 = vmatprep.subr.mxu0 0.0
        %3106 = vmatpush1.msra.mxu0 0.0
        %3107 = vmatprep.subr.mxu0 0.0
        %3108 = vmatpush1.msra.mxu0 0.0
        %3109 = vmatprep.subr.mxu0 0.0
        %3110 = vmatpush1.msra.mxu0 0.0
        %3111 = vmatprep.subr.mxu0 0.0
        %3112 = vmatpush1.msra.mxu0 0.0
        %3113 = vmatprep.subr.mxu0 0.0
        %3114 = vmatpush1.msra.mxu0 0.0
        %3115 = vmatprep.subr.mxu0 0.0
        %3116 = vmatpush1.msra.mxu0 0.0
        %3117 = vmatprep.subr.mxu0 0.0
        %3118 = vmatpush1.msra.mxu0 0.0
        %3119 = vmatprep.subr.mxu0 0.0
        %3120 = vmatpush1.msra.mxu0 0.0
        %3121 = vmatprep.subr.mxu0 0.0
        %3122 = vmatpush1.msra.mxu0 0.0
        %3123 = vmatprep.subr.mxu0 0.0
        %3124 = vmatpush1.msra.mxu0 0.0
        %3125 = vmatprep.subr.mxu0 0.0
        %3126 = vmatpush1.msra.mxu0 0.0
        %3127 = vmatprep.subr.mxu0 0.0
        %3128 = vmatpush1.msra.mxu0 %v3092
        %3129 = vmatprep.subr.mxu0 0.0
        %3130 = vmatpush1.msra.mxu0 %v3091
        %3131 = vmatprep.subr.mxu0 0.0
        %3132 = vmatpush1.msra.mxu0 %v3090
        %3133 = vmatprep.subr.mxu0 0.0
        %3134 = vmatpush1.msra.mxu0 %v3089
        %3135 = vmatprep.subr.mxu0 0.0
        %3136 = vmatpush2.msra.mxu0 0.0
        %3137 = vmatprep.subr.mxu0 0.0
        %3138 = vmatpush2.msra.mxu0 0.0
        %3139 = vmatprep.subr.mxu0 0.0
        %3140 = vmatpush2.msra.mxu0 0.0
        %3141 = vmatprep.subr.mxu0 0.0
        %3142 = vmatpush2.msra.mxu0 0.0
        %3143 = vmatprep.subr.mxu0 0.0
        %3144 = vmatpush2.msra.mxu0 0.0
        %3145 = vmatprep.subr.mxu0 0.0
        %3146 = vmatpush2.msra.mxu0 0.0
        %3147 = vmatprep.subr.mxu0 0.0
        %3148 = vmatpush2.msra.mxu0 0.0
        %3149 = vmatprep.subr.mxu0 0.0
        %3150 = vmatpush2.msra.mxu0 0.0
        %3151 = vmatprep.subr.mxu0 0.0
        %3152 = vmatpush2.msra.mxu0 0.0
        %3153 = vmatprep.subr.mxu0 0.0
        %3154 = vmatpush2.msra.mxu0 0.0
        %3155 = vmatprep.subr.mxu0 0.0
        %3156 = vmatpush2.msra.mxu0 0.0
        %3157 = vmatprep.subr.mxu0 0.0
        %3158 = vmatpush2.msra.mxu0 0.0
        %3159 = vmatprep.subr.mxu0 0.0
        %3160 = vmatpush2.msra.mxu0 0.0
        %3161 = vmatprep.subr.mxu0 0.0
        %3162 = vmatpush2.msra.mxu0 0.0
        %3163 = vmatprep.subr.mxu0 0.0
        %3164 = vmatpush2.msra.mxu0 0.0
        %3165 = vmatprep.subr.mxu0 0.0
        %3166 = vmatpush2.msra.mxu0 0.0
        %3167 = vmatprep.mubr.f32.mxu0 0.0
        %3168 = vmatmul.mubr.f32.gmra.mxu0 %v3101
        %v3169 = vpop.f32.mrf.mxu0
        %v3170 = vadd.f32 %v3098, %v3169
        %v3171 = vpop.f32.mrf.mxu0
        %3172 = vdwg.mxu0
        %v3173 = vmax.f32 %v3170, 0.0
        %v3174 = vld [vmem:[%s18] sm:$0xff]
        %v3175 = vld [vmem:[%s18 + $0x8] sm:$0xff]
        %v3176 = vld [vmem:[%s18 + $0x10] sm:$0xff]
        %v3177 = vld [vmem:[%s18 + $0x18] sm:$0xff]
        %v3178 = vld [vmem:[%s18 + $0x20] sm:$0xff]
        %v3179 = vld [vmem:[%s18 + $0x28] sm:$0xff]
        %v3180 = vld [vmem:[%s18 + $0x30] sm:$0xff]
        %v3181 = vld [vmem:[%s18 + $0x38] sm:$0xff]
        %v3182 = vld [vmem:[%s18 + $0x40] sm:$0xff]
        %v3183 = vld [vmem:[%s18 + $0x48] sm:$0xff]
        %v3184 = vld [vmem:[%s18 + $0x50] sm:$0xff]
        %v3185 = vld [vmem:[%s18 + $0x58] sm:$0xff]
        %v3186 = vld [vmem:[%s18 + $0x60] sm:$0xff]
        %v3187 = vld [vmem:[%s18 + $0x68] sm:$0xff]
        %v3188 = vld [vmem:[%s18 + $0x70] sm:$0xff]
        %v3189 = vld [vmem:[%s18 + $0x78] sm:$0xff]
        %v3190 = vld [vmem:[%s19] sm:$0x1]
        %v3192 = vlaneseq
        %v3193 = vshrl.u32 %v3192, 7
        %v3194 = vsub.s32 0, %v3193
        %v3195 = vrot.slane %v3190, %v3194
        %3197 = vmatprep.subr.mxu0 0.0
        %3198 = vmatpush1.msra.mxu0 %v3189
        %3199 = vmatprep.subr.mxu0 0.0
        %3200 = vmatpush1.msra.mxu0 %v3188
        %3201 = vmatprep.subr.mxu0 0.0
        %3202 = vmatpush1.msra.mxu0 %v3187
        %3203 = vmatprep.subr.mxu0 0.0
        %3204 = vmatpush1.msra.mxu0 %v3186
        %3205 = vmatprep.subr.mxu0 0.0
        %3206 = vmatpush1.msra.mxu0 %v3185
        %3207 = vmatprep.subr.mxu0 0.0
        %3208 = vmatpush1.msra.mxu0 %v3184
        %3209 = vmatprep.subr.mxu0 0.0
        %3210 = vmatpush1.msra.mxu0 %v3183
        %3211 = vmatprep.subr.mxu0 0.0
        %3212 = vmatpush1.msra.mxu0 %v3182
        %3213 = vmatprep.subr.mxu0 0.0
        %3214 = vmatpush1.msra.mxu0 %v3181
        %3215 = vmatprep.subr.mxu0 0.0
        %3216 = vmatpush1.msra.mxu0 %v3180
        %3217 = vmatprep.subr.mxu0 0.0
        %3218 = vmatpush1.msra.mxu0 %v3179
        %3219 = vmatprep.subr.mxu0 0.0
        %3220 = vmatpush1.msra.mxu0 %v3178
        %3221 = vmatprep.subr.mxu0 0.0
        %3222 = vmatpush1.msra.mxu0 %v3177
        %3223 = vmatprep.subr.mxu0 0.0
        %3224 = vmatpush1.msra.mxu0 %v3176
        %3225 = vmatprep.subr.mxu0 0.0
        %3226 = vmatpush1.msra.mxu0 %v3175
        %3227 = vmatprep.subr.mxu0 0.0
        %3228 = vmatpush1.msra.mxu0 %v3174
        %3229 = vmatprep.subr.mxu0 0.0
        %3230 = vmatpush2.msra.mxu0 0.0
        %3231 = vmatprep.subr.mxu0 0.0
        %3232 = vmatpush2.msra.mxu0 0.0
        %3233 = vmatprep.subr.mxu0 0.0
        %3234 = vmatpush2.msra.mxu0 0.0
        %3235 = vmatprep.subr.mxu0 0.0
        %3236 = vmatpush2.msra.mxu0 0.0
        %3237 = vmatprep.subr.mxu0 0.0
        %3238 = vmatpush2.msra.mxu0 0.0
        %3239 = vmatprep.subr.mxu0 0.0
        %3240 = vmatpush2.msra.mxu0 0.0
        %3241 = vmatprep.subr.mxu0 0.0
        %3242 = vmatpush2.msra.mxu0 0.0
        %3243 = vmatprep.subr.mxu0 0.0
        %3244 = vmatpush2.msra.mxu0 0.0
        %3245 = vmatprep.subr.mxu0 0.0
        %3246 = vmatpush2.msra.mxu0 0.0
        %3247 = vmatprep.subr.mxu0 0.0
        %3248 = vmatpush2.msra.mxu0 0.0
        %3249 = vmatprep.subr.mxu0 0.0
        %3250 = vmatpush2.msra.mxu0 0.0
        %3251 = vmatprep.subr.mxu0 0.0
        %3252 = vmatpush2.msra.mxu0 0.0
        %3253 = vmatprep.subr.mxu0 0.0
        %3254 = vmatpush2.msra.mxu0 0.0
        %3255 = vmatprep.subr.mxu0 0.0
        %3256 = vmatpush2.msra.mxu0 0.0
        %3257 = vmatprep.subr.mxu0 0.0
        %3258 = vmatpush2.msra.mxu0 0.0
        %3259 = vmatprep.subr.mxu0 0.0
        %3260 = vmatpush2.msra.mxu0 0.0
        %3261 = vmatprep.mubr.f32.mxu0 0.0
        %3262 = vmatmul.mubr.f32.gmra.mxu0 %v3173
        %v3263 = vpop.f32.mrf.mxu0
        %v3264 = vadd.f32 %v3195, %v3263
        %v3265 = vpop.f32.mrf.mxu0
        %3266 = vdwg.mxu0
        %v3267 = vadd.f32 %v3264, %v3088
        %v3268 = vld [vmem:[%s20] sm:$0x1]
        %v3269 = vld [vmem:[%s21] sm:$0x1]
        %v3270 = vsel %vm798, %v3267, 0.0
        %3271 = vadd.xlane.f32.xlu0 %v3270
        %v3272 = vpop.xlane.xlu0 %3271
        %v3273 = vmul.f32 %v3272, %v1909
        %v3274 = vsub.f32 %v3267, %v3273
        %v3275 = vmul.f32 %v3274, %v3274
        %v3276 = vsel %vm798, %v3275, 0.0
        %3277 = vadd.xlane.f32.xlu0 %v3276
        %v3278 = vpop.xlane.xlu0 %3277
        %v3279 = vmul.f32 %v3278, %v1909
        %v3280 = vadd.f32 %v3279, 1e-05
        %v3281 = vrsqrt.pop %v3280
        %v3282 = vmul.f32 %v3274, %v3281
        %v3284 = vlaneseq
        %v3285 = vshrl.u32 %v3284, 7
        %v3286 = vsub.s32 0, %v3285
        %v3287 = vrot.slane %v3268, %v3286
        %v3289 = vmul.f32 %v3282, %v3287
        %v3291 = vlaneseq
        %v3292 = vshrl.u32 %v3291, 7
        %v3293 = vsub.s32 0, %v3292
        %v3294 = vrot.slane %v3269, %v3293
        %v3296 = vadd.f32 %v3289, %v3294
        %s3297 = scalar_lea.vmem %s4, 32
        %v3298 = vld [vmem:[%s3297] sm:$0xff]
        %v3299 = vld [vmem:[%s3297 + $0x8] sm:$0xff]
        %v3300 = vld [vmem:[%s3297 + $0x10] sm:$0xff]
        %v3301 = vld [vmem:[%s3297 + $0x18] sm:$0xff]
        %s3302 = scalar_lea.vmem %s5, 32
        %v3303 = vld [vmem:[%s3302] sm:$0xff]
        %v3304 = vld [vmem:[%s3302 + $0x8] sm:$0xff]
        %v3305 = vld [vmem:[%s3302 + $0x10] sm:$0xff]
        %v3306 = vld [vmem:[%s3302 + $0x18] sm:$0xff]
        %s3307 = scalar_lea.vmem %s6, 32
        %v3308 = vld [vmem:[%s3307] sm:$0xff]
        %v3309 = vld [vmem:[%s3307 + $0x8] sm:$0xff]
        %v3310 = vld [vmem:[%s3307 + $0x10] sm:$0xff]
        %v3311 = vld [vmem:[%s3307 + $0x18] sm:$0xff]
        %s3312 = scalar_lea.vmem %s7, 1
        %v3313 = vld [vmem:[%s3312] sm:$0x1]
        %v3315 = vsel %vm798, %v3296, 0
        %3317 = vmatprep.subr.mxu0 0.0
        %3318 = vmatpush1.msra.mxu0 0.0
        %3319 = vmatprep.subr.mxu0 0.0
        %3320 = vmatpush1.msra.mxu0 0.0
        %3321 = vmatprep.subr.mxu0 0.0
        %3322 = vmatpush1.msra.mxu0 0.0
        %3323 = vmatprep.subr.mxu0 0.0
        %3324 = vmatpush1.msra.mxu0 0.0
        %3325 = vmatprep.subr.mxu0 0.0
        %3326 = vmatpush1.msra.mxu0 0.0
        %3327 = vmatprep.subr.mxu0 0.0
        %3328 = vmatpush1.msra.mxu0 0.0
        %3329 = vmatprep.subr.mxu0 0.0
        %3330 = vmatpush1.msra.mxu0 0.0
        %3331 = vmatprep.subr.mxu0 0.0
        %3332 = vmatpush1.msra.mxu0 0.0
        %3333 = vmatprep.subr.mxu0 0.0
        %3334 = vmatpush1.msra.mxu0 0.0
        %3335 = vmatprep.subr.mxu0 0.0
        %3336 = vmatpush1.msra.mxu0 0.0
        %3337 = vmatprep.subr.mxu0 0.0
        %3338 = vmatpush1.msra.mxu0 0.0
        %3339 = vmatprep.subr.mxu0 0.0
        %3340 = vmatpush1.msra.mxu0 0.0
        %3341 = vmatprep.subr.mxu0 0.0
        %3342 = vmatpush1.msra.mxu0 %v3301
        %3343 = vmatprep.subr.mxu0 0.0
        %3344 = vmatpush1.msra.mxu0 %v3300
        %3345 = vmatprep.subr.mxu0 0.0
        %3346 = vmatpush1.msra.mxu0 %v3299
        %3347 = vmatprep.subr.mxu0 0.0
        %3348 = vmatpush1.msra.mxu0 %v3298
        %3349 = vmatprep.subr.mxu0 0.0
        %3350 = vmatpush2.msra.mxu0 0.0
        %3351 = vmatprep.subr.mxu0 0.0
        %3352 = vmatpush2.msra.mxu0 0.0
        %3353 = vmatprep.subr.mxu0 0.0
        %3354 = vmatpush2.msra.mxu0 0.0
        %3355 = vmatprep.subr.mxu0 0.0
        %3356 = vmatpush2.msra.mxu0 0.0
        %3357 = vmatprep.subr.mxu0 0.0
        %3358 = vmatpush2.msra.mxu0 0.0
        %3359 = vmatprep.subr.mxu0 0.0
        %3360 = vmatpush2.msra.mxu0 0.0
        %3361 = vmatprep.subr.mxu0 0.0
        %3362 = vmatpush2.msra.mxu0 0.0
        %3363 = vmatprep.subr.mxu0 0.0
        %3364 = vmatpush2.msra.mxu0 0.0
        %3365 = vmatprep.subr.mxu0 0.0
        %3366 = vmatpush2.msra.mxu0 0.0
        %3367 = vmatprep.subr.mxu0 0.0
        %3368 = vmatpush2.msra.mxu0 0.0
        %3369 = vmatprep.subr.mxu0 0.0
        %3370 = vmatpush2.msra.mxu0 0.0
        %3371 = vmatprep.subr.mxu0 0.0
        %3372 = vmatpush2.msra.mxu0 0.0
        %3373 = vmatprep.subr.mxu0 0.0
        %3374 = vmatpush2.msra.mxu0 0.0
        %3375 = vmatprep.subr.mxu0 0.0
        %3376 = vmatpush2.msra.mxu0 0.0
        %3377 = vmatprep.subr.mxu0 0.0
        %3378 = vmatpush2.msra.mxu0 0.0
        %3379 = vmatprep.subr.mxu0 0.0
        %3380 = vmatpush2.msra.mxu0 0.0
        %3381 = vmatprep.mubr.f32.mxu0 0.0
        %3382 = vmatmul.mubr.f32.gmra.mxu0 %v3315
        %v3383 = vpop.f32.mrf.mxu0
        %v3384 = vadd.f32 0.0, %v3383
        %v3385 = vpop.f32.mrf.mxu0
        %3386 = vdwg.mxu0
        %v3387 = vmul.f32 %v3384, 0.17677669
        %3388 = vmatprep.subr.mxu0 0.0
        %3389 = vmatpush1.msra.mxu0 0.0
        %3390 = vmatprep.subr.mxu0 0.0
        %3391 = vmatpush1.msra.mxu0 0.0
        %3392 = vmatprep.subr.mxu0 0.0
        %3393 = vmatpush1.msra.mxu0 0.0
        %3394 = vmatprep.subr.mxu0 0.0
        %3395 = vmatpush1.msra.mxu0 0.0
        %3396 = vmatprep.subr.mxu0 0.0
        %3397 = vmatpush1.msra.mxu0 0.0
        %3398 = vmatprep.subr.mxu0 0.0
        %3399 = vmatpush1.msra.mxu0 0.0
        %3400 = vmatprep.subr.mxu0 0.0
        %3401 = vmatpush1.msra.mxu0 0.0
        %3402 = vmatprep.subr.mxu0 0.0
        %3403 = vmatpush1.msra.mxu0 0.0
        %3404 = vmatprep.subr.mxu0 0.0
        %3405 = vmatpush1.msra.mxu0 0.0
        %3406 = vmatprep.subr.mxu0 0.0
        %3407 = vmatpush1.msra.mxu0 0.0
        %3408 = vmatprep.subr.mxu0 0.0
        %3409 = vmatpush1.msra.mxu0 0.0
        %3410 = vmatprep.subr.mxu0 0.0
        %3411 = vmatpush1.msra.mxu0 0.0
        %3412 = vmatprep.subr.mxu0 0.0
        %3413 = vmatpush1.msra.mxu0 %v3306
        %3414 = vmatprep.subr.mxu0 0.0
        %3415 = vmatpush1.msra.mxu0 %v3305
        %3416 = vmatprep.subr.mxu0 0.0
        %3417 = vmatpush1.msra.mxu0 %v3304
        %3418 = vmatprep.subr.mxu0 0.0
        %3419 = vmatpush1.msra.mxu0 %v3303
        %3420 = vmatprep.subr.mxu0 0.0
        %3421 = vmatpush2.msra.mxu0 0.0
        %3422 = vmatprep.subr.mxu0 0.0
        %3423 = vmatpush2.msra.mxu0 0.0
        %3424 = vmatprep.subr.mxu0 0.0
        %3425 = vmatpush2.msra.mxu0 0.0
        %3426 = vmatprep.subr.mxu0 0.0
        %3427 = vmatpush2.msra.mxu0 0.0
        %3428 = vmatprep.subr.mxu0 0.0
        %3429 = vmatpush2.msra.mxu0 0.0
        %3430 = vmatprep.subr.mxu0 0.0
        %3431 = vmatpush2.msra.mxu0 0.0
        %3432 = vmatprep.subr.mxu0 0.0
        %3433 = vmatpush2.msra.mxu0 0.0
        %3434 = vmatprep.subr.mxu0 0.0
        %3435 = vmatpush2.msra.mxu0 0.0
        %3436 = vmatprep.subr.mxu0 0.0
        %3437 = vmatpush2.msra.mxu0 0.0
        %3438 = vmatprep.subr.mxu0 0.0
        %3439 = vmatpush2.msra.mxu0 0.0
        %3440 = vmatprep.subr.mxu0 0.0
        %3441 = vmatpush2.msra.mxu0 0.0
        %3442 = vmatprep.subr.mxu0 0.0
        %3443 = vmatpush2.msra.mxu0 0.0
        %3444 = vmatprep.subr.mxu0 0.0
        %3445 = vmatpush2.msra.mxu0 0.0
        %3446 = vmatprep.subr.mxu0 0.0
        %3447 = vmatpush2.msra.mxu0 0.0
        %3448 = vmatprep.subr.mxu0 0.0
        %3449 = vmatpush2.msra.mxu0 0.0
        %3450 = vmatprep.subr.mxu0 0.0
        %3451 = vmatpush2.msra.mxu0 0.0
        %3452 = vmatprep.mubr.f32.mxu0 0.0
        %3453 = vmatmul.mubr.f32.gmra.mxu0 %v3315
        %v3454 = vpop.f32.mrf.mxu0
        %v3455 = vadd.f32 0.0, %v3454
        %v3456 = vpop.f32.mrf.mxu0
        %3457 = vdwg.mxu0
        %v3459 = vsel %vm943, %v3387, 0
        %v3462 = vsel %vm943, %v3455, 0
        %3464 = vmatprep.subr.mxu0 0.0
        %3465 = vmatpush1.xpose.msra.mxu0 0.0
        %3466 = vmatprep.subr.mxu0 0.0
        %3467 = vmatpush1.xpose.msra.mxu0 0.0
        %3468 = vmatprep.subr.mxu0 0.0
        %3469 = vmatpush1.xpose.msra.mxu0 0.0
        %3470 = vmatprep.subr.mxu0 0.0
        %3471 = vmatpush1.xpose.msra.mxu0 0.0
        %3472 = vmatprep.subr.mxu0 0.0
        %3473 = vmatpush1.xpose.msra.mxu0 0.0
        %3474 = vmatprep.subr.mxu0 0.0
        %3475 = vmatpush1.xpose.msra.mxu0 0.0
        %3476 = vmatprep.subr.mxu0 0.0
        %3477 = vmatpush1.xpose.msra.mxu0 0.0
        %3478 = vmatprep.subr.mxu0 0.0
        %3479 = vmatpush1.xpose.msra.mxu0 0.0
        %3480 = vmatprep.subr.mxu0 0.0
        %3481 = vmatpush1.xpose.msra.mxu0 0.0
        %3482 = vmatprep.subr.mxu0 0.0
        %3483 = vmatpush1.xpose.msra.mxu0 0.0
        %3484 = vmatprep.subr.mxu0 0.0
        %3485 = vmatpush1.xpose.msra.mxu0 0.0
        %3486 = vmatprep.subr.mxu0 0.0
        %3487 = vmatpush1.xpose.msra.mxu0 0.0
        %3488 = vmatprep.subr.mxu0 0.0
        %3489 = vmatpush1.xpose.msra.mxu0 0.0
        %3490 = vmatprep.subr.mxu0 0.0
        %3491 = vmatpush1.xpose.msra.mxu0 0.0
        %3492 = vmatprep.subr.mxu0 0.0
        %3493 = vmatpush1.xpose.msra.mxu0 0.0
        %3494 = vmatprep.subr.mxu0 0.0
        %3495 = vmatpush1.xpose.msra.mxu0 %v3462
        %3496 = vmatprep.subr.mxu0 0.0
        %3497 = vmatpush2.xpose.msra.mxu0 0.0
        %3498 = vmatprep.subr.mxu0 0.0
        %3499 = vmatpush2.xpose.msra.mxu0 0.0
        %3500 = vmatprep.subr.mxu0 0.0
        %3501 = vmatpush2.xpose.msra.mxu0 0.0
        %3502 = vmatprep.subr.mxu0 0.0
        %3503 = vmatpush2.xpose.msra.mxu0 0.0
        %3504 = vmatprep.subr.mxu0 0.0
        %3505 = vmatpush2.xpose.msra.mxu0 0.0
        %3506 = vmatprep.subr.mxu0 0.0
        %3507 = vmatpush2.xpose.msra.mxu0 0.0
        %3508 = vmatprep.subr.mxu0 0.0
        %3509 = vmatpush2.xpose.msra.mxu0 0.0
        %3510 = vmatprep.subr.mxu0 0.0
        %3511 = vmatpush2.xpose.msra.mxu0 0.0
        %3512 = vmatprep.subr.mxu0 0.0
        %3513 = vmatpush2.xpose.msra.mxu0 0.0
        %3514 = vmatprep.subr.mxu0 0.0
        %3515 = vmatpush2.xpose.msra.mxu0 0.0
        %3516 = vmatprep.subr.mxu0 0.0
        %3517 = vmatpush2.xpose.msra.mxu0 0.0
        %3518 = vmatprep.subr.mxu0 0.0
        %3519 = vmatpush2.xpose.msra.mxu0 0.0
        %3520 = vmatprep.subr.mxu0 0.0
        %3521 = vmatpush2.xpose.msra.mxu0 0.0
        %3522 = vmatprep.subr.mxu0 0.0
        %3523 = vmatpush2.xpose.msra.mxu0 0.0
        %3524 = vmatprep.subr.mxu0 0.0
        %3525 = vmatpush2.xpose.msra.mxu0 0.0
        %3526 = vmatprep.subr.mxu0 0.0
        %3527 = vmatpush2.xpose.msra.mxu0 0.0
        %3528 = vmatprep.mubr.f32.mxu0 0.0
        %3529 = vmatmul.mubr.f32.gmra.mxu0 %v3459
        %v3530 = vpop.f32.mrf.mxu0
        %v3531 = vadd.f32 %v783, %v3530
        %v3532 = vpop.f32.mrf.mxu0
        %3533 = vdwg.mxu0
        %v3534 = vsel %vm943, %v3531, -inf
        %3535 = vmax.xlane.f32.xlu0 %v3534
        %v3536 = vpop.xlane.xlu0 %3535
        %v3537 = vsub.f32 %v3531, %v3536
        %v3538 = vmul.f32 %v3537, 1.442695
        %v3539 = vpow.pop %v3538
        %v3540 = vsel %vm943, %v3539, 0.0
        %3541 = vadd.xlane.f32.xlu0 %v3540
        %v3542 = vpop.xlane.xlu0 %3541
        %v3543 = vrcp.pop %v3542
        %v3544 = vmul.f32 %v3539, %v3543
        %3545 = vrot.lane.b32.xlu0 %v3455, 96
        %v3546 = vpop.permute.xlu0 %3545
        %v3549 = vsel %vm943, %v3544, 0
        %3551 = vmatprep.subr.mxu0 0.0
        %3552 = vmatpush1.msra.mxu0 0.0
        %3553 = vmatprep.subr.mxu0 0.0
        %3554 = vmatpush1.msra.mxu0 0.0
        %3555 = vmatprep.subr.mxu0 0.0
        %3556 = vmatpush1.msra.mxu0 0.0
        %3557 = vmatprep.subr.mxu0 0.0
        %3558 = vmatpush1.msra.mxu0 0.0
        %3559 = vmatprep.subr.mxu0 0.0
        %3560 = vmatpush1.msra.mxu0 0.0
        %3561 = vmatprep.subr.mxu0 0.0
        %3562 = vmatpush1.msra.mxu0 0.0
        %3563 = vmatprep.subr.mxu0 0.0
        %3564 = vmatpush1.msra.mxu0 0.0
        %3565 = vmatprep.subr.mxu0 0.0
        %3566 = vmatpush1.msra.mxu0 0.0
        %3567 = vmatprep.subr.mxu0 0.0
        %3568 = vmatpush1.msra.mxu0 0.0
        %3569 = vmatprep.subr.mxu0 0.0
        %3570 = vmatpush1.msra.mxu0 0.0
        %3571 = vmatprep.subr.mxu0 0.0
        %3572 = vmatpush1.msra.mxu0 0.0
        %3573 = vmatprep.subr.mxu0 0.0
        %3574 = vmatpush1.msra.mxu0 0.0
        %3575 = vmatprep.subr.mxu0 0.0
        %3576 = vmatpush1.msra.mxu0 0.0
        %3577 = vmatprep.subr.mxu0 0.0
        %3578 = vmatpush1.msra.mxu0 0.0
        %3579 = vmatprep.subr.mxu0 0.0
        %3580 = vmatpush1.msra.mxu0 0.0
        %3581 = vmatprep.subr.mxu0 0.0
        %3582 = vmatpush1.msra.mxu0 %v3546
        %3583 = vmatprep.subr.mxu0 0.0
        %3584 = vmatpush2.msra.mxu0 0.0
        %3585 = vmatprep.subr.mxu0 0.0
        %3586 = vmatpush2.msra.mxu0 0.0
        %3587 = vmatprep.subr.mxu0 0.0
        %3588 = vmatpush2.msra.mxu0 0.0
        %3589 = vmatprep.subr.mxu0 0.0
        %3590 = vmatpush2.msra.mxu0 0.0
        %3591 = vmatprep.subr.mxu0 0.0
        %3592 = vmatpush2.msra.mxu0 0.0
        %3593 = vmatprep.subr.mxu0 0.0
        %3594 = vmatpush2.msra.mxu0 0.0
        %3595 = vmatprep.subr.mxu0 0.0
        %3596 = vmatpush2.msra.mxu0 0.0
        %3597 = vmatprep.subr.mxu0 0.0
        %3598 = vmatpush2.msra.mxu0 0.0
        %3599 = vmatprep.subr.mxu0 0.0
        %3600 = vmatpush2.msra.mxu0 0.0
        %3601 = vmatprep.subr.mxu0 0.0
        %3602 = vmatpush2.msra.mxu0 0.0
        %3603 = vmatprep.subr.mxu0 0.0
        %3604 = vmatpush2.msra.mxu0 0.0
        %3605 = vmatprep.subr.mxu0 0.0
        %3606 = vmatpush2.msra.mxu0 0.0
        %3607 = vmatprep.subr.mxu0 0.0
        %3608 = vmatpush2.msra.mxu0 0.0
        %3609 = vmatprep.subr.mxu0 0.0
        %3610 = vmatpush2.msra.mxu0 0.0
        %3611 = vmatprep.subr.mxu0 0.0
        %3612 = vmatpush2.msra.mxu0 0.0
        %3613 = vmatprep.subr.mxu0 0.0
        %3614 = vmatpush2.msra.mxu0 0.0
        %3615 = vmatprep.mubr.f32.mxu0 0.0
        %3616 = vmatmul.mubr.f32.gmra.mxu0 %v3549
        %v3617 = vpop.f32.mrf.mxu0
        %v3618 = vadd.f32 0.0, %v3617
        %v3619 = vpop.f32.mrf.mxu0
        %3620 = vdwg.mxu0
        %3621 = vrot.lane.b32.xlu0 %v3387, 120
        %v3622 = vpop.permute.xlu0 %3621
        %3623 = vrot.lane.b32.xlu0 %v3455, 120
        %v3624 = vpop.permute.xlu0 %3623
        %v3625 = vsel %vm943, %v3622, 0
        %v3627 = vsel %vm943, %v3624, 0
        %3629 = vmatprep.subr.mxu0 0.0
        %3630 = vmatpush1.xpose.msra.mxu0 0.0
        %3631 = vmatprep.subr.mxu0 0.0
        %3632 = vmatpush1.xpose.msra.mxu0 0.0
        %3633 = vmatprep.subr.mxu0 0.0
        %3634 = vmatpush1.xpose.msra.mxu0 0.0
        %3635 = vmatprep.subr.mxu0 0.0
        %3636 = vmatpush1.xpose.msra.mxu0 0.0
        %3637 = vmatprep.subr.mxu0 0.0
        %3638 = vmatpush1.xpose.msra.mxu0 0.0
        %3639 = vmatprep.subr.mxu0 0.0
        %3640 = vmatpush1.xpose.msra.mxu0 0.0
        %3641 = vmatprep.subr.mxu0 0.0
        %3642 = vmatpush1.xpose.msra.mxu0 0.0
        %3643 = vmatprep.subr.mxu0 0.0
        %3644 = vmatpush1.xpose.msra.mxu0 0.0
        %3645 = vmatprep.subr.mxu0 0.0
        %3646 = vmatpush1.xpose.msra.mxu0 0.0
        %3647 = vmatprep.subr.mxu0 0.0
        %3648 = vmatpush1.xpose.msra.mxu0 0.0
        %3649 = vmatprep.subr.mxu0 0.0
        %3650 = vmatpush1.xpose.msra.mxu0 0.0
        %3651 = vmatprep.subr.mxu0 0.0
        %3652 = vmatpush1.xpose.msra.mxu0 0.0
        %3653 = vmatprep.subr.mxu0 0.0
        %3654 = vmatpush1.xpose.msra.mxu0 0.0
        %3655 = vmatprep.subr.mxu0 0.0
        %3656 = vmatpush1.xpose.msra.mxu0 0.0
        %3657 = vmatprep.subr.mxu0 0.0
        %3658 = vmatpush1.xpose.msra.mxu0 0.0
        %3659 = vmatprep.subr.mxu0 0.0
        %3660 = vmatpush1.xpose.msra.mxu0 %v3627
        %3661 = vmatprep.subr.mxu0 0.0
        %3662 = vmatpush2.xpose.msra.mxu0 0.0
        %3663 = vmatprep.subr.mxu0 0.0
        %3664 = vmatpush2.xpose.msra.mxu0 0.0
        %3665 = vmatprep.subr.mxu0 0.0
        %3666 = vmatpush2.xpose.msra.mxu0 0.0
        %3667 = vmatprep.subr.mxu0 0.0
        %3668 = vmatpush2.xpose.msra.mxu0 0.0
        %3669 = vmatprep.subr.mxu0 0.0
        %3670 = vmatpush2.xpose.msra.mxu0 0.0
        %3671 = vmatprep.subr.mxu0 0.0
        %3672 = vmatpush2.xpose.msra.mxu0 0.0
        %3673 = vmatprep.subr.mxu0 0.0
        %3674 = vmatpush2.xpose.msra.mxu0 0.0
        %3675 = vmatprep.subr.mxu0 0.0
        %3676 = vmatpush2.xpose.msra.mxu0 0.0
        %3677 = vmatprep.subr.mxu0 0.0
        %3678 = vmatpush2.xpose.msra.mxu0 0.0
        %3679 = vmatprep.subr.mxu0 0.0
        %3680 = vmatpush2.xpose.msra.mxu0 0.0
        %3681 = vmatprep.subr.mxu0 0.0
        %3682 = vmatpush2.xpose.msra.mxu0 0.0
        %3683 = vmatprep.subr.mxu0 0.0
        %3684 = vmatpush2.xpose.msra.mxu0 0.0
        %3685 = vmatprep.subr.mxu0 0.0
        %3686 = vmatpush2.xpose.msra.mxu0 0.0
        %3687 = vmatprep.subr.mxu0 0.0
        %3688 = vmatpush2.xpose.msra.mxu0 0.0
        %3689 = vmatprep.subr.mxu0 0.0
        %3690 = vmatpush2.xpose.msra.mxu0 0.0
        %3691 = vmatprep.subr.mxu0 0.0
        %3692 = vmatpush2.xpose.msra.mxu0 0.0
        %3693 = vmatprep.mubr.f32.mxu0 0.0
        %3694 = vmatmul.mubr.f32.gmra.mxu0 %v3625
        %v3695 = vpop.f32.mrf.mxu0
        %v3696 = vadd.f32 %v783, %v3695
        %v3697 = vpop.f32.mrf.mxu0
        %3698 = vdwg.mxu0
        %v3699 = vsel %vm943, %v3696, -inf
        %3700 = vmax.xlane.f32.xlu0 %v3699
        %v3701 = vpop.xlane.xlu0 %3700
        %v3702 = vsub.f32 %v3696, %v3701
        %v3703 = vmul.f32 %v3702, 1.442695
        %v3704 = vpow.pop %v3703
        %v3705 = vsel %vm943, %v3704, 0.0
        %3706 = vadd.xlane.f32.xlu0 %v3705
        %v3707 = vpop.xlane.xlu0 %3706
        %v3708 = vrcp.pop %v3707
        %v3709 = vmul.f32 %v3704, %v3708
        %3710 = vrot.lane.b32.xlu0 %v3455, 88
        %v3711 = vpop.permute.xlu0 %3710
        %v3714 = vsel %vm943, %v3709, 0
        %3716 = vmatprep.subr.mxu0 0.0
        %3717 = vmatpush1.msra.mxu0 0.0
        %3718 = vmatprep.subr.mxu0 0.0
        %3719 = vmatpush1.msra.mxu0 0.0
        %3720 = vmatprep.subr.mxu0 0.0
        %3721 = vmatpush1.msra.mxu0 0.0
        %3722 = vmatprep.subr.mxu0 0.0
        %3723 = vmatpush1.msra.mxu0 0.0
        %3724 = vmatprep.subr.mxu0 0.0
        %3725 = vmatpush1.msra.mxu0 0.0
        %3726 = vmatprep.subr.mxu0 0.0
        %3727 = vmatpush1.msra.mxu0 0.0
        %3728 = vmatprep.subr.mxu0 0.0
        %3729 = vmatpush1.msra.mxu0 0.0
        %3730 = vmatprep.subr.mxu0 0.0
        %3731 = vmatpush1.msra.mxu0 0.0
        %3732 = vmatprep.subr.mxu0 0.0
        %3733 = vmatpush1.msra.mxu0 0.0
        %3734 = vmatprep.subr.mxu0 0.0
        %3735 = vmatpush1.msra.mxu0 0.0
        %3736 = vmatprep.subr.mxu0 0.0
        %3737 = vmatpush1.msra.mxu0 0.0
        %3738 = vmatprep.subr.mxu0 0.0
        %3739 = vmatpush1.msra.mxu0 0.0
        %3740 = vmatprep.subr.mxu0 0.0
        %3741 = vmatpush1.msra.mxu0 0.0
        %3742 = vmatprep.subr.mxu0 0.0
        %3743 = vmatpush1.msra.mxu0 0.0
        %3744 = vmatprep.subr.mxu0 0.0
        %3745 = vmatpush1.msra.mxu0 0.0
        %3746 = vmatprep.subr.mxu0 0.0
        %3747 = vmatpush1.msra.mxu0 %v3711
        %3748 = vmatprep.subr.mxu0 0.0
        %3749 = vmatpush2.msra.mxu0 0.0
        %3750 = vmatprep.subr.mxu0 0.0
        %3751 = vmatpush2.msra.mxu0 0.0
        %3752 = vmatprep.subr.mxu0 0.0
        %3753 = vmatpush2.msra.mxu0 0.0
        %3754 = vmatprep.subr.mxu0 0.0
        %3755 = vmatpush2.msra.mxu0 0.0
        %3756 = vmatprep.subr.mxu0 0.0
        %3757 = vmatpush2.msra.mxu0 0.0
        %3758 = vmatprep.subr.mxu0 0.0
        %3759 = vmatpush2.msra.mxu0 0.0
        %3760 = vmatprep.subr.mxu0 0.0
        %3761 = vmatpush2.msra.mxu0 0.0
        %3762 = vmatprep.subr.mxu0 0.0
        %3763 = vmatpush2.msra.mxu0 0.0
        %3764 = vmatprep.subr.mxu0 0.0
        %3765 = vmatpush2.msra.mxu0 0.0
        %3766 = vmatprep.subr.mxu0 0.0
        %3767 = vmatpush2.msra.mxu0 0.0
        %3768 = vmatprep.subr.mxu0 0.0
        %3769 = vmatpush2.msra.mxu0 0.0
        %3770 = vmatprep.subr.mxu0 0.0
        %3771 = vmatpush2.msra.mxu0 0.0
        %3772 = vmatprep.subr.mxu0 0.0
        %3773 = vmatpush2.msra.mxu0 0.0
        %3774 = vmatprep.subr.mxu0 0.0
        %3775 = vmatpush2.msra.mxu0 0.0
        %3776 = vmatprep.subr.mxu0 0.0
        %3777 = vmatpush2.msra.mxu0 0.0
        %3778 = vmatprep.subr.mxu0 0.0
        %3779 = vmatpush2.msra.mxu0 0.0
        %3780 = vmatprep.mubr.f32.mxu0 0.0
        %3781 = vmatmul.mubr.f32.gmra.mxu0 %v3714
        %v3782 = vpop.f32.mrf.mxu0
        %v3783 = vadd.f32 0.0, %v3782
        %v3784 = vpop.f32.mrf.mxu0
        %3785 = vdwg.mxu0
        %v3787 = vsel %vm943, %v3783, 0
        %3789 = vmatprep.subr.mxu0 0.0
        %3790 = vmatpush1.msra.mxu0 0.0
        %3791 = vmatprep.subr.mxu0 0.0
        %3792 = vmatpush1.msra.mxu0 0.0
        %3793 = vmatprep.subr.mxu0 0.0
        %3794 = vmatpush1.msra.mxu0 0.0
        %3795 = vmatprep.subr.mxu0 0.0
        %3796 = vmatpush1.msra.mxu0 0.0
        %3797 = vmatprep.subr.mxu0 0.0
        %3798 = vmatpush1.msra.mxu0 0.0
        %3799 = vmatprep.subr.mxu0 0.0
        %3800 = vmatpush1.msra.mxu0 0.0
        %3801 = vmatprep.subr.mxu0 0.0
        %3802 = vmatpush1.msra.mxu0 0.0
        %3803 = vmatprep.subr.mxu0 0.0
        %3804 = vmatpush1.msra.mxu0 0.0
        %3805 = vmatprep.subr.mxu0 0.0
        %3806 = vmatpush1.msra.mxu0 0.0
        %3807 = vmatprep.subr.mxu0 0.0
        %3808 = vmatpush1.msra.mxu0 0.0
        %3809 = vmatprep.subr.mxu0 0.0
        %3810 = vmatpush1.msra.mxu0 0.0
        %3811 = vmatprep.subr.mxu0 0.0
        %3812 = vmatpush1.msra.mxu0 0.0
        %3813 = vmatprep.subr.mxu0 0.0
        %3814 = vmatpush1.msra.mxu0 0.0
        %3815 = vmatprep.subr.mxu0 0.0
        %3816 = vmatpush1.msra.mxu0 0.0
        %3817 = vmatprep.subr.mxu0 0.0
        %3818 = vmatpush1.msra.mxu0 0.0
        %3819 = vmatprep.subr.mxu0 0.0
        %3820 = vmatpush1.msra.mxu0 %v3309
        %3821 = vmatprep.subr.mxu0 0.0
        %3822 = vmatpush2.msra.mxu0 0.0
        %3823 = vmatprep.subr.mxu0 0.0
        %3824 = vmatpush2.msra.mxu0 0.0
        %3825 = vmatprep.subr.mxu0 0.0
        %3826 = vmatpush2.msra.mxu0 0.0
        %3827 = vmatprep.subr.mxu0 0.0
        %3828 = vmatpush2.msra.mxu0 0.0
        %3829 = vmatprep.subr.mxu0 0.0
        %3830 = vmatpush2.msra.mxu0 0.0
        %3831 = vmatprep.subr.mxu0 0.0
        %3832 = vmatpush2.msra.mxu0 0.0
        %3833 = vmatprep.subr.mxu0 0.0
        %3834 = vmatpush2.msra.mxu0 0.0
        %3835 = vmatprep.subr.mxu0 0.0
        %3836 = vmatpush2.msra.mxu0 0.0
        %3837 = vmatprep.subr.mxu0 0.0
        %3838 = vmatpush2.msra.mxu0 0.0
        %3839 = vmatprep.subr.mxu0 0.0
        %3840 = vmatpush2.msra.mxu0 0.0
        %3841 = vmatprep.subr.mxu0 0.0
        %3842 = vmatpush2.msra.mxu0 0.0
        %3843 = vmatprep.subr.mxu0 0.0
        %3844 = vmatpush2.msra.mxu0 0.0
        %3845 = vmatprep.subr.mxu0 0.0
        %3846 = vmatpush2.msra.mxu0 0.0
        %3847 = vmatprep.subr.mxu0 0.0
        %3848 = vmatpush2.msra.mxu0 0.0
        %3849 = vmatprep.subr.mxu0 0.0
        %3850 = vmatpush2.msra.mxu0 0.0
        %3851 = vmatprep.subr.mxu0 0.0
        %3852 = vmatpush2.msra.mxu0 0.0
        %3853 = vmatprep.mubr.f32.mxu0 0.0
        %3854 = vmatmul.mubr.f32.gmra.mxu0 %v3787
        %v3855 = vpop.f32.mrf.mxu0
        %v3856 = vadd.f32 0.0, %v3855
        %v3857 = vpop.f32.mrf.mxu0
        %3858 = vdwg.mxu0
        %v3860 = vsel %vm943, %v3618, 0
        %3862 = vmatprep.subr.mxu0 0.0
        %3863 = vmatpush1.msra.mxu0 0.0
        %3864 = vmatprep.subr.mxu0 0.0
        %3865 = vmatpush1.msra.mxu0 0.0
        %3866 = vmatprep.subr.mxu0 0.0
        %3867 = vmatpush1.msra.mxu0 0.0
        %3868 = vmatprep.subr.mxu0 0.0
        %3869 = vmatpush1.msra.mxu0 0.0
        %3870 = vmatprep.subr.mxu0 0.0
        %3871 = vmatpush1.msra.mxu0 0.0
        %3872 = vmatprep.subr.mxu0 0.0
        %3873 = vmatpush1.msra.mxu0 0.0
        %3874 = vmatprep.subr.mxu0 0.0
        %3875 = vmatpush1.msra.mxu0 0.0
        %3876 = vmatprep.subr.mxu0 0.0
        %3877 = vmatpush1.msra.mxu0 0.0
        %3878 = vmatprep.subr.mxu0 0.0
        %3879 = vmatpush1.msra.mxu0 0.0
        %3880 = vmatprep.subr.mxu0 0.0
        %3881 = vmatpush1.msra.mxu0 0.0
        %3882 = vmatprep.subr.mxu0 0.0
        %3883 = vmatpush1.msra.mxu0 0.0
        %3884 = vmatprep.subr.mxu0 0.0
        %3885 = vmatpush1.msra.mxu0 0.0
        %3886 = vmatprep.subr.mxu0 0.0
        %3887 = vmatpush1.msra.mxu0 0.0
        %3888 = vmatprep.subr.mxu0 0.0
        %3889 = vmatpush1.msra.mxu0 0.0
        %3890 = vmatprep.subr.mxu0 0.0
        %3891 = vmatpush1.msra.mxu0 0.0
        %3892 = vmatprep.subr.mxu0 0.0
        %3893 = vmatpush1.msra.mxu0 %v3308
        %3894 = vmatprep.subr.mxu0 0.0
        %3895 = vmatpush2.msra.mxu0 0.0
        %3896 = vmatprep.subr.mxu0 0.0
        %3897 = vmatpush2.msra.mxu0 0.0
        %3898 = vmatprep.subr.mxu0 0.0
        %3899 = vmatpush2.msra.mxu0 0.0
        %3900 = vmatprep.subr.mxu0 0.0
        %3901 = vmatpush2.msra.mxu0 0.0
        %3902 = vmatprep.subr.mxu0 0.0
        %3903 = vmatpush2.msra.mxu0 0.0
        %3904 = vmatprep.subr.mxu0 0.0
        %3905 = vmatpush2.msra.mxu0 0.0
        %3906 = vmatprep.subr.mxu0 0.0
        %3907 = vmatpush2.msra.mxu0 0.0
        %3908 = vmatprep.subr.mxu0 0.0
        %3909 = vmatpush2.msra.mxu0 0.0
        %3910 = vmatprep.subr.mxu0 0.0
        %3911 = vmatpush2.msra.mxu0 0.0
        %3912 = vmatprep.subr.mxu0 0.0
        %3913 = vmatpush2.msra.mxu0 0.0
        %3914 = vmatprep.subr.mxu0 0.0
        %3915 = vmatpush2.msra.mxu0 0.0
        %3916 = vmatprep.subr.mxu0 0.0
        %3917 = vmatpush2.msra.mxu0 0.0
        %3918 = vmatprep.subr.mxu0 0.0
        %3919 = vmatpush2.msra.mxu0 0.0
        %3920 = vmatprep.subr.mxu0 0.0
        %3921 = vmatpush2.msra.mxu0 0.0
        %3922 = vmatprep.subr.mxu0 0.0
        %3923 = vmatpush2.msra.mxu0 0.0
        %3924 = vmatprep.subr.mxu0 0.0
        %3925 = vmatpush2.msra.mxu0 0.0
        %3926 = vmatprep.mubr.f32.mxu0 0.0
        %3927 = vmatmul.mubr.f32.gmra.mxu0 %v3860
        %v3928 = vpop.f32.mrf.mxu0
        %v3929 = vadd.f32 %v3856, %v3928
        %v3930 = vpop.f32.mrf.mxu0
        %3931 = vdwg.mxu0
        %3932 = vrot.lane.b32.xlu0 %v3387, 112
        %v3933 = vpop.permute.xlu0 %3932
        %3934 = vrot.lane.b32.xlu0 %v3455, 112
        %v3935 = vpop.permute.xlu0 %3934
        %v3936 = vsel %vm943, %v3933, 0
        %v3938 = vsel %vm943, %v3935, 0
        %3940 = vmatprep.subr.mxu0 0.0
        %3941 = vmatpush1.xpose.msra.mxu0 0.0
        %3942 = vmatprep.subr.mxu0 0.0
        %3943 = vmatpush1.xpose.msra.mxu0 0.0
        %3944 = vmatprep.subr.mxu0 0.0
        %3945 = vmatpush1.xpose.msra.mxu0 0.0
        %3946 = vmatprep.subr.mxu0 0.0
        %3947 = vmatpush1.xpose.msra.mxu0 0.0
        %3948 = vmatprep.subr.mxu0 0.0
        %3949 = vmatpush1.xpose.msra.mxu0 0.0
        %3950 = vmatprep.subr.mxu0 0.0
        %3951 = vmatpush1.xpose.msra.mxu0 0.0
        %3952 = vmatprep.subr.mxu0 0.0
        %3953 = vmatpush1.xpose.msra.mxu0 0.0
        %3954 = vmatprep.subr.mxu0 0.0
        %3955 = vmatpush1.xpose.msra.mxu0 0.0
        %3956 = vmatprep.subr.mxu0 0.0
        %3957 = vmatpush1.xpose.msra.mxu0 0.0
        %3958 = vmatprep.subr.mxu0 0.0
        %3959 = vmatpush1.xpose.msra.mxu0 0.0
        %3960 = vmatprep.subr.mxu0 0.0
        %3961 = vmatpush1.xpose.msra.mxu0 0.0
        %3962 = vmatprep.subr.mxu0 0.0
        %3963 = vmatpush1.xpose.msra.mxu0 0.0
        %3964 = vmatprep.subr.mxu0 0.0
        %3965 = vmatpush1.xpose.msra.mxu0 0.0
        %3966 = vmatprep.subr.mxu0 0.0
        %3967 = vmatpush1.xpose.msra.mxu0 0.0
        %3968 = vmatprep.subr.mxu0 0.0
        %3969 = vmatpush1.xpose.msra.mxu0 0.0
        %3970 = vmatprep.subr.mxu0 0.0
        %3971 = vmatpush1.xpose.msra.mxu0 %v3938
        %3972 = vmatprep.subr.mxu0 0.0
        %3973 = vmatpush2.xpose.msra.mxu0 0.0
        %3974 = vmatprep.subr.mxu0 0.0
        %3975 = vmatpush2.xpose.msra.mxu0 0.0
        %3976 = vmatprep.subr.mxu0 0.0
        %3977 = vmatpush2.xpose.msra.mxu0 0.0
        %3978 = vmatprep.subr.mxu0 0.0
        %3979 = vmatpush2.xpose.msra.mxu0 0.0
        %3980 = vmatprep.subr.mxu0 0.0
        %3981 = vmatpush2.xpose.msra.mxu0 0.0
        %3982 = vmatprep.subr.mxu0 0.0
        %3983 = vmatpush2.xpose.msra.mxu0 0.0
        %3984 = vmatprep.subr.mxu0 0.0
        %3985 = vmatpush2.xpose.msra.mxu0 0.0
        %3986 = vmatprep.subr.mxu0 0.0
        %3987 = vmatpush2.xpose.msra.mxu0 0.0
        %3988 = vmatprep.subr.mxu0 0.0
        %3989 = vmatpush2.xpose.msra.mxu0 0.0
        %3990 = vmatprep.subr.mxu0 0.0
        %3991 = vmatpush2.xpose.msra.mxu0 0.0
        %3992 = vmatprep.subr.mxu0 0.0
        %3993 = vmatpush2.xpose.msra.mxu0 0.0
        %3994 = vmatprep.subr.mxu0 0.0
        %3995 = vmatpush2.xpose.msra.mxu0 0.0
        %3996 = vmatprep.subr.mxu0 0.0
        %3997 = vmatpush2.xpose.msra.mxu0 0.0
        %3998 = vmatprep.subr.mxu0 0.0
        %3999 = vmatpush2.xpose.msra.mxu0 0.0
        %4000 = vmatprep.subr.mxu0 0.0
        %4001 = vmatpush2.xpose.msra.mxu0 0.0
        %4002 = vmatprep.subr.mxu0 0.0
        %4003 = vmatpush2.xpose.msra.mxu0 0.0
        %4004 = vmatprep.mubr.f32.mxu0 0.0
        %4005 = vmatmul.mubr.f32.gmra.mxu0 %v3936
        %v4006 = vpop.f32.mrf.mxu0
        %v4007 = vadd.f32 %v783, %v4006
        %v4008 = vpop.f32.mrf.mxu0
        %4009 = vdwg.mxu0
        %v4010 = vsel %vm943, %v4007, -inf
        %4011 = vmax.xlane.f32.xlu0 %v4010
        %v4012 = vpop.xlane.xlu0 %4011
        %v4013 = vsub.f32 %v4007, %v4012
        %v4014 = vmul.f32 %v4013, 1.442695
        %v4015 = vpow.pop %v4014
        %v4016 = vsel %vm943, %v4015, 0.0
        %4017 = vadd.xlane.f32.xlu0 %v4016
        %v4018 = vpop.xlane.xlu0 %4017
        %v4019 = vrcp.pop %v4018
        %v4020 = vmul.f32 %v4015, %v4019
        %4021 = vrot.lane.b32.xlu0 %v3455, 80
        %v4022 = vpop.permute.xlu0 %4021
        %v4025 = vsel %vm943, %v4020, 0
        %4027 = vmatprep.subr.mxu0 0.0
        %4028 = vmatpush1.msra.mxu0 0.0
        %4029 = vmatprep.subr.mxu0 0.0
        %4030 = vmatpush1.msra.mxu0 0.0
        %4031 = vmatprep.subr.mxu0 0.0
        %4032 = vmatpush1.msra.mxu0 0.0
        %4033 = vmatprep.subr.mxu0 0.0
        %4034 = vmatpush1.msra.mxu0 0.0
        %4035 = vmatprep.subr.mxu0 0.0
        %4036 = vmatpush1.msra.mxu0 0.0
        %4037 = vmatprep.subr.mxu0 0.0
        %4038 = vmatpush1.msra.mxu0 0.0
        %4039 = vmatprep.subr.mxu0 0.0
        %4040 = vmatpush1.msra.mxu0 0.0
        %4041 = vmatprep.subr.mxu0 0.0
        %4042 = vmatpush1.msra.mxu0 0.0
        %4043 = vmatprep.subr.mxu0 0.0
        %4044 = vmatpush1.msra.mxu0 0.0
        %4045 = vmatprep.subr.mxu0 0.0
        %4046 = vmatpush1.msra.mxu0 0.0
        %4047 = vmatprep.subr.mxu0 0.0
        %4048 = vmatpush1.msra.mxu0 0.0
        %4049 = vmatprep.subr.mxu0 0.0
        %4050 = vmatpush1.msra.mxu0 0.0
        %4051 = vmatprep.subr.mxu0 0.0
        %4052 = vmatpush1.msra.mxu0 0.0
        %4053 = vmatprep.subr.mxu0 0.0
        %4054 = vmatpush1.msra.mxu0 0.0
        %4055 = vmatprep.subr.mxu0 0.0
        %4056 = vmatpush1.msra.mxu0 0.0
        %4057 = vmatprep.subr.mxu0 0.0
        %4058 = vmatpush1.msra.mxu0 %v4022
        %4059 = vmatprep.subr.mxu0 0.0
        %4060 = vmatpush2.msra.mxu0 0.0
        %4061 = vmatprep.subr.mxu0 0.0
        %4062 = vmatpush2.msra.mxu0 0.0
        %4063 = vmatprep.subr.mxu0 0.0
        %4064 = vmatpush2.msra.mxu0 0.0
        %4065 = vmatprep.subr.mxu0 0.0
        %4066 = vmatpush2.msra.mxu0 0.0
        %4067 = vmatprep.subr.mxu0 0.0
        %4068 = vmatpush2.msra.mxu0 0.0
        %4069 = vmatprep.subr.mxu0 0.0
        %4070 = vmatpush2.msra.mxu0 0.0
        %4071 = vmatprep.subr.mxu0 0.0
        %4072 = vmatpush2.msra.mxu0 0.0
        %4073 = vmatprep.subr.mxu0 0.0
        %4074 = vmatpush2.msra.mxu0 0.0
        %4075 = vmatprep.subr.mxu0 0.0
        %4076 = vmatpush2.msra.mxu0 0.0
        %4077 = vmatprep.subr.mxu0 0.0
        %4078 = vmatpush2.msra.mxu0 0.0
        %4079 = vmatprep.subr.mxu0 0.0
        %4080 = vmatpush2.msra.mxu0 0.0
        %4081 = vmatprep.subr.mxu0 0.0
        %4082 = vmatpush2.msra.mxu0 0.0
        %4083 = vmatprep.subr.mxu0 0.0
        %4084 = vmatpush2.msra.mxu0 0.0
        %4085 = vmatprep.subr.mxu0 0.0
        %4086 = vmatpush2.msra.mxu0 0.0
        %4087 = vmatprep.subr.mxu0 0.0
        %4088 = vmatpush2.msra.mxu0 0.0
        %4089 = vmatprep.subr.mxu0 0.0
        %4090 = vmatpush2.msra.mxu0 0.0
        %4091 = vmatprep.mubr.f32.mxu0 0.0
        %4092 = vmatmul.mubr.f32.gmra.mxu0 %v4025
        %v4093 = vpop.f32.mrf.mxu0
        %v4094 = vadd.f32 0.0, %v4093
        %v4095 = vpop.f32.mrf.mxu0
        %4096 = vdwg.mxu0
        %v4098 = vsel %vm943, %v4094, 0
        %4100 = vmatprep.subr.mxu0 0.0
        %4101 = vmatpush1.msra.mxu0 0.0
        %4102 = vmatprep.subr.mxu0 0.0
        %4103 = vmatpush1.msra.mxu0 0.0
        %4104 = vmatprep.subr.mxu0 0.0
        %4105 = vmatpush1.msra.mxu0 0.0
        %4106 = vmatprep.subr.mxu0 0.0
        %4107 = vmatpush1.msra.mxu0 0.0
        %4108 = vmatprep.subr.mxu0 0.0
        %4109 = vmatpush1.msra.mxu0 0.0
        %4110 = vmatprep.subr.mxu0 0.0
        %4111 = vmatpush1.msra.mxu0 0.0
        %4112 = vmatprep.subr.mxu0 0.0
        %4113 = vmatpush1.msra.mxu0 0.0
        %4114 = vmatprep.subr.mxu0 0.0
        %4115 = vmatpush1.msra.mxu0 0.0
        %4116 = vmatprep.subr.mxu0 0.0
        %4117 = vmatpush1.msra.mxu0 0.0
        %4118 = vmatprep.subr.mxu0 0.0
        %4119 = vmatpush1.msra.mxu0 0.0
        %4120 = vmatprep.subr.mxu0 0.0
        %4121 = vmatpush1.msra.mxu0 0.0
        %4122 = vmatprep.subr.mxu0 0.0
        %4123 = vmatpush1.msra.mxu0 0.0
        %4124 = vmatprep.subr.mxu0 0.0
        %4125 = vmatpush1.msra.mxu0 0.0
        %4126 = vmatprep.subr.mxu0 0.0
        %4127 = vmatpush1.msra.mxu0 0.0
        %4128 = vmatprep.subr.mxu0 0.0
        %4129 = vmatpush1.msra.mxu0 0.0
        %4130 = vmatprep.subr.mxu0 0.0
        %4131 = vmatpush1.msra.mxu0 %v3310
        %4132 = vmatprep.subr.mxu0 0.0
        %4133 = vmatpush2.msra.mxu0 0.0
        %4134 = vmatprep.subr.mxu0 0.0
        %4135 = vmatpush2.msra.mxu0 0.0
        %4136 = vmatprep.subr.mxu0 0.0
        %4137 = vmatpush2.msra.mxu0 0.0
        %4138 = vmatprep.subr.mxu0 0.0
        %4139 = vmatpush2.msra.mxu0 0.0
        %4140 = vmatprep.subr.mxu0 0.0
        %4141 = vmatpush2.msra.mxu0 0.0
        %4142 = vmatprep.subr.mxu0 0.0
        %4143 = vmatpush2.msra.mxu0 0.0
        %4144 = vmatprep.subr.mxu0 0.0
        %4145 = vmatpush2.msra.mxu0 0.0
        %4146 = vmatprep.subr.mxu0 0.0
        %4147 = vmatpush2.msra.mxu0 0.0
        %4148 = vmatprep.subr.mxu0 0.0
        %4149 = vmatpush2.msra.mxu0 0.0
        %4150 = vmatprep.subr.mxu0 0.0
        %4151 = vmatpush2.msra.mxu0 0.0
        %4152 = vmatprep.subr.mxu0 0.0
        %4153 = vmatpush2.msra.mxu0 0.0
        %4154 = vmatprep.subr.mxu0 0.0
        %4155 = vmatpush2.msra.mxu0 0.0
        %4156 = vmatprep.subr.mxu0 0.0
        %4157 = vmatpush2.msra.mxu0 0.0
        %4158 = vmatprep.subr.mxu0 0.0
        %4159 = vmatpush2.msra.mxu0 0.0
        %4160 = vmatprep.subr.mxu0 0.0
        %4161 = vmatpush2.msra.mxu0 0.0
        %4162 = vmatprep.subr.mxu0 0.0
        %4163 = vmatpush2.msra.mxu0 0.0
        %4164 = vmatprep.mubr.f32.mxu0 0.0
        %4165 = vmatmul.mubr.f32.gmra.mxu0 %v4098
        %v4166 = vpop.f32.mrf.mxu0
        %v4167 = vadd.f32 0.0, %v4166
        %v4168 = vpop.f32.mrf.mxu0
        %4169 = vdwg.mxu0
        %v4170 = vadd.f32 %v3929, %v4167
        %4171 = vrot.lane.b32.xlu0 %v3387, 104
        %v4172 = vpop.permute.xlu0 %4171
        %4173 = vrot.lane.b32.xlu0 %v3455, 104
        %v4174 = vpop.permute.xlu0 %4173
        %v4175 = vsel %vm943, %v4172, 0
        %v4177 = vsel %vm943, %v4174, 0
        %4179 = vmatprep.subr.mxu0 0.0
        %4180 = vmatpush1.xpose.msra.mxu0 0.0
        %4181 = vmatprep.subr.mxu0 0.0
        %4182 = vmatpush1.xpose.msra.mxu0 0.0
        %4183 = vmatprep.subr.mxu0 0.0
        %4184 = vmatpush1.xpose.msra.mxu0 0.0
        %4185 = vmatprep.subr.mxu0 0.0
        %4186 = vmatpush1.xpose.msra.mxu0 0.0
        %4187 = vmatprep.subr.mxu0 0.0
        %4188 = vmatpush1.xpose.msra.mxu0 0.0
        %4189 = vmatprep.subr.mxu0 0.0
        %4190 = vmatpush1.xpose.msra.mxu0 0.0
        %4191 = vmatprep.subr.mxu0 0.0
        %4192 = vmatpush1.xpose.msra.mxu0 0.0
        %4193 = vmatprep.subr.mxu0 0.0
        %4194 = vmatpush1.xpose.msra.mxu0 0.0
        %4195 = vmatprep.subr.mxu0 0.0
        %4196 = vmatpush1.xpose.msra.mxu0 0.0
        %4197 = vmatprep.subr.mxu0 0.0
        %4198 = vmatpush1.xpose.msra.mxu0 0.0
        %4199 = vmatprep.subr.mxu0 0.0
        %4200 = vmatpush1.xpose.msra.mxu0 0.0
        %4201 = vmatprep.subr.mxu0 0.0
        %4202 = vmatpush1.xpose.msra.mxu0 0.0
        %4203 = vmatprep.subr.mxu0 0.0
        %4204 = vmatpush1.xpose.msra.mxu0 0.0
        %4205 = vmatprep.subr.mxu0 0.0
        %4206 = vmatpush1.xpose.msra.mxu0 0.0
        %4207 = vmatprep.subr.mxu0 0.0
        %4208 = vmatpush1.xpose.msra.mxu0 0.0
        %4209 = vmatprep.subr.mxu0 0.0
        %4210 = vmatpush1.xpose.msra.mxu0 %v4177
        %4211 = vmatprep.subr.mxu0 0.0
        %4212 = vmatpush2.xpose.msra.mxu0 0.0
        %4213 = vmatprep.subr.mxu0 0.0
        %4214 = vmatpush2.xpose.msra.mxu0 0.0
        %4215 = vmatprep.subr.mxu0 0.0
        %4216 = vmatpush2.xpose.msra.mxu0 0.0
        %4217 = vmatprep.subr.mxu0 0.0
        %4218 = vmatpush2.xpose.msra.mxu0 0.0
        %4219 = vmatprep.subr.mxu0 0.0
        %4220 = vmatpush2.xpose.msra.mxu0 0.0
        %4221 = vmatprep.subr.mxu0 0.0
        %4222 = vmatpush2.xpose.msra.mxu0 0.0
        %4223 = vmatprep.subr.mxu0 0.0
        %4224 = vmatpush2.xpose.msra.mxu0 0.0
        %4225 = vmatprep.subr.mxu0 0.0
        %4226 = vmatpush2.xpose.msra.mxu0 0.0
        %4227 = vmatprep.subr.mxu0 0.0
        %4228 = vmatpush2.xpose.msra.mxu0 0.0
        %4229 = vmatprep.subr.mxu0 0.0
        %4230 = vmatpush2.xpose.msra.mxu0 0.0
        %4231 = vmatprep.subr.mxu0 0.0
        %4232 = vmatpush2.xpose.msra.mxu0 0.0
        %4233 = vmatprep.subr.mxu0 0.0
        %4234 = vmatpush2.xpose.msra.mxu0 0.0
        %4235 = vmatprep.subr.mxu0 0.0
        %4236 = vmatpush2.xpose.msra.mxu0 0.0
        %4237 = vmatprep.subr.mxu0 0.0
        %4238 = vmatpush2.xpose.msra.mxu0 0.0
        %4239 = vmatprep.subr.mxu0 0.0
        %4240 = vmatpush2.xpose.msra.mxu0 0.0
        %4241 = vmatprep.subr.mxu0 0.0
        %4242 = vmatpush2.xpose.msra.mxu0 0.0
        %4243 = vmatprep.mubr.f32.mxu0 0.0
        %4244 = vmatmul.mubr.f32.gmra.mxu0 %v4175
        %v4245 = vpop.f32.mrf.mxu0
        %v4246 = vadd.f32 %v783, %v4245
        %v4247 = vpop.f32.mrf.mxu0
        %4248 = vdwg.mxu0
        %v4249 = vsel %vm943, %v4246, -inf
        %4250 = vmax.xlane.f32.xlu0 %v4249
        %v4251 = vpop.xlane.xlu0 %4250
        %v4252 = vsub.f32 %v4246, %v4251
        %v4253 = vmul.f32 %v4252, 1.442695
        %v4254 = vpow.pop %v4253
        %v4255 = vsel %vm943, %v4254, 0.0
        %4256 = vadd.xlane.f32.xlu0 %v4255
        %v4257 = vpop.xlane.xlu0 %4256
        %v4258 = vrcp.pop %v4257
        %v4259 = vmul.f32 %v4254, %v4258
        %4260 = vrot.lane.b32.xlu0 %v3455, 72
        %v4261 = vpop.permute.xlu0 %4260
        %v4264 = vsel %vm943, %v4259, 0
        %4266 = vmatprep.subr.mxu0 0.0
        %4267 = vmatpush1.msra.mxu0 0.0
        %4268 = vmatprep.subr.mxu0 0.0
        %4269 = vmatpush1.msra.mxu0 0.0
        %4270 = vmatprep.subr.mxu0 0.0
        %4271 = vmatpush1.msra.mxu0 0.0
        %4272 = vmatprep.subr.mxu0 0.0
        %4273 = vmatpush1.msra.mxu0 0.0
        %4274 = vmatprep.subr.mxu0 0.0
        %4275 = vmatpush1.msra.mxu0 0.0
        %4276 = vmatprep.subr.mxu0 0.0
        %4277 = vmatpush1.msra.mxu0 0.0
        %4278 = vmatprep.subr.mxu0 0.0
        %4279 = vmatpush1.msra.mxu0 0.0
        %4280 = vmatprep.subr.mxu0 0.0
        %4281 = vmatpush1.msra.mxu0 0.0
        %4282 = vmatprep.subr.mxu0 0.0
        %4283 = vmatpush1.msra.mxu0 0.0
        %4284 = vmatprep.subr.mxu0 0.0
        %4285 = vmatpush1.msra.mxu0 0.0
        %4286 = vmatprep.subr.mxu0 0.0
        %4287 = vmatpush1.msra.mxu0 0.0
        %4288 = vmatprep.subr.mxu0 0.0
        %4289 = vmatpush1.msra.mxu0 0.0
        %4290 = vmatprep.subr.mxu0 0.0
        %4291 = vmatpush1.msra.mxu0 0.0
        %4292 = vmatprep.subr.mxu0 0.0
        %4293 = vmatpush1.msra.mxu0 0.0
        %4294 = vmatprep.subr.mxu0 0.0
        %4295 = vmatpush1.msra.mxu0 0.0
        %4296 = vmatprep.subr.mxu0 0.0
        %4297 = vmatpush1.msra.mxu0 %v4261
        %4298 = vmatprep.subr.mxu0 0.0
        %4299 = vmatpush2.msra.mxu0 0.0
        %4300 = vmatprep.subr.mxu0 0.0
        %4301 = vmatpush2.msra.mxu0 0.0
        %4302 = vmatprep.subr.mxu0 0.0
        %4303 = vmatpush2.msra.mxu0 0.0
        %4304 = vmatprep.subr.mxu0 0.0
        %4305 = vmatpush2.msra.mxu0 0.0
        %4306 = vmatprep.subr.mxu0 0.0
        %4307 = vmatpush2.msra.mxu0 0.0
        %4308 = vmatprep.subr.mxu0 0.0
        %4309 = vmatpush2.msra.mxu0 0.0
        %4310 = vmatprep.subr.mxu0 0.0
        %4311 = vmatpush2.msra.mxu0 0.0
        %4312 = vmatprep.subr.mxu0 0.0
        %4313 = vmatpush2.msra.mxu0 0.0
        %4314 = vmatprep.subr.mxu0 0.0
        %4315 = vmatpush2.msra.mxu0 0.0
        %4316 = vmatprep.subr.mxu0 0.0
        %4317 = vmatpush2.msra.mxu0 0.0
        %4318 = vmatprep.subr.mxu0 0.0
        %4319 = vmatpush2.msra.mxu0 0.0
        %4320 = vmatprep.subr.mxu0 0.0
        %4321 = vmatpush2.msra.mxu0 0.0
        %4322 = vmatprep.subr.mxu0 0.0
        %4323 = vmatpush2.msra.mxu0 0.0
        %4324 = vmatprep.subr.mxu0 0.0
        %4325 = vmatpush2.msra.mxu0 0.0
        %4326 = vmatprep.subr.mxu0 0.0
        %4327 = vmatpush2.msra.mxu0 0.0
        %4328 = vmatprep.subr.mxu0 0.0
        %4329 = vmatpush2.msra.mxu0 0.0
        %4330 = vmatprep.mubr.f32.mxu0 0.0
        %4331 = vmatmul.mubr.f32.gmra.mxu0 %v4264
        %v4332 = vpop.f32.mrf.mxu0
        %v4333 = vadd.f32 0.0, %v4332
        %v4334 = vpop.f32.mrf.mxu0
        %4335 = vdwg.mxu0
        %v4337 = vsel %vm943, %v4333, 0
        %4339 = vmatprep.subr.mxu0 0.0
        %4340 = vmatpush1.msra.mxu0 0.0
        %4341 = vmatprep.subr.mxu0 0.0
        %4342 = vmatpush1.msra.mxu0 0.0
        %4343 = vmatprep.subr.mxu0 0.0
        %4344 = vmatpush1.msra.mxu0 0.0
        %4345 = vmatprep.subr.mxu0 0.0
        %4346 = vmatpush1.msra.mxu0 0.0
        %4347 = vmatprep.subr.mxu0 0.0
        %4348 = vmatpush1.msra.mxu0 0.0
        %4349 = vmatprep.subr.mxu0 0.0
        %4350 = vmatpush1.msra.mxu0 0.0
        %4351 = vmatprep.subr.mxu0 0.0
        %4352 = vmatpush1.msra.mxu0 0.0
        %4353 = vmatprep.subr.mxu0 0.0
        %4354 = vmatpush1.msra.mxu0 0.0
        %4355 = vmatprep.subr.mxu0 0.0
        %4356 = vmatpush1.msra.mxu0 0.0
        %4357 = vmatprep.subr.mxu0 0.0
        %4358 = vmatpush1.msra.mxu0 0.0
        %4359 = vmatprep.subr.mxu0 0.0
        %4360 = vmatpush1.msra.mxu0 0.0
        %4361 = vmatprep.subr.mxu0 0.0
        %4362 = vmatpush1.msra.mxu0 0.0
        %4363 = vmatprep.subr.mxu0 0.0
        %4364 = vmatpush1.msra.mxu0 0.0
        %4365 = vmatprep.subr.mxu0 0.0
        %4366 = vmatpush1.msra.mxu0 0.0
        %4367 = vmatprep.subr.mxu0 0.0
        %4368 = vmatpush1.msra.mxu0 0.0
        %4369 = vmatprep.subr.mxu0 0.0
        %4370 = vmatpush1.msra.mxu0 %v3311
        %4371 = vmatprep.subr.mxu0 0.0
        %4372 = vmatpush2.msra.mxu0 0.0
        %4373 = vmatprep.subr.mxu0 0.0
        %4374 = vmatpush2.msra.mxu0 0.0
        %4375 = vmatprep.subr.mxu0 0.0
        %4376 = vmatpush2.msra.mxu0 0.0
        %4377 = vmatprep.subr.mxu0 0.0
        %4378 = vmatpush2.msra.mxu0 0.0
        %4379 = vmatprep.subr.mxu0 0.0
        %4380 = vmatpush2.msra.mxu0 0.0
        %4381 = vmatprep.subr.mxu0 0.0
        %4382 = vmatpush2.msra.mxu0 0.0
        %4383 = vmatprep.subr.mxu0 0.0
        %4384 = vmatpush2.msra.mxu0 0.0
        %4385 = vmatprep.subr.mxu0 0.0
        %4386 = vmatpush2.msra.mxu0 0.0
        %4387 = vmatprep.subr.mxu0 0.0
        %4388 = vmatpush2.msra.mxu0 0.0
        %4389 = vmatprep.subr.mxu0 0.0
        %4390 = vmatpush2.msra.mxu0 0.0
        %4391 = vmatprep.subr.mxu0 0.0
        %4392 = vmatpush2.msra.mxu0 0.0
        %4393 = vmatprep.subr.mxu0 0.0
        %4394 = vmatpush2.msra.mxu0 0.0
        %4395 = vmatprep.subr.mxu0 0.0
        %4396 = vmatpush2.msra.mxu0 0.0
        %4397 = vmatprep.subr.mxu0 0.0
        %4398 = vmatpush2.msra.mxu0 0.0
        %4399 = vmatprep.subr.mxu0 0.0
        %4400 = vmatpush2.msra.mxu0 0.0
        %4401 = vmatprep.subr.mxu0 0.0
        %4402 = vmatpush2.msra.mxu0 0.0
        %4403 = vmatprep.mubr.f32.mxu0 0.0
        %4404 = vmatmul.mubr.f32.gmra.mxu0 %v4337
        %v4405 = vpop.f32.mrf.mxu0
        %v4406 = vadd.f32 0.0, %v4405
        %v4407 = vpop.f32.mrf.mxu0
        %4408 = vdwg.mxu0
        %v4409 = vadd.f32 %v4170, %v4406
        %v4411 = vlaneseq
        %v4412 = vshrl.u32 %v4411, 7
        %v4413 = vsub.s32 0, %v4412
        %v4414 = vrot.slane %v3313, %v4413
        %v4416 = vadd.f32 %v4409, %v4414
        %v4417 = vadd.f32 %v4416, %v3296
        %s4418 = scalar_lea.vmem %s8, 1
        %v4419 = vld [vmem:[%s4418] sm:$0x1]
        %s4420 = scalar_lea.vmem %s9, 1
        %v4421 = vld [vmem:[%s4420] sm:$0x1]
        %v4422 = vsel %vm798, %v4417, 0.0
        %4423 = vadd.xlane.f32.xlu0 %v4422
        %v4424 = vpop.xlane.xlu0 %4423
        %v4425 = vmul.f32 %v4424, %v1909
        %v4426 = vsub.f32 %v4417, %v4425
        %v4427 = vmul.f32 %v4426, %v4426
        %v4428 = vsel %vm798, %v4427, 0.0
        %4429 = vadd.xlane.f32.xlu0 %v4428
        %v4430 = vpop.xlane.xlu0 %4429
        %v4431 = vmul.f32 %v4430, %v1909
        %v4432 = vadd.f32 %v4431, 1e-05
        %v4433 = vrsqrt.pop %v4432
        %v4434 = vmul.f32 %v4426, %v4433
        %v4436 = vlaneseq
        %v4437 = vshrl.u32 %v4436, 7
        %v4438 = vsub.s32 0, %v4437
        %v4439 = vrot.slane %v4419, %v4438
        %v4441 = vmul.f32 %v4434, %v4439
        %v4443 = vlaneseq
        %v4444 = vshrl.u32 %v4443, 7
        %v4445 = vsub.s32 0, %v4444
        %v4446 = vrot.slane %v4421, %v4445
        %v4448 = vadd.f32 %v4441, %v4446
        %s4449 = scalar_lea.vmem %s10, 32
        %v4450 = vld [vmem:[%s4449] sm:$0xff]
        %v4451 = vld [vmem:[%s4449 + $0x8] sm:$0xff]
        %v4452 = vld [vmem:[%s4449 + $0x10] sm:$0xff]
        %v4453 = vld [vmem:[%s4449 + $0x18] sm:$0xff]
        %s4454 = scalar_lea.vmem %s11, 32
        %v4455 = vld [vmem:[%s4454] sm:$0xff]
        %v4456 = vld [vmem:[%s4454 + $0x8] sm:$0xff]
        %v4457 = vld [vmem:[%s4454 + $0x10] sm:$0xff]
        %v4458 = vld [vmem:[%s4454 + $0x18] sm:$0xff]
        %s4459 = scalar_lea.vmem %s12, 32
        %v4460 = vld [vmem:[%s4459] sm:$0xff]
        %v4461 = vld [vmem:[%s4459 + $0x8] sm:$0xff]
        %v4462 = vld [vmem:[%s4459 + $0x10] sm:$0xff]
        %v4463 = vld [vmem:[%s4459 + $0x18] sm:$0xff]
        %s4464 = scalar_lea.vmem %s13, 1
        %v4465 = vld [vmem:[%s4464] sm:$0x1]
        %v4467 = vsel %vm798, %v4448, 0
        %4469 = vmatprep.subr.mxu0 0.0
        %4470 = vmatpush1.msra.mxu0 0.0
        %4471 = vmatprep.subr.mxu0 0.0
        %4472 = vmatpush1.msra.mxu0 0.0
        %4473 = vmatprep.subr.mxu0 0.0
        %4474 = vmatpush1.msra.mxu0 0.0
        %4475 = vmatprep.subr.mxu0 0.0
        %4476 = vmatpush1.msra.mxu0 0.0
        %4477 = vmatprep.subr.mxu0 0.0
        %4478 = vmatpush1.msra.mxu0 0.0
        %4479 = vmatprep.subr.mxu0 0.0
        %4480 = vmatpush1.msra.mxu0 0.0
        %4481 = vmatprep.subr.mxu0 0.0
        %4482 = vmatpush1.msra.mxu0 0.0
        %4483 = vmatprep.subr.mxu0 0.0
        %4484 = vmatpush1.msra.mxu0 0.0
        %4485 = vmatprep.subr.mxu0 0.0
        %4486 = vmatpush1.msra.mxu0 0.0
        %4487 = vmatprep.subr.mxu0 0.0
        %4488 = vmatpush1.msra.mxu0 0.0
        %4489 = vmatprep.subr.mxu0 0.0
        %4490 = vmatpush1.msra.mxu0 0.0
        %4491 = vmatprep.subr.mxu0 0.0
        %4492 = vmatpush1.msra.mxu0 0.0
        %4493 = vmatprep.subr.mxu0 0.0
        %4494 = vmatpush1.msra.mxu0 %v4453
        %4495 = vmatprep.subr.mxu0 0.0
        %4496 = vmatpush1.msra.mxu0 %v4452
        %4497 = vmatprep.subr.mxu0 0.0
        %4498 = vmatpush1.msra.mxu0 %v4451
        %4499 = vmatprep.subr.mxu0 0.0
        %4500 = vmatpush1.msra.mxu0 %v4450
        %4501 = vmatprep.subr.mxu0 0.0
        %4502 = vmatpush2.msra.mxu0 0.0
        %4503 = vmatprep.subr.mxu0 0.0
        %4504 = vmatpush2.msra.mxu0 0.0
        %4505 = vmatprep.subr.mxu0 0.0
        %4506 = vmatpush2.msra.mxu0 0.0
        %4507 = vmatprep.subr.mxu0 0.0
        %4508 = vmatpush2.msra.mxu0 0.0
        %4509 = vmatprep.subr.mxu0 0.0
        %4510 = vmatpush2.msra.mxu0 0.0
        %4511 = vmatprep.subr.mxu0 0.0
        %4512 = vmatpush2.msra.mxu0 0.0
        %4513 = vmatprep.subr.mxu0 0.0
        %4514 = vmatpush2.msra.mxu0 0.0
        %4515 = vmatprep.subr.mxu0 0.0
        %4516 = vmatpush2.msra.mxu0 0.0
        %4517 = vmatprep.subr.mxu0 0.0
        %4518 = vmatpush2.msra.mxu0 0.0
        %4519 = vmatprep.subr.mxu0 0.0
        %4520 = vmatpush2.msra.mxu0 0.0
        %4521 = vmatprep.subr.mxu0 0.0
        %4522 = vmatpush2.msra.mxu0 0.0
        %4523 = vmatprep.subr.mxu0 0.0
        %4524 = vmatpush2.msra.mxu0 0.0
        %4525 = vmatprep.subr.mxu0 0.0
        %4526 = vmatpush2.msra.mxu0 0.0
        %4527 = vmatprep.subr.mxu0 0.0
        %4528 = vmatpush2.msra.mxu0 0.0
        %4529 = vmatprep.subr.mxu0 0.0
        %4530 = vmatpush2.msra.mxu0 0.0
        %4531 = vmatprep.subr.mxu0 0.0
        %4532 = vmatpush2.msra.mxu0 0.0
        %4533 = vmatprep.mubr.f32.mxu0 0.0
        %4534 = vmatmul.mubr.f32.gmra.mxu0 %v4467
        %v4535 = vpop.f32.mrf.mxu0
        %v4536 = vadd.f32 0.0, %v4535
        %v4537 = vpop.f32.mrf.mxu0
        %4538 = vdwg.mxu0
        %v4539 = vmul.f32 %v4536, 0.17677669
        %4540 = vmatprep.subr.mxu0 0.0
        %4541 = vmatpush1.msra.mxu0 0.0
        %4542 = vmatprep.subr.mxu0 0.0
        %4543 = vmatpush1.msra.mxu0 0.0
        %4544 = vmatprep.subr.mxu0 0.0
        %4545 = vmatpush1.msra.mxu0 0.0
        %4546 = vmatprep.subr.mxu0 0.0
        %4547 = vmatpush1.msra.mxu0 0.0
        %4548 = vmatprep.subr.mxu0 0.0
        %4549 = vmatpush1.msra.mxu0 0.0
        %4550 = vmatprep.subr.mxu0 0.0
        %4551 = vmatpush1.msra.mxu0 0.0
        %4552 = vmatprep.subr.mxu0 0.0
        %4553 = vmatpush1.msra.mxu0 0.0
        %4554 = vmatprep.subr.mxu0 0.0
        %4555 = vmatpush1.msra.mxu0 0.0
        %4556 = vmatprep.subr.mxu0 0.0
        %4557 = vmatpush1.msra.mxu0 0.0
        %4558 = vmatprep.subr.mxu0 0.0
        %4559 = vmatpush1.msra.mxu0 0.0
        %4560 = vmatprep.subr.mxu0 0.0
        %4561 = vmatpush1.msra.mxu0 0.0
        %4562 = vmatprep.subr.mxu0 0.0
        %4563 = vmatpush1.msra.mxu0 0.0
        %4564 = vmatprep.subr.mxu0 0.0
        %4565 = vmatpush1.msra.mxu0 %v4458
        %4566 = vmatprep.subr.mxu0 0.0
        %4567 = vmatpush1.msra.mxu0 %v4457
        %4568 = vmatprep.subr.mxu0 0.0
        %4569 = vmatpush1.msra.mxu0 %v4456
        %4570 = vmatprep.subr.mxu0 0.0
        %4571 = vmatpush1.msra.mxu0 %v4455
        %4572 = vmatprep.subr.mxu0 0.0
        %4573 = vmatpush2.msra.mxu0 0.0
        %4574 = vmatprep.subr.mxu0 0.0
        %4575 = vmatpush2.msra.mxu0 0.0
        %4576 = vmatprep.subr.mxu0 0.0
        %4577 = vmatpush2.msra.mxu0 0.0
        %4578 = vmatprep.subr.mxu0 0.0
        %4579 = vmatpush2.msra.mxu0 0.0
        %4580 = vmatprep.subr.mxu0 0.0
        %4581 = vmatpush2.msra.mxu0 0.0
        %4582 = vmatprep.subr.mxu0 0.0
        %4583 = vmatpush2.msra.mxu0 0.0
        %4584 = vmatprep.subr.mxu0 0.0
        %4585 = vmatpush2.msra.mxu0 0.0
        %4586 = vmatprep.subr.mxu0 0.0
        %4587 = vmatpush2.msra.mxu0 0.0
        %4588 = vmatprep.subr.mxu0 0.0
        %4589 = vmatpush2.msra.mxu0 0.0
        %4590 = vmatprep.subr.mxu0 0.0
        %4591 = vmatpush2.msra.mxu0 0.0
        %4592 = vmatprep.subr.mxu0 0.0
        %4593 = vmatpush2.msra.mxu0 0.0
        %4594 = vmatprep.subr.mxu0 0.0
        %4595 = vmatpush2.msra.mxu0 0.0
        %4596 = vmatprep.subr.mxu0 0.0
        %4597 = vmatpush2.msra.mxu0 0.0
        %4598 = vmatprep.subr.mxu0 0.0
        %4599 = vmatpush2.msra.mxu0 0.0
        %4600 = vmatprep.subr.mxu0 0.0
        %4601 = vmatpush2.msra.mxu0 0.0
        %4602 = vmatprep.subr.mxu0 0.0
        %4603 = vmatpush2.msra.mxu0 0.0
        %4604 = vmatprep.mubr.f32.mxu0 0.0
        %4605 = vmatmul.mubr.f32.gmra.mxu0 %v2022
        %v4606 = vpop.f32.mrf.mxu0
        %v4607 = vadd.f32 0.0, %v4606
        %v4608 = vpop.f32.mrf.mxu0
        %4609 = vdwg.mxu0
        %v4611 = vsel %vm943, %v4539, 0
        %v4614 = vsel %vm943, %v4607, 0
        %4616 = vmatprep.subr.mxu0 0.0
        %4617 = vmatpush1.xpose.msra.mxu0 0.0
        %4618 = vmatprep.subr.mxu0 0.0
        %4619 = vmatpush1.xpose.msra.mxu0 0.0
        %4620 = vmatprep.subr.mxu0 0.0
        %4621 = vmatpush1.xpose.msra.mxu0 0.0
        %4622 = vmatprep.subr.mxu0 0.0
        %4623 = vmatpush1.xpose.msra.mxu0 0.0
        %4624 = vmatprep.subr.mxu0 0.0
        %4625 = vmatpush1.xpose.msra.mxu0 0.0
        %4626 = vmatprep.subr.mxu0 0.0
        %4627 = vmatpush1.xpose.msra.mxu0 0.0
        %4628 = vmatprep.subr.mxu0 0.0
        %4629 = vmatpush1.xpose.msra.mxu0 0.0
        %4630 = vmatprep.subr.mxu0 0.0
        %4631 = vmatpush1.xpose.msra.mxu0 0.0
        %4632 = vmatprep.subr.mxu0 0.0
        %4633 = vmatpush1.xpose.msra.mxu0 0.0
        %4634 = vmatprep.subr.mxu0 0.0
        %4635 = vmatpush1.xpose.msra.mxu0 0.0
        %4636 = vmatprep.subr.mxu0 0.0
        %4637 = vmatpush1.xpose.msra.mxu0 0.0
        %4638 = vmatprep.subr.mxu0 0.0
        %4639 = vmatpush1.xpose.msra.mxu0 0.0
        %4640 = vmatprep.subr.mxu0 0.0
        %4641 = vmatpush1.xpose.msra.mxu0 0.0
        %4642 = vmatprep.subr.mxu0 0.0
        %4643 = vmatpush1.xpose.msra.mxu0 0.0
        %4644 = vmatprep.subr.mxu0 0.0
        %4645 = vmatpush1.xpose.msra.mxu0 0.0
        %4646 = vmatprep.subr.mxu0 0.0
        %4647 = vmatpush1.xpose.msra.mxu0 %v4614
        %4648 = vmatprep.subr.mxu0 0.0
        %4649 = vmatpush2.xpose.msra.mxu0 0.0
        %4650 = vmatprep.subr.mxu0 0.0
        %4651 = vmatpush2.xpose.msra.mxu0 0.0
        %4652 = vmatprep.subr.mxu0 0.0
        %4653 = vmatpush2.xpose.msra.mxu0 0.0
        %4654 = vmatprep.subr.mxu0 0.0
        %4655 = vmatpush2.xpose.msra.mxu0 0.0
        %4656 = vmatprep.subr.mxu0 0.0
        %4657 = vmatpush2.xpose.msra.mxu0 0.0
        %4658 = vmatprep.subr.mxu0 0.0
        %4659 = vmatpush2.xpose.msra.mxu0 0.0
        %4660 = vmatprep.subr.mxu0 0.0
        %4661 = vmatpush2.xpose.msra.mxu0 0.0
        %4662 = vmatprep.subr.mxu0 0.0
        %4663 = vmatpush2.xpose.msra.mxu0 0.0
        %4664 = vmatprep.subr.mxu0 0.0
        %4665 = vmatpush2.xpose.msra.mxu0 0.0
        %4666 = vmatprep.subr.mxu0 0.0
        %4667 = vmatpush2.xpose.msra.mxu0 0.0
        %4668 = vmatprep.subr.mxu0 0.0
        %4669 = vmatpush2.xpose.msra.mxu0 0.0
        %4670 = vmatprep.subr.mxu0 0.0
        %4671 = vmatpush2.xpose.msra.mxu0 0.0
        %4672 = vmatprep.subr.mxu0 0.0
        %4673 = vmatpush2.xpose.msra.mxu0 0.0
        %4674 = vmatprep.subr.mxu0 0.0
        %4675 = vmatpush2.xpose.msra.mxu0 0.0
        %4676 = vmatprep.subr.mxu0 0.0
        %4677 = vmatpush2.xpose.msra.mxu0 0.0
        %4678 = vmatprep.subr.mxu0 0.0
        %4679 = vmatpush2.xpose.msra.mxu0 0.0
        %4680 = vmatprep.mubr.f32.mxu0 0.0
        %4681 = vmatmul.mubr.f32.gmra.mxu0 %v4611
        %v4682 = vpop.f32.mrf.mxu0
        %v4683 = vadd.f32 %v2098, %v4682
        %v4684 = vpop.f32.mrf.mxu0
        %4685 = vdwg.mxu0
        %v4686 = vsel %vm943, %v4683, -inf
        %4687 = vmax.xlane.f32.xlu0 %v4686
        %v4688 = vpop.xlane.xlu0 %4687
        %v4689 = vsub.f32 %v4683, %v4688
        %v4690 = vmul.f32 %v4689, 1.442695
        %v4691 = vpow.pop %v4690
        %v4692 = vsel %vm943, %v4691, 0.0
        %4693 = vadd.xlane.f32.xlu0 %v4692
        %v4694 = vpop.xlane.xlu0 %4693
        %v4695 = vrcp.pop %v4694
        %v4696 = vmul.f32 %v4691, %v4695
        %4697 = vrot.lane.b32.xlu0 %v4607, 96
        %v4698 = vpop.permute.xlu0 %4697
        %v4701 = vsel %vm943, %v4696, 0
        %4703 = vmatprep.subr.mxu0 0.0
        %4704 = vmatpush1.msra.mxu0 0.0
        %4705 = vmatprep.subr.mxu0 0.0
        %4706 = vmatpush1.msra.mxu0 0.0
        %4707 = vmatprep.subr.mxu0 0.0
        %4708 = vmatpush1.msra.mxu0 0.0
        %4709 = vmatprep.subr.mxu0 0.0
        %4710 = vmatpush1.msra.mxu0 0.0
        %4711 = vmatprep.subr.mxu0 0.0
        %4712 = vmatpush1.msra.mxu0 0.0
        %4713 = vmatprep.subr.mxu0 0.0
        %4714 = vmatpush1.msra.mxu0 0.0
        %4715 = vmatprep.subr.mxu0 0.0
        %4716 = vmatpush1.msra.mxu0 0.0
        %4717 = vmatprep.subr.mxu0 0.0
        %4718 = vmatpush1.msra.mxu0 0.0
        %4719 = vmatprep.subr.mxu0 0.0
        %4720 = vmatpush1.msra.mxu0 0.0
        %4721 = vmatprep.subr.mxu0 0.0
        %4722 = vmatpush1.msra.mxu0 0.0
        %4723 = vmatprep.subr.mxu0 0.0
        %4724 = vmatpush1.msra.mxu0 0.0
        %4725 = vmatprep.subr.mxu0 0.0
        %4726 = vmatpush1.msra.mxu0 0.0
        %4727 = vmatprep.subr.mxu0 0.0
        %4728 = vmatpush1.msra.mxu0 0.0
        %4729 = vmatprep.subr.mxu0 0.0
        %4730 = vmatpush1.msra.mxu0 0.0
        %4731 = vmatprep.subr.mxu0 0.0
        %4732 = vmatpush1.msra.mxu0 0.0
        %4733 = vmatprep.subr.mxu0 0.0
        %4734 = vmatpush1.msra.mxu0 %v4698
        %4735 = vmatprep.subr.mxu0 0.0
        %4736 = vmatpush2.msra.mxu0 0.0
        %4737 = vmatprep.subr.mxu0 0.0
        %4738 = vmatpush2.msra.mxu0 0.0
        %4739 = vmatprep.subr.mxu0 0.0
        %4740 = vmatpush2.msra.mxu0 0.0
        %4741 = vmatprep.subr.mxu0 0.0
        %4742 = vmatpush2.msra.mxu0 0.0
        %4743 = vmatprep.subr.mxu0 0.0
        %4744 = vmatpush2.msra.mxu0 0.0
        %4745 = vmatprep.subr.mxu0 0.0
        %4746 = vmatpush2.msra.mxu0 0.0
        %4747 = vmatprep.subr.mxu0 0.0
        %4748 = vmatpush2.msra.mxu0 0.0
        %4749 = vmatprep.subr.mxu0 0.0
        %4750 = vmatpush2.msra.mxu0 0.0
        %4751 = vmatprep.subr.mxu0 0.0
        %4752 = vmatpush2.msra.mxu0 0.0
        %4753 = vmatprep.subr.mxu0 0.0
        %4754 = vmatpush2.msra.mxu0 0.0
        %4755 = vmatprep.subr.mxu0 0.0
        %4756 = vmatpush2.msra.mxu0 0.0
        %4757 = vmatprep.subr.mxu0 0.0
        %4758 = vmatpush2.msra.mxu0 0.0
        %4759 = vmatprep.subr.mxu0 0.0
        %4760 = vmatpush2.msra.mxu0 0.0
        %4761 = vmatprep.subr.mxu0 0.0
        %4762 = vmatpush2.msra.mxu0 0.0
        %4763 = vmatprep.subr.mxu0 0.0
        %4764 = vmatpush2.msra.mxu0 0.0
        %4765 = vmatprep.subr.mxu0 0.0
        %4766 = vmatpush2.msra.mxu0 0.0
        %4767 = vmatprep.mubr.f32.mxu0 0.0
        %4768 = vmatmul.mubr.f32.gmra.mxu0 %v4701
        %v4769 = vpop.f32.mrf.mxu0
        %v4770 = vadd.f32 0.0, %v4769
        %v4771 = vpop.f32.mrf.mxu0
        %4772 = vdwg.mxu0
        %4773 = vrot.lane.b32.xlu0 %v4539, 120
        %v4774 = vpop.permute.xlu0 %4773
        %4775 = vrot.lane.b32.xlu0 %v4607, 120
        %v4776 = vpop.permute.xlu0 %4775
        %v4777 = vsel %vm943, %v4774, 0
        %v4779 = vsel %vm943, %v4776, 0
        %4781 = vmatprep.subr.mxu0 0.0
        %4782 = vmatpush1.xpose.msra.mxu0 0.0
        %4783 = vmatprep.subr.mxu0 0.0
        %4784 = vmatpush1.xpose.msra.mxu0 0.0
        %4785 = vmatprep.subr.mxu0 0.0
        %4786 = vmatpush1.xpose.msra.mxu0 0.0
        %4787 = vmatprep.subr.mxu0 0.0
        %4788 = vmatpush1.xpose.msra.mxu0 0.0
        %4789 = vmatprep.subr.mxu0 0.0
        %4790 = vmatpush1.xpose.msra.mxu0 0.0
        %4791 = vmatprep.subr.mxu0 0.0
        %4792 = vmatpush1.xpose.msra.mxu0 0.0
        %4793 = vmatprep.subr.mxu0 0.0
        %4794 = vmatpush1.xpose.msra.mxu0 0.0
        %4795 = vmatprep.subr.mxu0 0.0
        %4796 = vmatpush1.xpose.msra.mxu0 0.0
        %4797 = vmatprep.subr.mxu0 0.0
        %4798 = vmatpush1.xpose.msra.mxu0 0.0
        %4799 = vmatprep.subr.mxu0 0.0
        %4800 = vmatpush1.xpose.msra.mxu0 0.0
        %4801 = vmatprep.subr.mxu0 0.0
        %4802 = vmatpush1.xpose.msra.mxu0 0.0
        %4803 = vmatprep.subr.mxu0 0.0
        %4804 = vmatpush1.xpose.msra.mxu0 0.0
        %4805 = vmatprep.subr.mxu0 0.0
        %4806 = vmatpush1.xpose.msra.mxu0 0.0
        %4807 = vmatprep.subr.mxu0 0.0
        %4808 = vmatpush1.xpose.msra.mxu0 0.0
        %4809 = vmatprep.subr.mxu0 0.0
        %4810 = vmatpush1.xpose.msra.mxu0 0.0
        %4811 = vmatprep.subr.mxu0 0.0
        %4812 = vmatpush1.xpose.msra.mxu0 %v4779
        %4813 = vmatprep.subr.mxu0 0.0
        %4814 = vmatpush2.xpose.msra.mxu0 0.0
        %4815 = vmatprep.subr.mxu0 0.0
        %4816 = vmatpush2.xpose.msra.mxu0 0.0
        %4817 = vmatprep.subr.mxu0 0.0
        %4818 = vmatpush2.xpose.msra.mxu0 0.0
        %4819 = vmatprep.subr.mxu0 0.0
        %4820 = vmatpush2.xpose.msra.mxu0 0.0
        %4821 = vmatprep.subr.mxu0 0.0
        %4822 = vmatpush2.xpose.msra.mxu0 0.0
        %4823 = vmatprep.subr.mxu0 0.0
        %4824 = vmatpush2.xpose.msra.mxu0 0.0
        %4825 = vmatprep.subr.mxu0 0.0
        %4826 = vmatpush2.xpose.msra.mxu0 0.0
        %4827 = vmatprep.subr.mxu0 0.0
        %4828 = vmatpush2.xpose.msra.mxu0 0.0
        %4829 = vmatprep.subr.mxu0 0.0
        %4830 = vmatpush2.xpose.msra.mxu0 0.0
        %4831 = vmatprep.subr.mxu0 0.0
        %4832 = vmatpush2.xpose.msra.mxu0 0.0
        %4833 = vmatprep.subr.mxu0 0.0
        %4834 = vmatpush2.xpose.msra.mxu0 0.0
        %4835 = vmatprep.subr.mxu0 0.0
        %4836 = vmatpush2.xpose.msra.mxu0 0.0
        %4837 = vmatprep.subr.mxu0 0.0
        %4838 = vmatpush2.xpose.msra.mxu0 0.0
        %4839 = vmatprep.subr.mxu0 0.0
        %4840 = vmatpush2.xpose.msra.mxu0 0.0
        %4841 = vmatprep.subr.mxu0 0.0
        %4842 = vmatpush2.xpose.msra.mxu0 0.0
        %4843 = vmatprep.subr.mxu0 0.0
        %4844 = vmatpush2.xpose.msra.mxu0 0.0
        %4845 = vmatprep.mubr.f32.mxu0 0.0
        %4846 = vmatmul.mubr.f32.gmra.mxu0 %v4777
        %v4847 = vpop.f32.mrf.mxu0
        %v4848 = vadd.f32 %v2098, %v4847
        %v4849 = vpop.f32.mrf.mxu0
        %4850 = vdwg.mxu0
        %v4851 = vsel %vm943, %v4848, -inf
        %4852 = vmax.xlane.f32.xlu0 %v4851
        %v4853 = vpop.xlane.xlu0 %4852
        %v4854 = vsub.f32 %v4848, %v4853
        %v4855 = vmul.f32 %v4854, 1.442695
        %v4856 = vpow.pop %v4855
        %v4857 = vsel %vm943, %v4856, 0.0
        %4858 = vadd.xlane.f32.xlu0 %v4857
        %v4859 = vpop.xlane.xlu0 %4858
        %v4860 = vrcp.pop %v4859
        %v4861 = vmul.f32 %v4856, %v4860
        %4862 = vrot.lane.b32.xlu0 %v4607, 88
        %v4863 = vpop.permute.xlu0 %4862
        %v4866 = vsel %vm943, %v4861, 0
        %4868 = vmatprep.subr.mxu0 0.0
        %4869 = vmatpush1.msra.mxu0 0.0
        %4870 = vmatprep.subr.mxu0 0.0
        %4871 = vmatpush1.msra.mxu0 0.0
        %4872 = vmatprep.subr.mxu0 0.0
        %4873 = vmatpush1.msra.mxu0 0.0
        %4874 = vmatprep.subr.mxu0 0.0
        %4875 = vmatpush1.msra.mxu0 0.0
        %4876 = vmatprep.subr.mxu0 0.0
        %4877 = vmatpush1.msra.mxu0 0.0
        %4878 = vmatprep.subr.mxu0 0.0
        %4879 = vmatpush1.msra.mxu0 0.0
        %4880 = vmatprep.subr.mxu0 0.0
        %4881 = vmatpush1.msra.mxu0 0.0
        %4882 = vmatprep.subr.mxu0 0.0
        %4883 = vmatpush1.msra.mxu0 0.0
        %4884 = vmatprep.subr.mxu0 0.0
        %4885 = vmatpush1.msra.mxu0 0.0
        %4886 = vmatprep.subr.mxu0 0.0
        %4887 = vmatpush1.msra.mxu0 0.0
        %4888 = vmatprep.subr.mxu0 0.0
        %4889 = vmatpush1.msra.mxu0 0.0
        %4890 = vmatprep.subr.mxu0 0.0
        %4891 = vmatpush1.msra.mxu0 0.0
        %4892 = vmatprep.subr.mxu0 0.0
        %4893 = vmatpush1.msra.mxu0 0.0
        %4894 = vmatprep.subr.mxu0 0.0
        %4895 = vmatpush1.msra.mxu0 0.0
        %4896 = vmatprep.subr.mxu0 0.0
        %4897 = vmatpush1.msra.mxu0 0.0
        %4898 = vmatprep.subr.mxu0 0.0
        %4899 = vmatpush1.msra.mxu0 %v4863
        %4900 = vmatprep.subr.mxu0 0.0
        %4901 = vmatpush2.msra.mxu0 0.0
        %4902 = vmatprep.subr.mxu0 0.0
        %4903 = vmatpush2.msra.mxu0 0.0
        %4904 = vmatprep.subr.mxu0 0.0
        %4905 = vmatpush2.msra.mxu0 0.0
        %4906 = vmatprep.subr.mxu0 0.0
        %4907 = vmatpush2.msra.mxu0 0.0
        %4908 = vmatprep.subr.mxu0 0.0
        %4909 = vmatpush2.msra.mxu0 0.0
        %4910 = vmatprep.subr.mxu0 0.0
        %4911 = vmatpush2.msra.mxu0 0.0
        %4912 = vmatprep.subr.mxu0 0.0
        %4913 = vmatpush2.msra.mxu0 0.0
        %4914 = vmatprep.subr.mxu0 0.0
        %4915 = vmatpush2.msra.mxu0 0.0
        %4916 = vmatprep.subr.mxu0 0.0
        %4917 = vmatpush2.msra.mxu0 0.0
        %4918 = vmatprep.subr.mxu0 0.0
        %4919 = vmatpush2.msra.mxu0 0.0
        %4920 = vmatprep.subr.mxu0 0.0
        %4921 = vmatpush2.msra.mxu0 0.0
        %4922 = vmatprep.subr.mxu0 0.0
        %4923 = vmatpush2.msra.mxu0 0.0
        %4924 = vmatprep.subr.mxu0 0.0
        %4925 = vmatpush2.msra.mxu0 0.0
        %4926 = vmatprep.subr.mxu0 0.0
        %4927 = vmatpush2.msra.mxu0 0.0
        %4928 = vmatprep.subr.mxu0 0.0
        %4929 = vmatpush2.msra.mxu0 0.0
        %4930 = vmatprep.subr.mxu0 0.0
        %4931 = vmatpush2.msra.mxu0 0.0
        %4932 = vmatprep.mubr.f32.mxu0 0.0
        %4933 = vmatmul.mubr.f32.gmra.mxu0 %v4866
        %v4934 = vpop.f32.mrf.mxu0
        %v4935 = vadd.f32 0.0, %v4934
        %v4936 = vpop.f32.mrf.mxu0
        %4937 = vdwg.mxu0
        %v4939 = vsel %vm943, %v4935, 0
        %4941 = vmatprep.subr.mxu0 0.0
        %4942 = vmatpush1.msra.mxu0 0.0
        %4943 = vmatprep.subr.mxu0 0.0
        %4944 = vmatpush1.msra.mxu0 0.0
        %4945 = vmatprep.subr.mxu0 0.0
        %4946 = vmatpush1.msra.mxu0 0.0
        %4947 = vmatprep.subr.mxu0 0.0
        %4948 = vmatpush1.msra.mxu0 0.0
        %4949 = vmatprep.subr.mxu0 0.0
        %4950 = vmatpush1.msra.mxu0 0.0
        %4951 = vmatprep.subr.mxu0 0.0
        %4952 = vmatpush1.msra.mxu0 0.0
        %4953 = vmatprep.subr.mxu0 0.0
        %4954 = vmatpush1.msra.mxu0 0.0
        %4955 = vmatprep.subr.mxu0 0.0
        %4956 = vmatpush1.msra.mxu0 0.0
        %4957 = vmatprep.subr.mxu0 0.0
        %4958 = vmatpush1.msra.mxu0 0.0
        %4959 = vmatprep.subr.mxu0 0.0
        %4960 = vmatpush1.msra.mxu0 0.0
        %4961 = vmatprep.subr.mxu0 0.0
        %4962 = vmatpush1.msra.mxu0 0.0
        %4963 = vmatprep.subr.mxu0 0.0
        %4964 = vmatpush1.msra.mxu0 0.0
        %4965 = vmatprep.subr.mxu0 0.0
        %4966 = vmatpush1.msra.mxu0 0.0
        %4967 = vmatprep.subr.mxu0 0.0
        %4968 = vmatpush1.msra.mxu0 0.0
        %4969 = vmatprep.subr.mxu0 0.0
        %4970 = vmatpush1.msra.mxu0 0.0
        %4971 = vmatprep.subr.mxu0 0.0
        %4972 = vmatpush1.msra.mxu0 %v4461
        %4973 = vmatprep.subr.mxu0 0.0
        %4974 = vmatpush2.msra.mxu0 0.0
        %4975 = vmatprep.subr.mxu0 0.0
        %4976 = vmatpush2.msra.mxu0 0.0
        %4977 = vmatprep.subr.mxu0 0.0
        %4978 = vmatpush2.msra.mxu0 0.0
        %4979 = vmatprep.subr.mxu0 0.0
        %4980 = vmatpush2.msra.mxu0 0.0
        %4981 = vmatprep.subr.mxu0 0.0
        %4982 = vmatpush2.msra.mxu0 0.0
        %4983 = vmatprep.subr.mxu0 0.0
        %4984 = vmatpush2.msra.mxu0 0.0
        %4985 = vmatprep.subr.mxu0 0.0
        %4986 = vmatpush2.msra.mxu0 0.0
        %4987 = vmatprep.subr.mxu0 0.0
        %4988 = vmatpush2.msra.mxu0 0.0
        %4989 = vmatprep.subr.mxu0 0.0
        %4990 = vmatpush2.msra.mxu0 0.0
        %4991 = vmatprep.subr.mxu0 0.0
        %4992 = vmatpush2.msra.mxu0 0.0
        %4993 = vmatprep.subr.mxu0 0.0
        %4994 = vmatpush2.msra.mxu0 0.0
        %4995 = vmatprep.subr.mxu0 0.0
        %4996 = vmatpush2.msra.mxu0 0.0
        %4997 = vmatprep.subr.mxu0 0.0
        %4998 = vmatpush2.msra.mxu0 0.0
        %4999 = vmatprep.subr.mxu0 0.0
        %5000 = vmatpush2.msra.mxu0 0.0
        %5001 = vmatprep.subr.mxu0 0.0
        %5002 = vmatpush2.msra.mxu0 0.0
        %5003 = vmatprep.subr.mxu0 0.0
        %5004 = vmatpush2.msra.mxu0 0.0
        %5005 = vmatprep.mubr.f32.mxu0 0.0
        %5006 = vmatmul.mubr.f32.gmra.mxu0 %v4939
        %v5007 = vpop.f32.mrf.mxu0
        %v5008 = vadd.f32 0.0, %v5007
        %v5009 = vpop.f32.mrf.mxu0
        %5010 = vdwg.mxu0
        %v5012 = vsel %vm943, %v4770, 0
        %5014 = vmatprep.subr.mxu0 0.0
        %5015 = vmatpush1.msra.mxu0 0.0
        %5016 = vmatprep.subr.mxu0 0.0
        %5017 = vmatpush1.msra.mxu0 0.0
        %5018 = vmatprep.subr.mxu0 0.0
        %5019 = vmatpush1.msra.mxu0 0.0
        %5020 = vmatprep.subr.mxu0 0.0
        %5021 = vmatpush1.msra.mxu0 0.0
        %5022 = vmatprep.subr.mxu0 0.0
        %5023 = vmatpush1.msra.mxu0 0.0
        %5024 = vmatprep.subr.mxu0 0.0
        %5025 = vmatpush1.msra.mxu0 0.0
        %5026 = vmatprep.subr.mxu0 0.0
        %5027 = vmatpush1.msra.mxu0 0.0
        %5028 = vmatprep.subr.mxu0 0.0
        %5029 = vmatpush1.msra.mxu0 0.0
        %5030 = vmatprep.subr.mxu0 0.0
        %5031 = vmatpush1.msra.mxu0 0.0
        %5032 = vmatprep.subr.mxu0 0.0
        %5033 = vmatpush1.msra.mxu0 0.0
        %5034 = vmatprep.subr.mxu0 0.0
        %5035 = vmatpush1.msra.mxu0 0.0
        %5036 = vmatprep.subr.mxu0 0.0
        %5037 = vmatpush1.msra.mxu0 0.0
        %5038 = vmatprep.subr.mxu0 0.0
        %5039 = vmatpush1.msra.mxu0 0.0
        %5040 = vmatprep.subr.mxu0 0.0
        %5041 = vmatpush1.msra.mxu0 0.0
        %5042 = vmatprep.subr.mxu0 0.0
        %5043 = vmatpush1.msra.mxu0 0.0
        %5044 = vmatprep.subr.mxu0 0.0
        %5045 = vmatpush1.msra.mxu0 %v4460
        %5046 = vmatprep.subr.mxu0 0.0
        %5047 = vmatpush2.msra.mxu0 0.0
        %5048 = vmatprep.subr.mxu0 0.0
        %5049 = vmatpush2.msra.mxu0 0.0
        %5050 = vmatprep.subr.mxu0 0.0
        %5051 = vmatpush2.msra.mxu0 0.0
        %5052 = vmatprep.subr.mxu0 0.0
        %5053 = vmatpush2.msra.mxu0 0.0
        %5054 = vmatprep.subr.mxu0 0.0
        %5055 = vmatpush2.msra.mxu0 0.0
        %5056 = vmatprep.subr.mxu0 0.0
        %5057 = vmatpush2.msra.mxu0 0.0
        %5058 = vmatprep.subr.mxu0 0.0
        %5059 = vmatpush2.msra.mxu0 0.0
        %5060 = vmatprep.subr.mxu0 0.0
        %5061 = vmatpush2.msra.mxu0 0.0
        %5062 = vmatprep.subr.mxu0 0.0
        %5063 = vmatpush2.msra.mxu0 0.0
        %5064 = vmatprep.subr.mxu0 0.0
        %5065 = vmatpush2.msra.mxu0 0.0
        %5066 = vmatprep.subr.mxu0 0.0
        %5067 = vmatpush2.msra.mxu0 0.0
        %5068 = vmatprep.subr.mxu0 0.0
        %5069 = vmatpush2.msra.mxu0 0.0
        %5070 = vmatprep.subr.mxu0 0.0
        %5071 = vmatpush2.msra.mxu0 0.0
        %5072 = vmatprep.subr.mxu0 0.0
        %5073 = vmatpush2.msra.mxu0 0.0
        %5074 = vmatprep.subr.mxu0 0.0
        %5075 = vmatpush2.msra.mxu0 0.0
        %5076 = vmatprep.subr.mxu0 0.0
        %5077 = vmatpush2.msra.mxu0 0.0
        %5078 = vmatprep.mubr.f32.mxu0 0.0
        %5079 = vmatmul.mubr.f32.gmra.mxu0 %v5012
        %v5080 = vpop.f32.mrf.mxu0
        %v5081 = vadd.f32 %v5008, %v5080
        %v5082 = vpop.f32.mrf.mxu0
        %5083 = vdwg.mxu0
        %5084 = vrot.lane.b32.xlu0 %v4539, 112
        %v5085 = vpop.permute.xlu0 %5084
        %5086 = vrot.lane.b32.xlu0 %v4607, 112
        %v5087 = vpop.permute.xlu0 %5086
        %v5088 = vsel %vm943, %v5085, 0
        %v5090 = vsel %vm943, %v5087, 0
        %5092 = vmatprep.subr.mxu0 0.0
        %5093 = vmatpush1.xpose.msra.mxu0 0.0
        %5094 = vmatprep.subr.mxu0 0.0
        %5095 = vmatpush1.xpose.msra.mxu0 0.0
        %5096 = vmatprep.subr.mxu0 0.0
        %5097 = vmatpush1.xpose.msra.mxu0 0.0
        %5098 = vmatprep.subr.mxu0 0.0
        %5099 = vmatpush1.xpose.msra.mxu0 0.0
        %5100 = vmatprep.subr.mxu0 0.0
        %5101 = vmatpush1.xpose.msra.mxu0 0.0
        %5102 = vmatprep.subr.mxu0 0.0
        %5103 = vmatpush1.xpose.msra.mxu0 0.0
        %5104 = vmatprep.subr.mxu0 0.0
        %5105 = vmatpush1.xpose.msra.mxu0 0.0
        %5106 = vmatprep.subr.mxu0 0.0
        %5107 = vmatpush1.xpose.msra.mxu0 0.0
        %5108 = vmatprep.subr.mxu0 0.0
        %5109 = vmatpush1.xpose.msra.mxu0 0.0
        %5110 = vmatprep.subr.mxu0 0.0
        %5111 = vmatpush1.xpose.msra.mxu0 0.0
        %5112 = vmatprep.subr.mxu0 0.0
        %5113 = vmatpush1.xpose.msra.mxu0 0.0
        %5114 = vmatprep.subr.mxu0 0.0
        %5115 = vmatpush1.xpose.msra.mxu0 0.0
        %5116 = vmatprep.subr.mxu0 0.0
        %5117 = vmatpush1.xpose.msra.mxu0 0.0
        %5118 = vmatprep.subr.mxu0 0.0
        %5119 = vmatpush1.xpose.msra.mxu0 0.0
        %5120 = vmatprep.subr.mxu0 0.0
        %5121 = vmatpush1.xpose.msra.mxu0 0.0
        %5122 = vmatprep.subr.mxu0 0.0
        %5123 = vmatpush1.xpose.msra.mxu0 %v5090
        %5124 = vmatprep.subr.mxu0 0.0
        %5125 = vmatpush2.xpose.msra.mxu0 0.0
        %5126 = vmatprep.subr.mxu0 0.0
        %5127 = vmatpush2.xpose.msra.mxu0 0.0
        %5128 = vmatprep.subr.mxu0 0.0
        %5129 = vmatpush2.xpose.msra.mxu0 0.0
        %5130 = vmatprep.subr.mxu0 0.0
        %5131 = vmatpush2.xpose.msra.mxu0 0.0
        %5132 = vmatprep.subr.mxu0 0.0
        %5133 = vmatpush2.xpose.msra.mxu0 0.0
        %5134 = vmatprep.subr.mxu0 0.0
        %5135 = vmatpush2.xpose.msra.mxu0 0.0
        %5136 = vmatprep.subr.mxu0 0.0
        %5137 = vmatpush2.xpose.msra.mxu0 0.0
        %5138 = vmatprep.subr.mxu0 0.0
        %5139 = vmatpush2.xpose.msra.mxu0 0.0
        %5140 = vmatprep.subr.mxu0 0.0
        %5141 = vmatpush2.xpose.msra.mxu0 0.0
        %5142 = vmatprep.subr.mxu0 0.0
        %5143 = vmatpush2.xpose.msra.mxu0 0.0
        %5144 = vmatprep.subr.mxu0 0.0
        %5145 = vmatpush2.xpose.msra.mxu0 0.0
        %5146 = vmatprep.subr.mxu0 0.0
        %5147 = vmatpush2.xpose.msra.mxu0 0.0
        %5148 = vmatprep.subr.mxu0 0.0
        %5149 = vmatpush2.xpose.msra.mxu0 0.0
        %5150 = vmatprep.subr.mxu0 0.0
        %5151 = vmatpush2.xpose.msra.mxu0 0.0
        %5152 = vmatprep.subr.mxu0 0.0
        %5153 = vmatpush2.xpose.msra.mxu0 0.0
        %5154 = vmatprep.subr.mxu0 0.0
        %5155 = vmatpush2.xpose.msra.mxu0 0.0
        %5156 = vmatprep.mubr.f32.mxu0 0.0
        %5157 = vmatmul.mubr.f32.gmra.mxu0 %v5088
        %v5158 = vpop.f32.mrf.mxu0
        %v5159 = vadd.f32 %v2098, %v5158
        %v5160 = vpop.f32.mrf.mxu0
        %5161 = vdwg.mxu0
        %v5162 = vsel %vm943, %v5159, -inf
        %5163 = vmax.xlane.f32.xlu0 %v5162
        %v5164 = vpop.xlane.xlu0 %5163
        %v5165 = vsub.f32 %v5159, %v5164
        %v5166 = vmul.f32 %v5165, 1.442695
        %v5167 = vpow.pop %v5166
        %v5168 = vsel %vm943, %v5167, 0.0
        %5169 = vadd.xlane.f32.xlu0 %v5168
        %v5170 = vpop.xlane.xlu0 %5169
        %v5171 = vrcp.pop %v5170
        %v5172 = vmul.f32 %v5167, %v5171
        %5173 = vrot.lane.b32.xlu0 %v4607, 80
        %v5174 = vpop.permute.xlu0 %5173
        %v5177 = vsel %vm943, %v5172, 0
        %5179 = vmatprep.subr.mxu0 0.0
        %5180 = vmatpush1.msra.mxu0 0.0
        %5181 = vmatprep.subr.mxu0 0.0
        %5182 = vmatpush1.msra.mxu0 0.0
        %5183 = vmatprep.subr.mxu0 0.0
        %5184 = vmatpush1.msra.mxu0 0.0
        %5185 = vmatprep.subr.mxu0 0.0
        %5186 = vmatpush1.msra.mxu0 0.0
        %5187 = vmatprep.subr.mxu0 0.0
        %5188 = vmatpush1.msra.mxu0 0.0
        %5189 = vmatprep.subr.mxu0 0.0
        %5190 = vmatpush1.msra.mxu0 0.0
        %5191 = vmatprep.subr.mxu0 0.0
        %5192 = vmatpush1.msra.mxu0 0.0
        %5193 = vmatprep.subr.mxu0 0.0
        %5194 = vmatpush1.msra.mxu0 0.0
        %5195 = vmatprep.subr.mxu0 0.0
        %5196 = vmatpush1.msra.mxu0 0.0
        %5197 = vmatprep.subr.mxu0 0.0
        %5198 = vmatpush1.msra.mxu0 0.0
        %5199 = vmatprep.subr.mxu0 0.0
        %5200 = vmatpush1.msra.mxu0 0.0
        %5201 = vmatprep.subr.mxu0 0.0
        %5202 = vmatpush1.msra.mxu0 0.0
        %5203 = vmatprep.subr.mxu0 0.0
        %5204 = vmatpush1.msra.mxu0 0.0
        %5205 = vmatprep.subr.mxu0 0.0
        %5206 = vmatpush1.msra.mxu0 0.0
        %5207 = vmatprep.subr.mxu0 0.0
        %5208 = vmatpush1.msra.mxu0 0.0
        %5209 = vmatprep.subr.mxu0 0.0
        %5210 = vmatpush1.msra.mxu0 %v5174
        %5211 = vmatprep.subr.mxu0 0.0
        %5212 = vmatpush2.msra.mxu0 0.0
        %5213 = vmatprep.subr.mxu0 0.0
        %5214 = vmatpush2.msra.mxu0 0.0
        %5215 = vmatprep.subr.mxu0 0.0
        %5216 = vmatpush2.msra.mxu0 0.0
        %5217 = vmatprep.subr.mxu0 0.0
        %5218 = vmatpush2.msra.mxu0 0.0
        %5219 = vmatprep.subr.mxu0 0.0
        %5220 = vmatpush2.msra.mxu0 0.0
        %5221 = vmatprep.subr.mxu0 0.0
        %5222 = vmatpush2.msra.mxu0 0.0
        %5223 = vmatprep.subr.mxu0 0.0
        %5224 = vmatpush2.msra.mxu0 0.0
        %5225 = vmatprep.subr.mxu0 0.0
        %5226 = vmatpush2.msra.mxu0 0.0
        %5227 = vmatprep.subr.mxu0 0.0
        %5228 = vmatpush2.msra.mxu0 0.0
        %5229 = vmatprep.subr.mxu0 0.0
        %5230 = vmatpush2.msra.mxu0 0.0
        %5231 = vmatprep.subr.mxu0 0.0
        %5232 = vmatpush2.msra.mxu0 0.0
        %5233 = vmatprep.subr.mxu0 0.0
        %5234 = vmatpush2.msra.mxu0 0.0
        %5235 = vmatprep.subr.mxu0 0.0
        %5236 = vmatpush2.msra.mxu0 0.0
        %5237 = vmatprep.subr.mxu0 0.0
        %5238 = vmatpush2.msra.mxu0 0.0
        %5239 = vmatprep.subr.mxu0 0.0
        %5240 = vmatpush2.msra.mxu0 0.0
        %5241 = vmatprep.subr.mxu0 0.0
        %5242 = vmatpush2.msra.mxu0 0.0
        %5243 = vmatprep.mubr.f32.mxu0 0.0
        %5244 = vmatmul.mubr.f32.gmra.mxu0 %v5177
        %v5245 = vpop.f32.mrf.mxu0
        %v5246 = vadd.f32 0.0, %v5245
        %v5247 = vpop.f32.mrf.mxu0
        %5248 = vdwg.mxu0
        %v5250 = vsel %vm943, %v5246, 0
        %5252 = vmatprep.subr.mxu0 0.0
        %5253 = vmatpush1.msra.mxu0 0.0
        %5254 = vmatprep.subr.mxu0 0.0
        %5255 = vmatpush1.msra.mxu0 0.0
        %5256 = vmatprep.subr.mxu0 0.0
        %5257 = vmatpush1.msra.mxu0 0.0
        %5258 = vmatprep.subr.mxu0 0.0
        %5259 = vmatpush1.msra.mxu0 0.0
        %5260 = vmatprep.subr.mxu0 0.0
        %5261 = vmatpush1.msra.mxu0 0.0
        %5262 = vmatprep.subr.mxu0 0.0
        %5263 = vmatpush1.msra.mxu0 0.0
        %5264 = vmatprep.subr.mxu0 0.0
        %5265 = vmatpush1.msra.mxu0 0.0
        %5266 = vmatprep.subr.mxu0 0.0
        %5267 = vmatpush1.msra.mxu0 0.0
        %5268 = vmatprep.subr.mxu0 0.0
        %5269 = vmatpush1.msra.mxu0 0.0
        %5270 = vmatprep.subr.mxu0 0.0
        %5271 = vmatpush1.msra.mxu0 0.0
        %5272 = vmatprep.subr.mxu0 0.0
        %5273 = vmatpush1.msra.mxu0 0.0
        %5274 = vmatprep.subr.mxu0 0.0
        %5275 = vmatpush1.msra.mxu0 0.0
        %5276 = vmatprep.subr.mxu0 0.0
        %5277 = vmatpush1.msra.mxu0 0.0
        %5278 = vmatprep.subr.mxu0 0.0
        %5279 = vmatpush1.msra.mxu0 0.0
        %5280 = vmatprep.subr.mxu0 0.0
        %5281 = vmatpush1.msra.mxu0 0.0
        %5282 = vmatprep.subr.mxu0 0.0
        %5283 = vmatpush1.msra.mxu0 %v4462
        %5284 = vmatprep.subr.mxu0 0.0
        %5285 = vmatpush2.msra.mxu0 0.0
        %5286 = vmatprep.subr.mxu0 0.0
        %5287 = vmatpush2.msra.mxu0 0.0
        %5288 = vmatprep.subr.mxu0 0.0
        %5289 = vmatpush2.msra.mxu0 0.0
        %5290 = vmatprep.subr.mxu0 0.0
        %5291 = vmatpush2.msra.mxu0 0.0
        %5292 = vmatprep.subr.mxu0 0.0
        %5293 = vmatpush2.msra.mxu0 0.0
        %5294 = vmatprep.subr.mxu0 0.0
        %5295 = vmatpush2.msra.mxu0 0.0
        %5296 = vmatprep.subr.mxu0 0.0
        %5297 = vmatpush2.msra.mxu0 0.0
        %5298 = vmatprep.subr.mxu0 0.0
        %5299 = vmatpush2.msra.mxu0 0.0
        %5300 = vmatprep.subr.mxu0 0.0
        %5301 = vmatpush2.msra.mxu0 0.0
        %5302 = vmatprep.subr.mxu0 0.0
        %5303 = vmatpush2.msra.mxu0 0.0
        %5304 = vmatprep.subr.mxu0 0.0
        %5305 = vmatpush2.msra.mxu0 0.0
        %5306 = vmatprep.subr.mxu0 0.0
        %5307 = vmatpush2.msra.mxu0 0.0
        %5308 = vmatprep.subr.mxu0 0.0
        %5309 = vmatpush2.msra.mxu0 0.0
        %5310 = vmatprep.subr.mxu0 0.0
        %5311 = vmatpush2.msra.mxu0 0.0
        %5312 = vmatprep.subr.mxu0 0.0
        %5313 = vmatpush2.msra.mxu0 0.0
        %5314 = vmatprep.subr.mxu0 0.0
        %5315 = vmatpush2.msra.mxu0 0.0
        %5316 = vmatprep.mubr.f32.mxu0 0.0
        %5317 = vmatmul.mubr.f32.gmra.mxu0 %v5250
        %v5318 = vpop.f32.mrf.mxu0
        %v5319 = vadd.f32 0.0, %v5318
        %v5320 = vpop.f32.mrf.mxu0
        %5321 = vdwg.mxu0
        %v5322 = vadd.f32 %v5081, %v5319
        %5323 = vrot.lane.b32.xlu0 %v4539, 104
        %v5324 = vpop.permute.xlu0 %5323
        %5325 = vrot.lane.b32.xlu0 %v4607, 104
        %v5326 = vpop.permute.xlu0 %5325
        %v5327 = vsel %vm943, %v5324, 0
        %v5329 = vsel %vm943, %v5326, 0
        %5331 = vmatprep.subr.mxu0 0.0
        %5332 = vmatpush1.xpose.msra.mxu0 0.0
        %5333 = vmatprep.subr.mxu0 0.0
        %5334 = vmatpush1.xpose.msra.mxu0 0.0
        %5335 = vmatprep.subr.mxu0 0.0
        %5336 = vmatpush1.xpose.msra.mxu0 0.0
        %5337 = vmatprep.subr.mxu0 0.0
        %5338 = vmatpush1.xpose.msra.mxu0 0.0
        %5339 = vmatprep.subr.mxu0 0.0
        %5340 = vmatpush1.xpose.msra.mxu0 0.0
        %5341 = vmatprep.subr.mxu0 0.0
        %5342 = vmatpush1.xpose.msra.mxu0 0.0
        %5343 = vmatprep.subr.mxu0 0.0
        %5344 = vmatpush1.xpose.msra.mxu0 0.0
        %5345 = vmatprep.subr.mxu0 0.0
        %5346 = vmatpush1.xpose.msra.mxu0 0.0
        %5347 = vmatprep.subr.mxu0 0.0
        %5348 = vmatpush1.xpose.msra.mxu0 0.0
        %5349 = vmatprep.subr.mxu0 0.0
        %5350 = vmatpush1.xpose.msra.mxu0 0.0
        %5351 = vmatprep.subr.mxu0 0.0
        %5352 = vmatpush1.xpose.msra.mxu0 0.0
        %5353 = vmatprep.subr.mxu0 0.0
        %5354 = vmatpush1.xpose.msra.mxu0 0.0
        %5355 = vmatprep.subr.mxu0 0.0
        %5356 = vmatpush1.xpose.msra.mxu0 0.0
        %5357 = vmatprep.subr.mxu0 0.0
        %5358 = vmatpush1.xpose.msra.mxu0 0.0
        %5359 = vmatprep.subr.mxu0 0.0
        %5360 = vmatpush1.xpose.msra.mxu0 0.0
        %5361 = vmatprep.subr.mxu0 0.0
        %5362 = vmatpush1.xpose.msra.mxu0 %v5329
        %5363 = vmatprep.subr.mxu0 0.0
        %5364 = vmatpush2.xpose.msra.mxu0 0.0
        %5365 = vmatprep.subr.mxu0 0.0
        %5366 = vmatpush2.xpose.msra.mxu0 0.0
        %5367 = vmatprep.subr.mxu0 0.0
        %5368 = vmatpush2.xpose.msra.mxu0 0.0
        %5369 = vmatprep.subr.mxu0 0.0
        %5370 = vmatpush2.xpose.msra.mxu0 0.0
        %5371 = vmatprep.subr.mxu0 0.0
        %5372 = vmatpush2.xpose.msra.mxu0 0.0
        %5373 = vmatprep.subr.mxu0 0.0
        %5374 = vmatpush2.xpose.msra.mxu0 0.0
        %5375 = vmatprep.subr.mxu0 0.0
        %5376 = vmatpush2.xpose.msra.mxu0 0.0
        %5377 = vmatprep.subr.mxu0 0.0
        %5378 = vmatpush2.xpose.msra.mxu0 0.0
        %5379 = vmatprep.subr.mxu0 0.0
        %5380 = vmatpush2.xpose.msra.mxu0 0.0
        %5381 = vmatprep.subr.mxu0 0.0
        %5382 = vmatpush2.xpose.msra.mxu0 0.0
        %5383 = vmatprep.subr.mxu0 0.0
        %5384 = vmatpush2.xpose.msra.mxu0 0.0
        %5385 = vmatprep.subr.mxu0 0.0
        %5386 = vmatpush2.xpose.msra.mxu0 0.0
        %5387 = vmatprep.subr.mxu0 0.0
        %5388 = vmatpush2.xpose.msra.mxu0 0.0
        %5389 = vmatprep.subr.mxu0 0.0
        %5390 = vmatpush2.xpose.msra.mxu0 0.0
        %5391 = vmatprep.subr.mxu0 0.0
        %5392 = vmatpush2.xpose.msra.mxu0 0.0
        %5393 = vmatprep.subr.mxu0 0.0
        %5394 = vmatpush2.xpose.msra.mxu0 0.0
        %5395 = vmatprep.mubr.f32.mxu0 0.0
        %5396 = vmatmul.mubr.f32.gmra.mxu0 %v5327
        %v5397 = vpop.f32.mrf.mxu0
        %v5398 = vadd.f32 %v2098, %v5397
        %v5399 = vpop.f32.mrf.mxu0
        %5400 = vdwg.mxu0
        %v5401 = vsel %vm943, %v5398, -inf
        %5402 = vmax.xlane.f32.xlu0 %v5401
        %v5403 = vpop.xlane.xlu0 %5402
        %v5404 = vsub.f32 %v5398, %v5403
        %v5405 = vmul.f32 %v5404, 1.442695
        %v5406 = vpow.pop %v5405
        %v5407 = vsel %vm943, %v5406, 0.0
        %5408 = vadd.xlane.f32.xlu0 %v5407
        %v5409 = vpop.xlane.xlu0 %5408
        %v5410 = vrcp.pop %v5409
        %v5411 = vmul.f32 %v5406, %v5410
        %5412 = vrot.lane.b32.xlu0 %v4607, 72
        %v5413 = vpop.permute.xlu0 %5412
        %v5416 = vsel %vm943, %v5411, 0
        %5418 = vmatprep.subr.mxu0 0.0
        %5419 = vmatpush1.msra.mxu0 0.0
        %5420 = vmatprep.subr.mxu0 0.0
        %5421 = vmatpush1.msra.mxu0 0.0
        %5422 = vmatprep.subr.mxu0 0.0
        %5423 = vmatpush1.msra.mxu0 0.0
        %5424 = vmatprep.subr.mxu0 0.0
        %5425 = vmatpush1.msra.mxu0 0.0
        %5426 = vmatprep.subr.mxu0 0.0
        %5427 = vmatpush1.msra.mxu0 0.0
        %5428 = vmatprep.subr.mxu0 0.0
        %5429 = vmatpush1.msra.mxu0 0.0
        %5430 = vmatprep.subr.mxu0 0.0
        %5431 = vmatpush1.msra.mxu0 0.0
        %5432 = vmatprep.subr.mxu0 0.0
        %5433 = vmatpush1.msra.mxu0 0.0
        %5434 = vmatprep.subr.mxu0 0.0
        %5435 = vmatpush1.msra.mxu0 0.0
        %5436 = vmatprep.subr.mxu0 0.0
        %5437 = vmatpush1.msra.mxu0 0.0
        %5438 = vmatprep.subr.mxu0 0.0
        %5439 = vmatpush1.msra.mxu0 0.0
        %5440 = vmatprep.subr.mxu0 0.0
        %5441 = vmatpush1.msra.mxu0 0.0
        %5442 = vmatprep.subr.mxu0 0.0
        %5443 = vmatpush1.msra.mxu0 0.0
        %5444 = vmatprep.subr.mxu0 0.0
        %5445 = vmatpush1.msra.mxu0 0.0
        %5446 = vmatprep.subr.mxu0 0.0
        %5447 = vmatpush1.msra.mxu0 0.0
        %5448 = vmatprep.subr.mxu0 0.0
        %5449 = vmatpush1.msra.mxu0 %v5413
        %5450 = vmatprep.subr.mxu0 0.0
        %5451 = vmatpush2.msra.mxu0 0.0
        %5452 = vmatprep.subr.mxu0 0.0
        %5453 = vmatpush2.msra.mxu0 0.0
        %5454 = vmatprep.subr.mxu0 0.0
        %5455 = vmatpush2.msra.mxu0 0.0
        %5456 = vmatprep.subr.mxu0 0.0
        %5457 = vmatpush2.msra.mxu0 0.0
        %5458 = vmatprep.subr.mxu0 0.0
        %5459 = vmatpush2.msra.mxu0 0.0
        %5460 = vmatprep.subr.mxu0 0.0
        %5461 = vmatpush2.msra.mxu0 0.0
        %5462 = vmatprep.subr.mxu0 0.0
        %5463 = vmatpush2.msra.mxu0 0.0
        %5464 = vmatprep.subr.mxu0 0.0
        %5465 = vmatpush2.msra.mxu0 0.0
        %5466 = vmatprep.subr.mxu0 0.0
        %5467 = vmatpush2.msra.mxu0 0.0
        %5468 = vmatprep.subr.mxu0 0.0
        %5469 = vmatpush2.msra.mxu0 0.0
        %5470 = vmatprep.subr.mxu0 0.0
        %5471 = vmatpush2.msra.mxu0 0.0
        %5472 = vmatprep.subr.mxu0 0.0
        %5473 = vmatpush2.msra.mxu0 0.0
        %5474 = vmatprep.subr.mxu0 0.0
        %5475 = vmatpush2.msra.mxu0 0.0
        %5476 = vmatprep.subr.mxu0 0.0
        %5477 = vmatpush2.msra.mxu0 0.0
        %5478 = vmatprep.subr.mxu0 0.0
        %5479 = vmatpush2.msra.mxu0 0.0
        %5480 = vmatprep.subr.mxu0 0.0
        %5481 = vmatpush2.msra.mxu0 0.0
        %5482 = vmatprep.mubr.f32.mxu0 0.0
        %5483 = vmatmul.mubr.f32.gmra.mxu0 %v5416
        %v5484 = vpop.f32.mrf.mxu0
        %v5485 = vadd.f32 0.0, %v5484
        %v5486 = vpop.f32.mrf.mxu0
        %5487 = vdwg.mxu0
        %v5489 = vsel %vm943, %v5485, 0
        %5491 = vmatprep.subr.mxu0 0.0
        %5492 = vmatpush1.msra.mxu0 0.0
        %5493 = vmatprep.subr.mxu0 0.0
        %5494 = vmatpush1.msra.mxu0 0.0
        %5495 = vmatprep.subr.mxu0 0.0
        %5496 = vmatpush1.msra.mxu0 0.0
        %5497 = vmatprep.subr.mxu0 0.0
        %5498 = vmatpush1.msra.mxu0 0.0
        %5499 = vmatprep.subr.mxu0 0.0
        %5500 = vmatpush1.msra.mxu0 0.0
        %5501 = vmatprep.subr.mxu0 0.0
        %5502 = vmatpush1.msra.mxu0 0.0
        %5503 = vmatprep.subr.mxu0 0.0
        %5504 = vmatpush1.msra.mxu0 0.0
        %5505 = vmatprep.subr.mxu0 0.0
        %5506 = vmatpush1.msra.mxu0 0.0
        %5507 = vmatprep.subr.mxu0 0.0
        %5508 = vmatpush1.msra.mxu0 0.0
        %5509 = vmatprep.subr.mxu0 0.0
        %5510 = vmatpush1.msra.mxu0 0.0
        %5511 = vmatprep.subr.mxu0 0.0
        %5512 = vmatpush1.msra.mxu0 0.0
        %5513 = vmatprep.subr.mxu0 0.0
        %5514 = vmatpush1.msra.mxu0 0.0
        %5515 = vmatprep.subr.mxu0 0.0
        %5516 = vmatpush1.msra.mxu0 0.0
        %5517 = vmatprep.subr.mxu0 0.0
        %5518 = vmatpush1.msra.mxu0 0.0
        %5519 = vmatprep.subr.mxu0 0.0
        %5520 = vmatpush1.msra.mxu0 0.0
        %5521 = vmatprep.subr.mxu0 0.0
        %5522 = vmatpush1.msra.mxu0 %v4463
        %5523 = vmatprep.subr.mxu0 0.0
        %5524 = vmatpush2.msra.mxu0 0.0
        %5525 = vmatprep.subr.mxu0 0.0
        %5526 = vmatpush2.msra.mxu0 0.0
        %5527 = vmatprep.subr.mxu0 0.0
        %5528 = vmatpush2.msra.mxu0 0.0
        %5529 = vmatprep.subr.mxu0 0.0
        %5530 = vmatpush2.msra.mxu0 0.0
        %5531 = vmatprep.subr.mxu0 0.0
        %5532 = vmatpush2.msra.mxu0 0.0
        %5533 = vmatprep.subr.mxu0 0.0
        %5534 = vmatpush2.msra.mxu0 0.0
        %5535 = vmatprep.subr.mxu0 0.0
        %5536 = vmatpush2.msra.mxu0 0.0
        %5537 = vmatprep.subr.mxu0 0.0
        %5538 = vmatpush2.msra.mxu0 0.0
        %5539 = vmatprep.subr.mxu0 0.0
        %5540 = vmatpush2.msra.mxu0 0.0
        %5541 = vmatprep.subr.mxu0 0.0
        %5542 = vmatpush2.msra.mxu0 0.0
        %5543 = vmatprep.subr.mxu0 0.0
        %5544 = vmatpush2.msra.mxu0 0.0
        %5545 = vmatprep.subr.mxu0 0.0
        %5546 = vmatpush2.msra.mxu0 0.0
        %5547 = vmatprep.subr.mxu0 0.0
        %5548 = vmatpush2.msra.mxu0 0.0
        %5549 = vmatprep.subr.mxu0 0.0
        %5550 = vmatpush2.msra.mxu0 0.0
        %5551 = vmatprep.subr.mxu0 0.0
        %5552 = vmatpush2.msra.mxu0 0.0
        %5553 = vmatprep.subr.mxu0 0.0
        %5554 = vmatpush2.msra.mxu0 0.0
        %5555 = vmatprep.mubr.f32.mxu0 0.0
        %5556 = vmatmul.mubr.f32.gmra.mxu0 %v5489
        %v5557 = vpop.f32.mrf.mxu0
        %v5558 = vadd.f32 0.0, %v5557
        %v5559 = vpop.f32.mrf.mxu0
        %5560 = vdwg.mxu0
        %v5561 = vadd.f32 %v5322, %v5558
        %v5563 = vlaneseq
        %v5564 = vshrl.u32 %v5563, 7
        %v5565 = vsub.s32 0, %v5564
        %v5566 = vrot.slane %v4465, %v5565
        %v5568 = vadd.f32 %v5561, %v5566
        %v5569 = vadd.f32 %v5568, %v4448
        %s5570 = scalar_lea.vmem %s14, 1
        %v5571 = vld [vmem:[%s5570] sm:$0x1]
        %s5572 = scalar_lea.vmem %s15, 1
        %v5573 = vld [vmem:[%s5572] sm:$0x1]
        %v5574 = vsel %vm798, %v5569, 0.0
        %5575 = vadd.xlane.f32.xlu0 %v5574
        %v5576 = vpop.xlane.xlu0 %5575
        %v5577 = vmul.f32 %v5576, %v1909
        %v5578 = vsub.f32 %v5569, %v5577
        %v5579 = vmul.f32 %v5578, %v5578
        %v5580 = vsel %vm798, %v5579, 0.0
        %5581 = vadd.xlane.f32.xlu0 %v5580
        %v5582 = vpop.xlane.xlu0 %5581
        %v5583 = vmul.f32 %v5582, %v1909
        %v5584 = vadd.f32 %v5583, 1e-05
        %v5585 = vrsqrt.pop %v5584
        %v5586 = vmul.f32 %v5578, %v5585
        %v5588 = vlaneseq
        %v5589 = vshrl.u32 %v5588, 7
        %v5590 = vsub.s32 0, %v5589
        %v5591 = vrot.slane %v5571, %v5590
        %v5593 = vmul.f32 %v5586, %v5591
        %v5595 = vlaneseq
        %v5596 = vshrl.u32 %v5595, 7
        %v5597 = vsub.s32 0, %v5596
        %v5598 = vrot.slane %v5573, %v5597
        %v5600 = vadd.f32 %v5593, %v5598
        %s5601 = scalar_lea.vmem %s16, 32
        %v5602 = vld [vmem:[%s5601] sm:$0xff]
        %v5603 = vld [vmem:[%s5601 + $0x8] sm:$0xff]
        %v5604 = vld [vmem:[%s5601 + $0x10] sm:$0xff]
        %v5605 = vld [vmem:[%s5601 + $0x18] sm:$0xff]
        %s5606 = scalar_lea.vmem %s17, 1
        %v5607 = vld [vmem:[%s5606] sm:$0x1]
        %v5609 = vlaneseq
        %v5610 = vshrl.u32 %v5609, 7
        %v5611 = vsub.s32 0, %v5610
        %v5612 = vrot.slane %v5607, %v5611
        %v5615 = vsel %vm798, %v5600, 0
        %5617 = vmatprep.subr.mxu0 0.0
        %5618 = vmatpush1.msra.mxu0 0.0
        %5619 = vmatprep.subr.mxu0 0.0
        %5620 = vmatpush1.msra.mxu0 0.0
        %5621 = vmatprep.subr.mxu0 0.0
        %5622 = vmatpush1.msra.mxu0 0.0
        %5623 = vmatprep.subr.mxu0 0.0
        %5624 = vmatpush1.msra.mxu0 0.0
        %5625 = vmatprep.subr.mxu0 0.0
        %5626 = vmatpush1.msra.mxu0 0.0
        %5627 = vmatprep.subr.mxu0 0.0
        %5628 = vmatpush1.msra.mxu0 0.0
        %5629 = vmatprep.subr.mxu0 0.0
        %5630 = vmatpush1.msra.mxu0 0.0
        %5631 = vmatprep.subr.mxu0 0.0
        %5632 = vmatpush1.msra.mxu0 0.0
        %5633 = vmatprep.subr.mxu0 0.0
        %5634 = vmatpush1.msra.mxu0 0.0
        %5635 = vmatprep.subr.mxu0 0.0
        %5636 = vmatpush1.msra.mxu0 0.0
        %5637 = vmatprep.subr.mxu0 0.0
        %5638 = vmatpush1.msra.mxu0 0.0
        %5639 = vmatprep.subr.mxu0 0.0
        %5640 = vmatpush1.msra.mxu0 0.0
        %5641 = vmatprep.subr.mxu0 0.0
        %5642 = vmatpush1.msra.mxu0 %v5605
        %5643 = vmatprep.subr.mxu0 0.0
        %5644 = vmatpush1.msra.mxu0 %v5604
        %5645 = vmatprep.subr.mxu0 0.0
        %5646 = vmatpush1.msra.mxu0 %v5603
        %5647 = vmatprep.subr.mxu0 0.0
        %5648 = vmatpush1.msra.mxu0 %v5602
        %5649 = vmatprep.subr.mxu0 0.0
        %5650 = vmatpush2.msra.mxu0 0.0
        %5651 = vmatprep.subr.mxu0 0.0
        %5652 = vmatpush2.msra.mxu0 0.0
        %5653 = vmatprep.subr.mxu0 0.0
        %5654 = vmatpush2.msra.mxu0 0.0
        %5655 = vmatprep.subr.mxu0 0.0
        %5656 = vmatpush2.msra.mxu0 0.0
        %5657 = vmatprep.subr.mxu0 0.0
        %5658 = vmatpush2.msra.mxu0 0.0
        %5659 = vmatprep.subr.mxu0 0.0
        %5660 = vmatpush2.msra.mxu0 0.0
        %5661 = vmatprep.subr.mxu0 0.0
        %5662 = vmatpush2.msra.mxu0 0.0
        %5663 = vmatprep.subr.mxu0 0.0
        %5664 = vmatpush2.msra.mxu0 0.0
        %5665 = vmatprep.subr.mxu0 0.0
        %5666 = vmatpush2.msra.mxu0 0.0
        %5667 = vmatprep.subr.mxu0 0.0
        %5668 = vmatpush2.msra.mxu0 0.0
        %5669 = vmatprep.subr.mxu0 0.0
        %5670 = vmatpush2.msra.mxu0 0.0
        %5671 = vmatprep.subr.mxu0 0.0
        %5672 = vmatpush2.msra.mxu0 0.0
        %5673 = vmatprep.subr.mxu0 0.0
        %5674 = vmatpush2.msra.mxu0 0.0
        %5675 = vmatprep.subr.mxu0 0.0
        %5676 = vmatpush2.msra.mxu0 0.0
        %5677 = vmatprep.subr.mxu0 0.0
        %5678 = vmatpush2.msra.mxu0 0.0
        %5679 = vmatprep.subr.mxu0 0.0
        %5680 = vmatpush2.msra.mxu0 0.0
        %5681 = vmatprep.mubr.f32.mxu0 0.0
        %5682 = vmatmul.mubr.f32.gmra.mxu0 %v5615
        %v5683 = vpop.f32.mrf.mxu0
        %v5684 = vadd.f32 %v5612, %v5683
        %v5685 = vpop.f32.mrf.mxu0
        %5686 = vdwg.mxu0
        %v5687 = vmax.f32 %v5684, 0.0
        %s5688 = scalar_lea.vmem %s18, 128
        %v5689 = vld [vmem:[%s5688] sm:$0xff]
        %v5690 = vld [vmem:[%s5688 + $0x8] sm:$0xff]
        %v5691 = vld [vmem:[%s5688 + $0x10] sm:$0xff]
        %v5692 = vld [vmem:[%s5688 + $0x18] sm:$0xff]
        %v5693 = vld [vmem:[%s5688 + $0x20] sm:$0xff]
        %v5694 = vld [vmem:[%s5688 + $0x28] sm:$0xff]
        %v5695 = vld [vmem:[%s5688 + $0x30] sm:$0xff]
        %v5696 = vld [vmem:[%s5688 + $0x38] sm:$0xff]
        %v5697 = vld [vmem:[%s5688 + $0x40] sm:$0xff]
        %v5698 = vld [vmem:[%s5688 + $0x48] sm:$0xff]
        %v5699 = vld [vmem:[%s5688 + $0x50] sm:$0xff]
        %v5700 = vld [vmem:[%s5688 + $0x58] sm:$0xff]
        %v5701 = vld [vmem:[%s5688 + $0x60] sm:$0xff]
        %v5702 = vld [vmem:[%s5688 + $0x68] sm:$0xff]
        %v5703 = vld [vmem:[%s5688 + $0x70] sm:$0xff]
        %v5704 = vld [vmem:[%s5688 + $0x78] sm:$0xff]
        %s5705 = scalar_lea.vmem %s19, 1
        %v5706 = vld [vmem:[%s5705] sm:$0x1]
        %v5708 = vlaneseq
        %v5709 = vshrl.u32 %v5708, 7
        %v5710 = vsub.s32 0, %v5709
        %v5711 = vrot.slane %v5706, %v5710
        %5713 = vmatprep.subr.mxu0 0.0
        %5714 = vmatpush1.msra.mxu0 %v5704
        %5715 = vmatprep.subr.mxu0 0.0
        %5716 = vmatpush1.msra.mxu0 %v5703
        %5717 = vmatprep.subr.mxu0 0.0
        %5718 = vmatpush1.msra.mxu0 %v5702
        %5719 = vmatprep.subr.mxu0 0.0
        %5720 = vmatpush1.msra.mxu0 %v5701
        %5721 = vmatprep.subr.mxu0 0.0
        %5722 = vmatpush1.msra.mxu0 %v5700
        %5723 = vmatprep.subr.mxu0 0.0
        %5724 = vmatpush1.msra.mxu0 %v5699
        %5725 = vmatprep.subr.mxu0 0.0
        %5726 = vmatpush1.msra.mxu0 %v5698
        %5727 = vmatprep.subr.mxu0 0.0
        %5728 = vmatpush1.msra.mxu0 %v5697
        %5729 = vmatprep.subr.mxu0 0.0
        %5730 = vmatpush1.msra.mxu0 %v5696
        %5731 = vmatprep.subr.mxu0 0.0
        %5732 = vmatpush1.msra.mxu0 %v5695
        %5733 = vmatprep.subr.mxu0 0.0
        %5734 = vmatpush1.msra.mxu0 %v5694
        %5735 = vmatprep.subr.mxu0 0.0
        %5736 = vmatpush1.msra.mxu0 %v5693
        %5737 = vmatprep.subr.mxu0 0.0
        %5738 = vmatpush1.msra.mxu0 %v5692
        %5739 = vmatprep.subr.mxu0 0.0
        %5740 = vmatpush1.msra.mxu0 %v5691
        %5741 = vmatprep.subr.mxu0 0.0
        %5742 = vmatpush1.msra.mxu0 %v5690
        %5743 = vmatprep.subr.mxu0 0.0
        %5744 = vmatpush1.msra.mxu0 %v5689
        %5745 = vmatprep.subr.mxu0 0.0
        %5746 = vmatpush2.msra.mxu0 0.0
        %5747 = vmatprep.subr.mxu0 0.0
        %5748 = vmatpush2.msra.mxu0 0.0
        %5749 = vmatprep.subr.mxu0 0.0
        %5750 = vmatpush2.msra.mxu0 0.0
        %5751 = vmatprep.subr.mxu0 0.0
        %5752 = vmatpush2.msra.mxu0 0.0
        %5753 = vmatprep.subr.mxu0 0.0
        %5754 = vmatpush2.msra.mxu0 0.0
        %5755 = vmatprep.subr.mxu0 0.0
        %5756 = vmatpush2.msra.mxu0 0.0
        %5757 = vmatprep.subr.mxu0 0.0
        %5758 = vmatpush2.msra.mxu0 0.0
        %5759 = vmatprep.subr.mxu0 0.0
        %5760 = vmatpush2.msra.mxu0 0.0
        %5761 = vmatprep.subr.mxu0 0.0
        %5762 = vmatpush2.msra.mxu0 0.0
        %5763 = vmatprep.subr.mxu0 0.0
        %5764 = vmatpush2.msra.mxu0 0.0
        %5765 = vmatprep.subr.mxu0 0.0
        %5766 = vmatpush2.msra.mxu0 0.0
        %5767 = vmatprep.subr.mxu0 0.0
        %5768 = vmatpush2.msra.mxu0 0.0
        %5769 = vmatprep.subr.mxu0 0.0
        %5770 = vmatpush2.msra.mxu0 0.0
        %5771 = vmatprep.subr.mxu0 0.0
        %5772 = vmatpush2.msra.mxu0 0.0
        %5773 = vmatprep.subr.mxu0 0.0
        %5774 = vmatpush2.msra.mxu0 0.0
        %5775 = vmatprep.subr.mxu0 0.0
        %5776 = vmatpush2.msra.mxu0 0.0
        %5777 = vmatprep.mubr.f32.mxu0 0.0
        %5778 = vmatmul.mubr.f32.gmra.mxu0 %v5687
        %v5779 = vpop.f32.mrf.mxu0
        %v5780 = vadd.f32 %v5711, %v5779
        %v5781 = vpop.f32.mrf.mxu0
        %5782 = vdwg.mxu0
        %v5783 = vadd.f32 %v5780, %v5600
        %s5784 = scalar_lea.vmem %s20, 1
        %v5785 = vld [vmem:[%s5784] sm:$0x1]
        %s5786 = scalar_lea.vmem %s21, 1
        %v5787 = vld [vmem:[%s5786] sm:$0x1]
        %v5788 = vsel %vm798, %v5783, 0.0
        %5789 = vadd.xlane.f32.xlu0 %v5788
        %v5790 = vpop.xlane.xlu0 %5789
        %v5791 = vmul.f32 %v5790, %v1909
        %v5792 = vsub.f32 %v5783, %v5791
        %v5793 = vmul.f32 %v5792, %v5792
        %v5794 = vsel %vm798, %v5793, 0.0
        %5795 = vadd.xlane.f32.xlu0 %v5794
        %v5796 = vpop.xlane.xlu0 %5795
        %v5797 = vmul.f32 %v5796, %v1909
        %v5798 = vadd.f32 %v5797, 1e-05
        %v5799 = vrsqrt.pop %v5798
        %v5800 = vmul.f32 %v5792, %v5799
        %v5802 = vlaneseq
        %v5803 = vshrl.u32 %v5802, 7
        %v5804 = vsub.s32 0, %v5803
        %v5805 = vrot.slane %v5785, %v5804
        %v5807 = vmul.f32 %v5800, %v5805
        %v5809 = vlaneseq
        %v5810 = vshrl.u32 %v5809, 7
        %v5811 = vsub.s32 0, %v5810
        %v5812 = vrot.slane %v5787, %v5811
        %v5814 = vadd.f32 %v5807, %v5812
        %v5815 = vld [vmem:[%s22] sm:$0xff]
        %v5816 = vld [vmem:[%s22 + $0x8] sm:$0xff]
        %v5817 = vld [vmem:[%s22 + $0x10] sm:$0xff]
        %v5818 = vld [vmem:[%s22 + $0x18] sm:$0xff]
        %v5819 = vld [vmem:[%s23] sm:$0x1]
        %v5821 = vlaneseq
        %v5822 = vshrl.u32 %v5821, 7
        %v5823 = vsub.s32 0, %v5822
        %v5824 = vrot.slane %v5819, %v5823
        %v5827 = vsel %vm798, %v5814, 0
        %5829 = vmatprep.subr.mxu0 0.0
        %5830 = vmatpush1.msra.mxu0 0.0
        %5831 = vmatprep.subr.mxu0 0.0
        %5832 = vmatpush1.msra.mxu0 0.0
        %5833 = vmatprep.subr.mxu0 0.0
        %5834 = vmatpush1.msra.mxu0 0.0
        %5835 = vmatprep.subr.mxu0 0.0
        %5836 = vmatpush1.msra.mxu0 0.0
        %5837 = vmatprep.subr.mxu0 0.0
        %5838 = vmatpush1.msra.mxu0 0.0
        %5839 = vmatprep.subr.mxu0 0.0
        %5840 = vmatpush1.msra.mxu0 0.0
        %5841 = vmatprep.subr.mxu0 0.0
        %5842 = vmatpush1.msra.mxu0 0.0
        %5843 = vmatprep.subr.mxu0 0.0
        %5844 = vmatpush1.msra.mxu0 0.0
        %5845 = vmatprep.subr.mxu0 0.0
        %5846 = vmatpush1.msra.mxu0 0.0
        %5847 = vmatprep.subr.mxu0 0.0
        %5848 = vmatpush1.msra.mxu0 0.0
        %5849 = vmatprep.subr.mxu0 0.0
        %5850 = vmatpush1.msra.mxu0 0.0
        %5851 = vmatprep.subr.mxu0 0.0
        %5852 = vmatpush1.msra.mxu0 0.0
        %5853 = vmatprep.subr.mxu0 0.0
        %5854 = vmatpush1.msra.mxu0 %v5818
        %5855 = vmatprep.subr.mxu0 0.0
        %5856 = vmatpush1.msra.mxu0 %v5817
        %5857 = vmatprep.subr.mxu0 0.0
        %5858 = vmatpush1.msra.mxu0 %v5816
        %5859 = vmatprep.subr.mxu0 0.0
        %5860 = vmatpush1.msra.mxu0 %v5815
        %5861 = vmatprep.subr.mxu0 0.0
        %5862 = vmatpush2.msra.mxu0 0.0
        %5863 = vmatprep.subr.mxu0 0.0
        %5864 = vmatpush2.msra.mxu0 0.0
        %5865 = vmatprep.subr.mxu0 0.0
        %5866 = vmatpush2.msra.mxu0 0.0
        %5867 = vmatprep.subr.mxu0 0.0
        %5868 = vmatpush2.msra.mxu0 0.0
        %5869 = vmatprep.subr.mxu0 0.0
        %5870 = vmatpush2.msra.mxu0 0.0
        %5871 = vmatprep.subr.mxu0 0.0
        %5872 = vmatpush2.msra.mxu0 0.0
        %5873 = vmatprep.subr.mxu0 0.0
        %5874 = vmatpush2.msra.mxu0 0.0
        %5875 = vmatprep.subr.mxu0 0.0
        %5876 = vmatpush2.msra.mxu0 0.0
        %5877 = vmatprep.subr.mxu0 0.0
        %5878 = vmatpush2.msra.mxu0 0.0
        %5879 = vmatprep.subr.mxu0 0.0
        %5880 = vmatpush2.msra.mxu0 0.0
        %5881 = vmatprep.subr.mxu0 0.0
        %5882 = vmatpush2.msra.mxu0 0.0
        %5883 = vmatprep.subr.mxu0 0.0
        %5884 = vmatpush2.msra.mxu0 0.0
        %5885 = vmatprep.subr.mxu0 0.0
        %5886 = vmatpush2.msra.mxu0 0.0
        %5887 = vmatprep.subr.mxu0 0.0
        %5888 = vmatpush2.msra.mxu0 0.0
        %5889 = vmatprep.subr.mxu0 0.0
        %5890 = vmatpush2.msra.mxu0 0.0
        %5891 = vmatprep.subr.mxu0 0.0
        %5892 = vmatpush2.msra.mxu0 0.0
        %5893 = vmatprep.mubr.f32.mxu0 0.0
        %5894 = vmatmul.mubr.f32.gmra.mxu0 %v5827
        %v5895 = vpop.f32.mrf.mxu0
        %v5896 = vadd.f32 %v5824, %v5895
        %v5897 = vpop.f32.mrf.mxu0
        %5898 = vdwg.mxu0
        %5899 = vst [vmem:[%s765] sm:$0xff] %v5896
        %s5900 = sand.u32 %s570, 1
        %s5901 = scalar_lea.sflag [#allocation3], %s5900
        %s5902 = sand.u32 %s570, 1
        %s5903 = smul.addr %s5902, 8
        %s5904 = scalar_lea.vmem [#allocation2], %s5903
        // Predicated region
        $region117: #{decoder_forward.1} parent=115 // pred_check
          %p5905 = pneg %p580
        $region118: #{decoder_forward.1} parent=115 // pred_check_branch
          %5907 = sbr.rel (%p5905) target = $region120
        $region119: #{decoder_forward.1} parent=115 // pred_region
          %s5909 = ssub.s32 128, 128
          %5910 = vsyncadd %s5901, %s5909
          %s5911 = smul.addr %s38, 128
          %s5912 = scalar_lea.hbm %s24, %s5911
          %s5914 = sshll.u32 %s5904, 4
          %s5915 = int_to_ptr.vmem [resolvable:$true] %s5914
          %5917 = dma.vmem_to_hbm [thread:$0]  %s5915, 128, %s5912, %s5901
        $region120: #{decoder_forward.1} parent=115 // pred_fallthru
          _
      $region116: #{decoder_forward.1} parent=5 // pred_fallthru
        _
      %p5918 = scmp.le.s32.totalorder 2, %s33
      // Predicated region
      $region121: #{decoder_forward.1} parent=5 // pred_check
        %p5919 = pneg %p5918
      $region122: #{decoder_forward.1} parent=5 // pred_check_branch
        %5921 = sbr.rel (%p5919) target = $region124
      $region123: #{decoder_forward.1} parent=5 // pred_region
        %s5922 = ssub.s32 %s33, 2
        // Predicated region
        $region125: #{decoder_forward.1} parent=123 // pred_check
          %p5923 = pneg %p586
        $region126: #{decoder_forward.1} parent=123 // pred_check_branch
          %5925 = sbr.rel (%p5923) target = $region128
        $region127: #{decoder_forward.1} parent=123 // pred_region
          %s5926 = sand.u32 %s571, 1
          %s5927 = scalar_lea.sflag [#allocation3], %s5926
          %s5928 = sand.u32 %s571, 1
          %s5929 = smul.addr %s5928, 8
          %s5930 = scalar_lea.vmem [#allocation2], %s5929
          %5931 = dma.done %s5927, 128
        $region128: #{decoder_forward.1} parent=123 // pred_fallthru
          _
      $region124: #{decoder_forward.1} parent=5 // pred_fallthru
        _
    $region6: #{decoder_forward.1} parent=1 // loop_footer
      %s37 = sadd.s32 1, %s33
    $region7: #{decoder_forward.1} parent=1 // loop_footer_branch
      %32 = sbr.rel target = $region3
    $region8: #{decoder_forward.1} parent=1 // loop_exit
      _
    %5932 = vsyncpa [#allocation3], 1
    %s5933 = scalar_lea.sflag [#allocation3], 1
    %5934 = vsyncpa %s5933, 1

</llo_original>
